<compile_context>
chip_gen: v7x
topology: tpu7x:2x2x1
jax: 0.10.0
libtpu: 0.0.40
codegen_flags: <defaults>
</compile_context>

<pallas_src>
import functools

import jax
import jax.numpy as jnp
from jax.experimental import pallas as pl
from jax.experimental.pallas import tpu as pltpu

# Geometry fixed by the PyTorch module (84x84 input, fc1 = Linear(7*7*64, 512)).
_S2D = 4                  # conv1 stride -> space-to-depth factor
_G1 = 21                  # 84 / 4: side of the space-to-depth grid
_P = 11                   # padded side of one parity plane of the 21-grid
_PITCH = _P               # flat row pitch shared by all in-kernel slabs
_L1 = 9 * _PITCH + 10     # 109: conv1 slab length (valid 10x10 per parity plane)
_L2 = 8 * _PITCH + 9      # 97 : conv2 slab length (valid 9x9)
_L3 = 6 * _PITCH + 7      # 73 : conv3 slab length (valid 7x7)
_FLAT = _L3 * 64          # 4672: zero-row-padded fc1 input length
_NPAD = 128               # action logits padded to one full lane tile


# ----------------------------------------------------------------------------
# Kernel 1: fused conv1 -> conv2 -> conv3 (one batch block per grid step).
# ----------------------------------------------------------------------------
def _conv_kernel(x_ref, w1_ref, b1_ref, w2_ref, b2_ref, w3_ref, b3_ref, out_ref):
    f32, bf16 = jnp.float32, jnp.bfloat16
    tb = x_ref.shape[0]
    for t in range(tb):                                   # static unroll over block
        # conv1 (8x8/s4): one block-diagonal matmul over the K-concatenated
        # space-to-depth taps -> lane-dense (109, 128) packed parity slab.
        z1 = jnp.dot(x_ref[t], w1_ref[...], preferred_element_type=f32)
        z1 = jnp.maximum(z1 + b1_ref[...], 0.0).astype(bf16)          # (109, 128)

        # conv2 (4x4/s2): 4 taps of K=128 over the packed slab.
        acc2 = jnp.zeros((_L2, 64), f32)
        for du in range(2):
            for dv in range(2):
                off = du * _PITCH + dv
                acc2 = acc2 + jnp.dot(z1[off:off + _L2, :], w2_ref[du * 2 + dv],
                                      preferred_element_type=f32)
        y2 = jnp.maximum(acc2 + b2_ref[...], 0.0).astype(bf16)        # (97, 64)

        # conv3 (3x3/s1): 9 taps of K=64.
        # TODO(synk): on v6e/v7x the 3 j-taps per i could be K-concatenated to
        # (73, 192) @ (192, 64); kept as plain taps for lowering robustness.
        acc3 = jnp.zeros((_L3, 64), f32)
        for i in range(3):
            for j in range(3):
                off = i * _PITCH + j
                acc3 = acc3 + jnp.dot(y2[off:off + _L3, :], w3_ref[i * 3 + j],
                                      preferred_element_type=f32)
        y3 = jnp.maximum(acc3 + b3_ref[...], 0.0)                      # (73, 64)
        out_ref[t] = y3.astype(out_ref.dtype)


def _conv_stage(xc1, w1, b1, w2, b2, w3, b3, tb):
    B, _, kc = xc1.shape
    return pl.pallas_call(
        _conv_kernel,
        out_shape=jax.ShapeDtypeStruct((B, _L3, 64), jnp.bfloat16),
        grid=(B // tb,),
        in_specs=[
            pl.BlockSpec((tb, _L1, kc), lambda b: (b, 0, 0)),
            pl.BlockSpec(w1.shape, lambda b: (0, 0)),
            pl.BlockSpec(b1.shape, lambda b: (0, 0)),
            pl.BlockSpec(w2.shape, lambda b: (0, 0, 0)),
            pl.BlockSpec(b2.shape, lambda b: (0, 0)),
            pl.BlockSpec(w3.shape, lambda b: (0, 0, 0)),
            pl.BlockSpec(b3.shape, lambda b: (0, 0)),
        ],
        out_specs=pl.BlockSpec((tb, _L3, 64), lambda b: (b, 0, 0)),
        compiler_params=pltpu.CompilerParams(
            dimension_semantics=("parallel",),
            vmem_limit_bytes=32 * 1024 * 1024),
    )(xc1, w1, b1, w2, b2, w3, b3)


# ----------------------------------------------------------------------------
# Kernel 2: batched fc1 + out head over the whole batch.
# ----------------------------------------------------------------------------
def _head_kernel(f_ref, wf1_ref, bf1_ref, wo_ref, bo_ref, out_ref):
    f32 = jnp.float32
    h = jnp.dot(f_ref[...], wf1_ref[...], preferred_element_type=f32)  # (TM, 512)
    h = jnp.maximum(h + bf1_ref[...], 0.0)
    out_ref[...] = jnp.dot(h, wo_ref[...], preferred_element_type=f32) + bo_ref[...]


def _head_stage(f, wf1, bf1, wo, bo, tm):
    B = f.shape[0]
    return pl.pallas_call(
        _head_kernel,
        out_shape=jax.ShapeDtypeStruct((B, _NPAD), jnp.float32),
        grid=(B // tm,),
        in_specs=[
            pl.BlockSpec((tm, _FLAT), lambda m: (m, 0)),
            pl.BlockSpec(wf1.shape, lambda m: (0, 0)),
            pl.BlockSpec(bf1.shape, lambda m: (0, 0)),
            pl.BlockSpec(wo.shape, lambda m: (0, 0)),
            pl.BlockSpec(bo.shape, lambda m: (0, 0)),
        ],
        out_specs=pl.BlockSpec((tm, _NPAD), lambda m: (m, 0)),
        compiler_params=pltpu.CompilerParams(
            dimension_semantics=("parallel",),
            vmem_limit_bytes=32 * 1024 * 1024),
    )(f, wf1, bf1, wo, bo)


# ----------------------------------------------------------------------------
# Per-call input prep (tiny, layout-only) and one-time parameter prep.
# ----------------------------------------------------------------------------
def _prep_input(x_nchw):
    """NCHW -> space-to-depth(4) parity planes -> per-output-parity-plane,
    K-concatenated conv1 LHS slab of shape (B, 109, 256*C) in bf16."""
    B, C, H, W = x_nchw.shape
    x = jnp.transpose(x_nchw, (0, 2, 3, 1)).astype(jnp.float32)        # NHWC
    xs = x.reshape(B, _G1, _S2D, _G1, _S2D, C)
    xs = xs.transpose(0, 1, 3, 2, 4, 5).reshape(B, _G1, _G1, 16 * C)
    xs = jnp.pad(xs, ((0, 0), (0, 1), (0, 1), (0, 0)))                 # (B,22,22,16C)
    xp = xs.reshape(B, _P, 2, _P, 2, 16 * C).transpose(0, 2, 4, 1, 3, 5)
    xp = xp.reshape(B, 4, _P * _P, 16 * C)                             # (B,4,121,16C)
    slabs = []
    for qi in range(2):
        for qj in range(2):
            taps = []
            for du in range(2):
                for dv in range(2):
                    pi, u0 = (qi + du) % 2, (qi + du) // 2
                    pj, v0 = (qj + dv) % 2, (qj + dv) // 2
                    off = u0 * _P + v0
                    taps.append(xp[:, pi * 2 + pj, off:off + _L1, :])
            slabs.append(jnp.concatenate(taps, axis=-1))               # (B,109,64C)
    return jnp.concatenate(slabs, axis=-1).astype(jnp.bfloat16)        # (B,109,256C)


def preprocess_params(p):
    """One-time re-layout of the PyTorch parameters into kernel-ready form."""
    C = p["conv1_w"].shape[1]
    A = p["out_w"].shape[0]
    # conv1 (32, C, 8, 8): 2x2-stride-1 taps over the space-to-depth(4) input,
    # stacked block-diagonally over the 4 output parity planes -> (256C, 128).
    w1tap = p["conv1_w"].reshape(32, C, 2, 4, 2, 4)
    w1tap = w1tap.transpose(2, 4, 3, 5, 1, 0).reshape(4 * 16 * C, 32)
    w1 = jnp.zeros((4 * 64 * C, 128), jnp.float32)
    for plane in range(4):
        w1 = w1.at[plane * 64 * C:(plane + 1) * 64 * C,
                   plane * 32:(plane + 1) * 32].set(w1tap)
    w1 = w1.astype(jnp.bfloat16)
    b1 = jnp.tile(p["conv1_b"], 4).reshape(1, 128).astype(jnp.float32)
    # conv2 (64, 32, 4, 4): 2x2-stride-1 taps over the packed (qi,qj,cin) slab.
    w2 = p["conv2_w"].reshape(64, 32, 2, 2, 2, 2)
    w2 = w2.transpose(2, 4, 3, 5, 1, 0).reshape(4, 128, 64).astype(jnp.bfloat16)
    b2 = p["conv2_b"].reshape(1, 64).astype(jnp.float32)
    # conv3 (64, 64, 3, 3): per-tap (cin, cout) matrices.
    w3 = p["conv3_w"].transpose(2, 3, 1, 0).reshape(9, 64, 64).astype(jnp.bfloat16)
    b3 = p["conv3_b"].reshape(1, 64).astype(jnp.float32)
    # fc1 (512, 3136): expand rows to pitch-11 (p, q, c) slab order, with zero
    # rows at the invalid q positions, so no in-kernel flatten is needed.
    wf1 = p["fc1_w"].reshape(512, 64, 7, 7).transpose(2, 3, 1, 0)      # (p,q,c,o)
    wf1 = jnp.pad(wf1, ((0, 0), (0, _P - 7), (0, 0), (0, 0)))          # (7,11,64,512)
    wf1 = wf1.reshape(7 * _P * 64, 512)[:_FLAT].astype(jnp.bfloat16)   # (4672,512)
    bf1 = p["fc1_b"].reshape(1, 512).astype(jnp.float32)
    # out head, pre-transposed and zero-padded to one full 128-lane tile.
    wo = jnp.zeros((512, _NPAD), jnp.float32).at[:, :A].set(p["out_w"].T)
    bo = jnp.zeros((1, _NPAD), jnp.float32).at[0, :A].set(p["out_b"])
    return (w1, b1, w2, b2, w3, b3, wf1, bf1, wo, bo)


def _choose_tb(batch):
    # Images per conv grid step; keep >= 2 grid steps so both v7x cores work.
    for tb in (8, 4, 2):
        if batch % tb == 0 and batch // tb >= 2:
            return tb
    return 1


def _choose_tm(batch):
    # Batch tile for the head matmul.
    if batch <= 256:
        return batch
    for tm in (256, 128, 64, 32, 16, 8):
        if batch % tm == 0:
            return tm
    return batch


@functools.partial(jax.jit, static_argnums=(2,))
def dqn_forward(x_nchw, prepped, action_size):
    w1, b1, w2, b2, w3, b3, wf1, bf1, wo, bo = prepped
    xc1 = _prep_input(x_nchw)
    B = xc1.shape[0]
    y3 = _conv_stage(xc1, w1, b1, w2, b2, w3, b3, _choose_tb(B))    # (B,73,64) bf16
    f = y3.reshape(B, _FLAT)     # free row-major reshape; rows match wf1 layout
    q = _head_stage(f, wf1, bf1, wo, bo, _choose_tm(B))             # (B,128) f32
    return q[:, :action_size]


# ----------------------------------------------------------------------------
# Pure-JAX reference (mirrors the PyTorch module) + param init.
# ----------------------------------------------------------------------------
def dqn_reference(x_nchw, p):
    def conv(x, w, b, stride):
        y = jax.lax.conv_general_dilated(
            x, w, (stride, stride), "VALID",
            dimension_numbers=("NCHW", "OIHW", "NCHW"))
        return y + b[None, :, None, None]

    x = jax.nn.relu(conv(x_nchw, p["conv1_w"], p["conv1_b"], 4))
    x = jax.nn.relu(conv(x, p["conv2_w"], p["conv2_b"], 2))
    x = jax.nn.relu(conv(x, p["conv3_w"], p["conv3_b"], 1))
    x = x.reshape(x.shape[0], -1)
    x = jax.nn.relu(x @ p["fc1_w"].T + p["fc1_b"])
    return x @ p["out_w"].T + p["out_b"]


def init_params(key, input_channels, action_size):
    ks = jax.random.split(key, 10)
    s = 0.05
    return {
        "conv1_w": s * jax.random.normal(ks[0], (32, input_channels, 8, 8), jnp.float32),
        "conv1_b": 0.01 * jax.random.normal(ks[1], (32,), jnp.float32),
        "conv2_w": s * jax.random.normal(ks[2], (64, 32, 4, 4), jnp.float32),
        "conv2_b": 0.01 * jax.random.normal(ks[3], (64,), jnp.float32),
        "conv3_w": s * jax.random.normal(ks[4], (64, 64, 3, 3), jnp.float32),
        "conv3_b": 0.01 * jax.random.normal(ks[5], (64,), jnp.float32),
        "fc1_w": s * jax.random.normal(ks[6], (512, 7 * 7 * 64), jnp.float32),
        "fc1_b": 0.01 * jax.random.normal(ks[7], (512,), jnp.float32),
        "out_w": s * jax.random.normal(ks[8], (action_size, 512), jnp.float32),
        "out_b": 0.01 * jax.random.normal(ks[9], (action_size,), jnp.float32),
    }


if __name__ == "__main__":
    # Spatial size must be 84x84: fc1 hard-codes 7*7*64 in the PyTorch module.
    batch, input_channels, action_size = 2, 4, 6
    key = jax.random.PRNGKey(0)
    k_x, k_p = jax.random.split(key)
    x = jax.random.normal(k_x, (batch, input_channels, 84, 84), jnp.float32)
    params = init_params(k_p, input_channels, action_size)

    prepped = preprocess_params(params)          # one-time weight re-layout
    q = dqn_forward(x, prepped, action_size)
    q = jax.block_until_ready(q)

    q_ref = dqn_reference(x, params)
    assert q.shape == (batch, action_size)
    assert jnp.all(jnp.isfinite(q))
    err = float(jnp.max(jnp.abs(q - q_ref)))
    # bf16 weights/activations on every matmul -> slightly wider tolerance.
    assert jnp.allclose(q, q_ref, atol=2e-2, rtol=2e-2), f"max abs diff {err}"

    print("KERNEL_OK")
</pallas_src>

<mosaic_0001>
module attributes {stable_mosaic.version = 11 : i64} {
  func.func @_conv_kernel(%arg0: i32, %arg1: memref<1x109x1024xbf16, #tpu.memory_space<vmem>>, %arg2: memref<1024x128xbf16, #tpu.memory_space<vmem>>, %arg3: memref<1x128xf32, #tpu.memory_space<vmem>>, %arg4: memref<4x128x64xbf16, #tpu.memory_space<vmem>>, %arg5: memref<1x64xf32, #tpu.memory_space<vmem>>, %arg6: memref<9x64x64xbf16, #tpu.memory_space<vmem>>, %arg7: memref<1x64xf32, #tpu.memory_space<vmem>>, %arg8: memref<1x73x64xbf16, #tpu.memory_space<vmem>>) attributes {dimension_semantics = [#tpu.dimension_semantics<parallel>], iteration_bounds = array<i64: 2>, scalar_prefetch = 0 : i64, scratch_operands = 0 : i64, tpu.core_type = #tpu.core_type<tc>, window_params = [{transform_indices = @transform_0, window_bounds = array<i64: 1, 109, 1024>}, {pipeline_mode = #tpu.pipeline_mode<synchronous>, transform_indices = @transform_1, window_bounds = array<i64: 1024, 128>}, {pipeline_mode = #tpu.pipeline_mode<synchronous>, transform_indices = @transform_2, window_bounds = array<i64: 1, 128>}, {pipeline_mode = #tpu.pipeline_mode<synchronous>, transform_indices = @transform_3, window_bounds = array<i64: 4, 128, 64>}, {pipeline_mode = #tpu.pipeline_mode<synchronous>, transform_indices = @transform_4, window_bounds = array<i64: 1, 64>}, {pipeline_mode = #tpu.pipeline_mode<synchronous>, transform_indices = @transform_5, window_bounds = array<i64: 9, 64, 64>}, {pipeline_mode = #tpu.pipeline_mode<synchronous>, transform_indices = @transform_6, window_bounds = array<i64: 1, 64>}, {transform_indices = @transform_7, window_bounds = array<i64: 1, 73, 64>}]} {
    %c0 = arith.constant 0 : index
    %c0_0 = arith.constant 0 : index
    %c0_1 = arith.constant 0 : index
    %0 = vector.load %arg1[%c0, %c0_0, %c0_1] : memref<1x109x1024xbf16, #tpu.memory_space<vmem>>, vector<1x109x1024xbf16>
    %1 = vector.shape_cast %0 : vector<1x109x1024xbf16> to vector<109x1024xbf16>
    %c0_2 = arith.constant 0 : index
    %c0_3 = arith.constant 0 : index
    %2 = vector.load %arg2[%c0_2, %c0_3] : memref<1024x128xbf16, #tpu.memory_space<vmem>>, vector<1024x128xbf16>
    %cst = arith.constant dense<0.000000e+00> : vector<109x128xf32>
    %3 = tpu.matmul %1, %2, %cst {dimension_numbers = #tpu.dot_dimension_numbers<[1], [0], [0], [1], [0, 0, 1, 1], [], []>} : vector<109x1024xbf16>, vector<1024x128xbf16>, vector<109x128xf32> -> vector<109x128xf32>
    %c0_4 = arith.constant 0 : index
    %c0_5 = arith.constant 0 : index
    %4 = vector.load %arg3[%c0_4, %c0_5] : memref<1x128xf32, #tpu.memory_space<vmem>>, vector<1x128xf32>
    %5 = vector.broadcast %4 : vector<1x128xf32> to vector<109x128xf32>
    %6 = arith.addf %3, %5 : vector<109x128xf32>
    %cst_6 = arith.constant 0.000000e+00 : f32
    %7 = vector.broadcast %cst_6 : f32 to vector<109x128xf32>
    %8 = arith.maximumf %6, %7 : vector<109x128xf32>
    %9 = arith.truncf %8 : vector<109x128xf32> to vector<109x128xbf16>
    %cst_7 = arith.constant 0.000000e+00 : f32
    %10 = vector.broadcast %cst_7 : f32 to vector<97x64xf32>
    %11 = vector.extract_strided_slice %9 {offsets = [0, 0], sizes = [97, 128], strides = [1, 1]} : vector<109x128xbf16> to vector<97x128xbf16>
    %c0_8 = arith.constant 0 : index
    %c0_9 = arith.constant 0 : index
    %c0_10 = arith.constant 0 : index
    %12 = vector.load %arg4[%c0_8, %c0_9, %c0_10] : memref<4x128x64xbf16, #tpu.memory_space<vmem>>, vector<1x128x64xbf16>
    %13 = vector.shape_cast %12 : vector<1x128x64xbf16> to vector<128x64xbf16>
    %cst_11 = arith.constant dense<0.000000e+00> : vector<97x64xf32>
    %14 = tpu.matmul %11, %13, %cst_11 {dimension_numbers = #tpu.dot_dimension_numbers<[1], [0], [0], [1], [0, 0, 1, 1], [], []>} : vector<97x128xbf16>, vector<128x64xbf16>, vector<97x64xf32> -> vector<97x64xf32>
    %15 = arith.addf %10, %14 : vector<97x64xf32>
    %16 = vector.extract_strided_slice %9 {offsets = [1, 0], sizes = [97, 128], strides = [1, 1]} : vector<109x128xbf16> to vector<97x128xbf16>
    %c1 = arith.constant 1 : index
    %c0_12 = arith.constant 0 : index
    %c0_13 = arith.constant 0 : index
    %17 = vector.load %arg4[%c1, %c0_12, %c0_13] : memref<4x128x64xbf16, #tpu.memory_space<vmem>>, vector<1x128x64xbf16>
    %18 = vector.shape_cast %17 : vector<1x128x64xbf16> to vector<128x64xbf16>
    %cst_14 = arith.constant dense<0.000000e+00> : vector<97x64xf32>
    %19 = tpu.matmul %16, %18, %cst_14 {dimension_numbers = #tpu.dot_dimension_numbers<[1], [0], [0], [1], [0, 0, 1, 1], [], []>} : vector<97x128xbf16>, vector<128x64xbf16>, vector<97x64xf32> -> vector<97x64xf32>
    %20 = arith.addf %15, %19 : vector<97x64xf32>
    %21 = vector.extract_strided_slice %9 {offsets = [11, 0], sizes = [97, 128], strides = [1, 1]} : vector<109x128xbf16> to vector<97x128xbf16>
    %c2 = arith.constant 2 : index
    %c0_15 = arith.constant 0 : index
    %c0_16 = arith.constant 0 : index
    %22 = vector.load %arg4[%c2, %c0_15, %c0_16] : memref<4x128x64xbf16, #tpu.memory_space<vmem>>, vector<1x128x64xbf16>
    %23 = vector.shape_cast %22 : vector<1x128x64xbf16> to vector<128x64xbf16>
    %cst_17 = arith.constant dense<0.000000e+00> : vector<97x64xf32>
    %24 = tpu.matmul %21, %23, %cst_17 {dimension_numbers = #tpu.dot_dimension_numbers<[1], [0], [0], [1], [0, 0, 1, 1], [], []>} : vector<97x128xbf16>, vector<128x64xbf16>, vector<97x64xf32> -> vector<97x64xf32>
    %25 = arith.addf %20, %24 : vector<97x64xf32>
    %26 = vector.extract_strided_slice %9 {offsets = [12, 0], sizes = [97, 128], strides = [1, 1]} : vector<109x128xbf16> to vector<97x128xbf16>
    %c3 = arith.constant 3 : index
    %c0_18 = arith.constant 0 : index
    %c0_19 = arith.constant 0 : index
    %27 = vector.load %arg4[%c3, %c0_18, %c0_19] : memref<4x128x64xbf16, #tpu.memory_space<vmem>>, vector<1x128x64xbf16>
    %28 = vector.shape_cast %27 : vector<1x128x64xbf16> to vector<128x64xbf16>
    %cst_20 = arith.constant dense<0.000000e+00> : vector<97x64xf32>
    %29 = tpu.matmul %26, %28, %cst_20 {dimension_numbers = #tpu.dot_dimension_numbers<[1], [0], [0], [1], [0, 0, 1, 1], [], []>} : vector<97x128xbf16>, vector<128x64xbf16>, vector<97x64xf32> -> vector<97x64xf32>
    %30 = arith.addf %25, %29 : vector<97x64xf32>
    %c0_21 = arith.constant 0 : index
    %c0_22 = arith.constant 0 : index
    %31 = vector.load %arg5[%c0_21, %c0_22] : memref<1x64xf32, #tpu.memory_space<vmem>>, vector<1x64xf32>
    %32 = vector.broadcast %31 : vector<1x64xf32> to vector<97x64xf32>
    %33 = arith.addf %30, %32 : vector<97x64xf32>
    %cst_23 = arith.constant 0.000000e+00 : f32
    %34 = vector.broadcast %cst_23 : f32 to vector<97x64xf32>
    %35 = arith.maximumf %33, %34 : vector<97x64xf32>
    %36 = arith.truncf %35 : vector<97x64xf32> to vector<97x64xbf16>
    %cst_24 = arith.constant 0.000000e+00 : f32
    %37 = vector.broadcast %cst_24 : f32 to vector<73x64xf32>
    %38 = vector.extract_strided_slice %36 {offsets = [0, 0], sizes = [73, 64], strides = [1, 1]} : vector<97x64xbf16> to vector<73x64xbf16>
    %c0_25 = arith.constant 0 : index
    %c0_26 = arith.constant 0 : index
    %c0_27 = arith.constant 0 : index
    %39 = vector.load %arg6[%c0_25, %c0_26, %c0_27] : memref<9x64x64xbf16, #tpu.memory_space<vmem>>, vector<1x64x64xbf16>
    %40 = vector.shape_cast %39 : vector<1x64x64xbf16> to vector<64x64xbf16>
    %cst_28 = arith.constant dense<0.000000e+00> : vector<73x64xf32>
    %41 = tpu.matmul %38, %40, %cst_28 {dimension_numbers = #tpu.dot_dimension_numbers<[1], [0], [0], [1], [0, 0, 1, 1], [], []>} : vector<73x64xbf16>, vector<64x64xbf16>, vector<73x64xf32> -> vector<73x64xf32>
    %42 = arith.addf %37, %41 : vector<73x64xf32>
    %43 = vector.extract_strided_slice %36 {offsets = [1, 0], sizes = [73, 64], strides = [1, 1]} : vector<97x64xbf16> to vector<73x64xbf16>
    %c1_29 = arith.constant 1 : index
    %c0_30 = arith.constant 0 : index
    %c0_31 = arith.constant 0 : index
    %44 = vector.load %arg6[%c1_29, %c0_30, %c0_31] : memref<9x64x64xbf16, #tpu.memory_space<vmem>>, vector<1x64x64xbf16>
    %45 = vector.shape_cast %44 : vector<1x64x64xbf16> to vector<64x64xbf16>
    %cst_32 = arith.constant dense<0.000000e+00> : vector<73x64xf32>
    %46 = tpu.matmul %43, %45, %cst_32 {dimension_numbers = #tpu.dot_dimension_numbers<[1], [0], [0], [1], [0, 0, 1, 1], [], []>} : vector<73x64xbf16>, vector<64x64xbf16>, vector<73x64xf32> -> vector<73x64xf32>
    %47 = arith.addf %42, %46 : vector<73x64xf32>
    %48 = vector.extract_strided_slice %36 {offsets = [2, 0], sizes = [73, 64], strides = [1, 1]} : vector<97x64xbf16> to vector<73x64xbf16>
    %c2_33 = arith.constant 2 : index
    %c0_34 = arith.constant 0 : index
    %c0_35 = arith.constant 0 : index
    %49 = vector.load %arg6[%c2_33, %c0_34, %c0_35] : memref<9x64x64xbf16, #tpu.memory_space<vmem>>, vector<1x64x64xbf16>
    %50 = vector.shape_cast %49 : vector<1x64x64xbf16> to vector<64x64xbf16>
    %cst_36 = arith.constant dense<0.000000e+00> : vector<73x64xf32>
    %51 = tpu.matmul %48, %50, %cst_36 {dimension_numbers = #tpu.dot_dimension_numbers<[1], [0], [0], [1], [0, 0, 1, 1], [], []>} : vector<73x64xbf16>, vector<64x64xbf16>, vector<73x64xf32> -> vector<73x64xf32>
    %52 = arith.addf %47, %51 : vector<73x64xf32>
    %53 = vector.extract_strided_slice %36 {offsets = [11, 0], sizes = [73, 64], strides = [1, 1]} : vector<97x64xbf16> to vector<73x64xbf16>
    %c3_37 = arith.constant 3 : index
    %c0_38 = arith.constant 0 : index
    %c0_39 = arith.constant 0 : index
    %54 = vector.load %arg6[%c3_37, %c0_38, %c0_39] : memref<9x64x64xbf16, #tpu.memory_space<vmem>>, vector<1x64x64xbf16>
    %55 = vector.shape_cast %54 : vector<1x64x64xbf16> to vector<64x64xbf16>
    %cst_40 = arith.constant dense<0.000000e+00> : vector<73x64xf32>
    %56 = tpu.matmul %53, %55, %cst_40 {dimension_numbers = #tpu.dot_dimension_numbers<[1], [0], [0], [1], [0, 0, 1, 1], [], []>} : vector<73x64xbf16>, vector<64x64xbf16>, vector<73x64xf32> -> vector<73x64xf32>
    %57 = arith.addf %52, %56 : vector<73x64xf32>
    %58 = vector.extract_strided_slice %36 {offsets = [12, 0], sizes = [73, 64], strides = [1, 1]} : vector<97x64xbf16> to vector<73x64xbf16>
    %c4 = arith.constant 4 : index
    %c0_41 = arith.constant 0 : index
    %c0_42 = arith.constant 0 : index
    %59 = vector.load %arg6[%c4, %c0_41, %c0_42] : memref<9x64x64xbf16, #tpu.memory_space<vmem>>, vector<1x64x64xbf16>
    %60 = vector.shape_cast %59 : vector<1x64x64xbf16> to vector<64x64xbf16>
    %cst_43 = arith.constant dense<0.000000e+00> : vector<73x64xf32>
    %61 = tpu.matmul %58, %60, %cst_43 {dimension_numbers = #tpu.dot_dimension_numbers<[1], [0], [0], [1], [0, 0, 1, 1], [], []>} : vector<73x64xbf16>, vector<64x64xbf16>, vector<73x64xf32> -> vector<73x64xf32>
    %62 = arith.addf %57, %61 : vector<73x64xf32>
    %63 = vector.extract_strided_slice %36 {offsets = [13, 0], sizes = [73, 64], strides = [1, 1]} : vector<97x64xbf16> to vector<73x64xbf16>
    %c5 = arith.constant 5 : index
    %c0_44 = arith.constant 0 : index
    %c0_45 = arith.constant 0 : index
    %64 = vector.load %arg6[%c5, %c0_44, %c0_45] : memref<9x64x64xbf16, #tpu.memory_space<vmem>>, vector<1x64x64xbf16>
    %65 = vector.shape_cast %64 : vector<1x64x64xbf16> to vector<64x64xbf16>
    %cst_46 = arith.constant dense<0.000000e+00> : vector<73x64xf32>
    %66 = tpu.matmul %63, %65, %cst_46 {dimension_numbers = #tpu.dot_dimension_numbers<[1], [0], [0], [1], [0, 0, 1, 1], [], []>} : vector<73x64xbf16>, vector<64x64xbf16>, vector<73x64xf32> -> vector<73x64xf32>
    %67 = arith.addf %62, %66 : vector<73x64xf32>
    %68 = vector.extract_strided_slice %36 {offsets = [22, 0], sizes = [73, 64], strides = [1, 1]} : vector<97x64xbf16> to vector<73x64xbf16>
    %c6 = arith.constant 6 : index
    %c0_47 = arith.constant 0 : index
    %c0_48 = arith.constant 0 : index
    %69 = vector.load %arg6[%c6, %c0_47, %c0_48] : memref<9x64x64xbf16, #tpu.memory_space<vmem>>, vector<1x64x64xbf16>
    %70 = vector.shape_cast %69 : vector<1x64x64xbf16> to vector<64x64xbf16>
    %cst_49 = arith.constant dense<0.000000e+00> : vector<73x64xf32>
    %71 = tpu.matmul %68, %70, %cst_49 {dimension_numbers = #tpu.dot_dimension_numbers<[1], [0], [0], [1], [0, 0, 1, 1], [], []>} : vector<73x64xbf16>, vector<64x64xbf16>, vector<73x64xf32> -> vector<73x64xf32>
    %72 = arith.addf %67, %71 : vector<73x64xf32>
    %73 = vector.extract_strided_slice %36 {offsets = [23, 0], sizes = [73, 64], strides = [1, 1]} : vector<97x64xbf16> to vector<73x64xbf16>
    %c7 = arith.constant 7 : index
    %c0_50 = arith.constant 0 : index
    %c0_51 = arith.constant 0 : index
    %74 = vector.load %arg6[%c7, %c0_50, %c0_51] : memref<9x64x64xbf16, #tpu.memory_space<vmem>>, vector<1x64x64xbf16>
    %75 = vector.shape_cast %74 : vector<1x64x64xbf16> to vector<64x64xbf16>
    %cst_52 = arith.constant dense<0.000000e+00> : vector<73x64xf32>
    %76 = tpu.matmul %73, %75, %cst_52 {dimension_numbers = #tpu.dot_dimension_numbers<[1], [0], [0], [1], [0, 0, 1, 1], [], []>} : vector<73x64xbf16>, vector<64x64xbf16>, vector<73x64xf32> -> vector<73x64xf32>
    %77 = arith.addf %72, %76 : vector<73x64xf32>
    %78 = vector.extract_strided_slice %36 {offsets = [24, 0], sizes = [73, 64], strides = [1, 1]} : vector<97x64xbf16> to vector<73x64xbf16>
    %c8 = arith.constant 8 : index
    %c0_53 = arith.constant 0 : index
    %c0_54 = arith.constant 0 : index
    %79 = vector.load %arg6[%c8, %c0_53, %c0_54] : memref<9x64x64xbf16, #tpu.memory_space<vmem>>, vector<1x64x64xbf16>
    %80 = vector.shape_cast %79 : vector<1x64x64xbf16> to vector<64x64xbf16>
    %cst_55 = arith.constant dense<0.000000e+00> : vector<73x64xf32>
    %81 = tpu.matmul %78, %80, %cst_55 {dimension_numbers = #tpu.dot_dimension_numbers<[1], [0], [0], [1], [0, 0, 1, 1], [], []>} : vector<73x64xbf16>, vector<64x64xbf16>, vector<73x64xf32> -> vector<73x64xf32>
    %82 = arith.addf %77, %81 : vector<73x64xf32>
    %c0_56 = arith.constant 0 : index
    %c0_57 = arith.constant 0 : index
    %83 = vector.load %arg7[%c0_56, %c0_57] : memref<1x64xf32, #tpu.memory_space<vmem>>, vector<1x64xf32>
    %84 = vector.broadcast %83 : vector<1x64xf32> to vector<73x64xf32>
    %85 = arith.addf %82, %84 : vector<73x64xf32>
    %cst_58 = arith.constant 0.000000e+00 : f32
    %86 = vector.broadcast %cst_58 : f32 to vector<73x64xf32>
    %87 = arith.maximumf %85, %86 : vector<73x64xf32>
    %88 = arith.truncf %87 : vector<73x64xf32> to vector<73x64xbf16>
    %c0_59 = arith.constant 0 : index
    %c0_60 = arith.constant 0 : index
    %c0_61 = arith.constant 0 : index
    %89 = vector.load %arg8[%c0_59, %c0_60, %c0_61] : memref<1x73x64xbf16, #tpu.memory_space<vmem>>, vector<1x73x64xbf16>
    %90 = vector.shape_cast %89 : vector<1x73x64xbf16> to vector<73x64xbf16>
    %91 = vector.shape_cast %88 : vector<73x64xbf16> to vector<1x73x64xbf16>
    tpu.vector_store %arg8[%c0_59, %c0_60, %c0_61], %91 {strides = array<i32>} : memref<1x73x64xbf16, #tpu.memory_space<vmem>>, vector<1x73x64xbf16>,
    return
  }
  func.func @transform_0(%arg0: i32) -> (i32, i32, i32) {
    %c0_i32 = arith.constant 0 : i32
    %c0_i32_0 = arith.constant 0 : i32
    %c0_i32_1 = arith.constant 0 : i32
    return %arg0, %c0_i32, %c0_i32_0 : i32, i32, i32
  }
  func.func @transform_1(%arg0: i32) -> (i32, i32) {
    %c0_i32 = arith.constant 0 : i32
    %c0_i32_0 = arith.constant 0 : i32
    %c0_i32_1 = arith.constant 0 : i32
    return %c0_i32, %c0_i32_0 : i32, i32
  }
  func.func @transform_2(%arg0: i32) -> (i32, i32) {
    %c0_i32 = arith.constant 0 : i32
    %c0_i32_0 = arith.constant 0 : i32
    %c0_i32_1 = arith.constant 0 : i32
    return %c0_i32, %c0_i32_0 : i32, i32
  }
  func.func @transform_3(%arg0: i32) -> (i32, i32, i32) {
    %c0_i32 = arith.constant 0 : i32
    %c0_i32_0 = arith.constant 0 : i32
    %c0_i32_1 = arith.constant 0 : i32
    %c0_i32_2 = arith.constant 0 : i32
    return %c0_i32, %c0_i32_0, %c0_i32_1 : i32, i32, i32
  }
  func.func @transform_4(%arg0: i32) -> (i32, i32) {
    %c0_i32 = arith.constant 0 : i32
    %c0_i32_0 = arith.constant 0 : i32
    %c0_i32_1 = arith.constant 0 : i32
    return %c0_i32, %c0_i32_0 : i32, i32
  }
  func.func @transform_5(%arg0: i32) -> (i32, i32, i32) {
    %c0_i32 = arith.constant 0 : i32
    %c0_i32_0 = arith.constant 0 : i32
    %c0_i32_1 = arith.constant 0 : i32
    %c0_i32_2 = arith.constant 0 : i32
    return %c0_i32, %c0_i32_0, %c0_i32_1 : i32, i32, i32
  }
  func.func @transform_6(%arg0: i32) -> (i32, i32) {
    %c0_i32 = arith.constant 0 : i32
    %c0_i32_0 = arith.constant 0 : i32
    %c0_i32_1 = arith.constant 0 : i32
    return %c0_i32, %c0_i32_0 : i32, i32
  }
  func.func @transform_7(%arg0: i32) -> (i32, i32, i32) {
    %c0_i32 = arith.constant 0 : i32
    %c0_i32_0 = arith.constant 0 : i32
    %c0_i32_1 = arith.constant 0 : i32
    return %arg0, %c0_i32, %c0_i32_0 : i32, i32, i32
  }
}

module attributes {stable_mosaic.version = 11 : i64} {
  func.func @_head_kernel(%arg0: i32, %arg1: memref<2x4672xbf16, #tpu.memory_space<vmem>>, %arg2: memref<4672x512xbf16, #tpu.memory_space<vmem>>, %arg3: memref<1x512xf32, #tpu.memory_space<vmem>>, %arg4: memref<512x128xf32, #tpu.memory_space<vmem>>, %arg5: memref<1x128xf32, #tpu.memory_space<vmem>>, %arg6: memref<2x128xf32, #tpu.memory_space<vmem>>) attributes {dimension_semantics = [#tpu.dimension_semantics<parallel>], iteration_bounds = array<i64: 1>, scalar_prefetch = 0 : i64, scratch_operands = 0 : i64, tpu.core_type = #tpu.core_type<tc>, window_params = [{transform_indices = @transform_0, window_bounds = array<i64: 2, 4672>}, {pipeline_mode = #tpu.pipeline_mode<synchronous>, transform_indices = @transform_1, window_bounds = array<i64: 4672, 512>}, {pipeline_mode = #tpu.pipeline_mode<synchronous>, transform_indices = @transform_2, window_bounds = array<i64: 1, 512>}, {pipeline_mode = #tpu.pipeline_mode<synchronous>, transform_indices = @transform_3, window_bounds = array<i64: 512, 128>}, {pipeline_mode = #tpu.pipeline_mode<synchronous>, transform_indices = @transform_4, window_bounds = array<i64: 1, 128>}, {transform_indices = @transform_5, window_bounds = array<i64: 2, 128>}]} {
    %c0 = arith.constant 0 : index
    %c0_0 = arith.constant 0 : index
    %0 = vector.load %arg1[%c0, %c0_0] : memref<2x4672xbf16, #tpu.memory_space<vmem>>, vector<2x4672xbf16>
    %c0_1 = arith.constant 0 : index
    %c0_2 = arith.constant 0 : index
    %1 = vector.load %arg2[%c0_1, %c0_2] : memref<4672x512xbf16, #tpu.memory_space<vmem>>, vector<4672x512xbf16>
    %cst = arith.constant dense<0.000000e+00> : vector<2x512xf32>
    %2 = tpu.matmul %0, %1, %cst {dimension_numbers = #tpu.dot_dimension_numbers<[1], [0], [0], [1], [0, 0, 1, 1], [], []>} : vector<2x4672xbf16>, vector<4672x512xbf16>, vector<2x512xf32> -> vector<2x512xf32>
    %c0_3 = arith.constant 0 : index
    %c0_4 = arith.constant 0 : index
    %3 = vector.load %arg3[%c0_3, %c0_4] : memref<1x512xf32, #tpu.memory_space<vmem>>, vector<1x512xf32>
    %4 = vector.broadcast %3 : vector<1x512xf32> to vector<2x512xf32>
    %5 = arith.addf %2, %4 : vector<2x512xf32>
    %cst_5 = arith.constant 0.000000e+00 : f32
    %6 = vector.broadcast %cst_5 : f32 to vector<2x512xf32>
    %7 = arith.maximumf %5, %6 : vector<2x512xf32>
    %c0_6 = arith.constant 0 : index
    %c0_7 = arith.constant 0 : index
    %8 = vector.load %arg4[%c0_6, %c0_7] : memref<512x128xf32, #tpu.memory_space<vmem>>, vector<512x128xf32>
    %cst_8 = arith.constant dense<0.000000e+00> : vector<2x128xf32>
    %9 = tpu.matmul %7, %8, %cst_8 {dimension_numbers = #tpu.dot_dimension_numbers<[1], [0], [0], [1], [0, 0, 1, 1], [], []>} : vector<2x512xf32>, vector<512x128xf32>, vector<2x128xf32> -> vector<2x128xf32>
    %c0_9 = arith.constant 0 : index
    %c0_10 = arith.constant 0 : index
    %10 = vector.load %arg5[%c0_9, %c0_10] : memref<1x128xf32, #tpu.memory_space<vmem>>, vector<1x128xf32>
    %11 = vector.broadcast %10 : vector<1x128xf32> to vector<2x128xf32>
    %12 = arith.addf %9, %11 : vector<2x128xf32>
    %c0_11 = arith.constant 0 : index
    %c0_12 = arith.constant 0 : index
    %13 = vector.load %arg6[%c0_11, %c0_12] : memref<2x128xf32, #tpu.memory_space<vmem>>, vector<2x128xf32>
    tpu.vector_store %arg6[%c0_11, %c0_12], %12 {strides = array<i32>} : memref<2x128xf32, #tpu.memory_space<vmem>>, vector<2x128xf32>,
    return
  }
  func.func @transform_0(%arg0: i32) -> (i32, i32) {
    %c0_i32 = arith.constant 0 : i32
    %c0_i32_0 = arith.constant 0 : i32
    return %arg0, %c0_i32 : i32, i32
  }
  func.func @transform_1(%arg0: i32) -> (i32, i32) {
    %c0_i32 = arith.constant 0 : i32
    %c0_i32_0 = arith.constant 0 : i32
    %c0_i32_1 = arith.constant 0 : i32
    return %c0_i32, %c0_i32_0 : i32, i32
  }
  func.func @transform_2(%arg0: i32) -> (i32, i32) {
    %c0_i32 = arith.constant 0 : i32
    %c0_i32_0 = arith.constant 0 : i32
    %c0_i32_1 = arith.constant 0 : i32
    return %c0_i32, %c0_i32_0 : i32, i32
  }
  func.func @transform_3(%arg0: i32) -> (i32, i32) {
    %c0_i32 = arith.constant 0 : i32
    %c0_i32_0 = arith.constant 0 : i32
    %c0_i32_1 = arith.constant 0 : i32
    return %c0_i32, %c0_i32_0 : i32, i32
  }
  func.func @transform_4(%arg0: i32) -> (i32, i32) {
    %c0_i32 = arith.constant 0 : i32
    %c0_i32_0 = arith.constant 0 : i32
    %c0_i32_1 = arith.constant 0 : i32
    return %c0_i32, %c0_i32_0 : i32, i32
  }
  func.func @transform_5(%arg0: i32) -> (i32, i32) {
    %c0_i32 = arith.constant 0 : i32
    %c0_i32_0 = arith.constant 0 : i32
    return %arg0, %c0_i32 : i32, i32
  }
}

</mosaic_0001>

<llo_original>
// kernel: dqn_forward.2
$region0: #{dqn_forward.2}
  #allocation0 [shape = 'u32[]', space=smem, size = 0x4, offset = 0x4, fixed_abs, tag = 'smem constant byte address 0x4 - core index']
  #allocation1 [shape = 'u32[144,128]{1,0:T(1,128)}', space=vmem, size = 0x12000, scoped, tag = 'internal scratch']
  %s0 = inlined_call_operand.vmem [shape: bf16[2,109,1024], index: 0, kind: input, shape index: {}]
  %s1 = inlined_call_operand.vmem [shape: bf16[1024,128], index: 1, kind: input, shape index: {}]
  %s2 = inlined_call_operand.vmem [shape: f32[1,128], index: 2, kind: input, shape index: {}]
  %s3 = inlined_call_operand.vmem [shape: bf16[4,128,64], index: 3, kind: input, shape index: {}]
  %s4 = inlined_call_operand.vmem [shape: f32[1,64], index: 4, kind: input, shape index: {}]
  %s5 = inlined_call_operand.vmem [shape: bf16[9,64,64], index: 5, kind: input, shape index: {}]
  %s6 = inlined_call_operand.vmem [shape: f32[1,64], index: 6, kind: input, shape index: {}]
  %s7 = inlined_call_operand.vmem [shape: bf16[2,73,64], index: 7, kind: output, shape index: {}]
  %s8 = sld [smem:[#allocation0]]
  $region61: #{dqn_forward.2} parent=0
    _
  %s10 = ssub.s32 1, %s8
  %s11 = scalar_select 0, %s10, %s8
  loop: start=0, step=1, limit=4
  $region2: #{dqn_forward.2} parent=0 // loop_pre_header
    _
  $region3: #{dqn_forward.2} parent=0 // loop_header
    %s13 = sphi 0, %s17
    %p14 = scmp.ge.s32.totalorder %s13, 4
    %s23 = sphi 0, %s25
    %s26 = sphi 0, %s23
    %s27 = sphi 0, %s26
    %s43 = sphi 0, %s27
    %s47 = sphi 0, %s47
    %s49 = sphi 0, %s47
    %s50 = sphi 0, %s49
    %s64 = sphi 0, %s50
    %s68 = sphi 0, %s68
    %s70 = sphi 0, %s68
    %s71 = sphi 0, %s70
    %s85 = sphi 0, %s71
    %s89 = sphi 0, %s89
    %s91 = sphi 0, %s89
    %s92 = sphi 0, %s91
    %s106 = sphi 0, %s92
    %s110 = sphi 0, %s110
    %s112 = sphi 0, %s110
    %s113 = sphi 0, %s112
    %s127 = sphi 0, %s113
    %s131 = sphi 0, %s131
    %s133 = sphi 0, %s131
    %s134 = sphi 0, %s133
    %s148 = sphi 0, %s134
    %s152 = sphi 0, %s152
    %s154 = sphi 0, %s152
    %s155 = sphi 0, %s154
    %s169 = sphi 0, %s155
    %s175 = sphi 0, %s177
    %s178 = sphi 0, %s175
    %s179 = sphi 0, %s178
    %s195 = sphi 0, %s179
  $region4: #{dqn_forward.2} parent=0 // loop_header_branch
    %16 = sbr.rel (%p14) target = $region8
  $region5: #{dqn_forward.2} parent=0 // loop_body
    %s18 = ssub.s32 %s13, 1
    %s19 = ssub.s32 %s13, 2
    %s20 = sadd.s32 %s13, 1
    %s21 = ssub.s32 %s13, %s20
    %p22 = scmp.eq.s32.totalorder %s21, 0
    %s24 = sadd.s32 %s23, 1
    %s25 = scalar_select %p22, %s23, %s24
    %p28 = pneg %p22
    %p29 = scmp.eq.s32.totalorder %s13, 1
    %p30 = por %p28, %p29
    %p31 = scmp.ne.s32.totalorder %s23, %s26
    %p32 = scmp.eq.s32.totalorder %s13, 0
    %p33 = por %p31, %p32
    %p34 = scmp.ne.s32.totalorder %s23, %s26
    %p35 = scmp.eq.s32.totalorder %s18, 1
    %p36 = por %p34, %p35
    %p37 = scmp.ne.s32.totalorder %s26, %s27
    %p38 = scmp.eq.s32.totalorder %s18, 0
    %p39 = por %p37, %p38
    %p40 = scmp.ne.s32.totalorder %s26, %s27
    %p41 = scmp.eq.s32.totalorder %s19, 1
    %p42 = por %p40, %p41
    %p44 = scmp.ne.s32.totalorder %s27, %s43
    %p45 = scmp.eq.s32.totalorder %s19, 0
    %p46 = por %p44, %p45
    %s48 = sadd.s32 %s47, 1
    %p51 = scmp.eq.s32.totalorder %s13, 1
    %p52 = scmp.ne.s32.totalorder %s47, %s49
    %p53 = scmp.eq.s32.totalorder %s13, 0
    %p54 = por %p52, %p53
    %p55 = scmp.ne.s32.totalorder %s47, %s49
    %p56 = scmp.eq.s32.totalorder %s18, 1
    %p57 = por %p55, %p56
    %p58 = scmp.ne.s32.totalorder %s49, %s50
    %p59 = scmp.eq.s32.totalorder %s18, 0
    %p60 = por %p58, %p59
    %p61 = scmp.ne.s32.totalorder %s49, %s50
    %p62 = scmp.eq.s32.totalorder %s19, 1
    %p63 = por %p61, %p62
    %p65 = scmp.ne.s32.totalorder %s50, %s64
    %p66 = scmp.eq.s32.totalorder %s19, 0
    %p67 = por %p65, %p66
    %s69 = sadd.s32 %s68, 1
    %p72 = scmp.eq.s32.totalorder %s13, 1
    %p73 = scmp.ne.s32.totalorder %s68, %s70
    %p74 = scmp.eq.s32.totalorder %s13, 0
    %p75 = por %p73, %p74
    %p76 = scmp.ne.s32.totalorder %s68, %s70
    %p77 = scmp.eq.s32.totalorder %s18, 1
    %p78 = por %p76, %p77
    %p79 = scmp.ne.s32.totalorder %s70, %s71
    %p80 = scmp.eq.s32.totalorder %s18, 0
    %p81 = por %p79, %p80
    %p82 = scmp.ne.s32.totalorder %s70, %s71
    %p83 = scmp.eq.s32.totalorder %s19, 1
    %p84 = por %p82, %p83
    %p86 = scmp.ne.s32.totalorder %s71, %s85
    %p87 = scmp.eq.s32.totalorder %s19, 0
    %p88 = por %p86, %p87
    %s90 = sadd.s32 %s89, 1
    %p93 = scmp.eq.s32.totalorder %s13, 1
    %p94 = scmp.ne.s32.totalorder %s89, %s91
    %p95 = scmp.eq.s32.totalorder %s13, 0
    %p96 = por %p94, %p95
    %p97 = scmp.ne.s32.totalorder %s89, %s91
    %p98 = scmp.eq.s32.totalorder %s18, 1
    %p99 = por %p97, %p98
    %p100 = scmp.ne.s32.totalorder %s91, %s92
    %p101 = scmp.eq.s32.totalorder %s18, 0
    %p102 = por %p100, %p101
    %p103 = scmp.ne.s32.totalorder %s91, %s92
    %p104 = scmp.eq.s32.totalorder %s19, 1
    %p105 = por %p103, %p104
    %p107 = scmp.ne.s32.totalorder %s92, %s106
    %p108 = scmp.eq.s32.totalorder %s19, 0
    %p109 = por %p107, %p108
    %s111 = sadd.s32 %s110, 1
    %p114 = scmp.eq.s32.totalorder %s13, 1
    %p115 = scmp.ne.s32.totalorder %s110, %s112
    %p116 = scmp.eq.s32.totalorder %s13, 0
    %p117 = por %p115, %p116
    %p118 = scmp.ne.s32.totalorder %s110, %s112
    %p119 = scmp.eq.s32.totalorder %s18, 1
    %p120 = por %p118, %p119
    %p121 = scmp.ne.s32.totalorder %s112, %s113
    %p122 = scmp.eq.s32.totalorder %s18, 0
    %p123 = por %p121, %p122
    %p124 = scmp.ne.s32.totalorder %s112, %s113
    %p125 = scmp.eq.s32.totalorder %s19, 1
    %p126 = por %p124, %p125
    %p128 = scmp.ne.s32.totalorder %s113, %s127
    %p129 = scmp.eq.s32.totalorder %s19, 0
    %p130 = por %p128, %p129
    %s132 = sadd.s32 %s131, 1
    %p135 = scmp.eq.s32.totalorder %s13, 1
    %p136 = scmp.ne.s32.totalorder %s131, %s133
    %p137 = scmp.eq.s32.totalorder %s13, 0
    %p138 = por %p136, %p137
    %p139 = scmp.ne.s32.totalorder %s131, %s133
    %p140 = scmp.eq.s32.totalorder %s18, 1
    %p141 = por %p139, %p140
    %p142 = scmp.ne.s32.totalorder %s133, %s134
    %p143 = scmp.eq.s32.totalorder %s18, 0
    %p144 = por %p142, %p143
    %p145 = scmp.ne.s32.totalorder %s133, %s134
    %p146 = scmp.eq.s32.totalorder %s19, 1
    %p147 = por %p145, %p146
    %p149 = scmp.ne.s32.totalorder %s134, %s148
    %p150 = scmp.eq.s32.totalorder %s19, 0
    %p151 = por %p149, %p150
    %s153 = sadd.s32 %s152, 1
    %p156 = scmp.eq.s32.totalorder %s13, 1
    %p157 = scmp.ne.s32.totalorder %s152, %s154
    %p158 = scmp.eq.s32.totalorder %s13, 0
    %p159 = por %p157, %p158
    %p160 = scmp.ne.s32.totalorder %s152, %s154
    %p161 = scmp.eq.s32.totalorder %s18, 1
    %p162 = por %p160, %p161
    %p163 = scmp.ne.s32.totalorder %s154, %s155
    %p164 = scmp.eq.s32.totalorder %s18, 0
    %p165 = por %p163, %p164
    %p166 = scmp.ne.s32.totalorder %s154, %s155
    %p167 = scmp.eq.s32.totalorder %s19, 1
    %p168 = por %p166, %p167
    %p170 = scmp.ne.s32.totalorder %s155, %s169
    %p171 = scmp.eq.s32.totalorder %s19, 0
    %p172 = por %p170, %p171
    %s173 = ssub.s32 %s13, %s20
    %p174 = scmp.eq.s32.totalorder %s173, 0
    %s176 = sadd.s32 %s175, 1
    %s177 = scalar_select %p174, %s175, %s176
    %p180 = pneg %p174
    %p181 = scmp.eq.s32.totalorder %s13, 1
    %p182 = por %p180, %p181
    %p183 = scmp.ne.s32.totalorder %s175, %s178
    %p184 = scmp.eq.s32.totalorder %s13, 0
    %p185 = por %p183, %p184
    %p186 = scmp.ne.s32.totalorder %s175, %s178
    %p187 = scmp.eq.s32.totalorder %s18, 1
    %p188 = por %p186, %p187
    %p189 = scmp.ne.s32.totalorder %s178, %s179
    %p190 = scmp.eq.s32.totalorder %s18, 0
    %p191 = por %p189, %p190
    %p192 = scmp.ne.s32.totalorder %s178, %s179
    %p193 = scmp.eq.s32.totalorder %s19, 1
    %p194 = por %p192, %p193
    %p196 = scmp.ne.s32.totalorder %s179, %s195
    %p197 = scmp.eq.s32.totalorder %s19, 0
    %p198 = por %p196, %p197
    %p199 = scmp.le.s32.totalorder 1, %s13
    %p200 = scmp.lt.s32.totalorder %s13, 3
    %p201 = pnand %p199, %p200
    %p202 = pneg %p201
    // Predicated region
    $region9: #{dqn_forward.2} parent=5 // pred_check
      _
    $region10: #{dqn_forward.2} parent=5 // pred_check_branch
      %204 = sbr.rel (%p201) target = $region12
    $region11: #{dqn_forward.2} parent=5 // pred_region
      %s205 = ssub.s32 %s13, 1
      // Predicated region
      $region13: #{dqn_forward.2} parent=11 // pred_check
        %p206 = pneg %p60
      $region14: #{dqn_forward.2} parent=11 // pred_check_branch
        %208 = sbr.rel (%p206) target = $region16
      $region15: #{dqn_forward.2} parent=11 // pred_region
        _
      $region16: #{dqn_forward.2} parent=11 // pred_fallthru
        _
      // Predicated region
      $region17: #{dqn_forward.2} parent=11 // pred_check
        %p209 = pneg %p81
      $region18: #{dqn_forward.2} parent=11 // pred_check_branch
        %211 = sbr.rel (%p209) target = $region20
      $region19: #{dqn_forward.2} parent=11 // pred_region
        _
      $region20: #{dqn_forward.2} parent=11 // pred_fallthru
        _
      // Predicated region
      $region21: #{dqn_forward.2} parent=11 // pred_check
        %p212 = pneg %p102
      $region22: #{dqn_forward.2} parent=11 // pred_check_branch
        %214 = sbr.rel (%p212) target = $region24
      $region23: #{dqn_forward.2} parent=11 // pred_region
        _
      $region24: #{dqn_forward.2} parent=11 // pred_fallthru
        _
      // Predicated region
      $region25: #{dqn_forward.2} parent=11 // pred_check
        %p215 = pneg %p123
      $region26: #{dqn_forward.2} parent=11 // pred_check_branch
        %217 = sbr.rel (%p215) target = $region28
      $region27: #{dqn_forward.2} parent=11 // pred_region
        _
      $region28: #{dqn_forward.2} parent=11 // pred_fallthru
        _
      // Predicated region
      $region29: #{dqn_forward.2} parent=11 // pred_check
        %p218 = pneg %p144
      $region30: #{dqn_forward.2} parent=11 // pred_check_branch
        %220 = sbr.rel (%p218) target = $region32
      $region31: #{dqn_forward.2} parent=11 // pred_region
        _
      $region32: #{dqn_forward.2} parent=11 // pred_fallthru
        _
      // Predicated region
      $region33: #{dqn_forward.2} parent=11 // pred_check
        %p221 = pneg %p165
      $region34: #{dqn_forward.2} parent=11 // pred_check_branch
        %223 = sbr.rel (%p221) target = $region36
      $region35: #{dqn_forward.2} parent=11 // pred_region
        _
      $region36: #{dqn_forward.2} parent=11 // pred_fallthru
        _
    $region12: #{dqn_forward.2} parent=5 // pred_fallthru
      _
    %p224 = scmp.lt.s32.totalorder %s13, 2
    // Predicated region
    $region37: #{dqn_forward.2} parent=5 // pred_check
      %p225 = pneg %p224
    $region38: #{dqn_forward.2} parent=5 // pred_check_branch
      %227 = sbr.rel (%p225) target = $region40
    $region39: #{dqn_forward.2} parent=5 // pred_region
      // Predicated region
      $region41: #{dqn_forward.2} parent=39 // pred_check
        %p228 = pneg %p33
      $region42: #{dqn_forward.2} parent=39 // pred_check_branch
        %230 = sbr.rel (%p228) target = $region44
      $region43: #{dqn_forward.2} parent=39 // pred_region
        %p231 = scmp.lt.s32.totalorder %s13, 1
        %s232 = scalar_select %p231, %s13, 1
        %s233 = smul.addr %s232, 112
        %s234 = smul.addr %s233, 4
        %s235 = scalar_lea.vmem %s0, %s234
      $region44: #{dqn_forward.2} parent=39 // pred_fallthru
        _
    $region40: #{dqn_forward.2} parent=5 // pred_fallthru
      _
    %p236 = scmp.le.s32.totalorder 1, %s13
    %p237 = scmp.lt.s32.totalorder %s13, 3
    %p238 = pnand %p236, %p237
    %p239 = pneg %p238
    // Predicated region
    $region45: #{dqn_forward.2} parent=5 // pred_check
      _
    $region46: #{dqn_forward.2} parent=5 // pred_check_branch
      %241 = sbr.rel (%p238) target = $region48
    $region47: #{dqn_forward.2} parent=5 // pred_region
      %s242 = ssub.s32 %s13, 1
      %p243 = scmp.lt.s32.totalorder %s18, 1
      %s244 = scalar_select %p243, %s18, 1
      %s245 = smul.addr %s244, 112
      %s246 = smul.addr %s245, 4
      %s247 = scalar_lea.vmem %s0, %s246
      %p248 = pneg %p39
      %p249 = pneg %p36
      %p250 = pneg %p60
      %p251 = pneg %p57
      %p252 = pneg %p81
      %p253 = pneg %p78
      %p254 = pneg %p102
      %p255 = pneg %p99
      %p256 = pneg %p123
      %p257 = pneg %p120
      %p258 = pneg %p144
      %p259 = pneg %p141
      %p260 = pneg %p165
      %p261 = pneg %p162
      %p262 = pneg %p191
      %p263 = pneg %p188
      %p264 = scmp.lt.s32.totalorder %s18, 1
      %s265 = scalar_select %p264, %s18, 1
      %s266 = smul.addr %s265, 10
      %s267 = smul.addr %s266, 4
      %s268 = scalar_lea.vmem %s7, %s267
      %p269 = scmp.lt.s32.totalorder %s18, 1
      %s270 = scalar_select %p269, %s18, 1
      %s271 = smul.addr %s270, 112
      %s272 = smul.addr %s271, 4
      %s273 = scalar_lea.vmem %s0, %s272
      %p274 = scmp.lt.s32.totalorder %s18, 1
      %s275 = scalar_select %p274, %s18, 1
      %s276 = smul.addr %s275, 10
      %s277 = smul.addr %s276, 4
      %s278 = scalar_lea.vmem %s7, %s277
      %v280 = vld [vmem:[%s273] sm:$0xff]
      %v281 = vld [vmem:[%s273 + $0x8] sm:$0xff]
      %v282 = vld [vmem:[%s273 + $0x10] sm:$0xff]
      %v283 = vld [vmem:[%s273 + $0x18] sm:$0xff]
      %v284 = vld [vmem:[%s273 + $0x20] sm:$0xff]
      %v285 = vld [vmem:[%s273 + $0x28] sm:$0xff]
      %v286 = vld [vmem:[%s273 + $0x30] sm:$0xff]
      %v287 = vld [vmem:[%s273 + $0x38] sm:$0xff]
      %v288 = vld [vmem:[%s273 + $0x40] sm:$0xff]
      %v289 = vld [vmem:[%s273 + $0x48] sm:$0xff]
      %v290 = vld [vmem:[%s273 + $0x50] sm:$0xff]
      %v291 = vld [vmem:[%s273 + $0x58] sm:$0xff]
      %v292 = vld [vmem:[%s273 + $0x60] sm:$0xff]
      %v293 = vld [vmem:[%s273 + $0x68] sm:$0xff]
      %v294 = vld [vmem:[%s273 + $0x70] sm:$0xff]
      %v295 = vld [vmem:[%s273 + $0x78] sm:$0xff]
      %v296 = vld [vmem:[%s273 + $0x80] sm:$0xff]
      %v297 = vld [vmem:[%s273 + $0x88] sm:$0xff]
      %v298 = vld [vmem:[%s273 + $0x90] sm:$0xff]
      %v299 = vld [vmem:[%s273 + $0x98] sm:$0xff]
      %v300 = vld [vmem:[%s273 + $0xa0] sm:$0xff]
      %v301 = vld [vmem:[%s273 + $0xa8] sm:$0xff]
      %v302 = vld [vmem:[%s273 + $0xb0] sm:$0xff]
      %v303 = vld [vmem:[%s273 + $0xb8] sm:$0xff]
      %v304 = vld [vmem:[%s273 + $0xc0] sm:$0xff]
      %v305 = vld [vmem:[%s273 + $0xc8] sm:$0xff]
      %v306 = vld [vmem:[%s273 + $0xd0] sm:$0xff]
      %v307 = vld [vmem:[%s273 + $0xd8] sm:$0xff]
      %v308 = vld [vmem:[%s273 + $0xe0] sm:$0xff]
      %v309 = vld [vmem:[%s273 + $0xe8] sm:$0xff]
      %v310 = vld [vmem:[%s273 + $0xf0] sm:$0xff]
      %v311 = vld [vmem:[%s273 + $0xf8] sm:$0xff]
      %v312 = vld [vmem:[%s273 + $0x100] sm:$0xff]
      %v313 = vld [vmem:[%s273 + $0x108] sm:$0xff]
      %v314 = vld [vmem:[%s273 + $0x110] sm:$0xff]
      %v315 = vld [vmem:[%s273 + $0x118] sm:$0xff]
      %v316 = vld [vmem:[%s273 + $0x120] sm:$0xff]
      %v317 = vld [vmem:[%s273 + $0x128] sm:$0xff]
      %v318 = vld [vmem:[%s273 + $0x130] sm:$0xff]
      %v319 = vld [vmem:[%s273 + $0x138] sm:$0xff]
      %v320 = vld [vmem:[%s273 + $0x140] sm:$0xff]
      %v321 = vld [vmem:[%s273 + $0x148] sm:$0xff]
      %v322 = vld [vmem:[%s273 + $0x150] sm:$0xff]
      %v323 = vld [vmem:[%s273 + $0x158] sm:$0xff]
      %v324 = vld [vmem:[%s273 + $0x160] sm:$0xff]
      %v325 = vld [vmem:[%s273 + $0x168] sm:$0xff]
      %v326 = vld [vmem:[%s273 + $0x170] sm:$0xff]
      %v327 = vld [vmem:[%s273 + $0x178] sm:$0xff]
      %v328 = vld [vmem:[%s273 + $0x180] sm:$0xff]
      %v329 = vld [vmem:[%s273 + $0x188] sm:$0xff]
      %v330 = vld [vmem:[%s273 + $0x190] sm:$0xff]
      %v331 = vld [vmem:[%s273 + $0x198] sm:$0xff]
      %v332 = vld [vmem:[%s273 + $0x1a0] sm:$0x77]
      %v333 = vld [vmem:[%s273 + $0x1a8] sm:$0x77]
      %v334 = vld [vmem:[%s273 + $0x1b0] sm:$0x77]
      %v335 = vld [vmem:[%s273 + $0x1b8] sm:$0x77]
      %v336 = vld [vmem:[%s1] sm:$0xf]
      %v337 = vld [vmem:[%s1 + $0x4] sm:$0xf]
      %v338 = vld [vmem:[%s1 + $0x8] sm:$0xf]
      %v339 = vld [vmem:[%s1 + $0xc] sm:$0xf]
      %v340 = vld [vmem:[%s1 + $0x10] sm:$0xf]
      %v341 = vld [vmem:[%s1 + $0x14] sm:$0xf]
      %v342 = vld [vmem:[%s1 + $0x18] sm:$0xf]
      %v343 = vld [vmem:[%s1 + $0x1c] sm:$0xf]
      %v344 = vld [vmem:[%s1 + $0x20] sm:$0xf]
      %v345 = vld [vmem:[%s1 + $0x24] sm:$0xf]
      %v346 = vld [vmem:[%s1 + $0x28] sm:$0xf]
      %v347 = vld [vmem:[%s1 + $0x2c] sm:$0xf]
      %v348 = vld [vmem:[%s1 + $0x30] sm:$0xf]
      %v349 = vld [vmem:[%s1 + $0x34] sm:$0xf]
      %v350 = vld [vmem:[%s1 + $0x38] sm:$0xf]
      %v351 = vld [vmem:[%s1 + $0x3c] sm:$0xf]
      %v352 = vld [vmem:[%s1 + $0x40] sm:$0xf]
      %v353 = vld [vmem:[%s1 + $0x44] sm:$0xf]
      %v354 = vld [vmem:[%s1 + $0x48] sm:$0xf]
      %v355 = vld [vmem:[%s1 + $0x4c] sm:$0xf]
      %v356 = vld [vmem:[%s1 + $0x50] sm:$0xf]
      %v357 = vld [vmem:[%s1 + $0x54] sm:$0xf]
      %v358 = vld [vmem:[%s1 + $0x58] sm:$0xf]
      %v359 = vld [vmem:[%s1 + $0x5c] sm:$0xf]
      %v360 = vld [vmem:[%s1 + $0x60] sm:$0xf]
      %v361 = vld [vmem:[%s1 + $0x64] sm:$0xf]
      %v362 = vld [vmem:[%s1 + $0x68] sm:$0xf]
      %v363 = vld [vmem:[%s1 + $0x6c] sm:$0xf]
      %v364 = vld [vmem:[%s1 + $0x70] sm:$0xf]
      %v365 = vld [vmem:[%s1 + $0x74] sm:$0xf]
      %v366 = vld [vmem:[%s1 + $0x78] sm:$0xf]
      %v367 = vld [vmem:[%s1 + $0x7c] sm:$0xf]
      %v368 = vld [vmem:[%s1 + $0x80] sm:$0xf]
      %v369 = vld [vmem:[%s1 + $0x84] sm:$0xf]
      %v370 = vld [vmem:[%s1 + $0x88] sm:$0xf]
      %v371 = vld [vmem:[%s1 + $0x8c] sm:$0xf]
      %v372 = vld [vmem:[%s1 + $0x90] sm:$0xf]
      %v373 = vld [vmem:[%s1 + $0x94] sm:$0xf]
      %v374 = vld [vmem:[%s1 + $0x98] sm:$0xf]
      %v375 = vld [vmem:[%s1 + $0x9c] sm:$0xf]
      %v376 = vld [vmem:[%s1 + $0xa0] sm:$0xf]
      %v377 = vld [vmem:[%s1 + $0xa4] sm:$0xf]
      %v378 = vld [vmem:[%s1 + $0xa8] sm:$0xf]
      %v379 = vld [vmem:[%s1 + $0xac] sm:$0xf]
      %v380 = vld [vmem:[%s1 + $0xb0] sm:$0xf]
      %v381 = vld [vmem:[%s1 + $0xb4] sm:$0xf]
      %v382 = vld [vmem:[%s1 + $0xb8] sm:$0xf]
      %v383 = vld [vmem:[%s1 + $0xbc] sm:$0xf]
      %v384 = vld [vmem:[%s1 + $0xc0] sm:$0xf]
      %v385 = vld [vmem:[%s1 + $0xc4] sm:$0xf]
      %v386 = vld [vmem:[%s1 + $0xc8] sm:$0xf]
      %v387 = vld [vmem:[%s1 + $0xcc] sm:$0xf]
      %v388 = vld [vmem:[%s1 + $0xd0] sm:$0xf]
      %v389 = vld [vmem:[%s1 + $0xd4] sm:$0xf]
      %v390 = vld [vmem:[%s1 + $0xd8] sm:$0xf]
      %v391 = vld [vmem:[%s1 + $0xdc] sm:$0xf]
      %v392 = vld [vmem:[%s1 + $0xe0] sm:$0xf]
      %v393 = vld [vmem:[%s1 + $0xe4] sm:$0xf]
      %v394 = vld [vmem:[%s1 + $0xe8] sm:$0xf]
      %v395 = vld [vmem:[%s1 + $0xec] sm:$0xf]
      %v396 = vld [vmem:[%s1 + $0xf0] sm:$0xf]
      %v397 = vld [vmem:[%s1 + $0xf4] sm:$0xf]
      %v398 = vld [vmem:[%s1 + $0xf8] sm:$0xf]
      %v399 = vld [vmem:[%s1 + $0xfc] sm:$0xf]
      %v400 = vld [vmem:[%s1 + $0x100] sm:$0xf]
      %v401 = vld [vmem:[%s1 + $0x104] sm:$0xf]
      %v402 = vld [vmem:[%s1 + $0x108] sm:$0xf]
      %v403 = vld [vmem:[%s1 + $0x10c] sm:$0xf]
      %v404 = vld [vmem:[%s1 + $0x110] sm:$0xf]
      %v405 = vld [vmem:[%s1 + $0x114] sm:$0xf]
      %v406 = vld [vmem:[%s1 + $0x118] sm:$0xf]
      %v407 = vld [vmem:[%s1 + $0x11c] sm:$0xf]
      %v408 = vld [vmem:[%s1 + $0x120] sm:$0xf]
      %v409 = vld [vmem:[%s1 + $0x124] sm:$0xf]
      %v410 = vld [vmem:[%s1 + $0x128] sm:$0xf]
      %v411 = vld [vmem:[%s1 + $0x12c] sm:$0xf]
      %v412 = vld [vmem:[%s1 + $0x130] sm:$0xf]
      %v413 = vld [vmem:[%s1 + $0x134] sm:$0xf]
      %v414 = vld [vmem:[%s1 + $0x138] sm:$0xf]
      %v415 = vld [vmem:[%s1 + $0x13c] sm:$0xf]
      %v416 = vld [vmem:[%s1 + $0x140] sm:$0xf]
      %v417 = vld [vmem:[%s1 + $0x144] sm:$0xf]
      %v418 = vld [vmem:[%s1 + $0x148] sm:$0xf]
      %v419 = vld [vmem:[%s1 + $0x14c] sm:$0xf]
      %v420 = vld [vmem:[%s1 + $0x150] sm:$0xf]
      %v421 = vld [vmem:[%s1 + $0x154] sm:$0xf]
      %v422 = vld [vmem:[%s1 + $0x158] sm:$0xf]
      %v423 = vld [vmem:[%s1 + $0x15c] sm:$0xf]
      %v424 = vld [vmem:[%s1 + $0x160] sm:$0xf]
      %v425 = vld [vmem:[%s1 + $0x164] sm:$0xf]
      %v426 = vld [vmem:[%s1 + $0x168] sm:$0xf]
      %v427 = vld [vmem:[%s1 + $0x16c] sm:$0xf]
      %v428 = vld [vmem:[%s1 + $0x170] sm:$0xf]
      %v429 = vld [vmem:[%s1 + $0x174] sm:$0xf]
      %v430 = vld [vmem:[%s1 + $0x178] sm:$0xf]
      %v431 = vld [vmem:[%s1 + $0x17c] sm:$0xf]
      %v432 = vld [vmem:[%s1 + $0x180] sm:$0xf]
      %v433 = vld [vmem:[%s1 + $0x184] sm:$0xf]
      %v434 = vld [vmem:[%s1 + $0x188] sm:$0xf]
      %v435 = vld [vmem:[%s1 + $0x18c] sm:$0xf]
      %v436 = vld [vmem:[%s1 + $0x190] sm:$0xf]
      %v437 = vld [vmem:[%s1 + $0x194] sm:$0xf]
      %v438 = vld [vmem:[%s1 + $0x198] sm:$0xf]
      %v439 = vld [vmem:[%s1 + $0x19c] sm:$0xf]
      %v440 = vld [vmem:[%s1 + $0x1a0] sm:$0xf]
      %v441 = vld [vmem:[%s1 + $0x1a4] sm:$0xf]
      %v442 = vld [vmem:[%s1 + $0x1a8] sm:$0xf]
      %v443 = vld [vmem:[%s1 + $0x1ac] sm:$0xf]
      %v444 = vld [vmem:[%s1 + $0x1b0] sm:$0xf]
      %v445 = vld [vmem:[%s1 + $0x1b4] sm:$0xf]
      %v446 = vld [vmem:[%s1 + $0x1b8] sm:$0xf]
      %v447 = vld [vmem:[%s1 + $0x1bc] sm:$0xf]
      %v448 = vld [vmem:[%s1 + $0x1c0] sm:$0xf]
      %v449 = vld [vmem:[%s1 + $0x1c4] sm:$0xf]
      %v450 = vld [vmem:[%s1 + $0x1c8] sm:$0xf]
      %v451 = vld [vmem:[%s1 + $0x1cc] sm:$0xf]
      %v452 = vld [vmem:[%s1 + $0x1d0] sm:$0xf]
      %v453 = vld [vmem:[%s1 + $0x1d4] sm:$0xf]
      %v454 = vld [vmem:[%s1 + $0x1d8] sm:$0xf]
      %v455 = vld [vmem:[%s1 + $0x1dc] sm:$0xf]
      %v456 = vld [vmem:[%s1 + $0x1e0] sm:$0xf]
      %v457 = vld [vmem:[%s1 + $0x1e4] sm:$0xf]
      %v458 = vld [vmem:[%s1 + $0x1e8] sm:$0xf]
      %v459 = vld [vmem:[%s1 + $0x1ec] sm:$0xf]
      %v460 = vld [vmem:[%s1 + $0x1f0] sm:$0xf]
      %v461 = vld [vmem:[%s1 + $0x1f4] sm:$0xf]
      %v462 = vld [vmem:[%s1 + $0x1f8] sm:$0xf]
      %v463 = vld [vmem:[%s1 + $0x1fc] sm:$0xf]
      %v464 = vld [vmem:[%s2] sm:$0x1]
      %v466 = vlaneseq
      %v467 = vshrl.u32 %v466, 7
      %v468 = vsub.s32 0, %v467
      %v469 = vrot.slane %v464, %v468
      %v527 = vunpack.c.l.b16 %v280
      %v528 = vunpack.c.h.b16 %v280
      %v529 = vunpack.c.l.b16 %v281
      %v530 = vunpack.c.h.b16 %v281
      %v531 = vunpack.c.l.b16 %v282
      %v532 = vunpack.c.h.b16 %v282
      %v533 = vunpack.c.l.b16 %v283
      %v534 = vunpack.c.h.b16 %v283
      %v535 = vunpack.c.l.b16 %v284
      %v536 = vunpack.c.h.b16 %v284
      %v537 = vunpack.c.l.b16 %v285
      %v538 = vunpack.c.h.b16 %v285
      %v539 = vunpack.c.l.b16 %v286
      %v540 = vunpack.c.h.b16 %v286
      %v541 = vunpack.c.l.b16 %v287
      %v542 = vunpack.c.h.b16 %v287
      %v543 = vunpack.c.l.b16 %v288
      %v544 = vunpack.c.h.b16 %v288
      %v545 = vunpack.c.l.b16 %v289
      %v546 = vunpack.c.h.b16 %v289
      %v547 = vunpack.c.l.b16 %v290
      %v548 = vunpack.c.h.b16 %v290
      %v549 = vunpack.c.l.b16 %v291
      %v550 = vunpack.c.h.b16 %v291
      %v551 = vunpack.c.l.b16 %v292
      %v552 = vunpack.c.h.b16 %v292
      %v553 = vunpack.c.l.b16 %v293
      %v554 = vunpack.c.h.b16 %v293
      %v555 = vunpack.c.l.b16 %v294
      %v556 = vunpack.c.h.b16 %v294
      %v557 = vunpack.c.l.b16 %v295
      %v558 = vunpack.c.h.b16 %v295
      %v559 = vunpack.c.l.b16 %v296
      %v560 = vunpack.c.h.b16 %v296
      %v561 = vunpack.c.l.b16 %v297
      %v562 = vunpack.c.h.b16 %v297
      %v563 = vunpack.c.l.b16 %v298
      %v564 = vunpack.c.h.b16 %v298
      %v565 = vunpack.c.l.b16 %v299
      %v566 = vunpack.c.h.b16 %v299
      %v567 = vunpack.c.l.b16 %v300
      %v568 = vunpack.c.h.b16 %v300
      %v569 = vunpack.c.l.b16 %v301
      %v570 = vunpack.c.h.b16 %v301
      %v571 = vunpack.c.l.b16 %v302
      %v572 = vunpack.c.h.b16 %v302
      %v573 = vunpack.c.l.b16 %v303
      %v574 = vunpack.c.h.b16 %v303
      %v575 = vunpack.c.l.b16 %v304
      %v576 = vunpack.c.h.b16 %v304
      %v577 = vunpack.c.l.b16 %v305
      %v578 = vunpack.c.h.b16 %v305
      %v579 = vunpack.c.l.b16 %v306
      %v580 = vunpack.c.h.b16 %v306
      %v581 = vunpack.c.l.b16 %v307
      %v582 = vunpack.c.h.b16 %v307
      %v583 = vunpack.c.l.b16 %v308
      %v584 = vunpack.c.h.b16 %v308
      %v585 = vunpack.c.l.b16 %v309
      %v586 = vunpack.c.h.b16 %v309
      %v587 = vunpack.c.l.b16 %v310
      %v588 = vunpack.c.h.b16 %v310
      %v589 = vunpack.c.l.b16 %v311
      %v590 = vunpack.c.h.b16 %v311
      %v591 = vunpack.c.l.b16 %v312
      %v592 = vunpack.c.h.b16 %v312
      %v593 = vunpack.c.l.b16 %v313
      %v594 = vunpack.c.h.b16 %v313
      %v595 = vunpack.c.l.b16 %v314
      %v596 = vunpack.c.h.b16 %v314
      %v597 = vunpack.c.l.b16 %v315
      %v598 = vunpack.c.h.b16 %v315
      %v599 = vunpack.c.l.b16 %v316
      %v600 = vunpack.c.h.b16 %v316
      %v601 = vunpack.c.l.b16 %v317
      %v602 = vunpack.c.h.b16 %v317
      %v603 = vunpack.c.l.b16 %v318
      %v604 = vunpack.c.h.b16 %v318
      %v605 = vunpack.c.l.b16 %v319
      %v606 = vunpack.c.h.b16 %v319
      %v607 = vunpack.c.l.b16 %v320
      %v608 = vunpack.c.h.b16 %v320
      %v609 = vunpack.c.l.b16 %v321
      %v610 = vunpack.c.h.b16 %v321
      %v611 = vunpack.c.l.b16 %v322
      %v612 = vunpack.c.h.b16 %v322
      %v613 = vunpack.c.l.b16 %v323
      %v614 = vunpack.c.h.b16 %v323
      %v615 = vunpack.c.l.b16 %v324
      %v616 = vunpack.c.h.b16 %v324
      %v617 = vunpack.c.l.b16 %v325
      %v618 = vunpack.c.h.b16 %v325
      %v619 = vunpack.c.l.b16 %v326
      %v620 = vunpack.c.h.b16 %v326
      %v621 = vunpack.c.l.b16 %v327
      %v622 = vunpack.c.h.b16 %v327
      %v623 = vunpack.c.l.b16 %v328
      %v624 = vunpack.c.h.b16 %v328
      %v625 = vunpack.c.l.b16 %v329
      %v626 = vunpack.c.h.b16 %v329
      %v627 = vunpack.c.l.b16 %v330
      %v628 = vunpack.c.h.b16 %v330
      %v629 = vunpack.c.l.b16 %v331
      %v630 = vunpack.c.h.b16 %v331
      %v631 = vunpack.c.l.b16 %v332
      %v632 = vunpack.c.h.b16 %v332
      %v633 = vunpack.c.l.b16 %v333
      %v634 = vunpack.c.h.b16 %v333
      %v635 = vunpack.c.l.b16 %v334
      %v636 = vunpack.c.h.b16 %v334
      %v637 = vunpack.c.l.b16 %v335
      %v638 = vunpack.c.h.b16 %v335
      %v639 = vpack.c.b16 %v535, %v527
      %v640 = vpack.c.b16 %v536, %v528
      %v641 = vpack.c.b16 %v537, %v529
      %v642 = vpack.c.b16 %v538, %v530
      %v643 = vpack.c.b16 %v539, %v531
      %v644 = vpack.c.b16 %v540, %v532
      %v645 = vpack.c.b16 %v541, %v533
      %v646 = vpack.c.b16 %v542, %v534
      %v647 = vpack.c.b16 %v551, %v543
      %v648 = vpack.c.b16 %v552, %v544
      %v649 = vpack.c.b16 %v553, %v545
      %v650 = vpack.c.b16 %v554, %v546
      %v651 = vpack.c.b16 %v555, %v547
      %v652 = vpack.c.b16 %v556, %v548
      %v653 = vpack.c.b16 %v557, %v549
      %v654 = vpack.c.b16 %v558, %v550
      %v655 = vpack.c.b16 %v567, %v559
      %v656 = vpack.c.b16 %v568, %v560
      %v657 = vpack.c.b16 %v569, %v561
      %v658 = vpack.c.b16 %v570, %v562
      %v659 = vpack.c.b16 %v571, %v563
      %v660 = vpack.c.b16 %v572, %v564
      %v661 = vpack.c.b16 %v573, %v565
      %v662 = vpack.c.b16 %v574, %v566
      %v663 = vpack.c.b16 %v583, %v575
      %v664 = vpack.c.b16 %v584, %v576
      %v665 = vpack.c.b16 %v585, %v577
      %v666 = vpack.c.b16 %v586, %v578
      %v667 = vpack.c.b16 %v587, %v579
      %v668 = vpack.c.b16 %v588, %v580
      %v669 = vpack.c.b16 %v589, %v581
      %v670 = vpack.c.b16 %v590, %v582
      %v671 = vpack.c.b16 %v599, %v591
      %v672 = vpack.c.b16 %v600, %v592
      %v673 = vpack.c.b16 %v601, %v593
      %v674 = vpack.c.b16 %v602, %v594
      %v675 = vpack.c.b16 %v603, %v595
      %v676 = vpack.c.b16 %v604, %v596
      %v677 = vpack.c.b16 %v605, %v597
      %v678 = vpack.c.b16 %v606, %v598
      %v679 = vpack.c.b16 %v615, %v607
      %v680 = vpack.c.b16 %v616, %v608
      %v681 = vpack.c.b16 %v617, %v609
      %v682 = vpack.c.b16 %v618, %v610
      %v683 = vpack.c.b16 %v619, %v611
      %v684 = vpack.c.b16 %v620, %v612
      %v685 = vpack.c.b16 %v621, %v613
      %v686 = vpack.c.b16 %v622, %v614
      %v687 = vpack.c.b16 %v631, %v623
      %v688 = vpack.c.b16 %v632, %v624
      %v689 = vpack.c.b16 %v633, %v625
      %v690 = vpack.c.b16 %v634, %v626
      %v691 = vpack.c.b16 %v635, %v627
      %v692 = vpack.c.b16 %v636, %v628
      %v693 = vpack.c.b16 %v637, %v629
      %v694 = vpack.c.b16 %v638, %v630
      %v879 = vunpack.c.l.b16 %v336
      %v880 = vunpack.c.l.b16 %v337
      %v881 = vunpack.c.l.b16 %v338
      %v882 = vunpack.c.l.b16 %v339
      %v883 = vunpack.c.l.b16 %v340
      %v884 = vunpack.c.l.b16 %v341
      %v885 = vunpack.c.l.b16 %v342
      %v886 = vunpack.c.l.b16 %v343
      %v887 = vunpack.c.l.b16 %v344
      %v888 = vunpack.c.l.b16 %v345
      %v889 = vunpack.c.l.b16 %v346
      %v890 = vunpack.c.l.b16 %v347
      %v891 = vunpack.c.l.b16 %v348
      %v892 = vunpack.c.l.b16 %v349
      %v893 = vunpack.c.l.b16 %v350
      %v894 = vunpack.c.l.b16 %v351
      %v895 = vunpack.c.l.b16 %v352
      %v896 = vunpack.c.l.b16 %v353
      %v897 = vunpack.c.l.b16 %v354
      %v898 = vunpack.c.l.b16 %v355
      %v899 = vunpack.c.l.b16 %v356
      %v900 = vunpack.c.l.b16 %v357
      %v901 = vunpack.c.l.b16 %v358
      %v902 = vunpack.c.l.b16 %v359
      %v903 = vunpack.c.l.b16 %v360
      %v904 = vunpack.c.l.b16 %v361
      %v905 = vunpack.c.l.b16 %v362
      %v906 = vunpack.c.l.b16 %v363
      %v907 = vunpack.c.l.b16 %v364
      %v908 = vunpack.c.l.b16 %v365
      %v909 = vunpack.c.l.b16 %v366
      %v910 = vunpack.c.l.b16 %v367
      %v911 = vunpack.c.l.b16 %v368
      %v912 = vunpack.c.l.b16 %v369
      %v913 = vunpack.c.l.b16 %v370
      %v914 = vunpack.c.l.b16 %v371
      %v915 = vunpack.c.l.b16 %v372
      %v916 = vunpack.c.l.b16 %v373
      %v917 = vunpack.c.l.b16 %v374
      %v918 = vunpack.c.l.b16 %v375
      %v919 = vunpack.c.l.b16 %v376
      %v920 = vunpack.c.l.b16 %v377
      %v921 = vunpack.c.l.b16 %v378
      %v922 = vunpack.c.l.b16 %v379
      %v923 = vunpack.c.l.b16 %v380
      %v924 = vunpack.c.l.b16 %v381
      %v925 = vunpack.c.l.b16 %v382
      %v926 = vunpack.c.l.b16 %v383
      %v927 = vunpack.c.l.b16 %v384
      %v928 = vunpack.c.l.b16 %v385
      %v929 = vunpack.c.l.b16 %v386
      %v930 = vunpack.c.l.b16 %v387
      %v931 = vunpack.c.l.b16 %v388
      %v932 = vunpack.c.l.b16 %v389
      %v933 = vunpack.c.l.b16 %v390
      %v934 = vunpack.c.l.b16 %v391
      %v935 = vunpack.c.l.b16 %v392
      %v936 = vunpack.c.l.b16 %v393
      %v937 = vunpack.c.l.b16 %v394
      %v938 = vunpack.c.l.b16 %v395
      %v939 = vunpack.c.l.b16 %v396
      %v940 = vunpack.c.l.b16 %v397
      %v941 = vunpack.c.l.b16 %v398
      %v942 = vunpack.c.l.b16 %v399
      %v943 = vunpack.c.l.b16 %v400
      %v944 = vunpack.c.l.b16 %v401
      %v945 = vunpack.c.l.b16 %v402
      %v946 = vunpack.c.l.b16 %v403
      %v947 = vunpack.c.l.b16 %v404
      %v948 = vunpack.c.l.b16 %v405
      %v949 = vunpack.c.l.b16 %v406
      %v950 = vunpack.c.l.b16 %v407
      %v951 = vunpack.c.l.b16 %v408
      %v952 = vunpack.c.l.b16 %v409
      %v953 = vunpack.c.l.b16 %v410
      %v954 = vunpack.c.l.b16 %v411
      %v955 = vunpack.c.l.b16 %v412
      %v956 = vunpack.c.l.b16 %v413
      %v957 = vunpack.c.l.b16 %v414
      %v958 = vunpack.c.l.b16 %v415
      %v959 = vunpack.c.l.b16 %v416
      %v960 = vunpack.c.l.b16 %v417
      %v961 = vunpack.c.l.b16 %v418
      %v962 = vunpack.c.l.b16 %v419
      %v963 = vunpack.c.l.b16 %v420
      %v964 = vunpack.c.l.b16 %v421
      %v965 = vunpack.c.l.b16 %v422
      %v966 = vunpack.c.l.b16 %v423
      %v967 = vunpack.c.l.b16 %v424
      %v968 = vunpack.c.l.b16 %v425
      %v969 = vunpack.c.l.b16 %v426
      %v970 = vunpack.c.l.b16 %v427
      %v971 = vunpack.c.l.b16 %v428
      %v972 = vunpack.c.l.b16 %v429
      %v973 = vunpack.c.l.b16 %v430
      %v974 = vunpack.c.l.b16 %v431
      %v975 = vunpack.c.l.b16 %v432
      %v976 = vunpack.c.l.b16 %v433
      %v977 = vunpack.c.l.b16 %v434
      %v978 = vunpack.c.l.b16 %v435
      %v979 = vunpack.c.l.b16 %v436
      %v980 = vunpack.c.l.b16 %v437
      %v981 = vunpack.c.l.b16 %v438
      %v982 = vunpack.c.l.b16 %v439
      %v983 = vunpack.c.l.b16 %v440
      %v984 = vunpack.c.l.b16 %v441
      %v985 = vunpack.c.l.b16 %v442
      %v986 = vunpack.c.l.b16 %v443
      %v987 = vunpack.c.l.b16 %v444
      %v988 = vunpack.c.l.b16 %v445
      %v989 = vunpack.c.l.b16 %v446
      %v990 = vunpack.c.l.b16 %v447
      %v991 = vunpack.c.l.b16 %v448
      %v992 = vunpack.c.l.b16 %v449
      %v993 = vunpack.c.l.b16 %v450
      %v994 = vunpack.c.l.b16 %v451
      %v995 = vunpack.c.l.b16 %v452
      %v996 = vunpack.c.l.b16 %v453
      %v997 = vunpack.c.l.b16 %v454
      %v998 = vunpack.c.l.b16 %v455
      %v999 = vunpack.c.l.b16 %v456
      %v1000 = vunpack.c.l.b16 %v457
      %v1001 = vunpack.c.l.b16 %v458
      %v1002 = vunpack.c.l.b16 %v459
      %v1003 = vunpack.c.l.b16 %v460
      %v1004 = vunpack.c.l.b16 %v461
      %v1005 = vunpack.c.l.b16 %v462
      %v1006 = vunpack.c.l.b16 %v463
      %v1007 = vpack.c.b16 %v880, %v879
      %v1008 = vpack.c.b16 %v882, %v881
      %v1009 = vpack.c.b16 %v884, %v883
      %v1010 = vpack.c.b16 %v886, %v885
      %v1011 = vpack.c.b16 %v888, %v887
      %v1012 = vpack.c.b16 %v890, %v889
      %v1013 = vpack.c.b16 %v892, %v891
      %v1014 = vpack.c.b16 %v894, %v893
      %v1015 = vpack.c.b16 %v896, %v895
      %v1016 = vpack.c.b16 %v898, %v897
      %v1017 = vpack.c.b16 %v900, %v899
      %v1018 = vpack.c.b16 %v902, %v901
      %v1019 = vpack.c.b16 %v904, %v903
      %v1020 = vpack.c.b16 %v906, %v905
      %v1021 = vpack.c.b16 %v908, %v907
      %v1022 = vpack.c.b16 %v910, %v909
      %v1023 = vpack.c.b16 %v912, %v911
      %v1024 = vpack.c.b16 %v914, %v913
      %v1025 = vpack.c.b16 %v916, %v915
      %v1026 = vpack.c.b16 %v918, %v917
      %v1027 = vpack.c.b16 %v920, %v919
      %v1028 = vpack.c.b16 %v922, %v921
      %v1029 = vpack.c.b16 %v924, %v923
      %v1030 = vpack.c.b16 %v926, %v925
      %v1031 = vpack.c.b16 %v928, %v927
      %v1032 = vpack.c.b16 %v930, %v929
      %v1033 = vpack.c.b16 %v932, %v931
      %v1034 = vpack.c.b16 %v934, %v933
      %v1035 = vpack.c.b16 %v936, %v935
      %v1036 = vpack.c.b16 %v938, %v937
      %v1037 = vpack.c.b16 %v940, %v939
      %v1038 = vpack.c.b16 %v942, %v941
      %v1039 = vpack.c.b16 %v944, %v943
      %v1040 = vpack.c.b16 %v946, %v945
      %v1041 = vpack.c.b16 %v948, %v947
      %v1042 = vpack.c.b16 %v950, %v949
      %v1043 = vpack.c.b16 %v952, %v951
      %v1044 = vpack.c.b16 %v954, %v953
      %v1045 = vpack.c.b16 %v956, %v955
      %v1046 = vpack.c.b16 %v958, %v957
      %v1047 = vpack.c.b16 %v960, %v959
      %v1048 = vpack.c.b16 %v962, %v961
      %v1049 = vpack.c.b16 %v964, %v963
      %v1050 = vpack.c.b16 %v966, %v965
      %v1051 = vpack.c.b16 %v968, %v967
      %v1052 = vpack.c.b16 %v970, %v969
      %v1053 = vpack.c.b16 %v972, %v971
      %v1054 = vpack.c.b16 %v974, %v973
      %v1055 = vpack.c.b16 %v976, %v975
      %v1056 = vpack.c.b16 %v978, %v977
      %v1057 = vpack.c.b16 %v980, %v979
      %v1058 = vpack.c.b16 %v982, %v981
      %v1059 = vpack.c.b16 %v984, %v983
      %v1060 = vpack.c.b16 %v986, %v985
      %v1061 = vpack.c.b16 %v988, %v987
      %v1062 = vpack.c.b16 %v990, %v989
      %v1063 = vpack.c.b16 %v992, %v991
      %v1064 = vpack.c.b16 %v994, %v993
      %v1065 = vpack.c.b16 %v996, %v995
      %v1066 = vpack.c.b16 %v998, %v997
      %v1067 = vpack.c.b16 %v1000, %v999
      %v1068 = vpack.c.b16 %v1002, %v1001
      %v1069 = vpack.c.b16 %v1004, %v1003
      %v1070 = vpack.c.b16 %v1006, %v1005
      %1135 = vmatprep.subr.bf16.mxu0 0
      %1136 = vmatpush1.bf16.msra.mxu0 %v1007
      %1137 = vmatprep.subr.bf16.mxu0 0
      %1138 = vmatpush1.bf16.msra.mxu0 %v1008
      %1139 = vmatprep.subr.bf16.mxu0 0
      %1140 = vmatpush1.bf16.msra.mxu0 %v1009
      %1141 = vmatprep.subr.bf16.mxu0 0
      %1142 = vmatpush1.bf16.msra.mxu0 %v1010
      %1143 = vmatprep.subr.bf16.mxu0 0
      %1144 = vmatpush1.bf16.msra.mxu0 %v1011
      %1145 = vmatprep.subr.bf16.mxu0 0
      %1146 = vmatpush1.bf16.msra.mxu0 %v1012
      %1147 = vmatprep.subr.bf16.mxu0 0
      %1148 = vmatpush1.bf16.msra.mxu0 %v1013
      %1149 = vmatprep.subr.bf16.mxu0 0
      %1150 = vmatpush1.bf16.msra.mxu0 %v1014
      %1151 = vmatprep.subr.bf16.mxu0 0
      %1152 = vmatpush1.bf16.msra.mxu0 %v1015
      %1153 = vmatprep.subr.bf16.mxu0 0
      %1154 = vmatpush1.bf16.msra.mxu0 %v1016
      %1155 = vmatprep.subr.bf16.mxu0 0
      %1156 = vmatpush1.bf16.msra.mxu0 %v1017
      %1157 = vmatprep.subr.bf16.mxu0 0
      %1158 = vmatpush1.bf16.msra.mxu0 %v1018
      %1159 = vmatprep.subr.bf16.mxu0 0
      %1160 = vmatpush1.bf16.msra.mxu0 %v1019
      %1161 = vmatprep.subr.bf16.mxu0 0
      %1162 = vmatpush1.bf16.msra.mxu0 %v1020
      %1163 = vmatprep.subr.bf16.mxu0 0
      %1164 = vmatpush1.bf16.msra.mxu0 %v1021
      %1165 = vmatprep.subr.bf16.mxu0 0
      %1166 = vmatpush1.bf16.msra.mxu0 %v1022
      %1167 = vmatprep.mubr.bf16.mxu0 %v640
      %1168 = vmatmul.mubr.bf16.gmra.mrb[0].mxu0 %v639
      %v1169 = vpop.f32.mrb[0].mxu0
      %v1170 = vadd.f32 %v469, %v1169
      %v1171 = vpop.f32.mrb[0].mxu0
      %v1172 = vpop.f32.mrb[0].mxu0
      %v1173 = vadd.f32 %v469, %v1172
      %v1174 = vpop.f32.mrb[0].mxu0
      %1175 = vmatprep.mubr.bf16.mxu0 %v648
      %1176 = vmatmul.mubr.bf16.gmra.mrb[0].mxu0 %v647
      %v1177 = vpop.f32.mrb[0].mxu0
      %v1178 = vadd.f32 %v469, %v1177
      %v1179 = vpop.f32.mrb[0].mxu0
      %v1180 = vpop.f32.mrb[0].mxu0
      %v1181 = vadd.f32 %v469, %v1180
      %v1182 = vpop.f32.mrb[0].mxu0
      %1183 = vmatprep.mubr.bf16.mxu0 %v656
      %1184 = vmatmul.mubr.bf16.gmra.mrb[0].mxu0 %v655
      %v1185 = vpop.f32.mrb[0].mxu0
      %v1186 = vadd.f32 %v469, %v1185
      %v1187 = vpop.f32.mrb[0].mxu0
      %v1188 = vpop.f32.mrb[0].mxu0
      %v1189 = vadd.f32 %v469, %v1188
      %v1190 = vpop.f32.mrb[0].mxu0
      %1191 = vmatprep.mubr.bf16.mxu0 %v664
      %1192 = vmatmul.mubr.bf16.gmra.mrb[0].mxu0 %v663
      %v1193 = vpop.f32.mrb[0].mxu0
      %v1194 = vadd.f32 %v469, %v1193
      %v1195 = vpop.f32.mrb[0].mxu0
      %v1196 = vpop.f32.mrb[0].mxu0
      %v1197 = vadd.f32 %v469, %v1196
      %v1198 = vpop.f32.mrb[0].mxu0
      %1199 = vmatprep.mubr.bf16.mxu0 %v672
      %1200 = vmatmul.mubr.bf16.gmra.mrb[0].mxu0 %v671
      %v1201 = vpop.f32.mrb[0].mxu0
      %v1202 = vadd.f32 %v469, %v1201
      %v1203 = vpop.f32.mrb[0].mxu0
      %v1204 = vpop.f32.mrb[0].mxu0
      %v1205 = vadd.f32 %v469, %v1204
      %v1206 = vpop.f32.mrb[0].mxu0
      %1207 = vmatprep.mubr.bf16.mxu0 %v680
      %1208 = vmatmul.mubr.bf16.gmra.mrb[0].mxu0 %v679
      %v1209 = vpop.f32.mrb[0].mxu0
      %v1210 = vadd.f32 %v469, %v1209
      %v1211 = vpop.f32.mrb[0].mxu0
      %v1212 = vpop.f32.mrb[0].mxu0
      %v1213 = vadd.f32 %v469, %v1212
      %v1214 = vpop.f32.mrb[0].mxu0
      %1215 = vmatprep.mubr.bf16.mxu0 %v688
      %1216 = vmatmul.mubr.bf16.gmra.mrb[0].mxu0 %v687
      %v1217 = vpop.f32.mrb[0].mxu0
      %v1218 = vadd.f32 %v469, %v1217
      %v1219 = vpop.f32.mrb[0].mxu0
      %v1220 = vpop.f32.mrb[0].mxu0
      %v1221 = vadd.f32 %v469, %v1220
      %v1222 = vpop.f32.mrb[0].mxu0
      %1223 = vdwg.mxu0
      %1224 = vmatprep.subr.bf16.mxu0 0
      %1225 = vmatpush1.bf16.msra.mxu0 %v1023
      %1226 = vmatprep.subr.bf16.mxu0 0
      %1227 = vmatpush1.bf16.msra.mxu0 %v1024
      %1228 = vmatprep.subr.bf16.mxu0 0
      %1229 = vmatpush1.bf16.msra.mxu0 %v1025
      %1230 = vmatprep.subr.bf16.mxu0 0
      %1231 = vmatpush1.bf16.msra.mxu0 %v1026
      %1232 = vmatprep.subr.bf16.mxu0 0
      %1233 = vmatpush1.bf16.msra.mxu0 %v1027
      %1234 = vmatprep.subr.bf16.mxu0 0
      %1235 = vmatpush1.bf16.msra.mxu0 %v1028
      %1236 = vmatprep.subr.bf16.mxu0 0
      %1237 = vmatpush1.bf16.msra.mxu0 %v1029
      %1238 = vmatprep.subr.bf16.mxu0 0
      %1239 = vmatpush1.bf16.msra.mxu0 %v1030
      %1240 = vmatprep.subr.bf16.mxu0 0
      %1241 = vmatpush1.bf16.msra.mxu0 %v1031
      %1242 = vmatprep.subr.bf16.mxu0 0
      %1243 = vmatpush1.bf16.msra.mxu0 %v1032
      %1244 = vmatprep.subr.bf16.mxu0 0
      %1245 = vmatpush1.bf16.msra.mxu0 %v1033
      %1246 = vmatprep.subr.bf16.mxu0 0
      %1247 = vmatpush1.bf16.msra.mxu0 %v1034
      %1248 = vmatprep.subr.bf16.mxu0 0
      %1249 = vmatpush1.bf16.msra.mxu0 %v1035
      %1250 = vmatprep.subr.bf16.mxu0 0
      %1251 = vmatpush1.bf16.msra.mxu0 %v1036
      %1252 = vmatprep.subr.bf16.mxu0 0
      %1253 = vmatpush1.bf16.msra.mxu0 %v1037
      %1254 = vmatprep.subr.bf16.mxu0 0
      %1255 = vmatpush1.bf16.msra.mxu0 %v1038
      %1256 = vmatprep.mubr.bf16.mxu0 %v642
      %1257 = vmatmul.mubr.bf16.gmra.mrb[0].mxu0 %v641
      %v1258 = vpop.f32.mrb[0].mxu0
      %v1259 = vadd.f32 %v1170, %v1258
      %v1260 = vpop.f32.mrb[0].mxu0
      %v1261 = vpop.f32.mrb[0].mxu0
      %v1262 = vadd.f32 %v1173, %v1261
      %v1263 = vpop.f32.mrb[0].mxu0
      %1264 = vmatprep.mubr.bf16.mxu0 %v650
      %1265 = vmatmul.mubr.bf16.gmra.mrb[0].mxu0 %v649
      %v1266 = vpop.f32.mrb[0].mxu0
      %v1267 = vadd.f32 %v1178, %v1266
      %v1268 = vpop.f32.mrb[0].mxu0
      %v1269 = vpop.f32.mrb[0].mxu0
      %v1270 = vadd.f32 %v1181, %v1269
      %v1271 = vpop.f32.mrb[0].mxu0
      %1272 = vmatprep.mubr.bf16.mxu0 %v658
      %1273 = vmatmul.mubr.bf16.gmra.mrb[0].mxu0 %v657
      %v1274 = vpop.f32.mrb[0].mxu0
      %v1275 = vadd.f32 %v1186, %v1274
      %v1276 = vpop.f32.mrb[0].mxu0
      %v1277 = vpop.f32.mrb[0].mxu0
      %v1278 = vadd.f32 %v1189, %v1277
      %v1279 = vpop.f32.mrb[0].mxu0
      %1280 = vmatprep.mubr.bf16.mxu0 %v666
      %1281 = vmatmul.mubr.bf16.gmra.mrb[0].mxu0 %v665
      %v1282 = vpop.f32.mrb[0].mxu0
      %v1283 = vadd.f32 %v1194, %v1282
      %v1284 = vpop.f32.mrb[0].mxu0
      %v1285 = vpop.f32.mrb[0].mxu0
      %v1286 = vadd.f32 %v1197, %v1285
      %v1287 = vpop.f32.mrb[0].mxu0
      %1288 = vmatprep.mubr.bf16.mxu0 %v674
      %1289 = vmatmul.mubr.bf16.gmra.mrb[0].mxu0 %v673
      %v1290 = vpop.f32.mrb[0].mxu0
      %v1291 = vadd.f32 %v1202, %v1290
      %v1292 = vpop.f32.mrb[0].mxu0
      %v1293 = vpop.f32.mrb[0].mxu0
      %v1294 = vadd.f32 %v1205, %v1293
      %v1295 = vpop.f32.mrb[0].mxu0
      %1296 = vmatprep.mubr.bf16.mxu0 %v682
      %1297 = vmatmul.mubr.bf16.gmra.mrb[0].mxu0 %v681
      %v1298 = vpop.f32.mrb[0].mxu0
      %v1299 = vadd.f32 %v1210, %v1298
      %v1300 = vpop.f32.mrb[0].mxu0
      %v1301 = vpop.f32.mrb[0].mxu0
      %v1302 = vadd.f32 %v1213, %v1301
      %v1303 = vpop.f32.mrb[0].mxu0
      %1304 = vmatprep.mubr.bf16.mxu0 %v690
      %1305 = vmatmul.mubr.bf16.gmra.mrb[0].mxu0 %v689
      %v1306 = vpop.f32.mrb[0].mxu0
      %v1307 = vadd.f32 %v1218, %v1306
      %v1308 = vpop.f32.mrb[0].mxu0
      %v1309 = vpop.f32.mrb[0].mxu0
      %v1310 = vadd.f32 %v1221, %v1309
      %v1311 = vpop.f32.mrb[0].mxu0
      %1312 = vdwg.mxu0
      %1313 = vmatprep.subr.bf16.mxu0 0
      %1314 = vmatpush1.bf16.msra.mxu0 %v1039
      %1315 = vmatprep.subr.bf16.mxu0 0
      %1316 = vmatpush1.bf16.msra.mxu0 %v1040
      %1317 = vmatprep.subr.bf16.mxu0 0
      %1318 = vmatpush1.bf16.msra.mxu0 %v1041
      %1319 = vmatprep.subr.bf16.mxu0 0
      %1320 = vmatpush1.bf16.msra.mxu0 %v1042
      %1321 = vmatprep.subr.bf16.mxu0 0
      %1322 = vmatpush1.bf16.msra.mxu0 %v1043
      %1323 = vmatprep.subr.bf16.mxu0 0
      %1324 = vmatpush1.bf16.msra.mxu0 %v1044
      %1325 = vmatprep.subr.bf16.mxu0 0
      %1326 = vmatpush1.bf16.msra.mxu0 %v1045
      %1327 = vmatprep.subr.bf16.mxu0 0
      %1328 = vmatpush1.bf16.msra.mxu0 %v1046
      %1329 = vmatprep.subr.bf16.mxu0 0
      %1330 = vmatpush1.bf16.msra.mxu0 %v1047
      %1331 = vmatprep.subr.bf16.mxu0 0
      %1332 = vmatpush1.bf16.msra.mxu0 %v1048
      %1333 = vmatprep.subr.bf16.mxu0 0
      %1334 = vmatpush1.bf16.msra.mxu0 %v1049
      %1335 = vmatprep.subr.bf16.mxu0 0
      %1336 = vmatpush1.bf16.msra.mxu0 %v1050
      %1337 = vmatprep.subr.bf16.mxu0 0
      %1338 = vmatpush1.bf16.msra.mxu0 %v1051
      %1339 = vmatprep.subr.bf16.mxu0 0
      %1340 = vmatpush1.bf16.msra.mxu0 %v1052
      %1341 = vmatprep.subr.bf16.mxu0 0
      %1342 = vmatpush1.bf16.msra.mxu0 %v1053
      %1343 = vmatprep.subr.bf16.mxu0 0
      %1344 = vmatpush1.bf16.msra.mxu0 %v1054
      %1345 = vmatprep.mubr.bf16.mxu0 %v644
      %1346 = vmatmul.mubr.bf16.gmra.mrb[0].mxu0 %v643
      %v1347 = vpop.f32.mrb[0].mxu0
      %v1348 = vadd.f32 %v1259, %v1347
      %v1349 = vpop.f32.mrb[0].mxu0
      %v1350 = vpop.f32.mrb[0].mxu0
      %v1351 = vadd.f32 %v1262, %v1350
      %v1352 = vpop.f32.mrb[0].mxu0
      %1353 = vmatprep.mubr.bf16.mxu0 %v652
      %1354 = vmatmul.mubr.bf16.gmra.mrb[0].mxu0 %v651
      %v1355 = vpop.f32.mrb[0].mxu0
      %v1356 = vadd.f32 %v1267, %v1355
      %v1357 = vpop.f32.mrb[0].mxu0
      %v1358 = vpop.f32.mrb[0].mxu0
      %v1359 = vadd.f32 %v1270, %v1358
      %v1360 = vpop.f32.mrb[0].mxu0
      %1361 = vmatprep.mubr.bf16.mxu0 %v660
      %1362 = vmatmul.mubr.bf16.gmra.mrb[0].mxu0 %v659
      %v1363 = vpop.f32.mrb[0].mxu0
      %v1364 = vadd.f32 %v1275, %v1363
      %v1365 = vpop.f32.mrb[0].mxu0
      %v1366 = vpop.f32.mrb[0].mxu0
      %v1367 = vadd.f32 %v1278, %v1366
      %v1368 = vpop.f32.mrb[0].mxu0
      %1369 = vmatprep.mubr.bf16.mxu0 %v668
      %1370 = vmatmul.mubr.bf16.gmra.mrb[0].mxu0 %v667
      %v1371 = vpop.f32.mrb[0].mxu0
      %v1372 = vadd.f32 %v1283, %v1371
      %v1373 = vpop.f32.mrb[0].mxu0
      %v1374 = vpop.f32.mrb[0].mxu0
      %v1375 = vadd.f32 %v1286, %v1374
      %v1376 = vpop.f32.mrb[0].mxu0
      %1377 = vmatprep.mubr.bf16.mxu0 %v676
      %1378 = vmatmul.mubr.bf16.gmra.mrb[0].mxu0 %v675
      %v1379 = vpop.f32.mrb[0].mxu0
      %v1380 = vadd.f32 %v1291, %v1379
      %v1381 = vpop.f32.mrb[0].mxu0
      %v1382 = vpop.f32.mrb[0].mxu0
      %v1383 = vadd.f32 %v1294, %v1382
      %v1384 = vpop.f32.mrb[0].mxu0
      %1385 = vmatprep.mubr.bf16.mxu0 %v684
      %1386 = vmatmul.mubr.bf16.gmra.mrb[0].mxu0 %v683
      %v1387 = vpop.f32.mrb[0].mxu0
      %v1388 = vadd.f32 %v1299, %v1387
      %v1389 = vpop.f32.mrb[0].mxu0
      %v1390 = vpop.f32.mrb[0].mxu0
      %v1391 = vadd.f32 %v1302, %v1390
      %v1392 = vpop.f32.mrb[0].mxu0
      %1393 = vmatprep.mubr.bf16.mxu0 %v692
      %1394 = vmatmul.mubr.bf16.gmra.mrb[0].mxu0 %v691
      %v1395 = vpop.f32.mrb[0].mxu0
      %v1396 = vadd.f32 %v1307, %v1395
      %v1397 = vpop.f32.mrb[0].mxu0
      %v1398 = vpop.f32.mrb[0].mxu0
      %v1399 = vadd.f32 %v1310, %v1398
      %v1400 = vpop.f32.mrb[0].mxu0
      %1401 = vdwg.mxu0
      %1402 = vmatprep.subr.bf16.mxu0 0
      %1403 = vmatpush1.bf16.msra.mxu0 %v1055
      %1404 = vmatprep.subr.bf16.mxu0 0
      %1405 = vmatpush1.bf16.msra.mxu0 %v1056
      %1406 = vmatprep.subr.bf16.mxu0 0
      %1407 = vmatpush1.bf16.msra.mxu0 %v1057
      %1408 = vmatprep.subr.bf16.mxu0 0
      %1409 = vmatpush1.bf16.msra.mxu0 %v1058
      %1410 = vmatprep.subr.bf16.mxu0 0
      %1411 = vmatpush1.bf16.msra.mxu0 %v1059
      %1412 = vmatprep.subr.bf16.mxu0 0
      %1413 = vmatpush1.bf16.msra.mxu0 %v1060
      %1414 = vmatprep.subr.bf16.mxu0 0
      %1415 = vmatpush1.bf16.msra.mxu0 %v1061
      %1416 = vmatprep.subr.bf16.mxu0 0
      %1417 = vmatpush1.bf16.msra.mxu0 %v1062
      %1418 = vmatprep.subr.bf16.mxu0 0
      %1419 = vmatpush1.bf16.msra.mxu0 %v1063
      %1420 = vmatprep.subr.bf16.mxu0 0
      %1421 = vmatpush1.bf16.msra.mxu0 %v1064
      %1422 = vmatprep.subr.bf16.mxu0 0
      %1423 = vmatpush1.bf16.msra.mxu0 %v1065
      %1424 = vmatprep.subr.bf16.mxu0 0
      %1425 = vmatpush1.bf16.msra.mxu0 %v1066
      %1426 = vmatprep.subr.bf16.mxu0 0
      %1427 = vmatpush1.bf16.msra.mxu0 %v1067
      %1428 = vmatprep.subr.bf16.mxu0 0
      %1429 = vmatpush1.bf16.msra.mxu0 %v1068
      %1430 = vmatprep.subr.bf16.mxu0 0
      %1431 = vmatpush1.bf16.msra.mxu0 %v1069
      %1432 = vmatprep.subr.bf16.mxu0 0
      %1433 = vmatpush1.bf16.msra.mxu0 %v1070
      %1434 = vmatprep.mubr.bf16.mxu0 %v646
      %1435 = vmatmul.mubr.bf16.gmra.mrb[0].mxu0 %v645
      %v1436 = vpop.f32.mrb[0].mxu0
      %v1437 = vadd.f32 %v1348, %v1436
      %v1438 = vpop.f32.mrb[0].mxu0
      %v1439 = vpop.f32.mrb[0].mxu0
      %v1440 = vadd.f32 %v1351, %v1439
      %v1441 = vpop.f32.mrb[0].mxu0
      %1442 = vmatprep.mubr.bf16.mxu0 %v654
      %1443 = vmatmul.mubr.bf16.gmra.mrb[0].mxu0 %v653
      %v1444 = vpop.f32.mrb[0].mxu0
      %v1445 = vadd.f32 %v1356, %v1444
      %v1446 = vpop.f32.mrb[0].mxu0
      %v1447 = vpop.f32.mrb[0].mxu0
      %v1448 = vadd.f32 %v1359, %v1447
      %v1449 = vpop.f32.mrb[0].mxu0
      %1450 = vmatprep.mubr.bf16.mxu0 %v662
      %1451 = vmatmul.mubr.bf16.gmra.mrb[0].mxu0 %v661
      %v1452 = vpop.f32.mrb[0].mxu0
      %v1453 = vadd.f32 %v1364, %v1452
      %v1454 = vpop.f32.mrb[0].mxu0
      %v1455 = vpop.f32.mrb[0].mxu0
      %v1456 = vadd.f32 %v1367, %v1455
      %v1457 = vpop.f32.mrb[0].mxu0
      %1458 = vmatprep.mubr.bf16.mxu0 %v670
      %1459 = vmatmul.mubr.bf16.gmra.mrb[0].mxu0 %v669
      %v1460 = vpop.f32.mrb[0].mxu0
      %v1461 = vadd.f32 %v1372, %v1460
      %v1462 = vpop.f32.mrb[0].mxu0
      %v1463 = vpop.f32.mrb[0].mxu0
      %v1464 = vadd.f32 %v1375, %v1463
      %v1465 = vpop.f32.mrb[0].mxu0
      %1466 = vmatprep.mubr.bf16.mxu0 %v678
      %1467 = vmatmul.mubr.bf16.gmra.mrb[0].mxu0 %v677
      %v1468 = vpop.f32.mrb[0].mxu0
      %v1469 = vadd.f32 %v1380, %v1468
      %v1470 = vpop.f32.mrb[0].mxu0
      %v1471 = vpop.f32.mrb[0].mxu0
      %v1472 = vadd.f32 %v1383, %v1471
      %v1473 = vpop.f32.mrb[0].mxu0
      %1474 = vmatprep.mubr.bf16.mxu0 %v686
      %1475 = vmatmul.mubr.bf16.gmra.mrb[0].mxu0 %v685
      %v1476 = vpop.f32.mrb[0].mxu0
      %v1477 = vadd.f32 %v1388, %v1476
      %v1478 = vpop.f32.mrb[0].mxu0
      %v1479 = vpop.f32.mrb[0].mxu0
      %v1480 = vadd.f32 %v1391, %v1479
      %v1481 = vpop.f32.mrb[0].mxu0
      %1482 = vmatprep.mubr.bf16.mxu0 %v694
      %1483 = vmatmul.mubr.bf16.gmra.mrb[0].mxu0 %v693
      %v1484 = vpop.f32.mrb[0].mxu0
      %v1485 = vadd.f32 %v1396, %v1484
      %v1486 = vpop.f32.mrb[0].mxu0
      %v1487 = vpop.f32.mrb[0].mxu0
      %v1488 = vadd.f32 %v1399, %v1487
      %v1489 = vpop.f32.mrb[0].mxu0
      %1490 = vdwg.mxu0
      %v1491 = vmax.f32 %v1437, 0.0
      %v1492 = vmax.f32 %v1440, 0.0
      %v1493 = vmax.f32 %v1445, 0.0
      %v1494 = vmax.f32 %v1448, 0.0
      %v1495 = vmax.f32 %v1453, 0.0
      %v1496 = vmax.f32 %v1456, 0.0
      %v1497 = vmax.f32 %v1461, 0.0
      %v1498 = vmax.f32 %v1464, 0.0
      %v1499 = vmax.f32 %v1469, 0.0
      %v1500 = vmax.f32 %v1472, 0.0
      %v1501 = vmax.f32 %v1477, 0.0
      %v1502 = vmax.f32 %v1480, 0.0
      %v1503 = vmax.f32 %v1485, 0.0
      %v1504 = vmax.f32 %v1488, 0.0
      %v1505 = vpack.c.bf16 %v1492, %v1491
      %v1506 = vpack.c.bf16 %v1494, %v1493
      %v1507 = vpack.c.bf16 %v1496, %v1495
      %v1508 = vpack.c.bf16 %v1498, %v1497
      %v1509 = vpack.c.bf16 %v1500, %v1499
      %v1510 = vpack.c.bf16 %v1502, %v1501
      %v1511 = vpack.c.bf16 %v1504, %v1503
      %v1512 = vld [vmem:[%s3] sm:$0xf]
      %v1513 = vld [vmem:[%s3 + $0x4] sm:$0xf]
      %v1514 = vld [vmem:[%s3 + $0x8] sm:$0xf]
      %v1515 = vld [vmem:[%s3 + $0xc] sm:$0xf]
      %v1516 = vld [vmem:[%s3 + $0x10] sm:$0xf]
      %v1517 = vld [vmem:[%s3 + $0x14] sm:$0xf]
      %v1518 = vld [vmem:[%s3 + $0x18] sm:$0xf]
      %v1519 = vld [vmem:[%s3 + $0x1c] sm:$0xf]
      %v1520 = vld [vmem:[%s3 + $0x20] sm:$0xf]
      %v1521 = vld [vmem:[%s3 + $0x24] sm:$0xf]
      %v1522 = vld [vmem:[%s3 + $0x28] sm:$0xf]
      %v1523 = vld [vmem:[%s3 + $0x2c] sm:$0xf]
      %v1524 = vld [vmem:[%s3 + $0x30] sm:$0xf]
      %v1525 = vld [vmem:[%s3 + $0x34] sm:$0xf]
      %v1526 = vld [vmem:[%s3 + $0x38] sm:$0xf]
      %v1527 = vld [vmem:[%s3 + $0x3c] sm:$0xf]
      %s1528 = scalar_lea.vmem %s3, 64
      %v1529 = vld [vmem:[%s1528] sm:$0xf]
      %v1530 = vld [vmem:[%s1528 + $0x4] sm:$0xf]
      %v1531 = vld [vmem:[%s1528 + $0x8] sm:$0xf]
      %v1532 = vld [vmem:[%s1528 + $0xc] sm:$0xf]
      %v1533 = vld [vmem:[%s1528 + $0x10] sm:$0xf]
      %v1534 = vld [vmem:[%s1528 + $0x14] sm:$0xf]
      %v1535 = vld [vmem:[%s1528 + $0x18] sm:$0xf]
      %v1536 = vld [vmem:[%s1528 + $0x1c] sm:$0xf]
      %v1537 = vld [vmem:[%s1528 + $0x20] sm:$0xf]
      %v1538 = vld [vmem:[%s1528 + $0x24] sm:$0xf]
      %v1539 = vld [vmem:[%s1528 + $0x28] sm:$0xf]
      %v1540 = vld [vmem:[%s1528 + $0x2c] sm:$0xf]
      %v1541 = vld [vmem:[%s1528 + $0x30] sm:$0xf]
      %v1542 = vld [vmem:[%s1528 + $0x34] sm:$0xf]
      %v1543 = vld [vmem:[%s1528 + $0x38] sm:$0xf]
      %v1544 = vld [vmem:[%s1528 + $0x3c] sm:$0xf]
      %vm1545 = vsmask.f32 7424
      %v1547 = vshrl.u32 %v1505, 16
      %v1549 = vshll.u32 %v1505, 16
      %v1551 = vrot.slane %v1549, 1
      %v1552 = vor.u32 %v1547, %v1551
      %v1554 = vshll.u32 %v1506, 16
      %v1556 = vrot.slane %v1554, 1
      %v1557 = vsel %vm1545, %v1552, %v1556
      %v1558 = vshrl.u32 %v1506, 16
      %v1560 = vor.u32 %v1558, %v1556
      %v1562 = vshll.u32 %v1507, 16
      %v1564 = vrot.slane %v1562, 1
      %v1565 = vsel %vm1545, %v1560, %v1564
      %v1566 = vshrl.u32 %v1507, 16
      %v1568 = vor.u32 %v1566, %v1564
      %v1570 = vshll.u32 %v1508, 16
      %v1572 = vrot.slane %v1570, 1
      %v1573 = vsel %vm1545, %v1568, %v1572
      %v1574 = vshrl.u32 %v1508, 16
      %v1576 = vor.u32 %v1574, %v1572
      %v1578 = vshll.u32 %v1509, 16
      %v1580 = vrot.slane %v1578, 1
      %v1581 = vsel %vm1545, %v1576, %v1580
      %v1582 = vshrl.u32 %v1509, 16
      %v1584 = vor.u32 %v1582, %v1580
      %v1586 = vshll.u32 %v1510, 16
      %v1588 = vrot.slane %v1586, 1
      %v1589 = vsel %vm1545, %v1584, %v1588
      %v1590 = vshrl.u32 %v1510, 16
      %v1592 = vor.u32 %v1590, %v1588
      %v1594 = vshll.u32 %v1511, 16
      %v1596 = vrot.slane %v1594, 1
      %v1597 = vsel %vm1545, %v1592, %v1596
      %v1598 = vshrl.u32 %v1511, 16
      %v1623 = vunpack.c.l.b16 %v1529
      %v1624 = vunpack.c.l.b16 %v1530
      %v1625 = vunpack.c.l.b16 %v1531
      %v1626 = vunpack.c.l.b16 %v1532
      %v1627 = vunpack.c.l.b16 %v1533
      %v1628 = vunpack.c.l.b16 %v1534
      %v1629 = vunpack.c.l.b16 %v1535
      %v1630 = vunpack.c.l.b16 %v1536
      %v1631 = vunpack.c.l.b16 %v1537
      %v1632 = vunpack.c.l.b16 %v1538
      %v1633 = vunpack.c.l.b16 %v1539
      %v1634 = vunpack.c.l.b16 %v1540
      %v1635 = vunpack.c.l.b16 %v1541
      %v1636 = vunpack.c.l.b16 %v1542
      %v1637 = vunpack.c.l.b16 %v1543
      %v1638 = vunpack.c.l.b16 %v1544
      %v1639 = vpack.c.b16 %v1624, %v1623
      %v1640 = vpack.c.b16 %v1626, %v1625
      %v1641 = vpack.c.b16 %v1628, %v1627
      %v1642 = vpack.c.b16 %v1630, %v1629
      %v1643 = vpack.c.b16 %v1632, %v1631
      %v1644 = vpack.c.b16 %v1634, %v1633
      %v1645 = vpack.c.b16 %v1636, %v1635
      %v1646 = vpack.c.b16 %v1638, %v1637
      %1655 = vmatprep.subr.bf16.mxu0 0
      %1656 = vmatpush1.bf16.msra.mxu0 %v1639
      %1657 = vmatprep.subr.bf16.mxu0 0
      %1658 = vmatpush1.bf16.msra.mxu0 %v1640
      %1659 = vmatprep.subr.bf16.mxu0 0
      %1660 = vmatpush1.bf16.msra.mxu0 %v1641
      %1661 = vmatprep.subr.bf16.mxu0 0
      %1662 = vmatpush1.bf16.msra.mxu0 %v1642
      %1663 = vmatprep.subr.bf16.mxu0 0
      %1664 = vmatpush1.bf16.msra.mxu0 %v1643
      %1665 = vmatprep.subr.bf16.mxu0 0
      %1666 = vmatpush1.bf16.msra.mxu0 %v1644
      %1667 = vmatprep.subr.bf16.mxu0 0
      %1668 = vmatpush1.bf16.msra.mxu0 %v1645
      %1669 = vmatprep.subr.bf16.mxu0 0
      %1670 = vmatpush1.bf16.msra.mxu0 %v1646
      %1671 = vmatprep.subr.bf16.mxu0 0
      %1672 = vmatpush1.bf16.msra.mxu0 0
      %1673 = vmatprep.subr.bf16.mxu0 0
      %1674 = vmatpush1.bf16.msra.mxu0 0
      %1675 = vmatprep.subr.bf16.mxu0 0
      %1676 = vmatpush1.bf16.msra.mxu0 0
      %1677 = vmatprep.subr.bf16.mxu0 0
      %1678 = vmatpush1.bf16.msra.mxu0 0
      %1679 = vmatprep.subr.bf16.mxu0 0
      %1680 = vmatpush1.bf16.msra.mxu0 0
      %1681 = vmatprep.subr.bf16.mxu0 0
      %1682 = vmatpush1.bf16.msra.mxu0 0
      %1683 = vmatprep.subr.bf16.mxu0 0
      %1684 = vmatpush1.bf16.msra.mxu0 0
      %1685 = vmatprep.subr.bf16.mxu0 0
      %1686 = vmatpush1.bf16.msra.mxu0 0
      %1687 = vmatprep.mubr.bf16.mxu0 0
      %1688 = vmatmul.mubr.bf16.gmra.mrb[0].mxu0 %v1557
      %v1689 = vpop.f32.mrb[0].mxu0
      %v1690 = vadd.f32 0.0, %v1689
      %v1691 = vpop.f32.mrb[0].mxu0
      %v1692 = vpop.f32.mrb[0].mxu0
      %v1693 = vadd.f32 0.0, %v1692
      %v1694 = vpop.f32.mrb[0].mxu0
      %1695 = vmatprep.mubr.bf16.mxu0 0
      %1696 = vmatmul.mubr.bf16.gmra.mrb[0].mxu0 %v1565
      %v1697 = vpop.f32.mrb[0].mxu0
      %v1698 = vadd.f32 0.0, %v1697
      %v1699 = vpop.f32.mrb[0].mxu0
      %v1700 = vpop.f32.mrb[0].mxu0
      %v1701 = vadd.f32 0.0, %v1700
      %v1702 = vpop.f32.mrb[0].mxu0
      %1703 = vmatprep.mubr.bf16.mxu0 0
      %1704 = vmatmul.mubr.bf16.gmra.mrb[0].mxu0 %v1573
      %v1705 = vpop.f32.mrb[0].mxu0
      %v1706 = vadd.f32 0.0, %v1705
      %v1707 = vpop.f32.mrb[0].mxu0
      %v1708 = vpop.f32.mrb[0].mxu0
      %v1709 = vadd.f32 0.0, %v1708
      %v1710 = vpop.f32.mrb[0].mxu0
      %1711 = vmatprep.mubr.bf16.mxu0 0
      %1712 = vmatmul.mubr.bf16.gmra.mrb[0].mxu0 %v1581
      %v1713 = vpop.f32.mrb[0].mxu0
      %v1714 = vadd.f32 0.0, %v1713
      %v1715 = vpop.f32.mrb[0].mxu0
      %v1716 = vpop.f32.mrb[0].mxu0
      %v1717 = vadd.f32 0.0, %v1716
      %v1718 = vpop.f32.mrb[0].mxu0
      %1719 = vmatprep.mubr.bf16.mxu0 0
      %1720 = vmatmul.mubr.bf16.gmra.mrb[0].mxu0 %v1589
      %v1721 = vpop.f32.mrb[0].mxu0
      %v1722 = vadd.f32 0.0, %v1721
      %v1723 = vpop.f32.mrb[0].mxu0
      %v1724 = vpop.f32.mrb[0].mxu0
      %v1725 = vadd.f32 0.0, %v1724
      %v1726 = vpop.f32.mrb[0].mxu0
      %1727 = vmatprep.mubr.bf16.mxu0 0
      %1728 = vmatmul.mubr.bf16.gmra.mrb[0].mxu0 %v1597
      %v1729 = vpop.f32.mrb[0].mxu0
      %v1730 = vadd.f32 0.0, %v1729
      %v1731 = vpop.f32.mrb[0].mxu0
      %v1732 = vpop.f32.mrb[0].mxu0
      %v1733 = vadd.f32 0.0, %v1732
      %v1734 = vpop.f32.mrb[0].mxu0
      %1735 = vmatprep.mubr.bf16.mxu0 0
      %1736 = vmatmul.mubr.bf16.gmra.mrb[0].mxu0 %v1598
      %v1737 = vpop.f32.mrb[0].mxu0
      %v1738 = vadd.f32 0.0, %v1737
      %v1739 = vpop.f32.mrb[0].mxu0
      %v1740 = vpop.f32.mrb[0].mxu0
      %v1741 = vpop.f32.mrb[0].mxu0
      %1742 = vdwg.mxu0
      %v1759 = vunpack.c.l.b16 %v1512
      %v1760 = vunpack.c.l.b16 %v1513
      %v1761 = vunpack.c.l.b16 %v1514
      %v1762 = vunpack.c.l.b16 %v1515
      %v1763 = vunpack.c.l.b16 %v1516
      %v1764 = vunpack.c.l.b16 %v1517
      %v1765 = vunpack.c.l.b16 %v1518
      %v1766 = vunpack.c.l.b16 %v1519
      %v1767 = vunpack.c.l.b16 %v1520
      %v1768 = vunpack.c.l.b16 %v1521
      %v1769 = vunpack.c.l.b16 %v1522
      %v1770 = vunpack.c.l.b16 %v1523
      %v1771 = vunpack.c.l.b16 %v1524
      %v1772 = vunpack.c.l.b16 %v1525
      %v1773 = vunpack.c.l.b16 %v1526
      %v1774 = vunpack.c.l.b16 %v1527
      %v1775 = vpack.c.b16 %v1760, %v1759
      %v1776 = vpack.c.b16 %v1762, %v1761
      %v1777 = vpack.c.b16 %v1764, %v1763
      %v1778 = vpack.c.b16 %v1766, %v1765
      %v1779 = vpack.c.b16 %v1768, %v1767
      %v1780 = vpack.c.b16 %v1770, %v1769
      %v1781 = vpack.c.b16 %v1772, %v1771
      %v1782 = vpack.c.b16 %v1774, %v1773
      %1791 = vmatprep.subr.bf16.mxu0 0
      %1792 = vmatpush1.bf16.msra.mxu0 %v1775
      %1793 = vmatprep.subr.bf16.mxu0 0
      %1794 = vmatpush1.bf16.msra.mxu0 %v1776
      %1795 = vmatprep.subr.bf16.mxu0 0
      %1796 = vmatpush1.bf16.msra.mxu0 %v1777
      %1797 = vmatprep.subr.bf16.mxu0 0
      %1798 = vmatpush1.bf16.msra.mxu0 %v1778
      %1799 = vmatprep.subr.bf16.mxu0 0
      %1800 = vmatpush1.bf16.msra.mxu0 %v1779
      %1801 = vmatprep.subr.bf16.mxu0 0
      %1802 = vmatpush1.bf16.msra.mxu0 %v1780
      %1803 = vmatprep.subr.bf16.mxu0 0
      %1804 = vmatpush1.bf16.msra.mxu0 %v1781
      %1805 = vmatprep.subr.bf16.mxu0 0
      %1806 = vmatpush1.bf16.msra.mxu0 %v1782
      %1807 = vmatprep.subr.bf16.mxu0 0
      %1808 = vmatpush1.bf16.msra.mxu0 0
      %1809 = vmatprep.subr.bf16.mxu0 0
      %1810 = vmatpush1.bf16.msra.mxu0 0
      %1811 = vmatprep.subr.bf16.mxu0 0
      %1812 = vmatpush1.bf16.msra.mxu0 0
      %1813 = vmatprep.subr.bf16.mxu0 0
      %1814 = vmatpush1.bf16.msra.mxu0 0
      %1815 = vmatprep.subr.bf16.mxu0 0
      %1816 = vmatpush1.bf16.msra.mxu0 0
      %1817 = vmatprep.subr.bf16.mxu0 0
      %1818 = vmatpush1.bf16.msra.mxu0 0
      %1819 = vmatprep.subr.bf16.mxu0 0
      %1820 = vmatpush1.bf16.msra.mxu0 0
      %1821 = vmatprep.subr.bf16.mxu0 0
      %1822 = vmatpush1.bf16.msra.mxu0 0
      %1823 = vmatprep.mubr.bf16.mxu0 0
      %1824 = vmatmul.mubr.bf16.gmra.mrb[0].mxu0 %v1505
      %v1825 = vpop.f32.mrb[0].mxu0
      %v1826 = vadd.f32 %v1690, %v1825
      %v1827 = vpop.f32.mrb[0].mxu0
      %v1828 = vpop.f32.mrb[0].mxu0
      %v1829 = vadd.f32 %v1693, %v1828
      %v1830 = vpop.f32.mrb[0].mxu0
      %1831 = vmatprep.mubr.bf16.mxu0 0
      %1832 = vmatmul.mubr.bf16.gmra.mrb[0].mxu0 %v1506
      %v1833 = vpop.f32.mrb[0].mxu0
      %v1834 = vadd.f32 %v1698, %v1833
      %v1835 = vpop.f32.mrb[0].mxu0
      %v1836 = vpop.f32.mrb[0].mxu0
      %v1837 = vadd.f32 %v1701, %v1836
      %v1838 = vpop.f32.mrb[0].mxu0
      %1839 = vmatprep.mubr.bf16.mxu0 0
      %1840 = vmatmul.mubr.bf16.gmra.mrb[0].mxu0 %v1507
      %v1841 = vpop.f32.mrb[0].mxu0
      %v1842 = vadd.f32 %v1706, %v1841
      %v1843 = vpop.f32.mrb[0].mxu0
      %v1844 = vpop.f32.mrb[0].mxu0
      %v1845 = vadd.f32 %v1709, %v1844
      %v1846 = vpop.f32.mrb[0].mxu0
      %1847 = vmatprep.mubr.bf16.mxu0 0
      %1848 = vmatmul.mubr.bf16.gmra.mrb[0].mxu0 %v1508
      %v1849 = vpop.f32.mrb[0].mxu0
      %v1850 = vadd.f32 %v1714, %v1849
      %v1851 = vpop.f32.mrb[0].mxu0
      %v1852 = vpop.f32.mrb[0].mxu0
      %v1853 = vadd.f32 %v1717, %v1852
      %v1854 = vpop.f32.mrb[0].mxu0
      %1855 = vmatprep.mubr.bf16.mxu0 0
      %1856 = vmatmul.mubr.bf16.gmra.mrb[0].mxu0 %v1509
      %v1857 = vpop.f32.mrb[0].mxu0
      %v1858 = vadd.f32 %v1722, %v1857
      %v1859 = vpop.f32.mrb[0].mxu0
      %v1860 = vpop.f32.mrb[0].mxu0
      %v1861 = vadd.f32 %v1725, %v1860
      %v1862 = vpop.f32.mrb[0].mxu0
      %1863 = vmatprep.mubr.bf16.mxu0 0
      %1864 = vmatmul.mubr.bf16.gmra.mrb[0].mxu0 %v1510
      %v1865 = vpop.f32.mrb[0].mxu0
      %v1866 = vadd.f32 %v1730, %v1865
      %v1867 = vpop.f32.mrb[0].mxu0
      %v1868 = vpop.f32.mrb[0].mxu0
      %v1869 = vadd.f32 %v1733, %v1868
      %v1870 = vpop.f32.mrb[0].mxu0
      %1871 = vmatprep.mubr.bf16.mxu0 0
      %1872 = vmatmul.mubr.bf16.gmra.mrb[0].mxu0 %v1511
      %v1873 = vpop.f32.mrb[0].mxu0
      %v1874 = vadd.f32 %v1738, %v1873
      %v1875 = vpop.f32.mrb[0].mxu0
      %v1876 = vpop.f32.mrb[0].mxu0
      %v1877 = vpop.f32.mrb[0].mxu0
      %1878 = vdwg.mxu0
      %s1879 = scalar_lea.vmem %s3, 128
      %v1880 = vld [vmem:[%s1879] sm:$0xf]
      %v1881 = vld [vmem:[%s1879 + $0x4] sm:$0xf]
      %v1882 = vld [vmem:[%s1879 + $0x8] sm:$0xf]
      %v1883 = vld [vmem:[%s1879 + $0xc] sm:$0xf]
      %v1884 = vld [vmem:[%s1879 + $0x10] sm:$0xf]
      %v1885 = vld [vmem:[%s1879 + $0x14] sm:$0xf]
      %v1886 = vld [vmem:[%s1879 + $0x18] sm:$0xf]
      %v1887 = vld [vmem:[%s1879 + $0x1c] sm:$0xf]
      %v1888 = vld [vmem:[%s1879 + $0x20] sm:$0xf]
      %v1889 = vld [vmem:[%s1879 + $0x24] sm:$0xf]
      %v1890 = vld [vmem:[%s1879 + $0x28] sm:$0xf]
      %v1891 = vld [vmem:[%s1879 + $0x2c] sm:$0xf]
      %v1892 = vld [vmem:[%s1879 + $0x30] sm:$0xf]
      %v1893 = vld [vmem:[%s1879 + $0x34] sm:$0xf]
      %v1894 = vld [vmem:[%s1879 + $0x38] sm:$0xf]
      %v1895 = vld [vmem:[%s1879 + $0x3c] sm:$0xf]
      %vm1896 = vsmask.f32 2304
      %v1897 = vrot.slane %v1547, 5
      %v1898 = vrot.slane %v1549, 6
      %v1899 = vor.u32 %v1897, %v1898
      %v1900 = vrot.slane %v1558, 5
      %v1901 = vrot.slane %v1554, 6
      %v1902 = vor.u32 %v1900, %v1901
      %v1903 = vsel %vm1896, %v1899, %v1902
      %v1904 = vrot.slane %v1566, 5
      %v1905 = vrot.slane %v1562, 6
      %v1906 = vor.u32 %v1904, %v1905
      %v1907 = vsel %vm1896, %v1902, %v1906
      %v1908 = vrot.slane %v1574, 5
      %v1909 = vrot.slane %v1570, 6
      %v1910 = vor.u32 %v1908, %v1909
      %v1911 = vsel %vm1896, %v1906, %v1910
      %v1912 = vrot.slane %v1582, 5
      %v1913 = vrot.slane %v1578, 6
      %v1914 = vor.u32 %v1912, %v1913
      %v1915 = vsel %vm1896, %v1910, %v1914
      %v1916 = vrot.slane %v1590, 5
      %v1917 = vrot.slane %v1586, 6
      %v1918 = vor.u32 %v1916, %v1917
      %v1919 = vsel %vm1896, %v1914, %v1918
      %v1920 = vrot.slane %v1598, 5
      %v1921 = vrot.slane %v1594, 6
      %v1922 = vor.u32 %v1920, %v1921
      %v1923 = vsel %vm1896, %v1918, %v1922
      %v1947 = vunpack.c.l.b16 %v1880
      %v1948 = vunpack.c.l.b16 %v1881
      %v1949 = vunpack.c.l.b16 %v1882
      %v1950 = vunpack.c.l.b16 %v1883
      %v1951 = vunpack.c.l.b16 %v1884
      %v1952 = vunpack.c.l.b16 %v1885
      %v1953 = vunpack.c.l.b16 %v1886
      %v1954 = vunpack.c.l.b16 %v1887
      %v1955 = vunpack.c.l.b16 %v1888
      %v1956 = vunpack.c.l.b16 %v1889
      %v1957 = vunpack.c.l.b16 %v1890
      %v1958 = vunpack.c.l.b16 %v1891
      %v1959 = vunpack.c.l.b16 %v1892
      %v1960 = vunpack.c.l.b16 %v1893
      %v1961 = vunpack.c.l.b16 %v1894
      %v1962 = vunpack.c.l.b16 %v1895
      %v1963 = vpack.c.b16 %v1948, %v1947
      %v1964 = vpack.c.b16 %v1950, %v1949
      %v1965 = vpack.c.b16 %v1952, %v1951
      %v1966 = vpack.c.b16 %v1954, %v1953
      %v1967 = vpack.c.b16 %v1956, %v1955
      %v1968 = vpack.c.b16 %v1958, %v1957
      %v1969 = vpack.c.b16 %v1960, %v1959
      %v1970 = vpack.c.b16 %v1962, %v1961
      %1979 = vmatprep.subr.bf16.mxu0 0
      %1980 = vmatpush1.bf16.msra.mxu0 %v1963
      %1981 = vmatprep.subr.bf16.mxu0 0
      %1982 = vmatpush1.bf16.msra.mxu0 %v1964
      %1983 = vmatprep.subr.bf16.mxu0 0
      %1984 = vmatpush1.bf16.msra.mxu0 %v1965
      %1985 = vmatprep.subr.bf16.mxu0 0
      %1986 = vmatpush1.bf16.msra.mxu0 %v1966
      %1987 = vmatprep.subr.bf16.mxu0 0
      %1988 = vmatpush1.bf16.msra.mxu0 %v1967
      %1989 = vmatprep.subr.bf16.mxu0 0
      %1990 = vmatpush1.bf16.msra.mxu0 %v1968
      %1991 = vmatprep.subr.bf16.mxu0 0
      %1992 = vmatpush1.bf16.msra.mxu0 %v1969
      %1993 = vmatprep.subr.bf16.mxu0 0
      %1994 = vmatpush1.bf16.msra.mxu0 %v1970
      %1995 = vmatprep.subr.bf16.mxu0 0
      %1996 = vmatpush1.bf16.msra.mxu0 0
      %1997 = vmatprep.subr.bf16.mxu0 0
      %1998 = vmatpush1.bf16.msra.mxu0 0
      %1999 = vmatprep.subr.bf16.mxu0 0
      %2000 = vmatpush1.bf16.msra.mxu0 0
      %2001 = vmatprep.subr.bf16.mxu0 0
      %2002 = vmatpush1.bf16.msra.mxu0 0
      %2003 = vmatprep.subr.bf16.mxu0 0
      %2004 = vmatpush1.bf16.msra.mxu0 0
      %2005 = vmatprep.subr.bf16.mxu0 0
      %2006 = vmatpush1.bf16.msra.mxu0 0
      %2007 = vmatprep.subr.bf16.mxu0 0
      %2008 = vmatpush1.bf16.msra.mxu0 0
      %2009 = vmatprep.subr.bf16.mxu0 0
      %2010 = vmatpush1.bf16.msra.mxu0 0
      %2011 = vmatprep.mubr.bf16.mxu0 0
      %2012 = vmatmul.mubr.bf16.gmra.mrb[0].mxu0 %v1903
      %v2013 = vpop.f32.mrb[0].mxu0
      %v2014 = vadd.f32 0.0, %v2013
      %v2015 = vpop.f32.mrb[0].mxu0
      %v2016 = vpop.f32.mrb[0].mxu0
      %v2017 = vadd.f32 0.0, %v2016
      %v2018 = vpop.f32.mrb[0].mxu0
      %2019 = vmatprep.mubr.bf16.mxu0 0
      %2020 = vmatmul.mubr.bf16.gmra.mrb[0].mxu0 %v1907
      %v2021 = vpop.f32.mrb[0].mxu0
      %v2022 = vadd.f32 0.0, %v2021
      %v2023 = vpop.f32.mrb[0].mxu0
      %v2024 = vpop.f32.mrb[0].mxu0
      %v2025 = vadd.f32 0.0, %v2024
      %v2026 = vpop.f32.mrb[0].mxu0
      %2027 = vmatprep.mubr.bf16.mxu0 0
      %2028 = vmatmul.mubr.bf16.gmra.mrb[0].mxu0 %v1911
      %v2029 = vpop.f32.mrb[0].mxu0
      %v2030 = vadd.f32 0.0, %v2029
      %v2031 = vpop.f32.mrb[0].mxu0
      %v2032 = vpop.f32.mrb[0].mxu0
      %v2033 = vadd.f32 0.0, %v2032
      %v2034 = vpop.f32.mrb[0].mxu0
      %2035 = vmatprep.mubr.bf16.mxu0 0
      %2036 = vmatmul.mubr.bf16.gmra.mrb[0].mxu0 %v1915
      %v2037 = vpop.f32.mrb[0].mxu0
      %v2038 = vadd.f32 0.0, %v2037
      %v2039 = vpop.f32.mrb[0].mxu0
      %v2040 = vpop.f32.mrb[0].mxu0
      %v2041 = vadd.f32 0.0, %v2040
      %v2042 = vpop.f32.mrb[0].mxu0
      %2043 = vmatprep.mubr.bf16.mxu0 0
      %2044 = vmatmul.mubr.bf16.gmra.mrb[0].mxu0 %v1919
      %v2045 = vpop.f32.mrb[0].mxu0
      %v2046 = vadd.f32 0.0, %v2045
      %v2047 = vpop.f32.mrb[0].mxu0
      %v2048 = vpop.f32.mrb[0].mxu0
      %v2049 = vadd.f32 0.0, %v2048
      %v2050 = vpop.f32.mrb[0].mxu0
      %2051 = vmatprep.mubr.bf16.mxu0 0
      %2052 = vmatmul.mubr.bf16.gmra.mrb[0].mxu0 %v1923
      %v2053 = vpop.f32.mrb[0].mxu0
      %v2054 = vadd.f32 0.0, %v2053
      %v2055 = vpop.f32.mrb[0].mxu0
      %v2056 = vpop.f32.mrb[0].mxu0
      %v2057 = vadd.f32 0.0, %v2056
      %v2058 = vpop.f32.mrb[0].mxu0
      %2059 = vmatprep.mubr.bf16.mxu0 0
      %2060 = vmatmul.mubr.bf16.gmra.mrb[0].mxu0 %v1920
      %v2061 = vpop.f32.mrb[0].mxu0
      %v2062 = vadd.f32 0.0, %v2061
      %v2063 = vpop.f32.mrb[0].mxu0
      %v2064 = vpop.f32.mrb[0].mxu0
      %v2065 = vpop.f32.mrb[0].mxu0
      %2066 = vdwg.mxu0
      %v2067 = vadd.f32 %v1826, %v2014
      %v2068 = vadd.f32 %v1829, %v2017
      %v2069 = vadd.f32 %v1834, %v2022
      %v2070 = vadd.f32 %v1837, %v2025
      %v2071 = vadd.f32 %v1842, %v2030
      %v2072 = vadd.f32 %v1845, %v2033
      %v2073 = vadd.f32 %v1850, %v2038
      %v2074 = vadd.f32 %v1853, %v2041
      %v2075 = vadd.f32 %v1858, %v2046
      %v2076 = vadd.f32 %v1861, %v2049
      %v2077 = vadd.f32 %v1866, %v2054
      %v2078 = vadd.f32 %v1869, %v2057
      %v2079 = vadd.f32 %v1874, %v2062
      %s2080 = scalar_lea.vmem %s3, 192
      %v2081 = vld [vmem:[%s2080] sm:$0xf]
      %v2082 = vld [vmem:[%s2080 + $0x4] sm:$0xf]
      %v2083 = vld [vmem:[%s2080 + $0x8] sm:$0xf]
      %v2084 = vld [vmem:[%s2080 + $0xc] sm:$0xf]
      %v2085 = vld [vmem:[%s2080 + $0x10] sm:$0xf]
      %v2086 = vld [vmem:[%s2080 + $0x14] sm:$0xf]
      %v2087 = vld [vmem:[%s2080 + $0x18] sm:$0xf]
      %v2088 = vld [vmem:[%s2080 + $0x1c] sm:$0xf]
      %v2089 = vld [vmem:[%s2080 + $0x20] sm:$0xf]
      %v2090 = vld [vmem:[%s2080 + $0x24] sm:$0xf]
      %v2091 = vld [vmem:[%s2080 + $0x28] sm:$0xf]
      %v2092 = vld [vmem:[%s2080 + $0x2c] sm:$0xf]
      %v2093 = vld [vmem:[%s2080 + $0x30] sm:$0xf]
      %v2094 = vld [vmem:[%s2080 + $0x34] sm:$0xf]
      %v2095 = vld [vmem:[%s2080 + $0x38] sm:$0xf]
      %v2096 = vld [vmem:[%s2080 + $0x3c] sm:$0xf]
      %vm2104 = vcmask 1041408
      %v2105 = vrot.slane %v1505, 6
      %v2106 = vrot.slane %v1506, 6
      %v2107 = vsel %vm2104, %v2105, %v2106
      %v2108 = vrot.slane %v1507, 6
      %v2109 = vsel %vm2104, %v2106, %v2108
      %v2110 = vrot.slane %v1508, 6
      %v2111 = vsel %vm2104, %v2108, %v2110
      %v2112 = vrot.slane %v1509, 6
      %v2113 = vsel %vm2104, %v2110, %v2112
      %v2114 = vrot.slane %v1510, 6
      %v2115 = vsel %vm2104, %v2112, %v2114
      %v2116 = vrot.slane %v1511, 6
      %v2117 = vsel %vm2104, %v2114, %v2116
      %v2141 = vunpack.c.l.b16 %v2081
      %v2142 = vunpack.c.l.b16 %v2082
      %v2143 = vunpack.c.l.b16 %v2083
      %v2144 = vunpack.c.l.b16 %v2084
      %v2145 = vunpack.c.l.b16 %v2085
      %v2146 = vunpack.c.l.b16 %v2086
      %v2147 = vunpack.c.l.b16 %v2087
      %v2148 = vunpack.c.l.b16 %v2088
      %v2149 = vunpack.c.l.b16 %v2089
      %v2150 = vunpack.c.l.b16 %v2090
      %v2151 = vunpack.c.l.b16 %v2091
      %v2152 = vunpack.c.l.b16 %v2092
      %v2153 = vunpack.c.l.b16 %v2093
      %v2154 = vunpack.c.l.b16 %v2094
      %v2155 = vunpack.c.l.b16 %v2095
      %v2156 = vunpack.c.l.b16 %v2096
      %v2157 = vpack.c.b16 %v2142, %v2141
      %v2158 = vpack.c.b16 %v2144, %v2143
      %v2159 = vpack.c.b16 %v2146, %v2145
      %v2160 = vpack.c.b16 %v2148, %v2147
      %v2161 = vpack.c.b16 %v2150, %v2149
      %v2162 = vpack.c.b16 %v2152, %v2151
      %v2163 = vpack.c.b16 %v2154, %v2153
      %v2164 = vpack.c.b16 %v2156, %v2155
      %2173 = vmatprep.subr.bf16.mxu0 0
      %2174 = vmatpush1.bf16.msra.mxu0 %v2157
      %2175 = vmatprep.subr.bf16.mxu0 0
      %2176 = vmatpush1.bf16.msra.mxu0 %v2158
      %2177 = vmatprep.subr.bf16.mxu0 0
      %2178 = vmatpush1.bf16.msra.mxu0 %v2159
      %2179 = vmatprep.subr.bf16.mxu0 0
      %2180 = vmatpush1.bf16.msra.mxu0 %v2160
      %2181 = vmatprep.subr.bf16.mxu0 0
      %2182 = vmatpush1.bf16.msra.mxu0 %v2161
      %2183 = vmatprep.subr.bf16.mxu0 0
      %2184 = vmatpush1.bf16.msra.mxu0 %v2162
      %2185 = vmatprep.subr.bf16.mxu0 0
      %2186 = vmatpush1.bf16.msra.mxu0 %v2163
      %2187 = vmatprep.subr.bf16.mxu0 0
      %2188 = vmatpush1.bf16.msra.mxu0 %v2164
      %2189 = vmatprep.subr.bf16.mxu0 0
      %2190 = vmatpush1.bf16.msra.mxu0 0
      %2191 = vmatprep.subr.bf16.mxu0 0
      %2192 = vmatpush1.bf16.msra.mxu0 0
      %2193 = vmatprep.subr.bf16.mxu0 0
      %2194 = vmatpush1.bf16.msra.mxu0 0
      %2195 = vmatprep.subr.bf16.mxu0 0
      %2196 = vmatpush1.bf16.msra.mxu0 0
      %2197 = vmatprep.subr.bf16.mxu0 0
      %2198 = vmatpush1.bf16.msra.mxu0 0
      %2199 = vmatprep.subr.bf16.mxu0 0
      %2200 = vmatpush1.bf16.msra.mxu0 0
      %2201 = vmatprep.subr.bf16.mxu0 0
      %2202 = vmatpush1.bf16.msra.mxu0 0
      %2203 = vmatprep.subr.bf16.mxu0 0
      %2204 = vmatpush1.bf16.msra.mxu0 0
      %2205 = vmatprep.mubr.bf16.mxu0 0
      %2206 = vmatmul.mubr.bf16.gmra.mrb[0].mxu0 %v2107
      %v2207 = vpop.f32.mrb[0].mxu0
      %v2208 = vadd.f32 0.0, %v2207
      %v2209 = vpop.f32.mrb[0].mxu0
      %v2210 = vpop.f32.mrb[0].mxu0
      %v2211 = vadd.f32 0.0, %v2210
      %v2212 = vpop.f32.mrb[0].mxu0
      %2213 = vmatprep.mubr.bf16.mxu0 0
      %2214 = vmatmul.mubr.bf16.gmra.mrb[0].mxu0 %v2109
      %v2215 = vpop.f32.mrb[0].mxu0
      %v2216 = vadd.f32 0.0, %v2215
      %v2217 = vpop.f32.mrb[0].mxu0
      %v2218 = vpop.f32.mrb[0].mxu0
      %v2219 = vadd.f32 0.0, %v2218
      %v2220 = vpop.f32.mrb[0].mxu0
      %2221 = vmatprep.mubr.bf16.mxu0 0
      %2222 = vmatmul.mubr.bf16.gmra.mrb[0].mxu0 %v2111
      %v2223 = vpop.f32.mrb[0].mxu0
      %v2224 = vadd.f32 0.0, %v2223
      %v2225 = vpop.f32.mrb[0].mxu0
      %v2226 = vpop.f32.mrb[0].mxu0
      %v2227 = vadd.f32 0.0, %v2226
      %v2228 = vpop.f32.mrb[0].mxu0
      %2229 = vmatprep.mubr.bf16.mxu0 0
      %2230 = vmatmul.mubr.bf16.gmra.mrb[0].mxu0 %v2113
      %v2231 = vpop.f32.mrb[0].mxu0
      %v2232 = vadd.f32 0.0, %v2231
      %v2233 = vpop.f32.mrb[0].mxu0
      %v2234 = vpop.f32.mrb[0].mxu0
      %v2235 = vadd.f32 0.0, %v2234
      %v2236 = vpop.f32.mrb[0].mxu0
      %2237 = vmatprep.mubr.bf16.mxu0 0
      %2238 = vmatmul.mubr.bf16.gmra.mrb[0].mxu0 %v2115
      %v2239 = vpop.f32.mrb[0].mxu0
      %v2240 = vadd.f32 0.0, %v2239
      %v2241 = vpop.f32.mrb[0].mxu0
      %v2242 = vpop.f32.mrb[0].mxu0
      %v2243 = vadd.f32 0.0, %v2242
      %v2244 = vpop.f32.mrb[0].mxu0
      %2245 = vmatprep.mubr.bf16.mxu0 0
      %2246 = vmatmul.mubr.bf16.gmra.mrb[0].mxu0 %v2117
      %v2247 = vpop.f32.mrb[0].mxu0
      %v2248 = vadd.f32 0.0, %v2247
      %v2249 = vpop.f32.mrb[0].mxu0
      %v2250 = vpop.f32.mrb[0].mxu0
      %v2251 = vadd.f32 0.0, %v2250
      %v2252 = vpop.f32.mrb[0].mxu0
      %2253 = vmatprep.mubr.bf16.mxu0 0
      %2254 = vmatmul.mubr.bf16.gmra.mrb[0].mxu0 %v2116
      %v2255 = vpop.f32.mrb[0].mxu0
      %v2256 = vadd.f32 0.0, %v2255
      %v2257 = vpop.f32.mrb[0].mxu0
      %v2258 = vpop.f32.mrb[0].mxu0
      %v2259 = vpop.f32.mrb[0].mxu0
      %2260 = vdwg.mxu0
      %v2261 = vadd.f32 %v2067, %v2208
      %v2262 = vadd.f32 %v2068, %v2211
      %v2263 = vadd.f32 %v2069, %v2216
      %v2264 = vadd.f32 %v2070, %v2219
      %v2265 = vadd.f32 %v2071, %v2224
      %v2266 = vadd.f32 %v2072, %v2227
      %v2267 = vadd.f32 %v2073, %v2232
      %v2268 = vadd.f32 %v2074, %v2235
      %v2269 = vadd.f32 %v2075, %v2240
      %v2270 = vadd.f32 %v2076, %v2243
      %v2271 = vadd.f32 %v2077, %v2248
      %v2272 = vadd.f32 %v2078, %v2251
      %v2273 = vadd.f32 %v2079, %v2256
      %v2274 = vld [vmem:[%s4] sm:$0x1]
      %v2276 = vlaneseq
      %v2277 = vshrl.u32 %v2276, 7
      %v2278 = vsub.s32 0, %v2277
      %v2279 = vrot.slane %v2274, %v2278
      %v2281 = vadd.f32 %v2261, %v2279
      %v2282 = vadd.f32 %v2262, %v2279
      %v2283 = vadd.f32 %v2263, %v2279
      %v2284 = vadd.f32 %v2264, %v2279
      %v2285 = vadd.f32 %v2265, %v2279
      %v2286 = vadd.f32 %v2266, %v2279
      %v2287 = vadd.f32 %v2267, %v2279
      %v2288 = vadd.f32 %v2268, %v2279
      %v2289 = vadd.f32 %v2269, %v2279
      %v2290 = vadd.f32 %v2270, %v2279
      %v2291 = vadd.f32 %v2271, %v2279
      %v2292 = vadd.f32 %v2272, %v2279
      %v2293 = vadd.f32 %v2273, %v2279
      %v2294 = vmax.f32 %v2281, 0.0
      %v2295 = vmax.f32 %v2282, 0.0
      %v2296 = vmax.f32 %v2283, 0.0
      %v2297 = vmax.f32 %v2284, 0.0
      %v2298 = vmax.f32 %v2285, 0.0
      %v2299 = vmax.f32 %v2286, 0.0
      %v2300 = vmax.f32 %v2287, 0.0
      %v2301 = vmax.f32 %v2288, 0.0
      %v2302 = vmax.f32 %v2289, 0.0
      %v2303 = vmax.f32 %v2290, 0.0
      %v2304 = vmax.f32 %v2291, 0.0
      %v2305 = vmax.f32 %v2292, 0.0
      %v2306 = vmax.f32 %v2293, 0.0
      %v2307 = vpack.c.bf16 %v2295, %v2294
      %v2308 = vpack.c.bf16 %v2297, %v2296
      %v2309 = vpack.c.bf16 %v2299, %v2298
      %v2310 = vpack.c.bf16 %v2301, %v2300
      %v2311 = vpack.c.bf16 %v2303, %v2302
      %v2312 = vpack.c.bf16 %v2305, %v2304
      %v2313 = vpack.c.bf16 %v2306, %v2306
      %v2314 = vld [vmem:[%s5] sm:$0xf]
      %v2315 = vld [vmem:[%s5 + $0x4] sm:$0xf]
      %v2316 = vld [vmem:[%s5 + $0x8] sm:$0xf]
      %v2317 = vld [vmem:[%s5 + $0xc] sm:$0xf]
      %v2318 = vld [vmem:[%s5 + $0x10] sm:$0xf]
      %v2319 = vld [vmem:[%s5 + $0x14] sm:$0xf]
      %v2320 = vld [vmem:[%s5 + $0x18] sm:$0xf]
      %v2321 = vld [vmem:[%s5 + $0x1c] sm:$0xf]
      %s2322 = scalar_lea.vmem %s5, 32
      %v2323 = vld [vmem:[%s2322] sm:$0xf]
      %v2324 = vld [vmem:[%s2322 + $0x4] sm:$0xf]
      %v2325 = vld [vmem:[%s2322 + $0x8] sm:$0xf]
      %v2326 = vld [vmem:[%s2322 + $0xc] sm:$0xf]
      %v2327 = vld [vmem:[%s2322 + $0x10] sm:$0xf]
      %v2328 = vld [vmem:[%s2322 + $0x14] sm:$0xf]
      %v2329 = vld [vmem:[%s2322 + $0x18] sm:$0xf]
      %v2330 = vld [vmem:[%s2322 + $0x1c] sm:$0xf]
      %v2332 = vshrl.u32 %v2307, 16
      %v2334 = vshll.u32 %v2307, 16
      %v2336 = vrot.slane %v2334, 1
      %v2337 = vor.u32 %v2332, %v2336
      %v2339 = vshll.u32 %v2308, 16
      %v2341 = vrot.slane %v2339, 1
      %v2342 = vsel %vm1545, %v2337, %v2341
      %v2343 = vshrl.u32 %v2308, 16
      %v2345 = vor.u32 %v2343, %v2341
      %v2347 = vshll.u32 %v2309, 16
      %v2349 = vrot.slane %v2347, 1
      %v2350 = vsel %vm1545, %v2345, %v2349
      %v2351 = vshrl.u32 %v2309, 16
      %v2353 = vor.u32 %v2351, %v2349
      %v2355 = vshll.u32 %v2310, 16
      %v2357 = vrot.slane %v2355, 1
      %v2358 = vsel %vm1545, %v2353, %v2357
      %v2359 = vshrl.u32 %v2310, 16
      %v2361 = vor.u32 %v2359, %v2357
      %v2363 = vshll.u32 %v2311, 16
      %v2365 = vrot.slane %v2363, 1
      %v2366 = vsel %vm1545, %v2361, %v2365
      %v2367 = vshrl.u32 %v2311, 16
      %v2369 = vor.u32 %v2367, %v2365
      %v2378 = vunpack.c.l.b16 %v2323
      %v2379 = vunpack.c.l.b16 %v2324
      %v2380 = vunpack.c.l.b16 %v2325
      %v2381 = vunpack.c.l.b16 %v2326
      %v2382 = vunpack.c.l.b16 %v2327
      %v2383 = vunpack.c.l.b16 %v2328
      %v2384 = vunpack.c.l.b16 %v2329
      %v2385 = vunpack.c.l.b16 %v2330
      %v2386 = vpack.c.b16 %v2379, %v2378
      %v2387 = vpack.c.b16 %v2381, %v2380
      %v2388 = vpack.c.b16 %v2383, %v2382
      %v2389 = vpack.c.b16 %v2385, %v2384
      %vm2394 = vcmask 523264
      %v2396 = vsel %vm2394, %v2342, 0
      %v2399 = vsel %vm2394, %v2350, 0
      %v2402 = vsel %vm2394, %v2358, 0
      %v2405 = vsel %vm2394, %v2366, 0
      %v2408 = vsel %vm2394, %v2369, 0
      %2410 = vmatprep.subr.bf16.mxu0 0
      %2411 = vmatpush1.bf16.msra.mxu0 %v2386
      %2412 = vmatprep.subr.bf16.mxu0 0
      %2413 = vmatpush1.bf16.msra.mxu0 %v2387
      %2414 = vmatprep.subr.bf16.mxu0 0
      %2415 = vmatpush1.bf16.msra.mxu0 %v2388
      %2416 = vmatprep.subr.bf16.mxu0 0
      %2417 = vmatpush1.bf16.msra.mxu0 %v2389
      %2418 = vmatprep.subr.bf16.mxu0 0
      %2419 = vmatpush1.bf16.msra.mxu0 0
      %2420 = vmatprep.subr.bf16.mxu0 0
      %2421 = vmatpush1.bf16.msra.mxu0 0
      %2422 = vmatprep.subr.bf16.mxu0 0
      %2423 = vmatpush1.bf16.msra.mxu0 0
      %2424 = vmatprep.subr.bf16.mxu0 0
      %2425 = vmatpush1.bf16.msra.mxu0 0
      %2426 = vmatprep.subr.bf16.mxu0 0
      %2427 = vmatpush1.bf16.msra.mxu0 0
      %2428 = vmatprep.subr.bf16.mxu0 0
      %2429 = vmatpush1.bf16.msra.mxu0 0
      %2430 = vmatprep.subr.bf16.mxu0 0
      %2431 = vmatpush1.bf16.msra.mxu0 0
      %2432 = vmatprep.subr.bf16.mxu0 0
      %2433 = vmatpush1.bf16.msra.mxu0 0
      %2434 = vmatprep.subr.bf16.mxu0 0
      %2435 = vmatpush1.bf16.msra.mxu0 0
      %2436 = vmatprep.subr.bf16.mxu0 0
      %2437 = vmatpush1.bf16.msra.mxu0 0
      %2438 = vmatprep.subr.bf16.mxu0 0
      %2439 = vmatpush1.bf16.msra.mxu0 0
      %2440 = vmatprep.subr.bf16.mxu0 0
      %2441 = vmatpush1.bf16.msra.mxu0 0
      %2442 = vmatprep.mubr.bf16.mxu0 0
      %2443 = vmatmul.mubr.bf16.gmra.mrb[0].mxu0 %v2396
      %v2444 = vpop.f32.mrb[0].mxu0
      %v2445 = vadd.f32 0.0, %v2444
      %v2446 = vpop.f32.mrb[0].mxu0
      %v2447 = vpop.f32.mrb[0].mxu0
      %v2448 = vadd.f32 0.0, %v2447
      %v2449 = vpop.f32.mrb[0].mxu0
      %2450 = vmatprep.mubr.bf16.mxu0 0
      %2451 = vmatmul.mubr.bf16.gmra.mrb[0].mxu0 %v2399
      %v2452 = vpop.f32.mrb[0].mxu0
      %v2453 = vadd.f32 0.0, %v2452
      %v2454 = vpop.f32.mrb[0].mxu0
      %v2455 = vpop.f32.mrb[0].mxu0
      %v2456 = vadd.f32 0.0, %v2455
      %v2457 = vpop.f32.mrb[0].mxu0
      %2458 = vmatprep.mubr.bf16.mxu0 0
      %2459 = vmatmul.mubr.bf16.gmra.mrb[0].mxu0 %v2402
      %v2460 = vpop.f32.mrb[0].mxu0
      %v2461 = vadd.f32 0.0, %v2460
      %v2462 = vpop.f32.mrb[0].mxu0
      %v2463 = vpop.f32.mrb[0].mxu0
      %v2464 = vadd.f32 0.0, %v2463
      %v2465 = vpop.f32.mrb[0].mxu0
      %2466 = vmatprep.mubr.bf16.mxu0 0
      %2467 = vmatmul.mubr.bf16.gmra.mrb[0].mxu0 %v2405
      %v2468 = vpop.f32.mrb[0].mxu0
      %v2469 = vadd.f32 0.0, %v2468
      %v2470 = vpop.f32.mrb[0].mxu0
      %v2471 = vpop.f32.mrb[0].mxu0
      %v2472 = vadd.f32 0.0, %v2471
      %v2473 = vpop.f32.mrb[0].mxu0
      %2474 = vmatprep.mubr.bf16.mxu0 0
      %2475 = vmatmul.mubr.bf16.gmra.mrb[0].mxu0 %v2408
      %v2476 = vpop.f32.mrb[0].mxu0
      %v2477 = vadd.f32 0.0, %v2476
      %v2478 = vpop.f32.mrb[0].mxu0
      %v2479 = vpop.f32.mrb[0].mxu0
      %v2480 = vadd.f32 0.0, %v2479
      %v2481 = vpop.f32.mrb[0].mxu0
      %2482 = vdwg.mxu0
      %v2491 = vunpack.c.l.b16 %v2314
      %v2492 = vunpack.c.l.b16 %v2315
      %v2493 = vunpack.c.l.b16 %v2316
      %v2494 = vunpack.c.l.b16 %v2317
      %v2495 = vunpack.c.l.b16 %v2318
      %v2496 = vunpack.c.l.b16 %v2319
      %v2497 = vunpack.c.l.b16 %v2320
      %v2498 = vunpack.c.l.b16 %v2321
      %v2499 = vpack.c.b16 %v2492, %v2491
      %v2500 = vpack.c.b16 %v2494, %v2493
      %v2501 = vpack.c.b16 %v2496, %v2495
      %v2502 = vpack.c.b16 %v2498, %v2497
      %v2507 = vsel %vm2394, %v2307, 0
      %v2509 = vsel %vm2394, %v2308, 0
      %v2511 = vsel %vm2394, %v2309, 0
      %v2513 = vsel %vm2394, %v2310, 0
      %v2515 = vsel %vm2394, %v2311, 0
      %2517 = vmatprep.subr.bf16.mxu0 0
      %2518 = vmatpush1.bf16.msra.mxu0 %v2499
      %2519 = vmatprep.subr.bf16.mxu0 0
      %2520 = vmatpush1.bf16.msra.mxu0 %v2500
      %2521 = vmatprep.subr.bf16.mxu0 0
      %2522 = vmatpush1.bf16.msra.mxu0 %v2501
      %2523 = vmatprep.subr.bf16.mxu0 0
      %2524 = vmatpush1.bf16.msra.mxu0 %v2502
      %2525 = vmatprep.subr.bf16.mxu0 0
      %2526 = vmatpush1.bf16.msra.mxu0 0
      %2527 = vmatprep.subr.bf16.mxu0 0
      %2528 = vmatpush1.bf16.msra.mxu0 0
      %2529 = vmatprep.subr.bf16.mxu0 0
      %2530 = vmatpush1.bf16.msra.mxu0 0
      %2531 = vmatprep.subr.bf16.mxu0 0
      %2532 = vmatpush1.bf16.msra.mxu0 0
      %2533 = vmatprep.subr.bf16.mxu0 0
      %2534 = vmatpush1.bf16.msra.mxu0 0
      %2535 = vmatprep.subr.bf16.mxu0 0
      %2536 = vmatpush1.bf16.msra.mxu0 0
      %2537 = vmatprep.subr.bf16.mxu0 0
      %2538 = vmatpush1.bf16.msra.mxu0 0
      %2539 = vmatprep.subr.bf16.mxu0 0
      %2540 = vmatpush1.bf16.msra.mxu0 0
      %2541 = vmatprep.subr.bf16.mxu0 0
      %2542 = vmatpush1.bf16.msra.mxu0 0
      %2543 = vmatprep.subr.bf16.mxu0 0
      %2544 = vmatpush1.bf16.msra.mxu0 0
      %2545 = vmatprep.subr.bf16.mxu0 0
      %2546 = vmatpush1.bf16.msra.mxu0 0
      %2547 = vmatprep.subr.bf16.mxu0 0
      %2548 = vmatpush1.bf16.msra.mxu0 0
      %2549 = vmatprep.mubr.bf16.mxu0 0
      %2550 = vmatmul.mubr.bf16.gmra.mrb[0].mxu0 %v2507
      %v2551 = vpop.f32.mrb[0].mxu0
      %v2552 = vadd.f32 %v2445, %v2551
      %v2553 = vpop.f32.mrb[0].mxu0
      %v2554 = vpop.f32.mrb[0].mxu0
      %v2555 = vadd.f32 %v2448, %v2554
      %v2556 = vpop.f32.mrb[0].mxu0
      %2557 = vmatprep.mubr.bf16.mxu0 0
      %2558 = vmatmul.mubr.bf16.gmra.mrb[0].mxu0 %v2509
      %v2559 = vpop.f32.mrb[0].mxu0
      %v2560 = vadd.f32 %v2453, %v2559
      %v2561 = vpop.f32.mrb[0].mxu0
      %v2562 = vpop.f32.mrb[0].mxu0
      %v2563 = vadd.f32 %v2456, %v2562
      %v2564 = vpop.f32.mrb[0].mxu0
      %2565 = vmatprep.mubr.bf16.mxu0 0
      %2566 = vmatmul.mubr.bf16.gmra.mrb[0].mxu0 %v2511
      %v2567 = vpop.f32.mrb[0].mxu0
      %v2568 = vadd.f32 %v2461, %v2567
      %v2569 = vpop.f32.mrb[0].mxu0
      %v2570 = vpop.f32.mrb[0].mxu0
      %v2571 = vadd.f32 %v2464, %v2570
      %v2572 = vpop.f32.mrb[0].mxu0
      %2573 = vmatprep.mubr.bf16.mxu0 0
      %2574 = vmatmul.mubr.bf16.gmra.mrb[0].mxu0 %v2513
      %v2575 = vpop.f32.mrb[0].mxu0
      %v2576 = vadd.f32 %v2469, %v2575
      %v2577 = vpop.f32.mrb[0].mxu0
      %v2578 = vpop.f32.mrb[0].mxu0
      %v2579 = vadd.f32 %v2472, %v2578
      %v2580 = vpop.f32.mrb[0].mxu0
      %2581 = vmatprep.mubr.bf16.mxu0 0
      %2582 = vmatmul.mubr.bf16.gmra.mrb[0].mxu0 %v2515
      %v2583 = vpop.f32.mrb[0].mxu0
      %v2584 = vadd.f32 %v2477, %v2583
      %v2585 = vpop.f32.mrb[0].mxu0
      %v2586 = vpop.f32.mrb[0].mxu0
      %v2587 = vadd.f32 %v2480, %v2586
      %v2588 = vpop.f32.mrb[0].mxu0
      %2589 = vdwg.mxu0
      %s2590 = scalar_lea.vmem %s5, 64
      %v2591 = vld [vmem:[%s2590] sm:$0xf]
      %v2592 = vld [vmem:[%s2590 + $0x4] sm:$0xf]
      %v2593 = vld [vmem:[%s2590 + $0x8] sm:$0xf]
      %v2594 = vld [vmem:[%s2590 + $0xc] sm:$0xf]
      %v2595 = vld [vmem:[%s2590 + $0x10] sm:$0xf]
      %v2596 = vld [vmem:[%s2590 + $0x14] sm:$0xf]
      %v2597 = vld [vmem:[%s2590 + $0x18] sm:$0xf]
      %v2598 = vld [vmem:[%s2590 + $0x1c] sm:$0xf]
      %vm2604 = vcmask 1046528
      %v2605 = vrot.slane %v2307, 1
      %v2606 = vrot.slane %v2308, 1
      %v2607 = vsel %vm2604, %v2605, %v2606
      %v2608 = vrot.slane %v2309, 1
      %v2609 = vsel %vm2604, %v2606, %v2608
      %v2610 = vrot.slane %v2310, 1
      %v2611 = vsel %vm2604, %v2608, %v2610
      %v2612 = vrot.slane %v2311, 1
      %v2613 = vsel %vm2604, %v2610, %v2612
      %v2622 = vunpack.c.l.b16 %v2591
      %v2623 = vunpack.c.l.b16 %v2592
      %v2624 = vunpack.c.l.b16 %v2593
      %v2625 = vunpack.c.l.b16 %v2594
      %v2626 = vunpack.c.l.b16 %v2595
      %v2627 = vunpack.c.l.b16 %v2596
      %v2628 = vunpack.c.l.b16 %v2597
      %v2629 = vunpack.c.l.b16 %v2598
      %v2630 = vpack.c.b16 %v2623, %v2622
      %v2631 = vpack.c.b16 %v2625, %v2624
      %v2632 = vpack.c.b16 %v2627, %v2626
      %v2633 = vpack.c.b16 %v2629, %v2628
      %v2639 = vsel %vm2394, %v2607, 0
      %v2642 = vsel %vm2394, %v2609, 0
      %v2645 = vsel %vm2394, %v2611, 0
      %v2648 = vsel %vm2394, %v2613, 0
      %v2651 = vsel %vm2394, %v2612, 0
      %2653 = vmatprep.subr.bf16.mxu0 0
      %2654 = vmatpush1.bf16.msra.mxu0 %v2630
      %2655 = vmatprep.subr.bf16.mxu0 0
      %2656 = vmatpush1.bf16.msra.mxu0 %v2631
      %2657 = vmatprep.subr.bf16.mxu0 0
      %2658 = vmatpush1.bf16.msra.mxu0 %v2632
      %2659 = vmatprep.subr.bf16.mxu0 0
      %2660 = vmatpush1.bf16.msra.mxu0 %v2633
      %2661 = vmatprep.subr.bf16.mxu0 0
      %2662 = vmatpush1.bf16.msra.mxu0 0
      %2663 = vmatprep.subr.bf16.mxu0 0
      %2664 = vmatpush1.bf16.msra.mxu0 0
      %2665 = vmatprep.subr.bf16.mxu0 0
      %2666 = vmatpush1.bf16.msra.mxu0 0
      %2667 = vmatprep.subr.bf16.mxu0 0
      %2668 = vmatpush1.bf16.msra.mxu0 0
      %2669 = vmatprep.subr.bf16.mxu0 0
      %2670 = vmatpush1.bf16.msra.mxu0 0
      %2671 = vmatprep.subr.bf16.mxu0 0
      %2672 = vmatpush1.bf16.msra.mxu0 0
      %2673 = vmatprep.subr.bf16.mxu0 0
      %2674 = vmatpush1.bf16.msra.mxu0 0
      %2675 = vmatprep.subr.bf16.mxu0 0
      %2676 = vmatpush1.bf16.msra.mxu0 0
      %2677 = vmatprep.subr.bf16.mxu0 0
      %2678 = vmatpush1.bf16.msra.mxu0 0
      %2679 = vmatprep.subr.bf16.mxu0 0
      %2680 = vmatpush1.bf16.msra.mxu0 0
      %2681 = vmatprep.subr.bf16.mxu0 0
      %2682 = vmatpush1.bf16.msra.mxu0 0
      %2683 = vmatprep.subr.bf16.mxu0 0
      %2684 = vmatpush1.bf16.msra.mxu0 0
      %2685 = vmatprep.mubr.bf16.mxu0 0
      %2686 = vmatmul.mubr.bf16.gmra.mrb[0].mxu0 %v2639
      %v2687 = vpop.f32.mrb[0].mxu0
      %v2688 = vadd.f32 0.0, %v2687
      %v2689 = vpop.f32.mrb[0].mxu0
      %v2690 = vpop.f32.mrb[0].mxu0
      %v2691 = vadd.f32 0.0, %v2690
      %v2692 = vpop.f32.mrb[0].mxu0
      %2693 = vmatprep.mubr.bf16.mxu0 0
      %2694 = vmatmul.mubr.bf16.gmra.mrb[0].mxu0 %v2642
      %v2695 = vpop.f32.mrb[0].mxu0
      %v2696 = vadd.f32 0.0, %v2695
      %v2697 = vpop.f32.mrb[0].mxu0
      %v2698 = vpop.f32.mrb[0].mxu0
      %v2699 = vadd.f32 0.0, %v2698
      %v2700 = vpop.f32.mrb[0].mxu0
      %2701 = vmatprep.mubr.bf16.mxu0 0
      %2702 = vmatmul.mubr.bf16.gmra.mrb[0].mxu0 %v2645
      %v2703 = vpop.f32.mrb[0].mxu0
      %v2704 = vadd.f32 0.0, %v2703
      %v2705 = vpop.f32.mrb[0].mxu0
      %v2706 = vpop.f32.mrb[0].mxu0
      %v2707 = vadd.f32 0.0, %v2706
      %v2708 = vpop.f32.mrb[0].mxu0
      %2709 = vmatprep.mubr.bf16.mxu0 0
      %2710 = vmatmul.mubr.bf16.gmra.mrb[0].mxu0 %v2648
      %v2711 = vpop.f32.mrb[0].mxu0
      %v2712 = vadd.f32 0.0, %v2711
      %v2713 = vpop.f32.mrb[0].mxu0
      %v2714 = vpop.f32.mrb[0].mxu0
      %v2715 = vadd.f32 0.0, %v2714
      %v2716 = vpop.f32.mrb[0].mxu0
      %2717 = vmatprep.mubr.bf16.mxu0 0
      %2718 = vmatmul.mubr.bf16.gmra.mrb[0].mxu0 %v2651
      %v2719 = vpop.f32.mrb[0].mxu0
      %v2720 = vadd.f32 0.0, %v2719
      %v2721 = vpop.f32.mrb[0].mxu0
      %v2722 = vpop.f32.mrb[0].mxu0
      %v2723 = vadd.f32 0.0, %v2722
      %v2724 = vpop.f32.mrb[0].mxu0
      %2725 = vdwg.mxu0
      %v2726 = vadd.f32 %v2552, %v2688
      %v2727 = vadd.f32 %v2555, %v2691
      %v2728 = vadd.f32 %v2560, %v2696
      %v2729 = vadd.f32 %v2563, %v2699
      %v2730 = vadd.f32 %v2568, %v2704
      %v2731 = vadd.f32 %v2571, %v2707
      %v2732 = vadd.f32 %v2576, %v2712
      %v2733 = vadd.f32 %v2579, %v2715
      %v2734 = vadd.f32 %v2584, %v2720
      %v2735 = vadd.f32 %v2587, %v2723
      %s2736 = scalar_lea.vmem %s5, 96
      %v2737 = vld [vmem:[%s2736] sm:$0xf]
      %v2738 = vld [vmem:[%s2736 + $0x4] sm:$0xf]
      %v2739 = vld [vmem:[%s2736 + $0x8] sm:$0xf]
      %v2740 = vld [vmem:[%s2736 + $0xc] sm:$0xf]
      %v2741 = vld [vmem:[%s2736 + $0x10] sm:$0xf]
      %v2742 = vld [vmem:[%s2736 + $0x14] sm:$0xf]
      %v2743 = vld [vmem:[%s2736 + $0x18] sm:$0xf]
      %v2744 = vld [vmem:[%s2736 + $0x1c] sm:$0xf]
      %v2745 = vrot.slane %v2332, 5
      %v2746 = vrot.slane %v2334, 6
      %v2747 = vor.u32 %v2745, %v2746
      %v2748 = vrot.slane %v2343, 5
      %v2749 = vrot.slane %v2339, 6
      %v2750 = vor.u32 %v2748, %v2749
      %v2751 = vsel %vm1896, %v2747, %v2750
      %v2752 = vrot.slane %v2351, 5
      %v2753 = vrot.slane %v2347, 6
      %v2754 = vor.u32 %v2752, %v2753
      %v2755 = vsel %vm1896, %v2750, %v2754
      %v2756 = vrot.slane %v2359, 5
      %v2757 = vrot.slane %v2355, 6
      %v2758 = vor.u32 %v2756, %v2757
      %v2759 = vsel %vm1896, %v2754, %v2758
      %v2760 = vrot.slane %v2367, 5
      %v2761 = vrot.slane %v2363, 6
      %v2762 = vor.u32 %v2760, %v2761
      %v2763 = vsel %vm1896, %v2758, %v2762
      %v2765 = vshrl.u32 %v2312, 16
      %v2767 = vrot.slane %v2765, 5
      %v2768 = vshll.u32 %v2312, 16
      %v2770 = vrot.slane %v2768, 6
      %v2771 = vor.u32 %v2767, %v2770
      %v2772 = vsel %vm1896, %v2762, %v2771
      %v2781 = vunpack.c.l.b16 %v2737
      %v2782 = vunpack.c.l.b16 %v2738
      %v2783 = vunpack.c.l.b16 %v2739
      %v2784 = vunpack.c.l.b16 %v2740
      %v2785 = vunpack.c.l.b16 %v2741
      %v2786 = vunpack.c.l.b16 %v2742
      %v2787 = vunpack.c.l.b16 %v2743
      %v2788 = vunpack.c.l.b16 %v2744
      %v2789 = vpack.c.b16 %v2782, %v2781
      %v2790 = vpack.c.b16 %v2784, %v2783
      %v2791 = vpack.c.b16 %v2786, %v2785
      %v2792 = vpack.c.b16 %v2788, %v2787
      %v2798 = vsel %vm2394, %v2751, 0
      %v2801 = vsel %vm2394, %v2755, 0
      %v2804 = vsel %vm2394, %v2759, 0
      %v2807 = vsel %vm2394, %v2763, 0
      %v2810 = vsel %vm2394, %v2772, 0
      %2812 = vmatprep.subr.bf16.mxu0 0
      %2813 = vmatpush1.bf16.msra.mxu0 %v2789
      %2814 = vmatprep.subr.bf16.mxu0 0
      %2815 = vmatpush1.bf16.msra.mxu0 %v2790
      %2816 = vmatprep.subr.bf16.mxu0 0
      %2817 = vmatpush1.bf16.msra.mxu0 %v2791
      %2818 = vmatprep.subr.bf16.mxu0 0
      %2819 = vmatpush1.bf16.msra.mxu0 %v2792
      %2820 = vmatprep.subr.bf16.mxu0 0
      %2821 = vmatpush1.bf16.msra.mxu0 0
      %2822 = vmatprep.subr.bf16.mxu0 0
      %2823 = vmatpush1.bf16.msra.mxu0 0
      %2824 = vmatprep.subr.bf16.mxu0 0
      %2825 = vmatpush1.bf16.msra.mxu0 0
      %2826 = vmatprep.subr.bf16.mxu0 0
      %2827 = vmatpush1.bf16.msra.mxu0 0
      %2828 = vmatprep.subr.bf16.mxu0 0
      %2829 = vmatpush1.bf16.msra.mxu0 0
      %2830 = vmatprep.subr.bf16.mxu0 0
      %2831 = vmatpush1.bf16.msra.mxu0 0
      %2832 = vmatprep.subr.bf16.mxu0 0
      %2833 = vmatpush1.bf16.msra.mxu0 0
      %2834 = vmatprep.subr.bf16.mxu0 0
      %2835 = vmatpush1.bf16.msra.mxu0 0
      %2836 = vmatprep.subr.bf16.mxu0 0
      %2837 = vmatpush1.bf16.msra.mxu0 0
      %2838 = vmatprep.subr.bf16.mxu0 0
      %2839 = vmatpush1.bf16.msra.mxu0 0
      %2840 = vmatprep.subr.bf16.mxu0 0
      %2841 = vmatpush1.bf16.msra.mxu0 0
      %2842 = vmatprep.subr.bf16.mxu0 0
      %2843 = vmatpush1.bf16.msra.mxu0 0
      %2844 = vmatprep.mubr.bf16.mxu0 0
      %2845 = vmatmul.mubr.bf16.gmra.mrb[0].mxu0 %v2798
      %v2846 = vpop.f32.mrb[0].mxu0
      %v2847 = vadd.f32 0.0, %v2846
      %v2848 = vpop.f32.mrb[0].mxu0
      %v2849 = vpop.f32.mrb[0].mxu0
      %v2850 = vadd.f32 0.0, %v2849
      %v2851 = vpop.f32.mrb[0].mxu0
      %2852 = vmatprep.mubr.bf16.mxu0 0
      %2853 = vmatmul.mubr.bf16.gmra.mrb[0].mxu0 %v2801
      %v2854 = vpop.f32.mrb[0].mxu0
      %v2855 = vadd.f32 0.0, %v2854
      %v2856 = vpop.f32.mrb[0].mxu0
      %v2857 = vpop.f32.mrb[0].mxu0
      %v2858 = vadd.f32 0.0, %v2857
      %v2859 = vpop.f32.mrb[0].mxu0
      %2860 = vmatprep.mubr.bf16.mxu0 0
      %2861 = vmatmul.mubr.bf16.gmra.mrb[0].mxu0 %v2804
      %v2862 = vpop.f32.mrb[0].mxu0
      %v2863 = vadd.f32 0.0, %v2862
      %v2864 = vpop.f32.mrb[0].mxu0
      %v2865 = vpop.f32.mrb[0].mxu0
      %v2866 = vadd.f32 0.0, %v2865
      %v2867 = vpop.f32.mrb[0].mxu0
      %2868 = vmatprep.mubr.bf16.mxu0 0
      %2869 = vmatmul.mubr.bf16.gmra.mrb[0].mxu0 %v2807
      %v2870 = vpop.f32.mrb[0].mxu0
      %v2871 = vadd.f32 0.0, %v2870
      %v2872 = vpop.f32.mrb[0].mxu0
      %v2873 = vpop.f32.mrb[0].mxu0
      %v2874 = vadd.f32 0.0, %v2873
      %v2875 = vpop.f32.mrb[0].mxu0
      %2876 = vmatprep.mubr.bf16.mxu0 0
      %2877 = vmatmul.mubr.bf16.gmra.mrb[0].mxu0 %v2810
      %v2878 = vpop.f32.mrb[0].mxu0
      %v2879 = vadd.f32 0.0, %v2878
      %v2880 = vpop.f32.mrb[0].mxu0
      %v2881 = vpop.f32.mrb[0].mxu0
      %v2882 = vadd.f32 0.0, %v2881
      %v2883 = vpop.f32.mrb[0].mxu0
      %2884 = vdwg.mxu0
      %v2885 = vadd.f32 %v2726, %v2847
      %v2886 = vadd.f32 %v2727, %v2850
      %v2887 = vadd.f32 %v2728, %v2855
      %v2888 = vadd.f32 %v2729, %v2858
      %v2889 = vadd.f32 %v2730, %v2863
      %v2890 = vadd.f32 %v2731, %v2866
      %v2891 = vadd.f32 %v2732, %v2871
      %v2892 = vadd.f32 %v2733, %v2874
      %v2893 = vadd.f32 %v2734, %v2879
      %v2894 = vadd.f32 %v2735, %v2882
      %s2895 = scalar_lea.vmem %s5, 128
      %v2896 = vld [vmem:[%s2895] sm:$0xf]
      %v2897 = vld [vmem:[%s2895 + $0x4] sm:$0xf]
      %v2898 = vld [vmem:[%s2895 + $0x8] sm:$0xf]
      %v2899 = vld [vmem:[%s2895 + $0xc] sm:$0xf]
      %v2900 = vld [vmem:[%s2895 + $0x10] sm:$0xf]
      %v2901 = vld [vmem:[%s2895 + $0x14] sm:$0xf]
      %v2902 = vld [vmem:[%s2895 + $0x18] sm:$0xf]
      %v2903 = vld [vmem:[%s2895 + $0x1c] sm:$0xf]
      %v2905 = vrot.slane %v2307, 6
      %v2906 = vrot.slane %v2308, 6
      %v2907 = vsel %vm2104, %v2905, %v2906
      %v2908 = vrot.slane %v2309, 6
      %v2909 = vsel %vm2104, %v2906, %v2908
      %v2910 = vrot.slane %v2310, 6
      %v2911 = vsel %vm2104, %v2908, %v2910
      %v2912 = vrot.slane %v2311, 6
      %v2913 = vsel %vm2104, %v2910, %v2912
      %v2914 = vrot.slane %v2312, 6
      %v2915 = vsel %vm2104, %v2912, %v2914
      %v2924 = vunpack.c.l.b16 %v2896
      %v2925 = vunpack.c.l.b16 %v2897
      %v2926 = vunpack.c.l.b16 %v2898
      %v2927 = vunpack.c.l.b16 %v2899
      %v2928 = vunpack.c.l.b16 %v2900
      %v2929 = vunpack.c.l.b16 %v2901
      %v2930 = vunpack.c.l.b16 %v2902
      %v2931 = vunpack.c.l.b16 %v2903
      %v2932 = vpack.c.b16 %v2925, %v2924
      %v2933 = vpack.c.b16 %v2927, %v2926
      %v2934 = vpack.c.b16 %v2929, %v2928
      %v2935 = vpack.c.b16 %v2931, %v2930
      %v2941 = vsel %vm2394, %v2907, 0
      %v2944 = vsel %vm2394, %v2909, 0
      %v2947 = vsel %vm2394, %v2911, 0
      %v2950 = vsel %vm2394, %v2913, 0
      %v2953 = vsel %vm2394, %v2915, 0
      %2955 = vmatprep.subr.bf16.mxu0 0
      %2956 = vmatpush1.bf16.msra.mxu0 %v2932
      %2957 = vmatprep.subr.bf16.mxu0 0
      %2958 = vmatpush1.bf16.msra.mxu0 %v2933
      %2959 = vmatprep.subr.bf16.mxu0 0
      %2960 = vmatpush1.bf16.msra.mxu0 %v2934
      %2961 = vmatprep.subr.bf16.mxu0 0
      %2962 = vmatpush1.bf16.msra.mxu0 %v2935
      %2963 = vmatprep.subr.bf16.mxu0 0
      %2964 = vmatpush1.bf16.msra.mxu0 0
      %2965 = vmatprep.subr.bf16.mxu0 0
      %2966 = vmatpush1.bf16.msra.mxu0 0
      %2967 = vmatprep.subr.bf16.mxu0 0
      %2968 = vmatpush1.bf16.msra.mxu0 0
      %2969 = vmatprep.subr.bf16.mxu0 0
      %2970 = vmatpush1.bf16.msra.mxu0 0
      %2971 = vmatprep.subr.bf16.mxu0 0
      %2972 = vmatpush1.bf16.msra.mxu0 0
      %2973 = vmatprep.subr.bf16.mxu0 0
      %2974 = vmatpush1.bf16.msra.mxu0 0
      %2975 = vmatprep.subr.bf16.mxu0 0
      %2976 = vmatpush1.bf16.msra.mxu0 0
      %2977 = vmatprep.subr.bf16.mxu0 0
      %2978 = vmatpush1.bf16.msra.mxu0 0
      %2979 = vmatprep.subr.bf16.mxu0 0
      %2980 = vmatpush1.bf16.msra.mxu0 0
      %2981 = vmatprep.subr.bf16.mxu0 0
      %2982 = vmatpush1.bf16.msra.mxu0 0
      %2983 = vmatprep.subr.bf16.mxu0 0
      %2984 = vmatpush1.bf16.msra.mxu0 0
      %2985 = vmatprep.subr.bf16.mxu0 0
      %2986 = vmatpush1.bf16.msra.mxu0 0
      %2987 = vmatprep.mubr.bf16.mxu0 0
      %2988 = vmatmul.mubr.bf16.gmra.mrb[0].mxu0 %v2941
      %v2989 = vpop.f32.mrb[0].mxu0
      %v2990 = vadd.f32 0.0, %v2989
      %v2991 = vpop.f32.mrb[0].mxu0
      %v2992 = vpop.f32.mrb[0].mxu0
      %v2993 = vadd.f32 0.0, %v2992
      %v2994 = vpop.f32.mrb[0].mxu0
      %2995 = vmatprep.mubr.bf16.mxu0 0
      %2996 = vmatmul.mubr.bf16.gmra.mrb[0].mxu0 %v2944
      %v2997 = vpop.f32.mrb[0].mxu0
      %v2998 = vadd.f32 0.0, %v2997
      %v2999 = vpop.f32.mrb[0].mxu0
      %v3000 = vpop.f32.mrb[0].mxu0
      %v3001 = vadd.f32 0.0, %v3000
      %v3002 = vpop.f32.mrb[0].mxu0
      %3003 = vmatprep.mubr.bf16.mxu0 0
      %3004 = vmatmul.mubr.bf16.gmra.mrb[0].mxu0 %v2947
      %v3005 = vpop.f32.mrb[0].mxu0
      %v3006 = vadd.f32 0.0, %v3005
      %v3007 = vpop.f32.mrb[0].mxu0
      %v3008 = vpop.f32.mrb[0].mxu0
      %v3009 = vadd.f32 0.0, %v3008
      %v3010 = vpop.f32.mrb[0].mxu0
      %3011 = vmatprep.mubr.bf16.mxu0 0
      %3012 = vmatmul.mubr.bf16.gmra.mrb[0].mxu0 %v2950
      %v3013 = vpop.f32.mrb[0].mxu0
      %v3014 = vadd.f32 0.0, %v3013
      %v3015 = vpop.f32.mrb[0].mxu0
      %v3016 = vpop.f32.mrb[0].mxu0
      %v3017 = vadd.f32 0.0, %v3016
      %v3018 = vpop.f32.mrb[0].mxu0
      %3019 = vmatprep.mubr.bf16.mxu0 0
      %3020 = vmatmul.mubr.bf16.gmra.mrb[0].mxu0 %v2953
      %v3021 = vpop.f32.mrb[0].mxu0
      %v3022 = vadd.f32 0.0, %v3021
      %v3023 = vpop.f32.mrb[0].mxu0
      %v3024 = vpop.f32.mrb[0].mxu0
      %v3025 = vadd.f32 0.0, %v3024
      %v3026 = vpop.f32.mrb[0].mxu0
      %3027 = vdwg.mxu0
      %v3028 = vadd.f32 %v2885, %v2990
      %v3029 = vadd.f32 %v2886, %v2993
      %v3030 = vadd.f32 %v2887, %v2998
      %v3031 = vadd.f32 %v2888, %v3001
      %v3032 = vadd.f32 %v2889, %v3006
      %v3033 = vadd.f32 %v2890, %v3009
      %v3034 = vadd.f32 %v2891, %v3014
      %v3035 = vadd.f32 %v2892, %v3017
      %v3036 = vadd.f32 %v2893, %v3022
      %v3037 = vadd.f32 %v2894, %v3025
      %s3038 = scalar_lea.vmem %s5, 160
      %v3039 = vld [vmem:[%s3038] sm:$0xf]
      %v3040 = vld [vmem:[%s3038 + $0x4] sm:$0xf]
      %v3041 = vld [vmem:[%s3038 + $0x8] sm:$0xf]
      %v3042 = vld [vmem:[%s3038 + $0xc] sm:$0xf]
      %v3043 = vld [vmem:[%s3038 + $0x10] sm:$0xf]
      %v3044 = vld [vmem:[%s3038 + $0x14] sm:$0xf]
      %v3045 = vld [vmem:[%s3038 + $0x18] sm:$0xf]
      %v3046 = vld [vmem:[%s3038 + $0x1c] sm:$0xf]
      %vm3047 = vsmask.f32 1280
      %v3048 = vrot.slane %v2332, 6
      %v3049 = vrot.slane %v2334, 7
      %v3050 = vor.u32 %v3048, %v3049
      %v3051 = vrot.slane %v2343, 6
      %v3052 = vrot.slane %v2339, 7
      %v3053 = vor.u32 %v3051, %v3052
      %v3054 = vsel %vm3047, %v3050, %v3053
      %v3055 = vrot.slane %v2351, 6
      %v3056 = vrot.slane %v2347, 7
      %v3057 = vor.u32 %v3055, %v3056
      %v3058 = vsel %vm3047, %v3053, %v3057
      %v3059 = vrot.slane %v2359, 6
      %v3060 = vrot.slane %v2355, 7
      %v3061 = vor.u32 %v3059, %v3060
      %v3062 = vsel %vm3047, %v3057, %v3061
      %v3063 = vrot.slane %v2367, 6
      %v3064 = vrot.slane %v2363, 7
      %v3065 = vor.u32 %v3063, %v3064
      %v3066 = vsel %vm3047, %v3061, %v3065
      %v3067 = vrot.slane %v2765, 6
      %v3068 = vrot.slane %v2768, 7
      %v3069 = vor.u32 %v3067, %v3068
      %v3070 = vsel %vm3047, %v3065, %v3069
      %v3079 = vunpack.c.l.b16 %v3039
      %v3080 = vunpack.c.l.b16 %v3040
      %v3081 = vunpack.c.l.b16 %v3041
      %v3082 = vunpack.c.l.b16 %v3042
      %v3083 = vunpack.c.l.b16 %v3043
      %v3084 = vunpack.c.l.b16 %v3044
      %v3085 = vunpack.c.l.b16 %v3045
      %v3086 = vunpack.c.l.b16 %v3046
      %v3087 = vpack.c.b16 %v3080, %v3079
      %v3088 = vpack.c.b16 %v3082, %v3081
      %v3089 = vpack.c.b16 %v3084, %v3083
      %v3090 = vpack.c.b16 %v3086, %v3085
      %v3096 = vsel %vm2394, %v3054, 0
      %v3099 = vsel %vm2394, %v3058, 0
      %v3102 = vsel %vm2394, %v3062, 0
      %v3105 = vsel %vm2394, %v3066, 0
      %v3108 = vsel %vm2394, %v3070, 0
      %3110 = vmatprep.subr.bf16.mxu0 0
      %3111 = vmatpush1.bf16.msra.mxu0 %v3087
      %3112 = vmatprep.subr.bf16.mxu0 0
      %3113 = vmatpush1.bf16.msra.mxu0 %v3088
      %3114 = vmatprep.subr.bf16.mxu0 0
      %3115 = vmatpush1.bf16.msra.mxu0 %v3089
      %3116 = vmatprep.subr.bf16.mxu0 0
      %3117 = vmatpush1.bf16.msra.mxu0 %v3090
      %3118 = vmatprep.subr.bf16.mxu0 0
      %3119 = vmatpush1.bf16.msra.mxu0 0
      %3120 = vmatprep.subr.bf16.mxu0 0
      %3121 = vmatpush1.bf16.msra.mxu0 0
      %3122 = vmatprep.subr.bf16.mxu0 0
      %3123 = vmatpush1.bf16.msra.mxu0 0
      %3124 = vmatprep.subr.bf16.mxu0 0
      %3125 = vmatpush1.bf16.msra.mxu0 0
      %3126 = vmatprep.subr.bf16.mxu0 0
      %3127 = vmatpush1.bf16.msra.mxu0 0
      %3128 = vmatprep.subr.bf16.mxu0 0
      %3129 = vmatpush1.bf16.msra.mxu0 0
      %3130 = vmatprep.subr.bf16.mxu0 0
      %3131 = vmatpush1.bf16.msra.mxu0 0
      %3132 = vmatprep.subr.bf16.mxu0 0
      %3133 = vmatpush1.bf16.msra.mxu0 0
      %3134 = vmatprep.subr.bf16.mxu0 0
      %3135 = vmatpush1.bf16.msra.mxu0 0
      %3136 = vmatprep.subr.bf16.mxu0 0
      %3137 = vmatpush1.bf16.msra.mxu0 0
      %3138 = vmatprep.subr.bf16.mxu0 0
      %3139 = vmatpush1.bf16.msra.mxu0 0
      %3140 = vmatprep.subr.bf16.mxu0 0
      %3141 = vmatpush1.bf16.msra.mxu0 0
      %3142 = vmatprep.mubr.bf16.mxu0 0
      %3143 = vmatmul.mubr.bf16.gmra.mrb[0].mxu0 %v3096
      %v3144 = vpop.f32.mrb[0].mxu0
      %v3145 = vadd.f32 0.0, %v3144
      %v3146 = vpop.f32.mrb[0].mxu0
      %v3147 = vpop.f32.mrb[0].mxu0
      %v3148 = vadd.f32 0.0, %v3147
      %v3149 = vpop.f32.mrb[0].mxu0
      %3150 = vmatprep.mubr.bf16.mxu0 0
      %3151 = vmatmul.mubr.bf16.gmra.mrb[0].mxu0 %v3099
      %v3152 = vpop.f32.mrb[0].mxu0
      %v3153 = vadd.f32 0.0, %v3152
      %v3154 = vpop.f32.mrb[0].mxu0
      %v3155 = vpop.f32.mrb[0].mxu0
      %v3156 = vadd.f32 0.0, %v3155
      %v3157 = vpop.f32.mrb[0].mxu0
      %3158 = vmatprep.mubr.bf16.mxu0 0
      %3159 = vmatmul.mubr.bf16.gmra.mrb[0].mxu0 %v3102
      %v3160 = vpop.f32.mrb[0].mxu0
      %v3161 = vadd.f32 0.0, %v3160
      %v3162 = vpop.f32.mrb[0].mxu0
      %v3163 = vpop.f32.mrb[0].mxu0
      %v3164 = vadd.f32 0.0, %v3163
      %v3165 = vpop.f32.mrb[0].mxu0
      %3166 = vmatprep.mubr.bf16.mxu0 0
      %3167 = vmatmul.mubr.bf16.gmra.mrb[0].mxu0 %v3105
      %v3168 = vpop.f32.mrb[0].mxu0
      %v3169 = vadd.f32 0.0, %v3168
      %v3170 = vpop.f32.mrb[0].mxu0
      %v3171 = vpop.f32.mrb[0].mxu0
      %v3172 = vadd.f32 0.0, %v3171
      %v3173 = vpop.f32.mrb[0].mxu0
      %3174 = vmatprep.mubr.bf16.mxu0 0
      %3175 = vmatmul.mubr.bf16.gmra.mrb[0].mxu0 %v3108
      %v3176 = vpop.f32.mrb[0].mxu0
      %v3177 = vadd.f32 0.0, %v3176
      %v3178 = vpop.f32.mrb[0].mxu0
      %v3179 = vpop.f32.mrb[0].mxu0
      %v3180 = vadd.f32 0.0, %v3179
      %v3181 = vpop.f32.mrb[0].mxu0
      %3182 = vdwg.mxu0
      %v3183 = vadd.f32 %v3028, %v3145
      %v3184 = vadd.f32 %v3029, %v3148
      %v3185 = vadd.f32 %v3030, %v3153
      %v3186 = vadd.f32 %v3031, %v3156
      %v3187 = vadd.f32 %v3032, %v3161
      %v3188 = vadd.f32 %v3033, %v3164
      %v3189 = vadd.f32 %v3034, %v3169
      %v3190 = vadd.f32 %v3035, %v3172
      %v3191 = vadd.f32 %v3036, %v3177
      %v3192 = vadd.f32 %v3037, %v3180
      %s3193 = scalar_lea.vmem %s5, 192
      %v3194 = vld [vmem:[%s3193] sm:$0xf]
      %v3195 = vld [vmem:[%s3193 + $0x4] sm:$0xf]
      %v3196 = vld [vmem:[%s3193 + $0x8] sm:$0xf]
      %v3197 = vld [vmem:[%s3193 + $0xc] sm:$0xf]
      %v3198 = vld [vmem:[%s3193 + $0x10] sm:$0xf]
      %v3199 = vld [vmem:[%s3193 + $0x14] sm:$0xf]
      %v3200 = vld [vmem:[%s3193 + $0x18] sm:$0xf]
      %v3201 = vld [vmem:[%s3193 + $0x1c] sm:$0xf]
      %vm3202 = vcmask 1044480
      %v3203 = vrot.slane %v2308, 3
      %v3204 = vrot.slane %v2309, 3
      %v3205 = vsel %vm3202, %v3203, %v3204
      %v3206 = vrot.slane %v2310, 3
      %v3207 = vsel %vm3202, %v3204, %v3206
      %v3208 = vrot.slane %v2311, 3
      %v3209 = vsel %vm3202, %v3206, %v3208
      %v3210 = vrot.slane %v2312, 3
      %v3211 = vsel %vm3202, %v3208, %v3210
      %v3220 = vunpack.c.l.b16 %v3194
      %v3221 = vunpack.c.l.b16 %v3195
      %v3222 = vunpack.c.l.b16 %v3196
      %v3223 = vunpack.c.l.b16 %v3197
      %v3224 = vunpack.c.l.b16 %v3198
      %v3225 = vunpack.c.l.b16 %v3199
      %v3226 = vunpack.c.l.b16 %v3200
      %v3227 = vunpack.c.l.b16 %v3201
      %v3228 = vpack.c.b16 %v3221, %v3220
      %v3229 = vpack.c.b16 %v3223, %v3222
      %v3230 = vpack.c.b16 %v3225, %v3224
      %v3231 = vpack.c.b16 %v3227, %v3226
      %v3237 = vsel %vm2394, %v3205, 0
      %v3240 = vsel %vm2394, %v3207, 0
      %v3243 = vsel %vm2394, %v3209, 0
      %v3246 = vsel %vm2394, %v3211, 0
      %v3249 = vsel %vm2394, %v3210, 0
      %3251 = vmatprep.subr.bf16.mxu0 0
      %3252 = vmatpush1.bf16.msra.mxu0 %v3228
      %3253 = vmatprep.subr.bf16.mxu0 0
      %3254 = vmatpush1.bf16.msra.mxu0 %v3229
      %3255 = vmatprep.subr.bf16.mxu0 0
      %3256 = vmatpush1.bf16.msra.mxu0 %v3230
      %3257 = vmatprep.subr.bf16.mxu0 0
      %3258 = vmatpush1.bf16.msra.mxu0 %v3231
      %3259 = vmatprep.subr.bf16.mxu0 0
      %3260 = vmatpush1.bf16.msra.mxu0 0
      %3261 = vmatprep.subr.bf16.mxu0 0
      %3262 = vmatpush1.bf16.msra.mxu0 0
      %3263 = vmatprep.subr.bf16.mxu0 0
      %3264 = vmatpush1.bf16.msra.mxu0 0
      %3265 = vmatprep.subr.bf16.mxu0 0
      %3266 = vmatpush1.bf16.msra.mxu0 0
      %3267 = vmatprep.subr.bf16.mxu0 0
      %3268 = vmatpush1.bf16.msra.mxu0 0
      %3269 = vmatprep.subr.bf16.mxu0 0
      %3270 = vmatpush1.bf16.msra.mxu0 0
      %3271 = vmatprep.subr.bf16.mxu0 0
      %3272 = vmatpush1.bf16.msra.mxu0 0
      %3273 = vmatprep.subr.bf16.mxu0 0
      %3274 = vmatpush1.bf16.msra.mxu0 0
      %3275 = vmatprep.subr.bf16.mxu0 0
      %3276 = vmatpush1.bf16.msra.mxu0 0
      %3277 = vmatprep.subr.bf16.mxu0 0
      %3278 = vmatpush1.bf16.msra.mxu0 0
      %3279 = vmatprep.subr.bf16.mxu0 0
      %3280 = vmatpush1.bf16.msra.mxu0 0
      %3281 = vmatprep.subr.bf16.mxu0 0
      %3282 = vmatpush1.bf16.msra.mxu0 0
      %3283 = vmatprep.mubr.bf16.mxu0 0
      %3284 = vmatmul.mubr.bf16.gmra.mrb[0].mxu0 %v3237
      %v3285 = vpop.f32.mrb[0].mxu0
      %v3286 = vadd.f32 0.0, %v3285
      %v3287 = vpop.f32.mrb[0].mxu0
      %v3288 = vpop.f32.mrb[0].mxu0
      %v3289 = vadd.f32 0.0, %v3288
      %v3290 = vpop.f32.mrb[0].mxu0
      %3291 = vmatprep.mubr.bf16.mxu0 0
      %3292 = vmatmul.mubr.bf16.gmra.mrb[0].mxu0 %v3240
      %v3293 = vpop.f32.mrb[0].mxu0
      %v3294 = vadd.f32 0.0, %v3293
      %v3295 = vpop.f32.mrb[0].mxu0
      %v3296 = vpop.f32.mrb[0].mxu0
      %v3297 = vadd.f32 0.0, %v3296
      %v3298 = vpop.f32.mrb[0].mxu0
      %3299 = vmatprep.mubr.bf16.mxu0 0
      %3300 = vmatmul.mubr.bf16.gmra.mrb[0].mxu0 %v3243
      %v3301 = vpop.f32.mrb[0].mxu0
      %v3302 = vadd.f32 0.0, %v3301
      %v3303 = vpop.f32.mrb[0].mxu0
      %v3304 = vpop.f32.mrb[0].mxu0
      %v3305 = vadd.f32 0.0, %v3304
      %v3306 = vpop.f32.mrb[0].mxu0
      %3307 = vmatprep.mubr.bf16.mxu0 0
      %3308 = vmatmul.mubr.bf16.gmra.mrb[0].mxu0 %v3246
      %v3309 = vpop.f32.mrb[0].mxu0
      %v3310 = vadd.f32 0.0, %v3309
      %v3311 = vpop.f32.mrb[0].mxu0
      %v3312 = vpop.f32.mrb[0].mxu0
      %v3313 = vadd.f32 0.0, %v3312
      %v3314 = vpop.f32.mrb[0].mxu0
      %3315 = vmatprep.mubr.bf16.mxu0 0
      %3316 = vmatmul.mubr.bf16.gmra.mrb[0].mxu0 %v3249
      %v3317 = vpop.f32.mrb[0].mxu0
      %v3318 = vadd.f32 0.0, %v3317
      %v3319 = vpop.f32.mrb[0].mxu0
      %v3320 = vpop.f32.mrb[0].mxu0
      %v3321 = vadd.f32 0.0, %v3320
      %v3322 = vpop.f32.mrb[0].mxu0
      %3323 = vdwg.mxu0
      %v3324 = vadd.f32 %v3183, %v3286
      %v3325 = vadd.f32 %v3184, %v3289
      %v3326 = vadd.f32 %v3185, %v3294
      %v3327 = vadd.f32 %v3186, %v3297
      %v3328 = vadd.f32 %v3187, %v3302
      %v3329 = vadd.f32 %v3188, %v3305
      %v3330 = vadd.f32 %v3189, %v3310
      %v3331 = vadd.f32 %v3190, %v3313
      %v3332 = vadd.f32 %v3191, %v3318
      %v3333 = vadd.f32 %v3192, %v3321
      %s3334 = scalar_lea.vmem %s5, 224
      %v3335 = vld [vmem:[%s3334] sm:$0xf]
      %v3336 = vld [vmem:[%s3334 + $0x4] sm:$0xf]
      %v3337 = vld [vmem:[%s3334 + $0x8] sm:$0xf]
      %v3338 = vld [vmem:[%s3334 + $0xc] sm:$0xf]
      %v3339 = vld [vmem:[%s3334 + $0x10] sm:$0xf]
      %v3340 = vld [vmem:[%s3334 + $0x14] sm:$0xf]
      %v3341 = vld [vmem:[%s3334 + $0x18] sm:$0xf]
      %v3342 = vld [vmem:[%s3334 + $0x1c] sm:$0xf]
      %vm3343 = vsmask.f32 4352
      %v3344 = vrot.slane %v2343, 3
      %v3345 = vrot.slane %v2339, 4
      %v3346 = vor.u32 %v3344, %v3345
      %v3347 = vrot.slane %v2351, 3
      %v3348 = vrot.slane %v2347, 4
      %v3349 = vor.u32 %v3347, %v3348
      %v3350 = vsel %vm3343, %v3346, %v3349
      %v3351 = vrot.slane %v2359, 3
      %v3352 = vrot.slane %v2355, 4
      %v3353 = vor.u32 %v3351, %v3352
      %v3354 = vsel %vm3343, %v3349, %v3353
      %v3355 = vrot.slane %v2367, 3
      %v3356 = vrot.slane %v2363, 4
      %v3357 = vor.u32 %v3355, %v3356
      %v3358 = vsel %vm3343, %v3353, %v3357
      %v3359 = vrot.slane %v2765, 3
      %v3360 = vrot.slane %v2768, 4
      %v3361 = vor.u32 %v3359, %v3360
      %v3362 = vsel %vm3343, %v3357, %v3361
      %v3371 = vunpack.c.l.b16 %v3335
      %v3372 = vunpack.c.l.b16 %v3336
      %v3373 = vunpack.c.l.b16 %v3337
      %v3374 = vunpack.c.l.b16 %v3338
      %v3375 = vunpack.c.l.b16 %v3339
      %v3376 = vunpack.c.l.b16 %v3340
      %v3377 = vunpack.c.l.b16 %v3341
      %v3378 = vunpack.c.l.b16 %v3342
      %v3379 = vpack.c.b16 %v3372, %v3371
      %v3380 = vpack.c.b16 %v3374, %v3373
      %v3381 = vpack.c.b16 %v3376, %v3375
      %v3382 = vpack.c.b16 %v3378, %v3377
      %v3388 = vsel %vm2394, %v3350, 0
      %v3391 = vsel %vm2394, %v3354, 0
      %v3394 = vsel %vm2394, %v3358, 0
      %v3397 = vsel %vm2394, %v3362, 0
      %v3400 = vsel %vm2394, %v3361, 0
      %3402 = vmatprep.subr.bf16.mxu0 0
      %3403 = vmatpush1.bf16.msra.mxu0 %v3379
      %3404 = vmatprep.subr.bf16.mxu0 0
      %3405 = vmatpush1.bf16.msra.mxu0 %v3380
      %3406 = vmatprep.subr.bf16.mxu0 0
      %3407 = vmatpush1.bf16.msra.mxu0 %v3381
      %3408 = vmatprep.subr.bf16.mxu0 0
      %3409 = vmatpush1.bf16.msra.mxu0 %v3382
      %3410 = vmatprep.subr.bf16.mxu0 0
      %3411 = vmatpush1.bf16.msra.mxu0 0
      %3412 = vmatprep.subr.bf16.mxu0 0
      %3413 = vmatpush1.bf16.msra.mxu0 0
      %3414 = vmatprep.subr.bf16.mxu0 0
      %3415 = vmatpush1.bf16.msra.mxu0 0
      %3416 = vmatprep.subr.bf16.mxu0 0
      %3417 = vmatpush1.bf16.msra.mxu0 0
      %3418 = vmatprep.subr.bf16.mxu0 0
      %3419 = vmatpush1.bf16.msra.mxu0 0
      %3420 = vmatprep.subr.bf16.mxu0 0
      %3421 = vmatpush1.bf16.msra.mxu0 0
      %3422 = vmatprep.subr.bf16.mxu0 0
      %3423 = vmatpush1.bf16.msra.mxu0 0
      %3424 = vmatprep.subr.bf16.mxu0 0
      %3425 = vmatpush1.bf16.msra.mxu0 0
      %3426 = vmatprep.subr.bf16.mxu0 0
      %3427 = vmatpush1.bf16.msra.mxu0 0
      %3428 = vmatprep.subr.bf16.mxu0 0
      %3429 = vmatpush1.bf16.msra.mxu0 0
      %3430 = vmatprep.subr.bf16.mxu0 0
      %3431 = vmatpush1.bf16.msra.mxu0 0
      %3432 = vmatprep.subr.bf16.mxu0 0
      %3433 = vmatpush1.bf16.msra.mxu0 0
      %3434 = vmatprep.mubr.bf16.mxu0 0
      %3435 = vmatmul.mubr.bf16.gmra.mrb[0].mxu0 %v3388
      %v3436 = vpop.f32.mrb[0].mxu0
      %v3437 = vadd.f32 0.0, %v3436
      %v3438 = vpop.f32.mrb[0].mxu0
      %v3439 = vpop.f32.mrb[0].mxu0
      %v3440 = vadd.f32 0.0, %v3439
      %v3441 = vpop.f32.mrb[0].mxu0
      %3442 = vmatprep.mubr.bf16.mxu0 0
      %3443 = vmatmul.mubr.bf16.gmra.mrb[0].mxu0 %v3391
      %v3444 = vpop.f32.mrb[0].mxu0
      %v3445 = vadd.f32 0.0, %v3444
      %v3446 = vpop.f32.mrb[0].mxu0
      %v3447 = vpop.f32.mrb[0].mxu0
      %v3448 = vadd.f32 0.0, %v3447
      %v3449 = vpop.f32.mrb[0].mxu0
      %3450 = vmatprep.mubr.bf16.mxu0 0
      %3451 = vmatmul.mubr.bf16.gmra.mrb[0].mxu0 %v3394
      %v3452 = vpop.f32.mrb[0].mxu0
      %v3453 = vadd.f32 0.0, %v3452
      %v3454 = vpop.f32.mrb[0].mxu0
      %v3455 = vpop.f32.mrb[0].mxu0
      %v3456 = vadd.f32 0.0, %v3455
      %v3457 = vpop.f32.mrb[0].mxu0
      %3458 = vmatprep.mubr.bf16.mxu0 0
      %3459 = vmatmul.mubr.bf16.gmra.mrb[0].mxu0 %v3397
      %v3460 = vpop.f32.mrb[0].mxu0
      %v3461 = vadd.f32 0.0, %v3460
      %v3462 = vpop.f32.mrb[0].mxu0
      %v3463 = vpop.f32.mrb[0].mxu0
      %v3464 = vadd.f32 0.0, %v3463
      %v3465 = vpop.f32.mrb[0].mxu0
      %3466 = vmatprep.mubr.bf16.mxu0 0
      %3467 = vmatmul.mubr.bf16.gmra.mrb[0].mxu0 %v3400
      %v3468 = vpop.f32.mrb[0].mxu0
      %v3469 = vadd.f32 0.0, %v3468
      %v3470 = vpop.f32.mrb[0].mxu0
      %v3471 = vpop.f32.mrb[0].mxu0
      %v3472 = vadd.f32 0.0, %v3471
      %v3473 = vpop.f32.mrb[0].mxu0
      %3474 = vdwg.mxu0
      %v3475 = vadd.f32 %v3324, %v3437
      %v3476 = vadd.f32 %v3325, %v3440
      %v3477 = vadd.f32 %v3326, %v3445
      %v3478 = vadd.f32 %v3327, %v3448
      %v3479 = vadd.f32 %v3328, %v3453
      %v3480 = vadd.f32 %v3329, %v3456
      %v3481 = vadd.f32 %v3330, %v3461
      %v3482 = vadd.f32 %v3331, %v3464
      %v3483 = vadd.f32 %v3332, %v3469
      %v3484 = vadd.f32 %v3333, %v3472
      %s3485 = scalar_lea.vmem %s5, 256
      %v3486 = vld [vmem:[%s3485] sm:$0xf]
      %v3487 = vld [vmem:[%s3485 + $0x4] sm:$0xf]
      %v3488 = vld [vmem:[%s3485 + $0x8] sm:$0xf]
      %v3489 = vld [vmem:[%s3485 + $0xc] sm:$0xf]
      %v3490 = vld [vmem:[%s3485 + $0x10] sm:$0xf]
      %v3491 = vld [vmem:[%s3485 + $0x14] sm:$0xf]
      %v3492 = vld [vmem:[%s3485 + $0x18] sm:$0xf]
      %v3493 = vld [vmem:[%s3485 + $0x1c] sm:$0xf]
      %vm3495 = vcmask 1043456
      %v3496 = vrot.slane %v2308, 4
      %v3497 = vrot.slane %v2309, 4
      %v3498 = vsel %vm3495, %v3496, %v3497
      %v3499 = vrot.slane %v2310, 4
      %v3500 = vsel %vm3495, %v3497, %v3499
      %v3501 = vrot.slane %v2311, 4
      %v3502 = vsel %vm3495, %v3499, %v3501
      %v3503 = vrot.slane %v2312, 4
      %v3504 = vsel %vm3495, %v3501, %v3503
      %v3505 = vrot.slane %v2313, 4
      %v3506 = vsel %vm3495, %v3503, %v3505
      %v3515 = vunpack.c.l.b16 %v3486
      %v3516 = vunpack.c.l.b16 %v3487
      %v3517 = vunpack.c.l.b16 %v3488
      %v3518 = vunpack.c.l.b16 %v3489
      %v3519 = vunpack.c.l.b16 %v3490
      %v3520 = vunpack.c.l.b16 %v3491
      %v3521 = vunpack.c.l.b16 %v3492
      %v3522 = vunpack.c.l.b16 %v3493
      %v3523 = vpack.c.b16 %v3516, %v3515
      %v3524 = vpack.c.b16 %v3518, %v3517
      %v3525 = vpack.c.b16 %v3520, %v3519
      %v3526 = vpack.c.b16 %v3522, %v3521
      %v3532 = vsel %vm2394, %v3498, 0
      %v3535 = vsel %vm2394, %v3500, 0
      %v3538 = vsel %vm2394, %v3502, 0
      %v3541 = vsel %vm2394, %v3504, 0
      %v3544 = vsel %vm2394, %v3506, 0
      %3546 = vmatprep.subr.bf16.mxu0 0
      %3547 = vmatpush1.bf16.msra.mxu0 %v3523
      %3548 = vmatprep.subr.bf16.mxu0 0
      %3549 = vmatpush1.bf16.msra.mxu0 %v3524
      %3550 = vmatprep.subr.bf16.mxu0 0
      %3551 = vmatpush1.bf16.msra.mxu0 %v3525
      %3552 = vmatprep.subr.bf16.mxu0 0
      %3553 = vmatpush1.bf16.msra.mxu0 %v3526
      %3554 = vmatprep.subr.bf16.mxu0 0
      %3555 = vmatpush1.bf16.msra.mxu0 0
      %3556 = vmatprep.subr.bf16.mxu0 0
      %3557 = vmatpush1.bf16.msra.mxu0 0
      %3558 = vmatprep.subr.bf16.mxu0 0
      %3559 = vmatpush1.bf16.msra.mxu0 0
      %3560 = vmatprep.subr.bf16.mxu0 0
      %3561 = vmatpush1.bf16.msra.mxu0 0
      %3562 = vmatprep.subr.bf16.mxu0 0
      %3563 = vmatpush1.bf16.msra.mxu0 0
      %3564 = vmatprep.subr.bf16.mxu0 0
      %3565 = vmatpush1.bf16.msra.mxu0 0
      %3566 = vmatprep.subr.bf16.mxu0 0
      %3567 = vmatpush1.bf16.msra.mxu0 0
      %3568 = vmatprep.subr.bf16.mxu0 0
      %3569 = vmatpush1.bf16.msra.mxu0 0
      %3570 = vmatprep.subr.bf16.mxu0 0
      %3571 = vmatpush1.bf16.msra.mxu0 0
      %3572 = vmatprep.subr.bf16.mxu0 0
      %3573 = vmatpush1.bf16.msra.mxu0 0
      %3574 = vmatprep.subr.bf16.mxu0 0
      %3575 = vmatpush1.bf16.msra.mxu0 0
      %3576 = vmatprep.subr.bf16.mxu0 0
      %3577 = vmatpush1.bf16.msra.mxu0 0
      %3578 = vmatprep.mubr.bf16.mxu0 0
      %3579 = vmatmul.mubr.bf16.gmra.mrb[0].mxu0 %v3532
      %v3580 = vpop.f32.mrb[0].mxu0
      %v3581 = vadd.f32 0.0, %v3580
      %v3582 = vpop.f32.mrb[0].mxu0
      %v3583 = vpop.f32.mrb[0].mxu0
      %v3584 = vadd.f32 0.0, %v3583
      %v3585 = vpop.f32.mrb[0].mxu0
      %3586 = vmatprep.mubr.bf16.mxu0 0
      %3587 = vmatmul.mubr.bf16.gmra.mrb[0].mxu0 %v3535
      %v3588 = vpop.f32.mrb[0].mxu0
      %v3589 = vadd.f32 0.0, %v3588
      %v3590 = vpop.f32.mrb[0].mxu0
      %v3591 = vpop.f32.mrb[0].mxu0
      %v3592 = vadd.f32 0.0, %v3591
      %v3593 = vpop.f32.mrb[0].mxu0
      %3594 = vmatprep.mubr.bf16.mxu0 0
      %3595 = vmatmul.mubr.bf16.gmra.mrb[0].mxu0 %v3538
      %v3596 = vpop.f32.mrb[0].mxu0
      %v3597 = vadd.f32 0.0, %v3596
      %v3598 = vpop.f32.mrb[0].mxu0
      %v3599 = vpop.f32.mrb[0].mxu0
      %v3600 = vadd.f32 0.0, %v3599
      %v3601 = vpop.f32.mrb[0].mxu0
      %3602 = vmatprep.mubr.bf16.mxu0 0
      %3603 = vmatmul.mubr.bf16.gmra.mrb[0].mxu0 %v3541
      %v3604 = vpop.f32.mrb[0].mxu0
      %v3605 = vadd.f32 0.0, %v3604
      %v3606 = vpop.f32.mrb[0].mxu0
      %v3607 = vpop.f32.mrb[0].mxu0
      %v3608 = vadd.f32 0.0, %v3607
      %v3609 = vpop.f32.mrb[0].mxu0
      %3610 = vmatprep.mubr.bf16.mxu0 0
      %3611 = vmatmul.mubr.bf16.gmra.mrb[0].mxu0 %v3544
      %v3612 = vpop.f32.mrb[0].mxu0
      %v3613 = vadd.f32 0.0, %v3612
      %v3614 = vpop.f32.mrb[0].mxu0
      %v3615 = vpop.f32.mrb[0].mxu0
      %v3616 = vadd.f32 0.0, %v3615
      %v3617 = vpop.f32.mrb[0].mxu0
      %3618 = vdwg.mxu0
      %v3619 = vadd.f32 %v3475, %v3581
      %v3620 = vadd.f32 %v3476, %v3584
      %v3621 = vadd.f32 %v3477, %v3589
      %v3622 = vadd.f32 %v3478, %v3592
      %v3623 = vadd.f32 %v3479, %v3597
      %v3624 = vadd.f32 %v3480, %v3600
      %v3625 = vadd.f32 %v3481, %v3605
      %v3626 = vadd.f32 %v3482, %v3608
      %v3627 = vadd.f32 %v3483, %v3613
      %v3628 = vadd.f32 %v3484, %v3616
      %v3629 = vld [vmem:[%s6] sm:$0x1]
      %v3631 = vlaneseq
      %v3632 = vshrl.u32 %v3631, 7
      %v3633 = vsub.s32 0, %v3632
      %v3634 = vrot.slane %v3629, %v3633
      %v3636 = vadd.f32 %v3619, %v3634
      %v3637 = vadd.f32 %v3620, %v3634
      %v3638 = vadd.f32 %v3621, %v3634
      %v3639 = vadd.f32 %v3622, %v3634
      %v3640 = vadd.f32 %v3623, %v3634
      %v3641 = vadd.f32 %v3624, %v3634
      %v3642 = vadd.f32 %v3625, %v3634
      %v3643 = vadd.f32 %v3626, %v3634
      %v3644 = vadd.f32 %v3627, %v3634
      %v3645 = vadd.f32 %v3628, %v3634
      %v3646 = vmax.f32 %v3636, 0.0
      %v3647 = vmax.f32 %v3637, 0.0
      %v3648 = vmax.f32 %v3638, 0.0
      %v3649 = vmax.f32 %v3639, 0.0
      %v3650 = vmax.f32 %v3640, 0.0
      %v3651 = vmax.f32 %v3641, 0.0
      %v3652 = vmax.f32 %v3642, 0.0
      %v3653 = vmax.f32 %v3643, 0.0
      %v3654 = vmax.f32 %v3644, 0.0
      %v3655 = vmax.f32 %v3645, 0.0
      %v3656 = vpack.c.bf16 %v3647, %v3646
      %v3657 = vpack.c.bf16 %v3649, %v3648
      %v3658 = vpack.c.bf16 %v3651, %v3650
      %v3659 = vpack.c.bf16 %v3653, %v3652
      %v3660 = vpack.c.bf16 %v3655, %v3654
      %v3666 = vunpack.c.l.b16 %v3656
      %v3667 = vunpack.c.h.b16 %v3656
      %v3668 = vunpack.c.l.b16 %v3657
      %v3669 = vunpack.c.h.b16 %v3657
      %v3670 = vunpack.c.l.b16 %v3658
      %v3671 = vunpack.c.h.b16 %v3658
      %v3672 = vunpack.c.l.b16 %v3659
      %v3673 = vunpack.c.h.b16 %v3659
      %v3674 = vunpack.c.l.b16 %v3660
      %v3675 = vunpack.c.h.b16 %v3660
      %v3676 = vpack.c.b16 %v3666, %v3666
      %v3677 = vpack.c.b16 %v3667, %v3667
      %v3678 = vpack.c.b16 %v3668, %v3668
      %v3679 = vpack.c.b16 %v3669, %v3669
      %v3680 = vpack.c.b16 %v3670, %v3670
      %v3681 = vpack.c.b16 %v3671, %v3671
      %v3682 = vpack.c.b16 %v3672, %v3672
      %v3683 = vpack.c.b16 %v3673, %v3673
      %v3684 = vpack.c.b16 %v3674, %v3674
      %v3685 = vpack.c.b16 %v3675, %v3675
      %vm3696 = vcmask 519168
      %3697 = vst.msk [vmem:[%s278] sm:$0xf] %vm3696, %v3676
      %3698 = vst.msk [vmem:[%s278 + $0x4] sm:$0xf] %vm3696, %v3677
      %3699 = vst.msk [vmem:[%s278 + $0x8] sm:$0xf] %vm3696, %v3678
      %3700 = vst.msk [vmem:[%s278 + $0xc] sm:$0xf] %vm3696, %v3679
      %3701 = vst.msk [vmem:[%s278 + $0x10] sm:$0xf] %vm3696, %v3680
      %3702 = vst.msk [vmem:[%s278 + $0x14] sm:$0xf] %vm3696, %v3681
      %3703 = vst.msk [vmem:[%s278 + $0x18] sm:$0xf] %vm3696, %v3682
      %3704 = vst.msk [vmem:[%s278 + $0x1c] sm:$0xf] %vm3696, %v3683
      %3705 = vst.msk [vmem:[%s278 + $0x20] sm:$0xf] %vm3696, %v3684
      %vm3706 = vcmask 516096
      %vm3707 = vsmask.f32 256
      %vm3708 = vmand %vm3706, %vm3707
      %v3709 = vld [vmem:[%s278 + $0x24] sm:$0x1]
      %v3710 = vsel %vm3708, %v3685, %v3709
      %3711 = vst [vmem:[%s278 + $0x24] sm:$0x1] %v3710
      %p3712 = scmp.lt.s32.totalorder %s18, 1
      %s3713 = scalar_select %p3712, %s18, 1
      %s3714 = smul.addr %s3713, 10
      %s3715 = smul.addr %s3714, 4
      %s3716 = scalar_lea.vmem %s7, %s3715
      // Predicated region
      $region49: #{dqn_forward.2} parent=47 // pred_check
        %p3717 = pneg %p188
      $region50: #{dqn_forward.2} parent=47 // pred_check_branch
        %3719 = sbr.rel (%p3717) target = $region52
      $region51: #{dqn_forward.2} parent=47 // pred_region
        _
      $region52: #{dqn_forward.2} parent=47 // pred_fallthru
        _
    $region48: #{dqn_forward.2} parent=5 // pred_fallthru
      _
    %p3720 = scmp.le.s32.totalorder 2, %s13
    // Predicated region
    $region53: #{dqn_forward.2} parent=5 // pred_check
      %p3721 = pneg %p3720
    $region54: #{dqn_forward.2} parent=5 // pred_check_branch
      %3723 = sbr.rel (%p3721) target = $region56
    $region55: #{dqn_forward.2} parent=5 // pred_region
      %s3724 = ssub.s32 %s13, 2
      // Predicated region
      $region57: #{dqn_forward.2} parent=55 // pred_check
        %p3725 = pneg %p194
      $region58: #{dqn_forward.2} parent=55 // pred_check_branch
        %3727 = sbr.rel (%p3725) target = $region60
      $region59: #{dqn_forward.2} parent=55 // pred_region
        %p3728 = scmp.lt.s32.totalorder %s19, 1
        %s3729 = scalar_select %p3728, %s19, 1
        %s3730 = smul.addr %s3729, 10
        %s3731 = smul.addr %s3730, 4
        %s3732 = scalar_lea.vmem %s7, %s3731
      $region60: #{dqn_forward.2} parent=55 // pred_fallthru
        _
    $region56: #{dqn_forward.2} parent=5 // pred_fallthru
      _
  $region6: #{dqn_forward.2} parent=0 // loop_footer
    %s17 = sadd.s32 1, %s13
  $region7: #{dqn_forward.2} parent=0 // loop_footer_branch
    %12 = sbr.rel target = $region3
  $region8: #{dqn_forward.2} parent=0 // loop_exit
    _

// kernel: dqn_forward.3
$region0: #{dqn_forward.3}
  #allocation0 [shape = 'u32[]', space=smem, size = 0x4, offset = 0x4, fixed_abs, tag = 'smem constant byte address 0x4 - core index']
  #allocation1 [shape = 'u32[144,128]{1,0:T(1,128)}', space=vmem, size = 0x12000, scoped, tag = 'internal scratch']
  %s0 = inlined_call_operand.vmem [shape: bf16[2,4672], index: 0, kind: input, shape index: {}]
  %s1 = inlined_call_operand.vmem [shape: bf16[4672,512], index: 1, kind: input, shape index: {}]
  %s2 = inlined_call_operand.vmem [shape: f32[1,512], index: 2, kind: input, shape index: {}]
  %s3 = inlined_call_operand.vmem [shape: f32[512,128], index: 3, kind: input, shape index: {}]
  %s4 = inlined_call_operand.vmem [shape: f32[1,128], index: 4, kind: input, shape index: {}]
  %s5 = inlined_call_operand.hbm [shape: f32[2,128], index: 5, kind: output, shape index: {}]
  %s6 = sld [smem:[#allocation0]]
  $region30: #{dqn_forward.3} parent=0
    _
  %s8 = ssub.s32 1, %s6
  %s9 = scalar_select 0, %s8, %s6
  $region1: #{dqn_forward.3} parent=0
    #allocation2 [shape = 'u8[1024]{0}', space=vmem, size = 0x400, scoped, tag = 'output window, operand 0, single buffered']
    #allocation3 [shape = 's32[1]{0}', space=sflag, size = 0x4, scoped, tag = 'scoped memory for dqn_forward.3']
    %10 = vsyncpa [#allocation3], 0
    // Predicated region
    $region2: #{dqn_forward.3} parent=1 // pred_check
      _
    $region3: #{dqn_forward.3} parent=1 // pred_check_branch
      %12 = sbr.rel (0) target = $region5
    $region4: #{dqn_forward.3} parent=1 // pred_region
      _
    $region5: #{dqn_forward.3} parent=1 // pred_fallthru
      _
    // Predicated region
    $region6: #{dqn_forward.3} parent=1 // pred_check
      _
    $region7: #{dqn_forward.3} parent=1 // pred_check_branch
      %14 = sbr.rel (0) target = $region9
    $region8: #{dqn_forward.3} parent=1 // pred_region
      _
    $region9: #{dqn_forward.3} parent=1 // pred_fallthru
      _
    // Predicated region
    $region10: #{dqn_forward.3} parent=1 // pred_check
      _
    $region11: #{dqn_forward.3} parent=1 // pred_check_branch
      %16 = sbr.rel (0) target = $region13
    $region12: #{dqn_forward.3} parent=1 // pred_region
      _
    $region13: #{dqn_forward.3} parent=1 // pred_fallthru
      _
    // Predicated region
    $region14: #{dqn_forward.3} parent=1 // pred_check
      _
    $region15: #{dqn_forward.3} parent=1 // pred_check_branch
      %18 = sbr.rel (0) target = $region17
    $region16: #{dqn_forward.3} parent=1 // pred_region
      _
    $region17: #{dqn_forward.3} parent=1 // pred_fallthru
      _
    // Predicated region
    $region18: #{dqn_forward.3} parent=1 // pred_check
      _
    $region19: #{dqn_forward.3} parent=1 // pred_check_branch
      %20 = sbr.rel (0) target = $region21
    $region20: #{dqn_forward.3} parent=1 // pred_region
      _
    $region21: #{dqn_forward.3} parent=1 // pred_fallthru
      _
    %v22 = vld [vmem:[%s0] sm:$0xff]
    %v23 = vld [vmem:[%s0 + $0x8] sm:$0xff]
    %v24 = vld [vmem:[%s0 + $0x10] sm:$0xff]
    %v25 = vld [vmem:[%s0 + $0x18] sm:$0xff]
    %v26 = vld [vmem:[%s0 + $0x20] sm:$0x1f]
    %v27 = vld [vmem:[%s1] sm:$0xff]
    %v28 = vld [vmem:[%s1 + $0x8] sm:$0xff]
    %v29 = vld [vmem:[%s1 + $0x10] sm:$0xff]
    %v30 = vld [vmem:[%s1 + $0x18] sm:$0xff]
    %v31 = vld [vmem:[%s1 + $0x20] sm:$0xff]
    %v32 = vld [vmem:[%s1 + $0x28] sm:$0xff]
    %v33 = vld [vmem:[%s1 + $0x30] sm:$0xff]
    %v34 = vld [vmem:[%s1 + $0x38] sm:$0xff]
    %v35 = vld [vmem:[%s1 + $0x40] sm:$0xff]
    %v36 = vld [vmem:[%s1 + $0x48] sm:$0xff]
    %v37 = vld [vmem:[%s1 + $0x50] sm:$0xff]
    %v38 = vld [vmem:[%s1 + $0x58] sm:$0xff]
    %v39 = vld [vmem:[%s1 + $0x60] sm:$0xff]
    %v40 = vld [vmem:[%s1 + $0x68] sm:$0xff]
    %v41 = vld [vmem:[%s1 + $0x70] sm:$0xff]
    %v42 = vld [vmem:[%s1 + $0x78] sm:$0xff]
    %v43 = vld [vmem:[%s1 + $0x80] sm:$0xff]
    %v44 = vld [vmem:[%s1 + $0x88] sm:$0xff]
    %v45 = vld [vmem:[%s1 + $0x90] sm:$0xff]
    %v46 = vld [vmem:[%s1 + $0x98] sm:$0xff]
    %v47 = vld [vmem:[%s1 + $0xa0] sm:$0xff]
    %v48 = vld [vmem:[%s1 + $0xa8] sm:$0xff]
    %v49 = vld [vmem:[%s1 + $0xb0] sm:$0xff]
    %v50 = vld [vmem:[%s1 + $0xb8] sm:$0xff]
    %v51 = vld [vmem:[%s1 + $0xc0] sm:$0xff]
    %v52 = vld [vmem:[%s1 + $0xc8] sm:$0xff]
    %v53 = vld [vmem:[%s1 + $0xd0] sm:$0xff]
    %v54 = vld [vmem:[%s1 + $0xd8] sm:$0xff]
    %v55 = vld [vmem:[%s1 + $0xe0] sm:$0xff]
    %v56 = vld [vmem:[%s1 + $0xe8] sm:$0xff]
    %v57 = vld [vmem:[%s1 + $0xf0] sm:$0xff]
    %v58 = vld [vmem:[%s1 + $0xf8] sm:$0xff]
    %v59 = vld [vmem:[%s1 + $0x100] sm:$0xff]
    %v60 = vld [vmem:[%s1 + $0x108] sm:$0xff]
    %v61 = vld [vmem:[%s1 + $0x110] sm:$0xff]
    %v62 = vld [vmem:[%s1 + $0x118] sm:$0xff]
    %v63 = vld [vmem:[%s1 + $0x120] sm:$0xff]
    %v64 = vld [vmem:[%s1 + $0x128] sm:$0xff]
    %v65 = vld [vmem:[%s1 + $0x130] sm:$0xff]
    %v66 = vld [vmem:[%s1 + $0x138] sm:$0xff]
    %v67 = vld [vmem:[%s1 + $0x140] sm:$0xff]
    %v68 = vld [vmem:[%s1 + $0x148] sm:$0xff]
    %v69 = vld [vmem:[%s1 + $0x150] sm:$0xff]
    %v70 = vld [vmem:[%s1 + $0x158] sm:$0xff]
    %v71 = vld [vmem:[%s1 + $0x160] sm:$0xff]
    %v72 = vld [vmem:[%s1 + $0x168] sm:$0xff]
    %v73 = vld [vmem:[%s1 + $0x170] sm:$0xff]
    %v74 = vld [vmem:[%s1 + $0x178] sm:$0xff]
    %v75 = vld [vmem:[%s1 + $0x180] sm:$0xff]
    %v76 = vld [vmem:[%s1 + $0x188] sm:$0xff]
    %v77 = vld [vmem:[%s1 + $0x190] sm:$0xff]
    %v78 = vld [vmem:[%s1 + $0x198] sm:$0xff]
    %v79 = vld [vmem:[%s1 + $0x1a0] sm:$0xff]
    %v80 = vld [vmem:[%s1 + $0x1a8] sm:$0xff]
    %v81 = vld [vmem:[%s1 + $0x1b0] sm:$0xff]
    %v82 = vld [vmem:[%s1 + $0x1b8] sm:$0xff]
    %v83 = vld [vmem:[%s1 + $0x1c0] sm:$0xff]
    %v84 = vld [vmem:[%s1 + $0x1c8] sm:$0xff]
    %v85 = vld [vmem:[%s1 + $0x1d0] sm:$0xff]
    %v86 = vld [vmem:[%s1 + $0x1d8] sm:$0xff]
    %v87 = vld [vmem:[%s1 + $0x1e0] sm:$0xff]
    %v88 = vld [vmem:[%s1 + $0x1e8] sm:$0xff]
    %v89 = vld [vmem:[%s1 + $0x1f0] sm:$0xff]
    %v90 = vld [vmem:[%s1 + $0x1f8] sm:$0xff]
    %v91 = vld [vmem:[%s1 + $0x200] sm:$0xff]
    %v92 = vld [vmem:[%s1 + $0x208] sm:$0xff]
    %v93 = vld [vmem:[%s1 + $0x210] sm:$0xff]
    %v94 = vld [vmem:[%s1 + $0x218] sm:$0xff]
    %v95 = vld [vmem:[%s1 + $0x220] sm:$0xff]
    %v96 = vld [vmem:[%s1 + $0x228] sm:$0xff]
    %v97 = vld [vmem:[%s1 + $0x230] sm:$0xff]
    %v98 = vld [vmem:[%s1 + $0x238] sm:$0xff]
    %v99 = vld [vmem:[%s1 + $0x240] sm:$0xff]
    %v100 = vld [vmem:[%s1 + $0x248] sm:$0xff]
    %v101 = vld [vmem:[%s1 + $0x250] sm:$0xff]
    %v102 = vld [vmem:[%s1 + $0x258] sm:$0xff]
    %v103 = vld [vmem:[%s1 + $0x260] sm:$0xff]
    %v104 = vld [vmem:[%s1 + $0x268] sm:$0xff]
    %v105 = vld [vmem:[%s1 + $0x270] sm:$0xff]
    %v106 = vld [vmem:[%s1 + $0x278] sm:$0xff]
    %v107 = vld [vmem:[%s1 + $0x280] sm:$0xff]
    %v108 = vld [vmem:[%s1 + $0x288] sm:$0xff]
    %v109 = vld [vmem:[%s1 + $0x290] sm:$0xff]
    %v110 = vld [vmem:[%s1 + $0x298] sm:$0xff]
    %v111 = vld [vmem:[%s1 + $0x2a0] sm:$0xff]
    %v112 = vld [vmem:[%s1 + $0x2a8] sm:$0xff]
    %v113 = vld [vmem:[%s1 + $0x2b0] sm:$0xff]
    %v114 = vld [vmem:[%s1 + $0x2b8] sm:$0xff]
    %v115 = vld [vmem:[%s1 + $0x2c0] sm:$0xff]
    %v116 = vld [vmem:[%s1 + $0x2c8] sm:$0xff]
    %v117 = vld [vmem:[%s1 + $0x2d0] sm:$0xff]
    %v118 = vld [vmem:[%s1 + $0x2d8] sm:$0xff]
    %v119 = vld [vmem:[%s1 + $0x2e0] sm:$0xff]
    %v120 = vld [vmem:[%s1 + $0x2e8] sm:$0xff]
    %v121 = vld [vmem:[%s1 + $0x2f0] sm:$0xff]
    %v122 = vld [vmem:[%s1 + $0x2f8] sm:$0xff]
    %v123 = vld [vmem:[%s1 + $0x300] sm:$0xff]
    %v124 = vld [vmem:[%s1 + $0x308] sm:$0xff]
    %v125 = vld [vmem:[%s1 + $0x310] sm:$0xff]
    %v126 = vld [vmem:[%s1 + $0x318] sm:$0xff]
    %v127 = vld [vmem:[%s1 + $0x320] sm:$0xff]
    %v128 = vld [vmem:[%s1 + $0x328] sm:$0xff]
    %v129 = vld [vmem:[%s1 + $0x330] sm:$0xff]
    %v130 = vld [vmem:[%s1 + $0x338] sm:$0xff]
    %v131 = vld [vmem:[%s1 + $0x340] sm:$0xff]
    %v132 = vld [vmem:[%s1 + $0x348] sm:$0xff]
    %v133 = vld [vmem:[%s1 + $0x350] sm:$0xff]
    %v134 = vld [vmem:[%s1 + $0x358] sm:$0xff]
    %v135 = vld [vmem:[%s1 + $0x360] sm:$0xff]
    %v136 = vld [vmem:[%s1 + $0x368] sm:$0xff]
    %v137 = vld [vmem:[%s1 + $0x370] sm:$0xff]
    %v138 = vld [vmem:[%s1 + $0x378] sm:$0xff]
    %v139 = vld [vmem:[%s1 + $0x380] sm:$0xff]
    %v140 = vld [vmem:[%s1 + $0x388] sm:$0xff]
    %v141 = vld [vmem:[%s1 + $0x390] sm:$0xff]
    %v142 = vld [vmem:[%s1 + $0x398] sm:$0xff]
    %v143 = vld [vmem:[%s1 + $0x3a0] sm:$0xff]
    %v144 = vld [vmem:[%s1 + $0x3a8] sm:$0xff]
    %v145 = vld [vmem:[%s1 + $0x3b0] sm:$0xff]
    %v146 = vld [vmem:[%s1 + $0x3b8] sm:$0xff]
    %v147 = vld [vmem:[%s1 + $0x3c0] sm:$0xff]
    %v148 = vld [vmem:[%s1 + $0x3c8] sm:$0xff]
    %v149 = vld [vmem:[%s1 + $0x3d0] sm:$0xff]
    %v150 = vld [vmem:[%s1 + $0x3d8] sm:$0xff]
    %v151 = vld [vmem:[%s1 + $0x3e0] sm:$0xff]
    %v152 = vld [vmem:[%s1 + $0x3e8] sm:$0xff]
    %v153 = vld [vmem:[%s1 + $0x3f0] sm:$0xff]
    %v154 = vld [vmem:[%s1 + $0x3f8] sm:$0xff]
    %v155 = vld [vmem:[%s1 + $0x400] sm:$0xff]
    %v156 = vld [vmem:[%s1 + $0x408] sm:$0xff]
    %v157 = vld [vmem:[%s1 + $0x410] sm:$0xff]
    %v158 = vld [vmem:[%s1 + $0x418] sm:$0xff]
    %v159 = vld [vmem:[%s1 + $0x420] sm:$0xff]
    %v160 = vld [vmem:[%s1 + $0x428] sm:$0xff]
    %v161 = vld [vmem:[%s1 + $0x430] sm:$0xff]
    %v162 = vld [vmem:[%s1 + $0x438] sm:$0xff]
    %v163 = vld [vmem:[%s1 + $0x440] sm:$0xff]
    %v164 = vld [vmem:[%s1 + $0x448] sm:$0xff]
    %v165 = vld [vmem:[%s1 + $0x450] sm:$0xff]
    %v166 = vld [vmem:[%s1 + $0x458] sm:$0xff]
    %v167 = vld [vmem:[%s1 + $0x460] sm:$0xff]
    %v168 = vld [vmem:[%s1 + $0x468] sm:$0xff]
    %v169 = vld [vmem:[%s1 + $0x470] sm:$0xff]
    %v170 = vld [vmem:[%s1 + $0x478] sm:$0xff]
    %v171 = vld [vmem:[%s1 + $0x480] sm:$0xff]
    %v172 = vld [vmem:[%s1 + $0x488] sm:$0xff]
    %v173 = vld [vmem:[%s1 + $0x490] sm:$0xff]
    %v174 = vld [vmem:[%s1 + $0x498] sm:$0xff]
    %v175 = vld [vmem:[%s1 + $0x4a0] sm:$0xff]
    %v176 = vld [vmem:[%s1 + $0x4a8] sm:$0xff]
    %v177 = vld [vmem:[%s1 + $0x4b0] sm:$0xff]
    %v178 = vld [vmem:[%s1 + $0x4b8] sm:$0xff]
    %v179 = vld [vmem:[%s1 + $0x4c0] sm:$0xff]
    %v180 = vld [vmem:[%s1 + $0x4c8] sm:$0xff]
    %v181 = vld [vmem:[%s1 + $0x4d0] sm:$0xff]
    %v182 = vld [vmem:[%s1 + $0x4d8] sm:$0xff]
    %v183 = vld [vmem:[%s1 + $0x4e0] sm:$0xff]
    %v184 = vld [vmem:[%s1 + $0x4e8] sm:$0xff]
    %v185 = vld [vmem:[%s1 + $0x4f0] sm:$0xff]
    %v186 = vld [vmem:[%s1 + $0x4f8] sm:$0xff]
    %v187 = vld [vmem:[%s1 + $0x500] sm:$0xff]
    %v188 = vld [vmem:[%s1 + $0x508] sm:$0xff]
    %v189 = vld [vmem:[%s1 + $0x510] sm:$0xff]
    %v190 = vld [vmem:[%s1 + $0x518] sm:$0xff]
    %v191 = vld [vmem:[%s1 + $0x520] sm:$0xff]
    %v192 = vld [vmem:[%s1 + $0x528] sm:$0xff]
    %v193 = vld [vmem:[%s1 + $0x530] sm:$0xff]
    %v194 = vld [vmem:[%s1 + $0x538] sm:$0xff]
    %v195 = vld [vmem:[%s1 + $0x540] sm:$0xff]
    %v196 = vld [vmem:[%s1 + $0x548] sm:$0xff]
    %v197 = vld [vmem:[%s1 + $0x550] sm:$0xff]
    %v198 = vld [vmem:[%s1 + $0x558] sm:$0xff]
    %v199 = vld [vmem:[%s1 + $0x560] sm:$0xff]
    %v200 = vld [vmem:[%s1 + $0x568] sm:$0xff]
    %v201 = vld [vmem:[%s1 + $0x570] sm:$0xff]
    %v202 = vld [vmem:[%s1 + $0x578] sm:$0xff]
    %v203 = vld [vmem:[%s1 + $0x580] sm:$0xff]
    %v204 = vld [vmem:[%s1 + $0x588] sm:$0xff]
    %v205 = vld [vmem:[%s1 + $0x590] sm:$0xff]
    %v206 = vld [vmem:[%s1 + $0x598] sm:$0xff]
    %v207 = vld [vmem:[%s1 + $0x5a0] sm:$0xff]
    %v208 = vld [vmem:[%s1 + $0x5a8] sm:$0xff]
    %v209 = vld [vmem:[%s1 + $0x5b0] sm:$0xff]
    %v210 = vld [vmem:[%s1 + $0x5b8] sm:$0xff]
    %v211 = vld [vmem:[%s1 + $0x5c0] sm:$0xff]
    %v212 = vld [vmem:[%s1 + $0x5c8] sm:$0xff]
    %v213 = vld [vmem:[%s1 + $0x5d0] sm:$0xff]
    %v214 = vld [vmem:[%s1 + $0x5d8] sm:$0xff]
    %v215 = vld [vmem:[%s1 + $0x5e0] sm:$0xff]
    %v216 = vld [vmem:[%s1 + $0x5e8] sm:$0xff]
    %v217 = vld [vmem:[%s1 + $0x5f0] sm:$0xff]
    %v218 = vld [vmem:[%s1 + $0x5f8] sm:$0xff]
    %v219 = vld [vmem:[%s1 + $0x600] sm:$0xff]
    %v220 = vld [vmem:[%s1 + $0x608] sm:$0xff]
    %v221 = vld [vmem:[%s1 + $0x610] sm:$0xff]
    %v222 = vld [vmem:[%s1 + $0x618] sm:$0xff]
    %v223 = vld [vmem:[%s1 + $0x620] sm:$0xff]
    %v224 = vld [vmem:[%s1 + $0x628] sm:$0xff]
    %v225 = vld [vmem:[%s1 + $0x630] sm:$0xff]
    %v226 = vld [vmem:[%s1 + $0x638] sm:$0xff]
    %v227 = vld [vmem:[%s1 + $0x640] sm:$0xff]
    %v228 = vld [vmem:[%s1 + $0x648] sm:$0xff]
    %v229 = vld [vmem:[%s1 + $0x650] sm:$0xff]
    %v230 = vld [vmem:[%s1 + $0x658] sm:$0xff]
    %v231 = vld [vmem:[%s1 + $0x660] sm:$0xff]
    %v232 = vld [vmem:[%s1 + $0x668] sm:$0xff]
    %v233 = vld [vmem:[%s1 + $0x670] sm:$0xff]
    %v234 = vld [vmem:[%s1 + $0x678] sm:$0xff]
    %v235 = vld [vmem:[%s1 + $0x680] sm:$0xff]
    %v236 = vld [vmem:[%s1 + $0x688] sm:$0xff]
    %v237 = vld [vmem:[%s1 + $0x690] sm:$0xff]
    %v238 = vld [vmem:[%s1 + $0x698] sm:$0xff]
    %v239 = vld [vmem:[%s1 + $0x6a0] sm:$0xff]
    %v240 = vld [vmem:[%s1 + $0x6a8] sm:$0xff]
    %v241 = vld [vmem:[%s1 + $0x6b0] sm:$0xff]
    %v242 = vld [vmem:[%s1 + $0x6b8] sm:$0xff]
    %v243 = vld [vmem:[%s1 + $0x6c0] sm:$0xff]
    %v244 = vld [vmem:[%s1 + $0x6c8] sm:$0xff]
    %v245 = vld [vmem:[%s1 + $0x6d0] sm:$0xff]
    %v246 = vld [vmem:[%s1 + $0x6d8] sm:$0xff]
    %v247 = vld [vmem:[%s1 + $0x6e0] sm:$0xff]
    %v248 = vld [vmem:[%s1 + $0x6e8] sm:$0xff]
    %v249 = vld [vmem:[%s1 + $0x6f0] sm:$0xff]
    %v250 = vld [vmem:[%s1 + $0x6f8] sm:$0xff]
    %v251 = vld [vmem:[%s1 + $0x700] sm:$0xff]
    %v252 = vld [vmem:[%s1 + $0x708] sm:$0xff]
    %v253 = vld [vmem:[%s1 + $0x710] sm:$0xff]
    %v254 = vld [vmem:[%s1 + $0x718] sm:$0xff]
    %v255 = vld [vmem:[%s1 + $0x720] sm:$0xff]
    %v256 = vld [vmem:[%s1 + $0x728] sm:$0xff]
    %v257 = vld [vmem:[%s1 + $0x730] sm:$0xff]
    %v258 = vld [vmem:[%s1 + $0x738] sm:$0xff]
    %v259 = vld [vmem:[%s1 + $0x740] sm:$0xff]
    %v260 = vld [vmem:[%s1 + $0x748] sm:$0xff]
    %v261 = vld [vmem:[%s1 + $0x750] sm:$0xff]
    %v262 = vld [vmem:[%s1 + $0x758] sm:$0xff]
    %v263 = vld [vmem:[%s1 + $0x760] sm:$0xff]
    %v264 = vld [vmem:[%s1 + $0x768] sm:$0xff]
    %v265 = vld [vmem:[%s1 + $0x770] sm:$0xff]
    %v266 = vld [vmem:[%s1 + $0x778] sm:$0xff]
    %v267 = vld [vmem:[%s1 + $0x780] sm:$0xff]
    %v268 = vld [vmem:[%s1 + $0x788] sm:$0xff]
    %v269 = vld [vmem:[%s1 + $0x790] sm:$0xff]
    %v270 = vld [vmem:[%s1 + $0x798] sm:$0xff]
    %v271 = vld [vmem:[%s1 + $0x7a0] sm:$0xff]
    %v272 = vld [vmem:[%s1 + $0x7a8] sm:$0xff]
    %v273 = vld [vmem:[%s1 + $0x7b0] sm:$0xff]
    %v274 = vld [vmem:[%s1 + $0x7b8] sm:$0xff]
    %v275 = vld [vmem:[%s1 + $0x7c0] sm:$0xff]
    %v276 = vld [vmem:[%s1 + $0x7c8] sm:$0xff]
    %v277 = vld [vmem:[%s1 + $0x7d0] sm:$0xff]
    %v278 = vld [vmem:[%s1 + $0x7d8] sm:$0xff]
    %v279 = vld [vmem:[%s1 + $0x7e0] sm:$0xff]
    %v280 = vld [vmem:[%s1 + $0x7e8] sm:$0xff]
    %v281 = vld [vmem:[%s1 + $0x7f0] sm:$0xff]
    %v282 = vld [vmem:[%s1 + $0x7f8] sm:$0xff]
    %v283 = vld [vmem:[%s1 + $0x800] sm:$0xff]
    %v284 = vld [vmem:[%s1 + $0x808] sm:$0xff]
    %v285 = vld [vmem:[%s1 + $0x810] sm:$0xff]
    %v286 = vld [vmem:[%s1 + $0x818] sm:$0xff]
    %v287 = vld [vmem:[%s1 + $0x820] sm:$0xff]
    %v288 = vld [vmem:[%s1 + $0x828] sm:$0xff]
    %v289 = vld [vmem:[%s1 + $0x830] sm:$0xff]
    %v290 = vld [vmem:[%s1 + $0x838] sm:$0xff]
    %v291 = vld [vmem:[%s1 + $0x840] sm:$0xff]
    %v292 = vld [vmem:[%s1 + $0x848] sm:$0xff]
    %v293 = vld [vmem:[%s1 + $0x850] sm:$0xff]
    %v294 = vld [vmem:[%s1 + $0x858] sm:$0xff]
    %v295 = vld [vmem:[%s1 + $0x860] sm:$0xff]
    %v296 = vld [vmem:[%s1 + $0x868] sm:$0xff]
    %v297 = vld [vmem:[%s1 + $0x870] sm:$0xff]
    %v298 = vld [vmem:[%s1 + $0x878] sm:$0xff]
    %v299 = vld [vmem:[%s1 + $0x880] sm:$0xff]
    %v300 = vld [vmem:[%s1 + $0x888] sm:$0xff]
    %v301 = vld [vmem:[%s1 + $0x890] sm:$0xff]
    %v302 = vld [vmem:[%s1 + $0x898] sm:$0xff]
    %v303 = vld [vmem:[%s1 + $0x8a0] sm:$0xff]
    %v304 = vld [vmem:[%s1 + $0x8a8] sm:$0xff]
    %v305 = vld [vmem:[%s1 + $0x8b0] sm:$0xff]
    %v306 = vld [vmem:[%s1 + $0x8b8] sm:$0xff]
    %v307 = vld [vmem:[%s1 + $0x8c0] sm:$0xff]
    %v308 = vld [vmem:[%s1 + $0x8c8] sm:$0xff]
    %v309 = vld [vmem:[%s1 + $0x8d0] sm:$0xff]
    %v310 = vld [vmem:[%s1 + $0x8d8] sm:$0xff]
    %v311 = vld [vmem:[%s1 + $0x8e0] sm:$0xff]
    %v312 = vld [vmem:[%s1 + $0x8e8] sm:$0xff]
    %v313 = vld [vmem:[%s1 + $0x8f0] sm:$0xff]
    %v314 = vld [vmem:[%s1 + $0x8f8] sm:$0xff]
    %v315 = vld [vmem:[%s1 + $0x900] sm:$0xff]
    %v316 = vld [vmem:[%s1 + $0x908] sm:$0xff]
    %v317 = vld [vmem:[%s1 + $0x910] sm:$0xff]
    %v318 = vld [vmem:[%s1 + $0x918] sm:$0xff]
    %v319 = vld [vmem:[%s1 + $0x920] sm:$0xff]
    %v320 = vld [vmem:[%s1 + $0x928] sm:$0xff]
    %v321 = vld [vmem:[%s1 + $0x930] sm:$0xff]
    %v322 = vld [vmem:[%s1 + $0x938] sm:$0xff]
    %v323 = vld [vmem:[%s1 + $0x940] sm:$0xff]
    %v324 = vld [vmem:[%s1 + $0x948] sm:$0xff]
    %v325 = vld [vmem:[%s1 + $0x950] sm:$0xff]
    %v326 = vld [vmem:[%s1 + $0x958] sm:$0xff]
    %v327 = vld [vmem:[%s1 + $0x960] sm:$0xff]
    %v328 = vld [vmem:[%s1 + $0x968] sm:$0xff]
    %v329 = vld [vmem:[%s1 + $0x970] sm:$0xff]
    %v330 = vld [vmem:[%s1 + $0x978] sm:$0xff]
    %v331 = vld [vmem:[%s1 + $0x980] sm:$0xff]
    %v332 = vld [vmem:[%s1 + $0x988] sm:$0xff]
    %v333 = vld [vmem:[%s1 + $0x990] sm:$0xff]
    %v334 = vld [vmem:[%s1 + $0x998] sm:$0xff]
    %v335 = vld [vmem:[%s1 + $0x9a0] sm:$0xff]
    %v336 = vld [vmem:[%s1 + $0x9a8] sm:$0xff]
    %v337 = vld [vmem:[%s1 + $0x9b0] sm:$0xff]
    %v338 = vld [vmem:[%s1 + $0x9b8] sm:$0xff]
    %v339 = vld [vmem:[%s1 + $0x9c0] sm:$0xff]
    %v340 = vld [vmem:[%s1 + $0x9c8] sm:$0xff]
    %v341 = vld [vmem:[%s1 + $0x9d0] sm:$0xff]
    %v342 = vld [vmem:[%s1 + $0x9d8] sm:$0xff]
    %v343 = vld [vmem:[%s1 + $0x9e0] sm:$0xff]
    %v344 = vld [vmem:[%s1 + $0x9e8] sm:$0xff]
    %v345 = vld [vmem:[%s1 + $0x9f0] sm:$0xff]
    %v346 = vld [vmem:[%s1 + $0x9f8] sm:$0xff]
    %v347 = vld [vmem:[%s1 + $0xa00] sm:$0xff]
    %v348 = vld [vmem:[%s1 + $0xa08] sm:$0xff]
    %v349 = vld [vmem:[%s1 + $0xa10] sm:$0xff]
    %v350 = vld [vmem:[%s1 + $0xa18] sm:$0xff]
    %v351 = vld [vmem:[%s1 + $0xa20] sm:$0xff]
    %v352 = vld [vmem:[%s1 + $0xa28] sm:$0xff]
    %v353 = vld [vmem:[%s1 + $0xa30] sm:$0xff]
    %v354 = vld [vmem:[%s1 + $0xa38] sm:$0xff]
    %v355 = vld [vmem:[%s1 + $0xa40] sm:$0xff]
    %v356 = vld [vmem:[%s1 + $0xa48] sm:$0xff]
    %v357 = vld [vmem:[%s1 + $0xa50] sm:$0xff]
    %v358 = vld [vmem:[%s1 + $0xa58] sm:$0xff]
    %v359 = vld [vmem:[%s1 + $0xa60] sm:$0xff]
    %v360 = vld [vmem:[%s1 + $0xa68] sm:$0xff]
    %v361 = vld [vmem:[%s1 + $0xa70] sm:$0xff]
    %v362 = vld [vmem:[%s1 + $0xa78] sm:$0xff]
    %v363 = vld [vmem:[%s1 + $0xa80] sm:$0xff]
    %v364 = vld [vmem:[%s1 + $0xa88] sm:$0xff]
    %v365 = vld [vmem:[%s1 + $0xa90] sm:$0xff]
    %v366 = vld [vmem:[%s1 + $0xa98] sm:$0xff]
    %v367 = vld [vmem:[%s1 + $0xaa0] sm:$0xff]
    %v368 = vld [vmem:[%s1 + $0xaa8] sm:$0xff]
    %v369 = vld [vmem:[%s1 + $0xab0] sm:$0xff]
    %v370 = vld [vmem:[%s1 + $0xab8] sm:$0xff]
    %v371 = vld [vmem:[%s1 + $0xac0] sm:$0xff]
    %v372 = vld [vmem:[%s1 + $0xac8] sm:$0xff]
    %v373 = vld [vmem:[%s1 + $0xad0] sm:$0xff]
    %v374 = vld [vmem:[%s1 + $0xad8] sm:$0xff]
    %v375 = vld [vmem:[%s1 + $0xae0] sm:$0xff]
    %v376 = vld [vmem:[%s1 + $0xae8] sm:$0xff]
    %v377 = vld [vmem:[%s1 + $0xaf0] sm:$0xff]
    %v378 = vld [vmem:[%s1 + $0xaf8] sm:$0xff]
    %v379 = vld [vmem:[%s1 + $0xb00] sm:$0xff]
    %v380 = vld [vmem:[%s1 + $0xb08] sm:$0xff]
    %v381 = vld [vmem:[%s1 + $0xb10] sm:$0xff]
    %v382 = vld [vmem:[%s1 + $0xb18] sm:$0xff]
    %v383 = vld [vmem:[%s1 + $0xb20] sm:$0xff]
    %v384 = vld [vmem:[%s1 + $0xb28] sm:$0xff]
    %v385 = vld [vmem:[%s1 + $0xb30] sm:$0xff]
    %v386 = vld [vmem:[%s1 + $0xb38] sm:$0xff]
    %v387 = vld [vmem:[%s1 + $0xb40] sm:$0xff]
    %v388 = vld [vmem:[%s1 + $0xb48] sm:$0xff]
    %v389 = vld [vmem:[%s1 + $0xb50] sm:$0xff]
    %v390 = vld [vmem:[%s1 + $0xb58] sm:$0xff]
    %v391 = vld [vmem:[%s1 + $0xb60] sm:$0xff]
    %v392 = vld [vmem:[%s1 + $0xb68] sm:$0xff]
    %v393 = vld [vmem:[%s1 + $0xb70] sm:$0xff]
    %v394 = vld [vmem:[%s1 + $0xb78] sm:$0xff]
    %v395 = vld [vmem:[%s1 + $0xb80] sm:$0xff]
    %v396 = vld [vmem:[%s1 + $0xb88] sm:$0xff]
    %v397 = vld [vmem:[%s1 + $0xb90] sm:$0xff]
    %v398 = vld [vmem:[%s1 + $0xb98] sm:$0xff]
    %v399 = vld [vmem:[%s1 + $0xba0] sm:$0xff]
    %v400 = vld [vmem:[%s1 + $0xba8] sm:$0xff]
    %v401 = vld [vmem:[%s1 + $0xbb0] sm:$0xff]
    %v402 = vld [vmem:[%s1 + $0xbb8] sm:$0xff]
    %v403 = vld [vmem:[%s1 + $0xbc0] sm:$0xff]
    %v404 = vld [vmem:[%s1 + $0xbc8] sm:$0xff]
    %v405 = vld [vmem:[%s1 + $0xbd0] sm:$0xff]
    %v406 = vld [vmem:[%s1 + $0xbd8] sm:$0xff]
    %v407 = vld [vmem:[%s1 + $0xbe0] sm:$0xff]
    %v408 = vld [vmem:[%s1 + $0xbe8] sm:$0xff]
    %v409 = vld [vmem:[%s1 + $0xbf0] sm:$0xff]
    %v410 = vld [vmem:[%s1 + $0xbf8] sm:$0xff]
    %v411 = vld [vmem:[%s1 + $0xc00] sm:$0xff]
    %v412 = vld [vmem:[%s1 + $0xc08] sm:$0xff]
    %v413 = vld [vmem:[%s1 + $0xc10] sm:$0xff]
    %v414 = vld [vmem:[%s1 + $0xc18] sm:$0xff]
    %v415 = vld [vmem:[%s1 + $0xc20] sm:$0xff]
    %v416 = vld [vmem:[%s1 + $0xc28] sm:$0xff]
    %v417 = vld [vmem:[%s1 + $0xc30] sm:$0xff]
    %v418 = vld [vmem:[%s1 + $0xc38] sm:$0xff]
    %v419 = vld [vmem:[%s1 + $0xc40] sm:$0xff]
    %v420 = vld [vmem:[%s1 + $0xc48] sm:$0xff]
    %v421 = vld [vmem:[%s1 + $0xc50] sm:$0xff]
    %v422 = vld [vmem:[%s1 + $0xc58] sm:$0xff]
    %v423 = vld [vmem:[%s1 + $0xc60] sm:$0xff]
    %v424 = vld [vmem:[%s1 + $0xc68] sm:$0xff]
    %v425 = vld [vmem:[%s1 + $0xc70] sm:$0xff]
    %v426 = vld [vmem:[%s1 + $0xc78] sm:$0xff]
    %v427 = vld [vmem:[%s1 + $0xc80] sm:$0xff]
    %v428 = vld [vmem:[%s1 + $0xc88] sm:$0xff]
    %v429 = vld [vmem:[%s1 + $0xc90] sm:$0xff]
    %v430 = vld [vmem:[%s1 + $0xc98] sm:$0xff]
    %v431 = vld [vmem:[%s1 + $0xca0] sm:$0xff]
    %v432 = vld [vmem:[%s1 + $0xca8] sm:$0xff]
    %v433 = vld [vmem:[%s1 + $0xcb0] sm:$0xff]
    %v434 = vld [vmem:[%s1 + $0xcb8] sm:$0xff]
    %v435 = vld [vmem:[%s1 + $0xcc0] sm:$0xff]
    %v436 = vld [vmem:[%s1 + $0xcc8] sm:$0xff]
    %v437 = vld [vmem:[%s1 + $0xcd0] sm:$0xff]
    %v438 = vld [vmem:[%s1 + $0xcd8] sm:$0xff]
    %v439 = vld [vmem:[%s1 + $0xce0] sm:$0xff]
    %v440 = vld [vmem:[%s1 + $0xce8] sm:$0xff]
    %v441 = vld [vmem:[%s1 + $0xcf0] sm:$0xff]
    %v442 = vld [vmem:[%s1 + $0xcf8] sm:$0xff]
    %v443 = vld [vmem:[%s1 + $0xd00] sm:$0xff]
    %v444 = vld [vmem:[%s1 + $0xd08] sm:$0xff]
    %v445 = vld [vmem:[%s1 + $0xd10] sm:$0xff]
    %v446 = vld [vmem:[%s1 + $0xd18] sm:$0xff]
    %v447 = vld [vmem:[%s1 + $0xd20] sm:$0xff]
    %v448 = vld [vmem:[%s1 + $0xd28] sm:$0xff]
    %v449 = vld [vmem:[%s1 + $0xd30] sm:$0xff]
    %v450 = vld [vmem:[%s1 + $0xd38] sm:$0xff]
    %v451 = vld [vmem:[%s1 + $0xd40] sm:$0xff]
    %v452 = vld [vmem:[%s1 + $0xd48] sm:$0xff]
    %v453 = vld [vmem:[%s1 + $0xd50] sm:$0xff]
    %v454 = vld [vmem:[%s1 + $0xd58] sm:$0xff]
    %v455 = vld [vmem:[%s1 + $0xd60] sm:$0xff]
    %v456 = vld [vmem:[%s1 + $0xd68] sm:$0xff]
    %v457 = vld [vmem:[%s1 + $0xd70] sm:$0xff]
    %v458 = vld [vmem:[%s1 + $0xd78] sm:$0xff]
    %v459 = vld [vmem:[%s1 + $0xd80] sm:$0xff]
    %v460 = vld [vmem:[%s1 + $0xd88] sm:$0xff]
    %v461 = vld [vmem:[%s1 + $0xd90] sm:$0xff]
    %v462 = vld [vmem:[%s1 + $0xd98] sm:$0xff]
    %v463 = vld [vmem:[%s1 + $0xda0] sm:$0xff]
    %v464 = vld [vmem:[%s1 + $0xda8] sm:$0xff]
    %v465 = vld [vmem:[%s1 + $0xdb0] sm:$0xff]
    %v466 = vld [vmem:[%s1 + $0xdb8] sm:$0xff]
    %v467 = vld [vmem:[%s1 + $0xdc0] sm:$0xff]
    %v468 = vld [vmem:[%s1 + $0xdc8] sm:$0xff]
    %v469 = vld [vmem:[%s1 + $0xdd0] sm:$0xff]
    %v470 = vld [vmem:[%s1 + $0xdd8] sm:$0xff]
    %v471 = vld [vmem:[%s1 + $0xde0] sm:$0xff]
    %v472 = vld [vmem:[%s1 + $0xde8] sm:$0xff]
    %v473 = vld [vmem:[%s1 + $0xdf0] sm:$0xff]
    %v474 = vld [vmem:[%s1 + $0xdf8] sm:$0xff]
    %v475 = vld [vmem:[%s1 + $0xe00] sm:$0xff]
    %v476 = vld [vmem:[%s1 + $0xe08] sm:$0xff]
    %v477 = vld [vmem:[%s1 + $0xe10] sm:$0xff]
    %v478 = vld [vmem:[%s1 + $0xe18] sm:$0xff]
    %v479 = vld [vmem:[%s1 + $0xe20] sm:$0xff]
    %v480 = vld [vmem:[%s1 + $0xe28] sm:$0xff]
    %v481 = vld [vmem:[%s1 + $0xe30] sm:$0xff]
    %v482 = vld [vmem:[%s1 + $0xe38] sm:$0xff]
    %v483 = vld [vmem:[%s1 + $0xe40] sm:$0xff]
    %v484 = vld [vmem:[%s1 + $0xe48] sm:$0xff]
    %v485 = vld [vmem:[%s1 + $0xe50] sm:$0xff]
    %v486 = vld [vmem:[%s1 + $0xe58] sm:$0xff]
    %v487 = vld [vmem:[%s1 + $0xe60] sm:$0xff]
    %v488 = vld [vmem:[%s1 + $0xe68] sm:$0xff]
    %v489 = vld [vmem:[%s1 + $0xe70] sm:$0xff]
    %v490 = vld [vmem:[%s1 + $0xe78] sm:$0xff]
    %v491 = vld [vmem:[%s1 + $0xe80] sm:$0xff]
    %v492 = vld [vmem:[%s1 + $0xe88] sm:$0xff]
    %v493 = vld [vmem:[%s1 + $0xe90] sm:$0xff]
    %v494 = vld [vmem:[%s1 + $0xe98] sm:$0xff]
    %v495 = vld [vmem:[%s1 + $0xea0] sm:$0xff]
    %v496 = vld [vmem:[%s1 + $0xea8] sm:$0xff]
    %v497 = vld [vmem:[%s1 + $0xeb0] sm:$0xff]
    %v498 = vld [vmem:[%s1 + $0xeb8] sm:$0xff]
    %v499 = vld [vmem:[%s1 + $0xec0] sm:$0xff]
    %v500 = vld [vmem:[%s1 + $0xec8] sm:$0xff]
    %v501 = vld [vmem:[%s1 + $0xed0] sm:$0xff]
    %v502 = vld [vmem:[%s1 + $0xed8] sm:$0xff]
    %v503 = vld [vmem:[%s1 + $0xee0] sm:$0xff]
    %v504 = vld [vmem:[%s1 + $0xee8] sm:$0xff]
    %v505 = vld [vmem:[%s1 + $0xef0] sm:$0xff]
    %v506 = vld [vmem:[%s1 + $0xef8] sm:$0xff]
    %v507 = vld [vmem:[%s1 + $0xf00] sm:$0xff]
    %v508 = vld [vmem:[%s1 + $0xf08] sm:$0xff]
    %v509 = vld [vmem:[%s1 + $0xf10] sm:$0xff]
    %v510 = vld [vmem:[%s1 + $0xf18] sm:$0xff]
    %v511 = vld [vmem:[%s1 + $0xf20] sm:$0xff]
    %v512 = vld [vmem:[%s1 + $0xf28] sm:$0xff]
    %v513 = vld [vmem:[%s1 + $0xf30] sm:$0xff]
    %v514 = vld [vmem:[%s1 + $0xf38] sm:$0xff]
    %v515 = vld [vmem:[%s1 + $0xf40] sm:$0xff]
    %v516 = vld [vmem:[%s1 + $0xf48] sm:$0xff]
    %v517 = vld [vmem:[%s1 + $0xf50] sm:$0xff]
    %v518 = vld [vmem:[%s1 + $0xf58] sm:$0xff]
    %v519 = vld [vmem:[%s1 + $0xf60] sm:$0xff]
    %v520 = vld [vmem:[%s1 + $0xf68] sm:$0xff]
    %v521 = vld [vmem:[%s1 + $0xf70] sm:$0xff]
    %v522 = vld [vmem:[%s1 + $0xf78] sm:$0xff]
    %v523 = vld [vmem:[%s1 + $0xf80] sm:$0xff]
    %v524 = vld [vmem:[%s1 + $0xf88] sm:$0xff]
    %v525 = vld [vmem:[%s1 + $0xf90] sm:$0xff]
    %v526 = vld [vmem:[%s1 + $0xf98] sm:$0xff]
    %v527 = vld [vmem:[%s1 + $0xfa0] sm:$0xff]
    %v528 = vld [vmem:[%s1 + $0xfa8] sm:$0xff]
    %v529 = vld [vmem:[%s1 + $0xfb0] sm:$0xff]
    %v530 = vld [vmem:[%s1 + $0xfb8] sm:$0xff]
    %v531 = vld [vmem:[%s1 + $0xfc0] sm:$0xff]
    %v532 = vld [vmem:[%s1 + $0xfc8] sm:$0xff]
    %v533 = vld [vmem:[%s1 + $0xfd0] sm:$0xff]
    %v534 = vld [vmem:[%s1 + $0xfd8] sm:$0xff]
    %v535 = vld [vmem:[%s1 + $0xfe0] sm:$0xff]
    %v536 = vld [vmem:[%s1 + $0xfe8] sm:$0xff]
    %v537 = vld [vmem:[%s1 + $0xff0] sm:$0xff]
    %v538 = vld [vmem:[%s1 + $0xff8] sm:$0xff]
    %v539 = vld [vmem:[%s1 + $0x1000] sm:$0xff]
    %v540 = vld [vmem:[%s1 + $0x1008] sm:$0xff]
    %v541 = vld [vmem:[%s1 + $0x1010] sm:$0xff]
    %v542 = vld [vmem:[%s1 + $0x1018] sm:$0xff]
    %v543 = vld [vmem:[%s1 + $0x1020] sm:$0xff]
    %v544 = vld [vmem:[%s1 + $0x1028] sm:$0xff]
    %v545 = vld [vmem:[%s1 + $0x1030] sm:$0xff]
    %v546 = vld [vmem:[%s1 + $0x1038] sm:$0xff]
    %v547 = vld [vmem:[%s1 + $0x1040] sm:$0xff]
    %v548 = vld [vmem:[%s1 + $0x1048] sm:$0xff]
    %v549 = vld [vmem:[%s1 + $0x1050] sm:$0xff]
    %v550 = vld [vmem:[%s1 + $0x1058] sm:$0xff]
    %v551 = vld [vmem:[%s1 + $0x1060] sm:$0xff]
    %v552 = vld [vmem:[%s1 + $0x1068] sm:$0xff]
    %v553 = vld [vmem:[%s1 + $0x1070] sm:$0xff]
    %v554 = vld [vmem:[%s1 + $0x1078] sm:$0xff]
    %v555 = vld [vmem:[%s1 + $0x1080] sm:$0xff]
    %v556 = vld [vmem:[%s1 + $0x1088] sm:$0xff]
    %v557 = vld [vmem:[%s1 + $0x1090] sm:$0xff]
    %v558 = vld [vmem:[%s1 + $0x1098] sm:$0xff]
    %v559 = vld [vmem:[%s1 + $0x10a0] sm:$0xff]
    %v560 = vld [vmem:[%s1 + $0x10a8] sm:$0xff]
    %v561 = vld [vmem:[%s1 + $0x10b0] sm:$0xff]
    %v562 = vld [vmem:[%s1 + $0x10b8] sm:$0xff]
    %v563 = vld [vmem:[%s1 + $0x10c0] sm:$0xff]
    %v564 = vld [vmem:[%s1 + $0x10c8] sm:$0xff]
    %v565 = vld [vmem:[%s1 + $0x10d0] sm:$0xff]
    %v566 = vld [vmem:[%s1 + $0x10d8] sm:$0xff]
    %v567 = vld [vmem:[%s1 + $0x10e0] sm:$0xff]
    %v568 = vld [vmem:[%s1 + $0x10e8] sm:$0xff]
    %v569 = vld [vmem:[%s1 + $0x10f0] sm:$0xff]
    %v570 = vld [vmem:[%s1 + $0x10f8] sm:$0xff]
    %v571 = vld [vmem:[%s1 + $0x1100] sm:$0xff]
    %v572 = vld [vmem:[%s1 + $0x1108] sm:$0xff]
    %v573 = vld [vmem:[%s1 + $0x1110] sm:$0xff]
    %v574 = vld [vmem:[%s1 + $0x1118] sm:$0xff]
    %v575 = vld [vmem:[%s1 + $0x1120] sm:$0xff]
    %v576 = vld [vmem:[%s1 + $0x1128] sm:$0xff]
    %v577 = vld [vmem:[%s1 + $0x1130] sm:$0xff]
    %v578 = vld [vmem:[%s1 + $0x1138] sm:$0xff]
    %v579 = vld [vmem:[%s1 + $0x1140] sm:$0xff]
    %v580 = vld [vmem:[%s1 + $0x1148] sm:$0xff]
    %v581 = vld [vmem:[%s1 + $0x1150] sm:$0xff]
    %v582 = vld [vmem:[%s1 + $0x1158] sm:$0xff]
    %v583 = vld [vmem:[%s1 + $0x1160] sm:$0xff]
    %v584 = vld [vmem:[%s1 + $0x1168] sm:$0xff]
    %v585 = vld [vmem:[%s1 + $0x1170] sm:$0xff]
    %v586 = vld [vmem:[%s1 + $0x1178] sm:$0xff]
    %v587 = vld [vmem:[%s1 + $0x1180] sm:$0xff]
    %v588 = vld [vmem:[%s1 + $0x1188] sm:$0xff]
    %v589 = vld [vmem:[%s1 + $0x1190] sm:$0xff]
    %v590 = vld [vmem:[%s1 + $0x1198] sm:$0xff]
    %v591 = vld [vmem:[%s1 + $0x11a0] sm:$0xff]
    %v592 = vld [vmem:[%s1 + $0x11a8] sm:$0xff]
    %v593 = vld [vmem:[%s1 + $0x11b0] sm:$0xff]
    %v594 = vld [vmem:[%s1 + $0x11b8] sm:$0xff]
    %v595 = vld [vmem:[%s1 + $0x11c0] sm:$0xff]
    %v596 = vld [vmem:[%s1 + $0x11c8] sm:$0xff]
    %v597 = vld [vmem:[%s1 + $0x11d0] sm:$0xff]
    %v598 = vld [vmem:[%s1 + $0x11d8] sm:$0xff]
    %v599 = vld [vmem:[%s1 + $0x11e0] sm:$0xff]
    %v600 = vld [vmem:[%s1 + $0x11e8] sm:$0xff]
    %v601 = vld [vmem:[%s1 + $0x11f0] sm:$0xff]
    %v602 = vld [vmem:[%s1 + $0x11f8] sm:$0xff]
    %v603 = vld [vmem:[%s1 + $0x1200] sm:$0xff]
    %v604 = vld [vmem:[%s1 + $0x1208] sm:$0xff]
    %v605 = vld [vmem:[%s1 + $0x1210] sm:$0xff]
    %v606 = vld [vmem:[%s1 + $0x1218] sm:$0xff]
    %v607 = vld [vmem:[%s1 + $0x1220] sm:$0xff]
    %v608 = vld [vmem:[%s1 + $0x1228] sm:$0xff]
    %v609 = vld [vmem:[%s1 + $0x1230] sm:$0xff]
    %v610 = vld [vmem:[%s1 + $0x1238] sm:$0xff]
    %v611 = vld [vmem:[%s1 + $0x1240] sm:$0xff]
    %v612 = vld [vmem:[%s1 + $0x1248] sm:$0xff]
    %v613 = vld [vmem:[%s1 + $0x1250] sm:$0xff]
    %v614 = vld [vmem:[%s1 + $0x1258] sm:$0xff]
    %v615 = vld [vmem:[%s1 + $0x1260] sm:$0xff]
    %v616 = vld [vmem:[%s1 + $0x1268] sm:$0xff]
    %v617 = vld [vmem:[%s1 + $0x1270] sm:$0xff]
    %v618 = vld [vmem:[%s1 + $0x1278] sm:$0xff]
    %v619 = vld [vmem:[%s1 + $0x1280] sm:$0xff]
    %v620 = vld [vmem:[%s1 + $0x1288] sm:$0xff]
    %v621 = vld [vmem:[%s1 + $0x1290] sm:$0xff]
    %v622 = vld [vmem:[%s1 + $0x1298] sm:$0xff]
    %v623 = vld [vmem:[%s1 + $0x12a0] sm:$0xff]
    %v624 = vld [vmem:[%s1 + $0x12a8] sm:$0xff]
    %v625 = vld [vmem:[%s1 + $0x12b0] sm:$0xff]
    %v626 = vld [vmem:[%s1 + $0x12b8] sm:$0xff]
    %v627 = vld [vmem:[%s1 + $0x12c0] sm:$0xff]
    %v628 = vld [vmem:[%s1 + $0x12c8] sm:$0xff]
    %v629 = vld [vmem:[%s1 + $0x12d0] sm:$0xff]
    %v630 = vld [vmem:[%s1 + $0x12d8] sm:$0xff]
    %v631 = vld [vmem:[%s1 + $0x12e0] sm:$0xff]
    %v632 = vld [vmem:[%s1 + $0x12e8] sm:$0xff]
    %v633 = vld [vmem:[%s1 + $0x12f0] sm:$0xff]
    %v634 = vld [vmem:[%s1 + $0x12f8] sm:$0xff]
    %v635 = vld [vmem:[%s1 + $0x1300] sm:$0xff]
    %v636 = vld [vmem:[%s1 + $0x1308] sm:$0xff]
    %v637 = vld [vmem:[%s1 + $0x1310] sm:$0xff]
    %v638 = vld [vmem:[%s1 + $0x1318] sm:$0xff]
    %v639 = vld [vmem:[%s1 + $0x1320] sm:$0xff]
    %v640 = vld [vmem:[%s1 + $0x1328] sm:$0xff]
    %v641 = vld [vmem:[%s1 + $0x1330] sm:$0xff]
    %v642 = vld [vmem:[%s1 + $0x1338] sm:$0xff]
    %v643 = vld [vmem:[%s1 + $0x1340] sm:$0xff]
    %v644 = vld [vmem:[%s1 + $0x1348] sm:$0xff]
    %v645 = vld [vmem:[%s1 + $0x1350] sm:$0xff]
    %v646 = vld [vmem:[%s1 + $0x1358] sm:$0xff]
    %v647 = vld [vmem:[%s1 + $0x1360] sm:$0xff]
    %v648 = vld [vmem:[%s1 + $0x1368] sm:$0xff]
    %v649 = vld [vmem:[%s1 + $0x1370] sm:$0xff]
    %v650 = vld [vmem:[%s1 + $0x1378] sm:$0xff]
    %v651 = vld [vmem:[%s1 + $0x1380] sm:$0xff]
    %v652 = vld [vmem:[%s1 + $0x1388] sm:$0xff]
    %v653 = vld [vmem:[%s1 + $0x1390] sm:$0xff]
    %v654 = vld [vmem:[%s1 + $0x1398] sm:$0xff]
    %v655 = vld [vmem:[%s1 + $0x13a0] sm:$0xff]
    %v656 = vld [vmem:[%s1 + $0x13a8] sm:$0xff]
    %v657 = vld [vmem:[%s1 + $0x13b0] sm:$0xff]
    %v658 = vld [vmem:[%s1 + $0x13b8] sm:$0xff]
    %v659 = vld [vmem:[%s1 + $0x13c0] sm:$0xff]
    %v660 = vld [vmem:[%s1 + $0x13c8] sm:$0xff]
    %v661 = vld [vmem:[%s1 + $0x13d0] sm:$0xff]
    %v662 = vld [vmem:[%s1 + $0x13d8] sm:$0xff]
    %v663 = vld [vmem:[%s1 + $0x13e0] sm:$0xff]
    %v664 = vld [vmem:[%s1 + $0x13e8] sm:$0xff]
    %v665 = vld [vmem:[%s1 + $0x13f0] sm:$0xff]
    %v666 = vld [vmem:[%s1 + $0x13f8] sm:$0xff]
    %v667 = vld [vmem:[%s1 + $0x1400] sm:$0xff]
    %v668 = vld [vmem:[%s1 + $0x1408] sm:$0xff]
    %v669 = vld [vmem:[%s1 + $0x1410] sm:$0xff]
    %v670 = vld [vmem:[%s1 + $0x1418] sm:$0xff]
    %v671 = vld [vmem:[%s1 + $0x1420] sm:$0xff]
    %v672 = vld [vmem:[%s1 + $0x1428] sm:$0xff]
    %v673 = vld [vmem:[%s1 + $0x1430] sm:$0xff]
    %v674 = vld [vmem:[%s1 + $0x1438] sm:$0xff]
    %v675 = vld [vmem:[%s1 + $0x1440] sm:$0xff]
    %v676 = vld [vmem:[%s1 + $0x1448] sm:$0xff]
    %v677 = vld [vmem:[%s1 + $0x1450] sm:$0xff]
    %v678 = vld [vmem:[%s1 + $0x1458] sm:$0xff]
    %v679 = vld [vmem:[%s1 + $0x1460] sm:$0xff]
    %v680 = vld [vmem:[%s1 + $0x1468] sm:$0xff]
    %v681 = vld [vmem:[%s1 + $0x1470] sm:$0xff]
    %v682 = vld [vmem:[%s1 + $0x1478] sm:$0xff]
    %v683 = vld [vmem:[%s1 + $0x1480] sm:$0xff]
    %v684 = vld [vmem:[%s1 + $0x1488] sm:$0xff]
    %v685 = vld [vmem:[%s1 + $0x1490] sm:$0xff]
    %v686 = vld [vmem:[%s1 + $0x1498] sm:$0xff]
    %v687 = vld [vmem:[%s1 + $0x14a0] sm:$0xff]
    %v688 = vld [vmem:[%s1 + $0x14a8] sm:$0xff]
    %v689 = vld [vmem:[%s1 + $0x14b0] sm:$0xff]
    %v690 = vld [vmem:[%s1 + $0x14b8] sm:$0xff]
    %v691 = vld [vmem:[%s1 + $0x14c0] sm:$0xff]
    %v692 = vld [vmem:[%s1 + $0x14c8] sm:$0xff]
    %v693 = vld [vmem:[%s1 + $0x14d0] sm:$0xff]
    %v694 = vld [vmem:[%s1 + $0x14d8] sm:$0xff]
    %v695 = vld [vmem:[%s1 + $0x14e0] sm:$0xff]
    %v696 = vld [vmem:[%s1 + $0x14e8] sm:$0xff]
    %v697 = vld [vmem:[%s1 + $0x14f0] sm:$0xff]
    %v698 = vld [vmem:[%s1 + $0x14f8] sm:$0xff]
    %v699 = vld [vmem:[%s1 + $0x1500] sm:$0xff]
    %v700 = vld [vmem:[%s1 + $0x1508] sm:$0xff]
    %v701 = vld [vmem:[%s1 + $0x1510] sm:$0xff]
    %v702 = vld [vmem:[%s1 + $0x1518] sm:$0xff]
    %v703 = vld [vmem:[%s1 + $0x1520] sm:$0xff]
    %v704 = vld [vmem:[%s1 + $0x1528] sm:$0xff]
    %v705 = vld [vmem:[%s1 + $0x1530] sm:$0xff]
    %v706 = vld [vmem:[%s1 + $0x1538] sm:$0xff]
    %v707 = vld [vmem:[%s1 + $0x1540] sm:$0xff]
    %v708 = vld [vmem:[%s1 + $0x1548] sm:$0xff]
    %v709 = vld [vmem:[%s1 + $0x1550] sm:$0xff]
    %v710 = vld [vmem:[%s1 + $0x1558] sm:$0xff]
    %v711 = vld [vmem:[%s1 + $0x1560] sm:$0xff]
    %v712 = vld [vmem:[%s1 + $0x1568] sm:$0xff]
    %v713 = vld [vmem:[%s1 + $0x1570] sm:$0xff]
    %v714 = vld [vmem:[%s1 + $0x1578] sm:$0xff]
    %v715 = vld [vmem:[%s1 + $0x1580] sm:$0xff]
    %v716 = vld [vmem:[%s1 + $0x1588] sm:$0xff]
    %v717 = vld [vmem:[%s1 + $0x1590] sm:$0xff]
    %v718 = vld [vmem:[%s1 + $0x1598] sm:$0xff]
    %v719 = vld [vmem:[%s1 + $0x15a0] sm:$0xff]
    %v720 = vld [vmem:[%s1 + $0x15a8] sm:$0xff]
    %v721 = vld [vmem:[%s1 + $0x15b0] sm:$0xff]
    %v722 = vld [vmem:[%s1 + $0x15b8] sm:$0xff]
    %v723 = vld [vmem:[%s1 + $0x15c0] sm:$0xff]
    %v724 = vld [vmem:[%s1 + $0x15c8] sm:$0xff]
    %v725 = vld [vmem:[%s1 + $0x15d0] sm:$0xff]
    %v726 = vld [vmem:[%s1 + $0x15d8] sm:$0xff]
    %v727 = vld [vmem:[%s1 + $0x15e0] sm:$0xff]
    %v728 = vld [vmem:[%s1 + $0x15e8] sm:$0xff]
    %v729 = vld [vmem:[%s1 + $0x15f0] sm:$0xff]
    %v730 = vld [vmem:[%s1 + $0x15f8] sm:$0xff]
    %v731 = vld [vmem:[%s1 + $0x1600] sm:$0xff]
    %v732 = vld [vmem:[%s1 + $0x1608] sm:$0xff]
    %v733 = vld [vmem:[%s1 + $0x1610] sm:$0xff]
    %v734 = vld [vmem:[%s1 + $0x1618] sm:$0xff]
    %v735 = vld [vmem:[%s1 + $0x1620] sm:$0xff]
    %v736 = vld [vmem:[%s1 + $0x1628] sm:$0xff]
    %v737 = vld [vmem:[%s1 + $0x1630] sm:$0xff]
    %v738 = vld [vmem:[%s1 + $0x1638] sm:$0xff]
    %v739 = vld [vmem:[%s1 + $0x1640] sm:$0xff]
    %v740 = vld [vmem:[%s1 + $0x1648] sm:$0xff]
    %v741 = vld [vmem:[%s1 + $0x1650] sm:$0xff]
    %v742 = vld [vmem:[%s1 + $0x1658] sm:$0xff]
    %v743 = vld [vmem:[%s1 + $0x1660] sm:$0xff]
    %v744 = vld [vmem:[%s1 + $0x1668] sm:$0xff]
    %v745 = vld [vmem:[%s1 + $0x1670] sm:$0xff]
    %v746 = vld [vmem:[%s1 + $0x1678] sm:$0xff]
    %v747 = vld [vmem:[%s1 + $0x1680] sm:$0xff]
    %v748 = vld [vmem:[%s1 + $0x1688] sm:$0xff]
    %v749 = vld [vmem:[%s1 + $0x1690] sm:$0xff]
    %v750 = vld [vmem:[%s1 + $0x1698] sm:$0xff]
    %v751 = vld [vmem:[%s1 + $0x16a0] sm:$0xff]
    %v752 = vld [vmem:[%s1 + $0x16a8] sm:$0xff]
    %v753 = vld [vmem:[%s1 + $0x16b0] sm:$0xff]
    %v754 = vld [vmem:[%s1 + $0x16b8] sm:$0xff]
    %v755 = vld [vmem:[%s1 + $0x16c0] sm:$0xff]
    %v756 = vld [vmem:[%s1 + $0x16c8] sm:$0xff]
    %v757 = vld [vmem:[%s1 + $0x16d0] sm:$0xff]
    %v758 = vld [vmem:[%s1 + $0x16d8] sm:$0xff]
    %v759 = vld [vmem:[%s1 + $0x16e0] sm:$0xff]
    %v760 = vld [vmem:[%s1 + $0x16e8] sm:$0xff]
    %v761 = vld [vmem:[%s1 + $0x16f0] sm:$0xff]
    %v762 = vld [vmem:[%s1 + $0x16f8] sm:$0xff]
    %v763 = vld [vmem:[%s1 + $0x1700] sm:$0xff]
    %v764 = vld [vmem:[%s1 + $0x1708] sm:$0xff]
    %v765 = vld [vmem:[%s1 + $0x1710] sm:$0xff]
    %v766 = vld [vmem:[%s1 + $0x1718] sm:$0xff]
    %v767 = vld [vmem:[%s1 + $0x1720] sm:$0xff]
    %v768 = vld [vmem:[%s1 + $0x1728] sm:$0xff]
    %v769 = vld [vmem:[%s1 + $0x1730] sm:$0xff]
    %v770 = vld [vmem:[%s1 + $0x1738] sm:$0xff]
    %v771 = vld [vmem:[%s1 + $0x1740] sm:$0xff]
    %v772 = vld [vmem:[%s1 + $0x1748] sm:$0xff]
    %v773 = vld [vmem:[%s1 + $0x1750] sm:$0xff]
    %v774 = vld [vmem:[%s1 + $0x1758] sm:$0xff]
    %v775 = vld [vmem:[%s1 + $0x1760] sm:$0xff]
    %v776 = vld [vmem:[%s1 + $0x1768] sm:$0xff]
    %v777 = vld [vmem:[%s1 + $0x1770] sm:$0xff]
    %v778 = vld [vmem:[%s1 + $0x1778] sm:$0xff]
    %v779 = vld [vmem:[%s1 + $0x1780] sm:$0xff]
    %v780 = vld [vmem:[%s1 + $0x1788] sm:$0xff]
    %v781 = vld [vmem:[%s1 + $0x1790] sm:$0xff]
    %v782 = vld [vmem:[%s1 + $0x1798] sm:$0xff]
    %v783 = vld [vmem:[%s1 + $0x17a0] sm:$0xff]
    %v784 = vld [vmem:[%s1 + $0x17a8] sm:$0xff]
    %v785 = vld [vmem:[%s1 + $0x17b0] sm:$0xff]
    %v786 = vld [vmem:[%s1 + $0x17b8] sm:$0xff]
    %v787 = vld [vmem:[%s1 + $0x17c0] sm:$0xff]
    %v788 = vld [vmem:[%s1 + $0x17c8] sm:$0xff]
    %v789 = vld [vmem:[%s1 + $0x17d0] sm:$0xff]
    %v790 = vld [vmem:[%s1 + $0x17d8] sm:$0xff]
    %v791 = vld [vmem:[%s1 + $0x17e0] sm:$0xff]
    %v792 = vld [vmem:[%s1 + $0x17e8] sm:$0xff]
    %v793 = vld [vmem:[%s1 + $0x17f0] sm:$0xff]
    %v794 = vld [vmem:[%s1 + $0x17f8] sm:$0xff]
    %v795 = vld [vmem:[%s1 + $0x1800] sm:$0xff]
    %v796 = vld [vmem:[%s1 + $0x1808] sm:$0xff]
    %v797 = vld [vmem:[%s1 + $0x1810] sm:$0xff]
    %v798 = vld [vmem:[%s1 + $0x1818] sm:$0xff]
    %v799 = vld [vmem:[%s1 + $0x1820] sm:$0xff]
    %v800 = vld [vmem:[%s1 + $0x1828] sm:$0xff]
    %v801 = vld [vmem:[%s1 + $0x1830] sm:$0xff]
    %v802 = vld [vmem:[%s1 + $0x1838] sm:$0xff]
    %v803 = vld [vmem:[%s1 + $0x1840] sm:$0xff]
    %v804 = vld [vmem:[%s1 + $0x1848] sm:$0xff]
    %v805 = vld [vmem:[%s1 + $0x1850] sm:$0xff]
    %v806 = vld [vmem:[%s1 + $0x1858] sm:$0xff]
    %v807 = vld [vmem:[%s1 + $0x1860] sm:$0xff]
    %v808 = vld [vmem:[%s1 + $0x1868] sm:$0xff]
    %v809 = vld [vmem:[%s1 + $0x1870] sm:$0xff]
    %v810 = vld [vmem:[%s1 + $0x1878] sm:$0xff]
    %v811 = vld [vmem:[%s1 + $0x1880] sm:$0xff]
    %v812 = vld [vmem:[%s1 + $0x1888] sm:$0xff]
    %v813 = vld [vmem:[%s1 + $0x1890] sm:$0xff]
    %v814 = vld [vmem:[%s1 + $0x1898] sm:$0xff]
    %v815 = vld [vmem:[%s1 + $0x18a0] sm:$0xff]
    %v816 = vld [vmem:[%s1 + $0x18a8] sm:$0xff]
    %v817 = vld [vmem:[%s1 + $0x18b0] sm:$0xff]
    %v818 = vld [vmem:[%s1 + $0x18b8] sm:$0xff]
    %v819 = vld [vmem:[%s1 + $0x18c0] sm:$0xff]
    %v820 = vld [vmem:[%s1 + $0x18c8] sm:$0xff]
    %v821 = vld [vmem:[%s1 + $0x18d0] sm:$0xff]
    %v822 = vld [vmem:[%s1 + $0x18d8] sm:$0xff]
    %v823 = vld [vmem:[%s1 + $0x18e0] sm:$0xff]
    %v824 = vld [vmem:[%s1 + $0x18e8] sm:$0xff]
    %v825 = vld [vmem:[%s1 + $0x18f0] sm:$0xff]
    %v826 = vld [vmem:[%s1 + $0x18f8] sm:$0xff]
    %v827 = vld [vmem:[%s1 + $0x1900] sm:$0xff]
    %v828 = vld [vmem:[%s1 + $0x1908] sm:$0xff]
    %v829 = vld [vmem:[%s1 + $0x1910] sm:$0xff]
    %v830 = vld [vmem:[%s1 + $0x1918] sm:$0xff]
    %v831 = vld [vmem:[%s1 + $0x1920] sm:$0xff]
    %v832 = vld [vmem:[%s1 + $0x1928] sm:$0xff]
    %v833 = vld [vmem:[%s1 + $0x1930] sm:$0xff]
    %v834 = vld [vmem:[%s1 + $0x1938] sm:$0xff]
    %v835 = vld [vmem:[%s1 + $0x1940] sm:$0xff]
    %v836 = vld [vmem:[%s1 + $0x1948] sm:$0xff]
    %v837 = vld [vmem:[%s1 + $0x1950] sm:$0xff]
    %v838 = vld [vmem:[%s1 + $0x1958] sm:$0xff]
    %v839 = vld [vmem:[%s1 + $0x1960] sm:$0xff]
    %v840 = vld [vmem:[%s1 + $0x1968] sm:$0xff]
    %v841 = vld [vmem:[%s1 + $0x1970] sm:$0xff]
    %v842 = vld [vmem:[%s1 + $0x1978] sm:$0xff]
    %v843 = vld [vmem:[%s1 + $0x1980] sm:$0xff]
    %v844 = vld [vmem:[%s1 + $0x1988] sm:$0xff]
    %v845 = vld [vmem:[%s1 + $0x1990] sm:$0xff]
    %v846 = vld [vmem:[%s1 + $0x1998] sm:$0xff]
    %v847 = vld [vmem:[%s1 + $0x19a0] sm:$0xff]
    %v848 = vld [vmem:[%s1 + $0x19a8] sm:$0xff]
    %v849 = vld [vmem:[%s1 + $0x19b0] sm:$0xff]
    %v850 = vld [vmem:[%s1 + $0x19b8] sm:$0xff]
    %v851 = vld [vmem:[%s1 + $0x19c0] sm:$0xff]
    %v852 = vld [vmem:[%s1 + $0x19c8] sm:$0xff]
    %v853 = vld [vmem:[%s1 + $0x19d0] sm:$0xff]
    %v854 = vld [vmem:[%s1 + $0x19d8] sm:$0xff]
    %v855 = vld [vmem:[%s1 + $0x19e0] sm:$0xff]
    %v856 = vld [vmem:[%s1 + $0x19e8] sm:$0xff]
    %v857 = vld [vmem:[%s1 + $0x19f0] sm:$0xff]
    %v858 = vld [vmem:[%s1 + $0x19f8] sm:$0xff]
    %v859 = vld [vmem:[%s1 + $0x1a00] sm:$0xff]
    %v860 = vld [vmem:[%s1 + $0x1a08] sm:$0xff]
    %v861 = vld [vmem:[%s1 + $0x1a10] sm:$0xff]
    %v862 = vld [vmem:[%s1 + $0x1a18] sm:$0xff]
    %v863 = vld [vmem:[%s1 + $0x1a20] sm:$0xff]
    %v864 = vld [vmem:[%s1 + $0x1a28] sm:$0xff]
    %v865 = vld [vmem:[%s1 + $0x1a30] sm:$0xff]
    %v866 = vld [vmem:[%s1 + $0x1a38] sm:$0xff]
    %v867 = vld [vmem:[%s1 + $0x1a40] sm:$0xff]
    %v868 = vld [vmem:[%s1 + $0x1a48] sm:$0xff]
    %v869 = vld [vmem:[%s1 + $0x1a50] sm:$0xff]
    %v870 = vld [vmem:[%s1 + $0x1a58] sm:$0xff]
    %v871 = vld [vmem:[%s1 + $0x1a60] sm:$0xff]
    %v872 = vld [vmem:[%s1 + $0x1a68] sm:$0xff]
    %v873 = vld [vmem:[%s1 + $0x1a70] sm:$0xff]
    %v874 = vld [vmem:[%s1 + $0x1a78] sm:$0xff]
    %v875 = vld [vmem:[%s1 + $0x1a80] sm:$0xff]
    %v876 = vld [vmem:[%s1 + $0x1a88] sm:$0xff]
    %v877 = vld [vmem:[%s1 + $0x1a90] sm:$0xff]
    %v878 = vld [vmem:[%s1 + $0x1a98] sm:$0xff]
    %v879 = vld [vmem:[%s1 + $0x1aa0] sm:$0xff]
    %v880 = vld [vmem:[%s1 + $0x1aa8] sm:$0xff]
    %v881 = vld [vmem:[%s1 + $0x1ab0] sm:$0xff]
    %v882 = vld [vmem:[%s1 + $0x1ab8] sm:$0xff]
    %v883 = vld [vmem:[%s1 + $0x1ac0] sm:$0xff]
    %v884 = vld [vmem:[%s1 + $0x1ac8] sm:$0xff]
    %v885 = vld [vmem:[%s1 + $0x1ad0] sm:$0xff]
    %v886 = vld [vmem:[%s1 + $0x1ad8] sm:$0xff]
    %v887 = vld [vmem:[%s1 + $0x1ae0] sm:$0xff]
    %v888 = vld [vmem:[%s1 + $0x1ae8] sm:$0xff]
    %v889 = vld [vmem:[%s1 + $0x1af0] sm:$0xff]
    %v890 = vld [vmem:[%s1 + $0x1af8] sm:$0xff]
    %v891 = vld [vmem:[%s1 + $0x1b00] sm:$0xff]
    %v892 = vld [vmem:[%s1 + $0x1b08] sm:$0xff]
    %v893 = vld [vmem:[%s1 + $0x1b10] sm:$0xff]
    %v894 = vld [vmem:[%s1 + $0x1b18] sm:$0xff]
    %v895 = vld [vmem:[%s1 + $0x1b20] sm:$0xff]
    %v896 = vld [vmem:[%s1 + $0x1b28] sm:$0xff]
    %v897 = vld [vmem:[%s1 + $0x1b30] sm:$0xff]
    %v898 = vld [vmem:[%s1 + $0x1b38] sm:$0xff]
    %v899 = vld [vmem:[%s1 + $0x1b40] sm:$0xff]
    %v900 = vld [vmem:[%s1 + $0x1b48] sm:$0xff]
    %v901 = vld [vmem:[%s1 + $0x1b50] sm:$0xff]
    %v902 = vld [vmem:[%s1 + $0x1b58] sm:$0xff]
    %v903 = vld [vmem:[%s1 + $0x1b60] sm:$0xff]
    %v904 = vld [vmem:[%s1 + $0x1b68] sm:$0xff]
    %v905 = vld [vmem:[%s1 + $0x1b70] sm:$0xff]
    %v906 = vld [vmem:[%s1 + $0x1b78] sm:$0xff]
    %v907 = vld [vmem:[%s1 + $0x1b80] sm:$0xff]
    %v908 = vld [vmem:[%s1 + $0x1b88] sm:$0xff]
    %v909 = vld [vmem:[%s1 + $0x1b90] sm:$0xff]
    %v910 = vld [vmem:[%s1 + $0x1b98] sm:$0xff]
    %v911 = vld [vmem:[%s1 + $0x1ba0] sm:$0xff]
    %v912 = vld [vmem:[%s1 + $0x1ba8] sm:$0xff]
    %v913 = vld [vmem:[%s1 + $0x1bb0] sm:$0xff]
    %v914 = vld [vmem:[%s1 + $0x1bb8] sm:$0xff]
    %v915 = vld [vmem:[%s1 + $0x1bc0] sm:$0xff]
    %v916 = vld [vmem:[%s1 + $0x1bc8] sm:$0xff]
    %v917 = vld [vmem:[%s1 + $0x1bd0] sm:$0xff]
    %v918 = vld [vmem:[%s1 + $0x1bd8] sm:$0xff]
    %v919 = vld [vmem:[%s1 + $0x1be0] sm:$0xff]
    %v920 = vld [vmem:[%s1 + $0x1be8] sm:$0xff]
    %v921 = vld [vmem:[%s1 + $0x1bf0] sm:$0xff]
    %v922 = vld [vmem:[%s1 + $0x1bf8] sm:$0xff]
    %v923 = vld [vmem:[%s1 + $0x1c00] sm:$0xff]
    %v924 = vld [vmem:[%s1 + $0x1c08] sm:$0xff]
    %v925 = vld [vmem:[%s1 + $0x1c10] sm:$0xff]
    %v926 = vld [vmem:[%s1 + $0x1c18] sm:$0xff]
    %v927 = vld [vmem:[%s1 + $0x1c20] sm:$0xff]
    %v928 = vld [vmem:[%s1 + $0x1c28] sm:$0xff]
    %v929 = vld [vmem:[%s1 + $0x1c30] sm:$0xff]
    %v930 = vld [vmem:[%s1 + $0x1c38] sm:$0xff]
    %v931 = vld [vmem:[%s1 + $0x1c40] sm:$0xff]
    %v932 = vld [vmem:[%s1 + $0x1c48] sm:$0xff]
    %v933 = vld [vmem:[%s1 + $0x1c50] sm:$0xff]
    %v934 = vld [vmem:[%s1 + $0x1c58] sm:$0xff]
    %v935 = vld [vmem:[%s1 + $0x1c60] sm:$0xff]
    %v936 = vld [vmem:[%s1 + $0x1c68] sm:$0xff]
    %v937 = vld [vmem:[%s1 + $0x1c70] sm:$0xff]
    %v938 = vld [vmem:[%s1 + $0x1c78] sm:$0xff]
    %v939 = vld [vmem:[%s1 + $0x1c80] sm:$0xff]
    %v940 = vld [vmem:[%s1 + $0x1c88] sm:$0xff]
    %v941 = vld [vmem:[%s1 + $0x1c90] sm:$0xff]
    %v942 = vld [vmem:[%s1 + $0x1c98] sm:$0xff]
    %v943 = vld [vmem:[%s1 + $0x1ca0] sm:$0xff]
    %v944 = vld [vmem:[%s1 + $0x1ca8] sm:$0xff]
    %v945 = vld [vmem:[%s1 + $0x1cb0] sm:$0xff]
    %v946 = vld [vmem:[%s1 + $0x1cb8] sm:$0xff]
    %v947 = vld [vmem:[%s1 + $0x1cc0] sm:$0xff]
    %v948 = vld [vmem:[%s1 + $0x1cc8] sm:$0xff]
    %v949 = vld [vmem:[%s1 + $0x1cd0] sm:$0xff]
    %v950 = vld [vmem:[%s1 + $0x1cd8] sm:$0xff]
    %v951 = vld [vmem:[%s1 + $0x1ce0] sm:$0xff]
    %v952 = vld [vmem:[%s1 + $0x1ce8] sm:$0xff]
    %v953 = vld [vmem:[%s1 + $0x1cf0] sm:$0xff]
    %v954 = vld [vmem:[%s1 + $0x1cf8] sm:$0xff]
    %v955 = vld [vmem:[%s1 + $0x1d00] sm:$0xff]
    %v956 = vld [vmem:[%s1 + $0x1d08] sm:$0xff]
    %v957 = vld [vmem:[%s1 + $0x1d10] sm:$0xff]
    %v958 = vld [vmem:[%s1 + $0x1d18] sm:$0xff]
    %v959 = vld [vmem:[%s1 + $0x1d20] sm:$0xff]
    %v960 = vld [vmem:[%s1 + $0x1d28] sm:$0xff]
    %v961 = vld [vmem:[%s1 + $0x1d30] sm:$0xff]
    %v962 = vld [vmem:[%s1 + $0x1d38] sm:$0xff]
    %v963 = vld [vmem:[%s1 + $0x1d40] sm:$0xff]
    %v964 = vld [vmem:[%s1 + $0x1d48] sm:$0xff]
    %v965 = vld [vmem:[%s1 + $0x1d50] sm:$0xff]
    %v966 = vld [vmem:[%s1 + $0x1d58] sm:$0xff]
    %v967 = vld [vmem:[%s1 + $0x1d60] sm:$0xff]
    %v968 = vld [vmem:[%s1 + $0x1d68] sm:$0xff]
    %v969 = vld [vmem:[%s1 + $0x1d70] sm:$0xff]
    %v970 = vld [vmem:[%s1 + $0x1d78] sm:$0xff]
    %v971 = vld [vmem:[%s1 + $0x1d80] sm:$0xff]
    %v972 = vld [vmem:[%s1 + $0x1d88] sm:$0xff]
    %v973 = vld [vmem:[%s1 + $0x1d90] sm:$0xff]
    %v974 = vld [vmem:[%s1 + $0x1d98] sm:$0xff]
    %v975 = vld [vmem:[%s1 + $0x1da0] sm:$0xff]
    %v976 = vld [vmem:[%s1 + $0x1da8] sm:$0xff]
    %v977 = vld [vmem:[%s1 + $0x1db0] sm:$0xff]
    %v978 = vld [vmem:[%s1 + $0x1db8] sm:$0xff]
    %v979 = vld [vmem:[%s1 + $0x1dc0] sm:$0xff]
    %v980 = vld [vmem:[%s1 + $0x1dc8] sm:$0xff]
    %v981 = vld [vmem:[%s1 + $0x1dd0] sm:$0xff]
    %v982 = vld [vmem:[%s1 + $0x1dd8] sm:$0xff]
    %v983 = vld [vmem:[%s1 + $0x1de0] sm:$0xff]
    %v984 = vld [vmem:[%s1 + $0x1de8] sm:$0xff]
    %v985 = vld [vmem:[%s1 + $0x1df0] sm:$0xff]
    %v986 = vld [vmem:[%s1 + $0x1df8] sm:$0xff]
    %v987 = vld [vmem:[%s1 + $0x1e00] sm:$0xff]
    %v988 = vld [vmem:[%s1 + $0x1e08] sm:$0xff]
    %v989 = vld [vmem:[%s1 + $0x1e10] sm:$0xff]
    %v990 = vld [vmem:[%s1 + $0x1e18] sm:$0xff]
    %v991 = vld [vmem:[%s1 + $0x1e20] sm:$0xff]
    %v992 = vld [vmem:[%s1 + $0x1e28] sm:$0xff]
    %v993 = vld [vmem:[%s1 + $0x1e30] sm:$0xff]
    %v994 = vld [vmem:[%s1 + $0x1e38] sm:$0xff]
    %v995 = vld [vmem:[%s1 + $0x1e40] sm:$0xff]
    %v996 = vld [vmem:[%s1 + $0x1e48] sm:$0xff]
    %v997 = vld [vmem:[%s1 + $0x1e50] sm:$0xff]
    %v998 = vld [vmem:[%s1 + $0x1e58] sm:$0xff]
    %v999 = vld [vmem:[%s1 + $0x1e60] sm:$0xff]
    %v1000 = vld [vmem:[%s1 + $0x1e68] sm:$0xff]
    %v1001 = vld [vmem:[%s1 + $0x1e70] sm:$0xff]
    %v1002 = vld [vmem:[%s1 + $0x1e78] sm:$0xff]
    %v1003 = vld [vmem:[%s1 + $0x1e80] sm:$0xff]
    %v1004 = vld [vmem:[%s1 + $0x1e88] sm:$0xff]
    %v1005 = vld [vmem:[%s1 + $0x1e90] sm:$0xff]
    %v1006 = vld [vmem:[%s1 + $0x1e98] sm:$0xff]
    %v1007 = vld [vmem:[%s1 + $0x1ea0] sm:$0xff]
    %v1008 = vld [vmem:[%s1 + $0x1ea8] sm:$0xff]
    %v1009 = vld [vmem:[%s1 + $0x1eb0] sm:$0xff]
    %v1010 = vld [vmem:[%s1 + $0x1eb8] sm:$0xff]
    %v1011 = vld [vmem:[%s1 + $0x1ec0] sm:$0xff]
    %v1012 = vld [vmem:[%s1 + $0x1ec8] sm:$0xff]
    %v1013 = vld [vmem:[%s1 + $0x1ed0] sm:$0xff]
    %v1014 = vld [vmem:[%s1 + $0x1ed8] sm:$0xff]
    %v1015 = vld [vmem:[%s1 + $0x1ee0] sm:$0xff]
    %v1016 = vld [vmem:[%s1 + $0x1ee8] sm:$0xff]
    %v1017 = vld [vmem:[%s1 + $0x1ef0] sm:$0xff]
    %v1018 = vld [vmem:[%s1 + $0x1ef8] sm:$0xff]
    %v1019 = vld [vmem:[%s1 + $0x1f00] sm:$0xff]
    %v1020 = vld [vmem:[%s1 + $0x1f08] sm:$0xff]
    %v1021 = vld [vmem:[%s1 + $0x1f10] sm:$0xff]
    %v1022 = vld [vmem:[%s1 + $0x1f18] sm:$0xff]
    %v1023 = vld [vmem:[%s1 + $0x1f20] sm:$0xff]
    %v1024 = vld [vmem:[%s1 + $0x1f28] sm:$0xff]
    %v1025 = vld [vmem:[%s1 + $0x1f30] sm:$0xff]
    %v1026 = vld [vmem:[%s1 + $0x1f38] sm:$0xff]
    %v1027 = vld [vmem:[%s1 + $0x1f40] sm:$0xff]
    %v1028 = vld [vmem:[%s1 + $0x1f48] sm:$0xff]
    %v1029 = vld [vmem:[%s1 + $0x1f50] sm:$0xff]
    %v1030 = vld [vmem:[%s1 + $0x1f58] sm:$0xff]
    %v1031 = vld [vmem:[%s1 + $0x1f60] sm:$0xff]
    %v1032 = vld [vmem:[%s1 + $0x1f68] sm:$0xff]
    %v1033 = vld [vmem:[%s1 + $0x1f70] sm:$0xff]
    %v1034 = vld [vmem:[%s1 + $0x1f78] sm:$0xff]
    %v1035 = vld [vmem:[%s1 + $0x1f80] sm:$0xff]
    %v1036 = vld [vmem:[%s1 + $0x1f88] sm:$0xff]
    %v1037 = vld [vmem:[%s1 + $0x1f90] sm:$0xff]
    %v1038 = vld [vmem:[%s1 + $0x1f98] sm:$0xff]
    %v1039 = vld [vmem:[%s1 + $0x1fa0] sm:$0xff]
    %v1040 = vld [vmem:[%s1 + $0x1fa8] sm:$0xff]
    %v1041 = vld [vmem:[%s1 + $0x1fb0] sm:$0xff]
    %v1042 = vld [vmem:[%s1 + $0x1fb8] sm:$0xff]
    %v1043 = vld [vmem:[%s1 + $0x1fc0] sm:$0xff]
    %v1044 = vld [vmem:[%s1 + $0x1fc8] sm:$0xff]
    %v1045 = vld [vmem:[%s1 + $0x1fd0] sm:$0xff]
    %v1046 = vld [vmem:[%s1 + $0x1fd8] sm:$0xff]
    %v1047 = vld [vmem:[%s1 + $0x1fe0] sm:$0xff]
    %v1048 = vld [vmem:[%s1 + $0x1fe8] sm:$0xff]
    %v1049 = vld [vmem:[%s1 + $0x1ff0] sm:$0xff]
    %v1050 = vld [vmem:[%s1 + $0x1ff8] sm:$0xff]
    %v1051 = vld [vmem:[%s1 + $0x2000] sm:$0xff]
    %v1052 = vld [vmem:[%s1 + $0x2008] sm:$0xff]
    %v1053 = vld [vmem:[%s1 + $0x2010] sm:$0xff]
    %v1054 = vld [vmem:[%s1 + $0x2018] sm:$0xff]
    %v1055 = vld [vmem:[%s1 + $0x2020] sm:$0xff]
    %v1056 = vld [vmem:[%s1 + $0x2028] sm:$0xff]
    %v1057 = vld [vmem:[%s1 + $0x2030] sm:$0xff]
    %v1058 = vld [vmem:[%s1 + $0x2038] sm:$0xff]
    %v1059 = vld [vmem:[%s1 + $0x2040] sm:$0xff]
    %v1060 = vld [vmem:[%s1 + $0x2048] sm:$0xff]
    %v1061 = vld [vmem:[%s1 + $0x2050] sm:$0xff]
    %v1062 = vld [vmem:[%s1 + $0x2058] sm:$0xff]
    %v1063 = vld [vmem:[%s1 + $0x2060] sm:$0xff]
    %v1064 = vld [vmem:[%s1 + $0x2068] sm:$0xff]
    %v1065 = vld [vmem:[%s1 + $0x2070] sm:$0xff]
    %v1066 = vld [vmem:[%s1 + $0x2078] sm:$0xff]
    %v1067 = vld [vmem:[%s1 + $0x2080] sm:$0xff]
    %v1068 = vld [vmem:[%s1 + $0x2088] sm:$0xff]
    %v1069 = vld [vmem:[%s1 + $0x2090] sm:$0xff]
    %v1070 = vld [vmem:[%s1 + $0x2098] sm:$0xff]
    %v1071 = vld [vmem:[%s1 + $0x20a0] sm:$0xff]
    %v1072 = vld [vmem:[%s1 + $0x20a8] sm:$0xff]
    %v1073 = vld [vmem:[%s1 + $0x20b0] sm:$0xff]
    %v1074 = vld [vmem:[%s1 + $0x20b8] sm:$0xff]
    %v1075 = vld [vmem:[%s1 + $0x20c0] sm:$0xff]
    %v1076 = vld [vmem:[%s1 + $0x20c8] sm:$0xff]
    %v1077 = vld [vmem:[%s1 + $0x20d0] sm:$0xff]
    %v1078 = vld [vmem:[%s1 + $0x20d8] sm:$0xff]
    %v1079 = vld [vmem:[%s1 + $0x20e0] sm:$0xff]
    %v1080 = vld [vmem:[%s1 + $0x20e8] sm:$0xff]
    %v1081 = vld [vmem:[%s1 + $0x20f0] sm:$0xff]
    %v1082 = vld [vmem:[%s1 + $0x20f8] sm:$0xff]
    %v1083 = vld [vmem:[%s1 + $0x2100] sm:$0xff]
    %v1084 = vld [vmem:[%s1 + $0x2108] sm:$0xff]
    %v1085 = vld [vmem:[%s1 + $0x2110] sm:$0xff]
    %v1086 = vld [vmem:[%s1 + $0x2118] sm:$0xff]
    %v1087 = vld [vmem:[%s1 + $0x2120] sm:$0xff]
    %v1088 = vld [vmem:[%s1 + $0x2128] sm:$0xff]
    %v1089 = vld [vmem:[%s1 + $0x2130] sm:$0xff]
    %v1090 = vld [vmem:[%s1 + $0x2138] sm:$0xff]
    %v1091 = vld [vmem:[%s1 + $0x2140] sm:$0xff]
    %v1092 = vld [vmem:[%s1 + $0x2148] sm:$0xff]
    %v1093 = vld [vmem:[%s1 + $0x2150] sm:$0xff]
    %v1094 = vld [vmem:[%s1 + $0x2158] sm:$0xff]
    %v1095 = vld [vmem:[%s1 + $0x2160] sm:$0xff]
    %v1096 = vld [vmem:[%s1 + $0x2168] sm:$0xff]
    %v1097 = vld [vmem:[%s1 + $0x2170] sm:$0xff]
    %v1098 = vld [vmem:[%s1 + $0x2178] sm:$0xff]
    %v1099 = vld [vmem:[%s1 + $0x2180] sm:$0xff]
    %v1100 = vld [vmem:[%s1 + $0x2188] sm:$0xff]
    %v1101 = vld [vmem:[%s1 + $0x2190] sm:$0xff]
    %v1102 = vld [vmem:[%s1 + $0x2198] sm:$0xff]
    %v1103 = vld [vmem:[%s1 + $0x21a0] sm:$0xff]
    %v1104 = vld [vmem:[%s1 + $0x21a8] sm:$0xff]
    %v1105 = vld [vmem:[%s1 + $0x21b0] sm:$0xff]
    %v1106 = vld [vmem:[%s1 + $0x21b8] sm:$0xff]
    %v1107 = vld [vmem:[%s1 + $0x21c0] sm:$0xff]
    %v1108 = vld [vmem:[%s1 + $0x21c8] sm:$0xff]
    %v1109 = vld [vmem:[%s1 + $0x21d0] sm:$0xff]
    %v1110 = vld [vmem:[%s1 + $0x21d8] sm:$0xff]
    %v1111 = vld [vmem:[%s1 + $0x21e0] sm:$0xff]
    %v1112 = vld [vmem:[%s1 + $0x21e8] sm:$0xff]
    %v1113 = vld [vmem:[%s1 + $0x21f0] sm:$0xff]
    %v1114 = vld [vmem:[%s1 + $0x21f8] sm:$0xff]
    %v1115 = vld [vmem:[%s1 + $0x2200] sm:$0xff]
    %v1116 = vld [vmem:[%s1 + $0x2208] sm:$0xff]
    %v1117 = vld [vmem:[%s1 + $0x2210] sm:$0xff]
    %v1118 = vld [vmem:[%s1 + $0x2218] sm:$0xff]
    %v1119 = vld [vmem:[%s1 + $0x2220] sm:$0xff]
    %v1120 = vld [vmem:[%s1 + $0x2228] sm:$0xff]
    %v1121 = vld [vmem:[%s1 + $0x2230] sm:$0xff]
    %v1122 = vld [vmem:[%s1 + $0x2238] sm:$0xff]
    %v1123 = vld [vmem:[%s1 + $0x2240] sm:$0xff]
    %v1124 = vld [vmem:[%s1 + $0x2248] sm:$0xff]
    %v1125 = vld [vmem:[%s1 + $0x2250] sm:$0xff]
    %v1126 = vld [vmem:[%s1 + $0x2258] sm:$0xff]
    %v1127 = vld [vmem:[%s1 + $0x2260] sm:$0xff]
    %v1128 = vld [vmem:[%s1 + $0x2268] sm:$0xff]
    %v1129 = vld [vmem:[%s1 + $0x2270] sm:$0xff]
    %v1130 = vld [vmem:[%s1 + $0x2278] sm:$0xff]
    %v1131 = vld [vmem:[%s1 + $0x2280] sm:$0xff]
    %v1132 = vld [vmem:[%s1 + $0x2288] sm:$0xff]
    %v1133 = vld [vmem:[%s1 + $0x2290] sm:$0xff]
    %v1134 = vld [vmem:[%s1 + $0x2298] sm:$0xff]
    %v1135 = vld [vmem:[%s1 + $0x22a0] sm:$0xff]
    %v1136 = vld [vmem:[%s1 + $0x22a8] sm:$0xff]
    %v1137 = vld [vmem:[%s1 + $0x22b0] sm:$0xff]
    %v1138 = vld [vmem:[%s1 + $0x22b8] sm:$0xff]
    %v1139 = vld [vmem:[%s1 + $0x22c0] sm:$0xff]
    %v1140 = vld [vmem:[%s1 + $0x22c8] sm:$0xff]
    %v1141 = vld [vmem:[%s1 + $0x22d0] sm:$0xff]
    %v1142 = vld [vmem:[%s1 + $0x22d8] sm:$0xff]
    %v1143 = vld [vmem:[%s1 + $0x22e0] sm:$0xff]
    %v1144 = vld [vmem:[%s1 + $0x22e8] sm:$0xff]
    %v1145 = vld [vmem:[%s1 + $0x22f0] sm:$0xff]
    %v1146 = vld [vmem:[%s1 + $0x22f8] sm:$0xff]
    %v1147 = vld [vmem:[%s1 + $0x2300] sm:$0xff]
    %v1148 = vld [vmem:[%s1 + $0x2308] sm:$0xff]
    %v1149 = vld [vmem:[%s1 + $0x2310] sm:$0xff]
    %v1150 = vld [vmem:[%s1 + $0x2318] sm:$0xff]
    %v1151 = vld [vmem:[%s1 + $0x2320] sm:$0xff]
    %v1152 = vld [vmem:[%s1 + $0x2328] sm:$0xff]
    %v1153 = vld [vmem:[%s1 + $0x2330] sm:$0xff]
    %v1154 = vld [vmem:[%s1 + $0x2338] sm:$0xff]
    %v1155 = vld [vmem:[%s1 + $0x2340] sm:$0xff]
    %v1156 = vld [vmem:[%s1 + $0x2348] sm:$0xff]
    %v1157 = vld [vmem:[%s1 + $0x2350] sm:$0xff]
    %v1158 = vld [vmem:[%s1 + $0x2358] sm:$0xff]
    %v1159 = vld [vmem:[%s1 + $0x2360] sm:$0xff]
    %v1160 = vld [vmem:[%s1 + $0x2368] sm:$0xff]
    %v1161 = vld [vmem:[%s1 + $0x2370] sm:$0xff]
    %v1162 = vld [vmem:[%s1 + $0x2378] sm:$0xff]
    %v1163 = vld [vmem:[%s1 + $0x2380] sm:$0xff]
    %v1164 = vld [vmem:[%s1 + $0x2388] sm:$0xff]
    %v1165 = vld [vmem:[%s1 + $0x2390] sm:$0xff]
    %v1166 = vld [vmem:[%s1 + $0x2398] sm:$0xff]
    %v1167 = vld [vmem:[%s1 + $0x23a0] sm:$0xff]
    %v1168 = vld [vmem:[%s1 + $0x23a8] sm:$0xff]
    %v1169 = vld [vmem:[%s1 + $0x23b0] sm:$0xff]
    %v1170 = vld [vmem:[%s1 + $0x23b8] sm:$0xff]
    %v1171 = vld [vmem:[%s1 + $0x23c0] sm:$0xff]
    %v1172 = vld [vmem:[%s1 + $0x23c8] sm:$0xff]
    %v1173 = vld [vmem:[%s1 + $0x23d0] sm:$0xff]
    %v1174 = vld [vmem:[%s1 + $0x23d8] sm:$0xff]
    %v1175 = vld [vmem:[%s1 + $0x23e0] sm:$0xff]
    %v1176 = vld [vmem:[%s1 + $0x23e8] sm:$0xff]
    %v1177 = vld [vmem:[%s1 + $0x23f0] sm:$0xff]
    %v1178 = vld [vmem:[%s1 + $0x23f8] sm:$0xff]
    %v1179 = vld [vmem:[%s1 + $0x2400] sm:$0xff]
    %v1180 = vld [vmem:[%s1 + $0x2408] sm:$0xff]
    %v1181 = vld [vmem:[%s1 + $0x2410] sm:$0xff]
    %v1182 = vld [vmem:[%s1 + $0x2418] sm:$0xff]
    %v1183 = vld [vmem:[%s1 + $0x2420] sm:$0xff]
    %v1184 = vld [vmem:[%s1 + $0x2428] sm:$0xff]
    %v1185 = vld [vmem:[%s1 + $0x2430] sm:$0xff]
    %v1186 = vld [vmem:[%s1 + $0x2438] sm:$0xff]
    %v1187 = vld [vmem:[%s1 + $0x2440] sm:$0xff]
    %v1188 = vld [vmem:[%s1 + $0x2448] sm:$0xff]
    %v1189 = vld [vmem:[%s1 + $0x2450] sm:$0xff]
    %v1190 = vld [vmem:[%s1 + $0x2458] sm:$0xff]
    %v1191 = vld [vmem:[%s1 + $0x2460] sm:$0xff]
    %v1192 = vld [vmem:[%s1 + $0x2468] sm:$0xff]
    %v1193 = vld [vmem:[%s1 + $0x2470] sm:$0xff]
    %v1194 = vld [vmem:[%s1 + $0x2478] sm:$0xff]
    %v1195 = vld [vmem:[%s2] sm:$0xf]
    %v1197 = vlaneseq
    %v1198 = vshrl.u32 %v1197, 7
    %v1199 = vsub.s32 0, %v1198
    %v1200 = vrot.slane %v1195, %v1199
    %v1201 = vlaneseq
    %v1202 = vshrl.u32 %v1201, 7
    %v1203 = vsub.s32 1, %v1202
    %v1204 = vrot.slane %v1195, %v1203
    %v1205 = vlaneseq
    %v1206 = vshrl.u32 %v1205, 7
    %v1207 = vsub.s32 2, %v1206
    %v1208 = vrot.slane %v1195, %v1207
    %v1209 = vlaneseq
    %v1210 = vshrl.u32 %v1209, 7
    %v1211 = vsub.s32 3, %v1210
    %v1212 = vrot.slane %v1195, %v1211
    %v1222 = vcombine.high %v22, %v22
    %v1224 = vunpack.c.l.s4 1966171168
    %v1225 = vunpack.c.0.s8 %v1224
    %v1226 = vlaneseq
    %v1227 = vshrl.u32 %v1226, 7
    %v1228 = vsub.s32 %v1225, %v1227
    %v1229 = vrot.slane %v22, %v1228
    %v1231 = vunpack.c.l.s4 1966171168
    %v1232 = vunpack.c.0.s8 %v1231
    %v1233 = vlaneseq
    %v1234 = vshrl.u32 %v1233, 7
    %v1235 = vsub.s32 %v1232, %v1234
    %v1236 = vrot.slane %v1222, %v1235
    %v1237 = vcombine.high %v1229, %v1229
    %v1238 = vcombine.high %v1236, %v1236
    %v1240 = vunpack.c.l.s4 1966171168
    %v1241 = vunpack.c.0.s8 %v1240
    %v1242 = vlaneseq
    %v1243 = vshrl.u32 %v1242, 7
    %v1244 = vsub.s32 %v1241, %v1243
    %v1245 = vrot.slane %v1229, %v1244
    %v1247 = vunpack.c.l.s4 1966171168
    %v1248 = vunpack.c.0.s8 %v1247
    %v1249 = vlaneseq
    %v1250 = vshrl.u32 %v1249, 7
    %v1251 = vsub.s32 %v1248, %v1250
    %v1252 = vrot.slane %v1236, %v1251
    %v1254 = vunpack.c.l.s4 1966171168
    %v1255 = vunpack.c.0.s8 %v1254
    %v1256 = vlaneseq
    %v1257 = vshrl.u32 %v1256, 7
    %v1258 = vsub.s32 %v1255, %v1257
    %v1259 = vrot.slane %v1237, %v1258
    %v1261 = vunpack.c.l.s4 1966171168
    %v1262 = vunpack.c.0.s8 %v1261
    %v1263 = vlaneseq
    %v1264 = vshrl.u32 %v1263, 7
    %v1265 = vsub.s32 %v1262, %v1264
    %v1266 = vrot.slane %v1238, %v1265
    %v1267 = vcombine.high %v1245, %v1245
    %v1268 = vcombine.high %v1252, %v1252
    %v1269 = vcombine.high %v1259, %v1259
    %v1270 = vcombine.high %v1266, %v1266
    %v1271 = vcombine.high %v23, %v23
    %v1273 = vunpack.c.l.s4 1966171168
    %v1274 = vunpack.c.0.s8 %v1273
    %v1275 = vlaneseq
    %v1276 = vshrl.u32 %v1275, 7
    %v1277 = vsub.s32 %v1274, %v1276
    %v1278 = vrot.slane %v23, %v1277
    %v1280 = vunpack.c.l.s4 1966171168
    %v1281 = vunpack.c.0.s8 %v1280
    %v1282 = vlaneseq
    %v1283 = vshrl.u32 %v1282, 7
    %v1284 = vsub.s32 %v1281, %v1283
    %v1285 = vrot.slane %v1271, %v1284
    %v1286 = vcombine.high %v1278, %v1278
    %v1287 = vcombine.high %v1285, %v1285
    %v1289 = vunpack.c.l.s4 1966171168
    %v1290 = vunpack.c.0.s8 %v1289
    %v1291 = vlaneseq
    %v1292 = vshrl.u32 %v1291, 7
    %v1293 = vsub.s32 %v1290, %v1292
    %v1294 = vrot.slane %v1278, %v1293
    %v1296 = vunpack.c.l.s4 1966171168
    %v1297 = vunpack.c.0.s8 %v1296
    %v1298 = vlaneseq
    %v1299 = vshrl.u32 %v1298, 7
    %v1300 = vsub.s32 %v1297, %v1299
    %v1301 = vrot.slane %v1285, %v1300
    %v1303 = vunpack.c.l.s4 1966171168
    %v1304 = vunpack.c.0.s8 %v1303
    %v1305 = vlaneseq
    %v1306 = vshrl.u32 %v1305, 7
    %v1307 = vsub.s32 %v1304, %v1306
    %v1308 = vrot.slane %v1286, %v1307
    %v1310 = vunpack.c.l.s4 1966171168
    %v1311 = vunpack.c.0.s8 %v1310
    %v1312 = vlaneseq
    %v1313 = vshrl.u32 %v1312, 7
    %v1314 = vsub.s32 %v1311, %v1313
    %v1315 = vrot.slane %v1287, %v1314
    %v1316 = vcombine.high %v1294, %v1294
    %v1317 = vcombine.high %v1301, %v1301
    %v1318 = vcombine.high %v1308, %v1308
    %v1319 = vcombine.high %v1315, %v1315
    %v1320 = vcombine.high %v24, %v24
    %v1322 = vunpack.c.l.s4 1966171168
    %v1323 = vunpack.c.0.s8 %v1322
    %v1324 = vlaneseq
    %v1325 = vshrl.u32 %v1324, 7
    %v1326 = vsub.s32 %v1323, %v1325
    %v1327 = vrot.slane %v24, %v1326
    %v1329 = vunpack.c.l.s4 1966171168
    %v1330 = vunpack.c.0.s8 %v1329
    %v1331 = vlaneseq
    %v1332 = vshrl.u32 %v1331, 7
    %v1333 = vsub.s32 %v1330, %v1332
    %v1334 = vrot.slane %v1320, %v1333
    %v1335 = vcombine.high %v1327, %v1327
    %v1336 = vcombine.high %v1334, %v1334
    %v1338 = vunpack.c.l.s4 1966171168
    %v1339 = vunpack.c.0.s8 %v1338
    %v1340 = vlaneseq
    %v1341 = vshrl.u32 %v1340, 7
    %v1342 = vsub.s32 %v1339, %v1341
    %v1343 = vrot.slane %v1327, %v1342
    %v1345 = vunpack.c.l.s4 1966171168
    %v1346 = vunpack.c.0.s8 %v1345
    %v1347 = vlaneseq
    %v1348 = vshrl.u32 %v1347, 7
    %v1349 = vsub.s32 %v1346, %v1348
    %v1350 = vrot.slane %v1334, %v1349
    %v1352 = vunpack.c.l.s4 1966171168
    %v1353 = vunpack.c.0.s8 %v1352
    %v1354 = vlaneseq
    %v1355 = vshrl.u32 %v1354, 7
    %v1356 = vsub.s32 %v1353, %v1355
    %v1357 = vrot.slane %v1335, %v1356
    %v1359 = vunpack.c.l.s4 1966171168
    %v1360 = vunpack.c.0.s8 %v1359
    %v1361 = vlaneseq
    %v1362 = vshrl.u32 %v1361, 7
    %v1363 = vsub.s32 %v1360, %v1362
    %v1364 = vrot.slane %v1336, %v1363
    %v1365 = vcombine.high %v1343, %v1343
    %v1366 = vcombine.high %v1350, %v1350
    %v1367 = vcombine.high %v1357, %v1357
    %v1368 = vcombine.high %v1364, %v1364
    %v1369 = vcombine.high %v25, %v25
    %v1371 = vunpack.c.l.s4 1966171168
    %v1372 = vunpack.c.0.s8 %v1371
    %v1373 = vlaneseq
    %v1374 = vshrl.u32 %v1373, 7
    %v1375 = vsub.s32 %v1372, %v1374
    %v1376 = vrot.slane %v25, %v1375
    %v1378 = vunpack.c.l.s4 1966171168
    %v1379 = vunpack.c.0.s8 %v1378
    %v1380 = vlaneseq
    %v1381 = vshrl.u32 %v1380, 7
    %v1382 = vsub.s32 %v1379, %v1381
    %v1383 = vrot.slane %v1369, %v1382
    %v1384 = vcombine.high %v1376, %v1376
    %v1385 = vcombine.high %v1383, %v1383
    %v1387 = vunpack.c.l.s4 1966171168
    %v1388 = vunpack.c.0.s8 %v1387
    %v1389 = vlaneseq
    %v1390 = vshrl.u32 %v1389, 7
    %v1391 = vsub.s32 %v1388, %v1390
    %v1392 = vrot.slane %v1376, %v1391
    %v1394 = vunpack.c.l.s4 1966171168
    %v1395 = vunpack.c.0.s8 %v1394
    %v1396 = vlaneseq
    %v1397 = vshrl.u32 %v1396, 7
    %v1398 = vsub.s32 %v1395, %v1397
    %v1399 = vrot.slane %v1383, %v1398
    %v1401 = vunpack.c.l.s4 1966171168
    %v1402 = vunpack.c.0.s8 %v1401
    %v1403 = vlaneseq
    %v1404 = vshrl.u32 %v1403, 7
    %v1405 = vsub.s32 %v1402, %v1404
    %v1406 = vrot.slane %v1384, %v1405
    %v1408 = vunpack.c.l.s4 1966171168
    %v1409 = vunpack.c.0.s8 %v1408
    %v1410 = vlaneseq
    %v1411 = vshrl.u32 %v1410, 7
    %v1412 = vsub.s32 %v1409, %v1411
    %v1413 = vrot.slane %v1385, %v1412
    %v1414 = vcombine.high %v1392, %v1392
    %v1415 = vcombine.high %v1399, %v1399
    %v1416 = vcombine.high %v1406, %v1406
    %v1417 = vcombine.high %v1413, %v1413
    %v1418 = vcombine.high %v26, %v26
    %v1420 = vunpack.c.l.s4 1966171168
    %v1421 = vunpack.c.0.s8 %v1420
    %v1422 = vlaneseq
    %v1423 = vshrl.u32 %v1422, 7
    %v1424 = vsub.s32 %v1421, %v1423
    %v1425 = vrot.slane %v26, %v1424
    %v1427 = vunpack.c.l.s4 1966171168
    %v1428 = vunpack.c.0.s8 %v1427
    %v1429 = vlaneseq
    %v1430 = vshrl.u32 %v1429, 7
    %v1431 = vsub.s32 %v1428, %v1430
    %v1432 = vrot.slane %v1418, %v1431
    %v1433 = vcombine.high %v1425, %v1425
    %v1435 = vunpack.c.l.s4 1966171168
    %v1436 = vunpack.c.0.s8 %v1435
    %v1437 = vlaneseq
    %v1438 = vshrl.u32 %v1437, 7
    %v1439 = vsub.s32 %v1436, %v1438
    %v1440 = vrot.slane %v1425, %v1439
    %v1442 = vunpack.c.l.s4 1966171168
    %v1443 = vunpack.c.0.s8 %v1442
    %v1444 = vlaneseq
    %v1445 = vshrl.u32 %v1444, 7
    %v1446 = vsub.s32 %v1443, %v1445
    %v1447 = vrot.slane %v1432, %v1446
    %v1449 = vunpack.c.l.s4 1966171168
    %v1450 = vunpack.c.0.s8 %v1449
    %v1451 = vlaneseq
    %v1452 = vshrl.u32 %v1451, 7
    %v1453 = vsub.s32 %v1450, %v1452
    %v1454 = vrot.slane %v1433, %v1453
    %v1455 = vcombine.high %v1440, %v1440
    %v1456 = vcombine.high %v1454, %v1454
    %v2661 = vunpack.c.l.b16 %v27
    %v2662 = vunpack.c.h.b16 %v27
    %v2663 = vunpack.c.l.b16 %v28
    %v2664 = vunpack.c.h.b16 %v28
    %v2665 = vunpack.c.l.b16 %v29
    %v2666 = vunpack.c.h.b16 %v29
    %v2667 = vunpack.c.l.b16 %v30
    %v2668 = vunpack.c.h.b16 %v30
    %v2669 = vunpack.c.l.b16 %v31
    %v2670 = vunpack.c.h.b16 %v31
    %v2671 = vunpack.c.l.b16 %v32
    %v2672 = vunpack.c.h.b16 %v32
    %v2673 = vunpack.c.l.b16 %v33
    %v2674 = vunpack.c.h.b16 %v33
    %v2675 = vunpack.c.l.b16 %v34
    %v2676 = vunpack.c.h.b16 %v34
    %v2677 = vunpack.c.l.b16 %v35
    %v2678 = vunpack.c.h.b16 %v35
    %v2679 = vunpack.c.l.b16 %v36
    %v2680 = vunpack.c.h.b16 %v36
    %v2681 = vunpack.c.l.b16 %v37
    %v2682 = vunpack.c.h.b16 %v37
    %v2683 = vunpack.c.l.b16 %v38
    %v2684 = vunpack.c.h.b16 %v38
    %v2685 = vunpack.c.l.b16 %v39
    %v2686 = vunpack.c.h.b16 %v39
    %v2687 = vunpack.c.l.b16 %v40
    %v2688 = vunpack.c.h.b16 %v40
    %v2689 = vunpack.c.l.b16 %v41
    %v2690 = vunpack.c.h.b16 %v41
    %v2691 = vunpack.c.l.b16 %v42
    %v2692 = vunpack.c.h.b16 %v42
    %v2693 = vunpack.c.l.b16 %v43
    %v2694 = vunpack.c.h.b16 %v43
    %v2695 = vunpack.c.l.b16 %v44
    %v2696 = vunpack.c.h.b16 %v44
    %v2697 = vunpack.c.l.b16 %v45
    %v2698 = vunpack.c.h.b16 %v45
    %v2699 = vunpack.c.l.b16 %v46
    %v2700 = vunpack.c.h.b16 %v46
    %v2701 = vunpack.c.l.b16 %v47
    %v2702 = vunpack.c.h.b16 %v47
    %v2703 = vunpack.c.l.b16 %v48
    %v2704 = vunpack.c.h.b16 %v48
    %v2705 = vunpack.c.l.b16 %v49
    %v2706 = vunpack.c.h.b16 %v49
    %v2707 = vunpack.c.l.b16 %v50
    %v2708 = vunpack.c.h.b16 %v50
    %v2709 = vunpack.c.l.b16 %v51
    %v2710 = vunpack.c.h.b16 %v51
    %v2711 = vunpack.c.l.b16 %v52
    %v2712 = vunpack.c.h.b16 %v52
    %v2713 = vunpack.c.l.b16 %v53
    %v2714 = vunpack.c.h.b16 %v53
    %v2715 = vunpack.c.l.b16 %v54
    %v2716 = vunpack.c.h.b16 %v54
    %v2717 = vunpack.c.l.b16 %v55
    %v2718 = vunpack.c.h.b16 %v55
    %v2719 = vunpack.c.l.b16 %v56
    %v2720 = vunpack.c.h.b16 %v56
    %v2721 = vunpack.c.l.b16 %v57
    %v2722 = vunpack.c.h.b16 %v57
    %v2723 = vunpack.c.l.b16 %v58
    %v2724 = vunpack.c.h.b16 %v58
    %v2725 = vunpack.c.l.b16 %v59
    %v2726 = vunpack.c.h.b16 %v59
    %v2727 = vunpack.c.l.b16 %v60
    %v2728 = vunpack.c.h.b16 %v60
    %v2729 = vunpack.c.l.b16 %v61
    %v2730 = vunpack.c.h.b16 %v61
    %v2731 = vunpack.c.l.b16 %v62
    %v2732 = vunpack.c.h.b16 %v62
    %v2733 = vunpack.c.l.b16 %v63
    %v2734 = vunpack.c.h.b16 %v63
    %v2735 = vunpack.c.l.b16 %v64
    %v2736 = vunpack.c.h.b16 %v64
    %v2737 = vunpack.c.l.b16 %v65
    %v2738 = vunpack.c.h.b16 %v65
    %v2739 = vunpack.c.l.b16 %v66
    %v2740 = vunpack.c.h.b16 %v66
    %v2741 = vunpack.c.l.b16 %v67
    %v2742 = vunpack.c.h.b16 %v67
    %v2743 = vunpack.c.l.b16 %v68
    %v2744 = vunpack.c.h.b16 %v68
    %v2745 = vunpack.c.l.b16 %v69
    %v2746 = vunpack.c.h.b16 %v69
    %v2747 = vunpack.c.l.b16 %v70
    %v2748 = vunpack.c.h.b16 %v70
    %v2749 = vunpack.c.l.b16 %v71
    %v2750 = vunpack.c.h.b16 %v71
    %v2751 = vunpack.c.l.b16 %v72
    %v2752 = vunpack.c.h.b16 %v72
    %v2753 = vunpack.c.l.b16 %v73
    %v2754 = vunpack.c.h.b16 %v73
    %v2755 = vunpack.c.l.b16 %v74
    %v2756 = vunpack.c.h.b16 %v74
    %v2757 = vunpack.c.l.b16 %v75
    %v2758 = vunpack.c.h.b16 %v75
    %v2759 = vunpack.c.l.b16 %v76
    %v2760 = vunpack.c.h.b16 %v76
    %v2761 = vunpack.c.l.b16 %v77
    %v2762 = vunpack.c.h.b16 %v77
    %v2763 = vunpack.c.l.b16 %v78
    %v2764 = vunpack.c.h.b16 %v78
    %v2765 = vunpack.c.l.b16 %v79
    %v2766 = vunpack.c.h.b16 %v79
    %v2767 = vunpack.c.l.b16 %v80
    %v2768 = vunpack.c.h.b16 %v80
    %v2769 = vunpack.c.l.b16 %v81
    %v2770 = vunpack.c.h.b16 %v81
    %v2771 = vunpack.c.l.b16 %v82
    %v2772 = vunpack.c.h.b16 %v82
    %v2773 = vunpack.c.l.b16 %v83
    %v2774 = vunpack.c.h.b16 %v83
    %v2775 = vunpack.c.l.b16 %v84
    %v2776 = vunpack.c.h.b16 %v84
    %v2777 = vunpack.c.l.b16 %v85
    %v2778 = vunpack.c.h.b16 %v85
    %v2779 = vunpack.c.l.b16 %v86
    %v2780 = vunpack.c.h.b16 %v86
    %v2781 = vunpack.c.l.b16 %v87
    %v2782 = vunpack.c.h.b16 %v87
    %v2783 = vunpack.c.l.b16 %v88
    %v2784 = vunpack.c.h.b16 %v88
    %v2785 = vunpack.c.l.b16 %v89
    %v2786 = vunpack.c.h.b16 %v89
    %v2787 = vunpack.c.l.b16 %v90
    %v2788 = vunpack.c.h.b16 %v90
    %v2789 = vunpack.c.l.b16 %v91
    %v2790 = vunpack.c.h.b16 %v91
    %v2791 = vunpack.c.l.b16 %v92
    %v2792 = vunpack.c.h.b16 %v92
    %v2793 = vunpack.c.l.b16 %v93
    %v2794 = vunpack.c.h.b16 %v93
    %v2795 = vunpack.c.l.b16 %v94
    %v2796 = vunpack.c.h.b16 %v94
    %v2797 = vunpack.c.l.b16 %v95
    %v2798 = vunpack.c.h.b16 %v95
    %v2799 = vunpack.c.l.b16 %v96
    %v2800 = vunpack.c.h.b16 %v96
    %v2801 = vunpack.c.l.b16 %v97
    %v2802 = vunpack.c.h.b16 %v97
    %v2803 = vunpack.c.l.b16 %v98
    %v2804 = vunpack.c.h.b16 %v98
    %v2805 = vunpack.c.l.b16 %v99
    %v2806 = vunpack.c.h.b16 %v99
    %v2807 = vunpack.c.l.b16 %v100
    %v2808 = vunpack.c.h.b16 %v100
    %v2809 = vunpack.c.l.b16 %v101
    %v2810 = vunpack.c.h.b16 %v101
    %v2811 = vunpack.c.l.b16 %v102
    %v2812 = vunpack.c.h.b16 %v102
    %v2813 = vunpack.c.l.b16 %v103
    %v2814 = vunpack.c.h.b16 %v103
    %v2815 = vunpack.c.l.b16 %v104
    %v2816 = vunpack.c.h.b16 %v104
    %v2817 = vunpack.c.l.b16 %v105
    %v2818 = vunpack.c.h.b16 %v105
    %v2819 = vunpack.c.l.b16 %v106
    %v2820 = vunpack.c.h.b16 %v106
    %v2821 = vunpack.c.l.b16 %v107
    %v2822 = vunpack.c.h.b16 %v107
    %v2823 = vunpack.c.l.b16 %v108
    %v2824 = vunpack.c.h.b16 %v108
    %v2825 = vunpack.c.l.b16 %v109
    %v2826 = vunpack.c.h.b16 %v109
    %v2827 = vunpack.c.l.b16 %v110
    %v2828 = vunpack.c.h.b16 %v110
    %v2829 = vunpack.c.l.b16 %v111
    %v2830 = vunpack.c.h.b16 %v111
    %v2831 = vunpack.c.l.b16 %v112
    %v2832 = vunpack.c.h.b16 %v112
    %v2833 = vunpack.c.l.b16 %v113
    %v2834 = vunpack.c.h.b16 %v113
    %v2835 = vunpack.c.l.b16 %v114
    %v2836 = vunpack.c.h.b16 %v114
    %v2837 = vunpack.c.l.b16 %v115
    %v2838 = vunpack.c.h.b16 %v115
    %v2839 = vunpack.c.l.b16 %v116
    %v2840 = vunpack.c.h.b16 %v116
    %v2841 = vunpack.c.l.b16 %v117
    %v2842 = vunpack.c.h.b16 %v117
    %v2843 = vunpack.c.l.b16 %v118
    %v2844 = vunpack.c.h.b16 %v118
    %v2845 = vunpack.c.l.b16 %v119
    %v2846 = vunpack.c.h.b16 %v119
    %v2847 = vunpack.c.l.b16 %v120
    %v2848 = vunpack.c.h.b16 %v120
    %v2849 = vunpack.c.l.b16 %v121
    %v2850 = vunpack.c.h.b16 %v121
    %v2851 = vunpack.c.l.b16 %v122
    %v2852 = vunpack.c.h.b16 %v122
    %v2853 = vunpack.c.l.b16 %v123
    %v2854 = vunpack.c.h.b16 %v123
    %v2855 = vunpack.c.l.b16 %v124
    %v2856 = vunpack.c.h.b16 %v124
    %v2857 = vunpack.c.l.b16 %v125
    %v2858 = vunpack.c.h.b16 %v125
    %v2859 = vunpack.c.l.b16 %v126
    %v2860 = vunpack.c.h.b16 %v126
    %v2861 = vunpack.c.l.b16 %v127
    %v2862 = vunpack.c.h.b16 %v127
    %v2863 = vunpack.c.l.b16 %v128
    %v2864 = vunpack.c.h.b16 %v128
    %v2865 = vunpack.c.l.b16 %v129
    %v2866 = vunpack.c.h.b16 %v129
    %v2867 = vunpack.c.l.b16 %v130
    %v2868 = vunpack.c.h.b16 %v130
    %v2869 = vunpack.c.l.b16 %v131
    %v2870 = vunpack.c.h.b16 %v131
    %v2871 = vunpack.c.l.b16 %v132
    %v2872 = vunpack.c.h.b16 %v132
    %v2873 = vunpack.c.l.b16 %v133
    %v2874 = vunpack.c.h.b16 %v133
    %v2875 = vunpack.c.l.b16 %v134
    %v2876 = vunpack.c.h.b16 %v134
    %v2877 = vunpack.c.l.b16 %v135
    %v2878 = vunpack.c.h.b16 %v135
    %v2879 = vunpack.c.l.b16 %v136
    %v2880 = vunpack.c.h.b16 %v136
    %v2881 = vunpack.c.l.b16 %v137
    %v2882 = vunpack.c.h.b16 %v137
    %v2883 = vunpack.c.l.b16 %v138
    %v2884 = vunpack.c.h.b16 %v138
    %v2885 = vunpack.c.l.b16 %v139
    %v2886 = vunpack.c.h.b16 %v139
    %v2887 = vunpack.c.l.b16 %v140
    %v2888 = vunpack.c.h.b16 %v140
    %v2889 = vunpack.c.l.b16 %v141
    %v2890 = vunpack.c.h.b16 %v141
    %v2891 = vunpack.c.l.b16 %v142
    %v2892 = vunpack.c.h.b16 %v142
    %v2893 = vunpack.c.l.b16 %v143
    %v2894 = vunpack.c.h.b16 %v143
    %v2895 = vunpack.c.l.b16 %v144
    %v2896 = vunpack.c.h.b16 %v144
    %v2897 = vunpack.c.l.b16 %v145
    %v2898 = vunpack.c.h.b16 %v145
    %v2899 = vunpack.c.l.b16 %v146
    %v2900 = vunpack.c.h.b16 %v146
    %v2901 = vunpack.c.l.b16 %v147
    %v2902 = vunpack.c.h.b16 %v147
    %v2903 = vunpack.c.l.b16 %v148
    %v2904 = vunpack.c.h.b16 %v148
    %v2905 = vunpack.c.l.b16 %v149
    %v2906 = vunpack.c.h.b16 %v149
    %v2907 = vunpack.c.l.b16 %v150
    %v2908 = vunpack.c.h.b16 %v150
    %v2909 = vunpack.c.l.b16 %v151
    %v2910 = vunpack.c.h.b16 %v151
    %v2911 = vunpack.c.l.b16 %v152
    %v2912 = vunpack.c.h.b16 %v152
    %v2913 = vunpack.c.l.b16 %v153
    %v2914 = vunpack.c.h.b16 %v153
    %v2915 = vunpack.c.l.b16 %v154
    %v2916 = vunpack.c.h.b16 %v154
    %v2917 = vunpack.c.l.b16 %v155
    %v2918 = vunpack.c.h.b16 %v155
    %v2919 = vunpack.c.l.b16 %v156
    %v2920 = vunpack.c.h.b16 %v156
    %v2921 = vunpack.c.l.b16 %v157
    %v2922 = vunpack.c.h.b16 %v157
    %v2923 = vunpack.c.l.b16 %v158
    %v2924 = vunpack.c.h.b16 %v158
    %v2925 = vunpack.c.l.b16 %v159
    %v2926 = vunpack.c.h.b16 %v159
    %v2927 = vunpack.c.l.b16 %v160
    %v2928 = vunpack.c.h.b16 %v160
    %v2929 = vunpack.c.l.b16 %v161
    %v2930 = vunpack.c.h.b16 %v161
    %v2931 = vunpack.c.l.b16 %v162
    %v2932 = vunpack.c.h.b16 %v162
    %v2933 = vunpack.c.l.b16 %v163
    %v2934 = vunpack.c.h.b16 %v163
    %v2935 = vunpack.c.l.b16 %v164
    %v2936 = vunpack.c.h.b16 %v164
    %v2937 = vunpack.c.l.b16 %v165
    %v2938 = vunpack.c.h.b16 %v165
    %v2939 = vunpack.c.l.b16 %v166
    %v2940 = vunpack.c.h.b16 %v166
    %v2941 = vunpack.c.l.b16 %v167
    %v2942 = vunpack.c.h.b16 %v167
    %v2943 = vunpack.c.l.b16 %v168
    %v2944 = vunpack.c.h.b16 %v168
    %v2945 = vunpack.c.l.b16 %v169
    %v2946 = vunpack.c.h.b16 %v169
    %v2947 = vunpack.c.l.b16 %v170
    %v2948 = vunpack.c.h.b16 %v170
    %v2949 = vunpack.c.l.b16 %v171
    %v2950 = vunpack.c.h.b16 %v171
    %v2951 = vunpack.c.l.b16 %v172
    %v2952 = vunpack.c.h.b16 %v172
    %v2953 = vunpack.c.l.b16 %v173
    %v2954 = vunpack.c.h.b16 %v173
    %v2955 = vunpack.c.l.b16 %v174
    %v2956 = vunpack.c.h.b16 %v174
    %v2957 = vunpack.c.l.b16 %v175
    %v2958 = vunpack.c.h.b16 %v175
    %v2959 = vunpack.c.l.b16 %v176
    %v2960 = vunpack.c.h.b16 %v176
    %v2961 = vunpack.c.l.b16 %v177
    %v2962 = vunpack.c.h.b16 %v177
    %v2963 = vunpack.c.l.b16 %v178
    %v2964 = vunpack.c.h.b16 %v178
    %v2965 = vunpack.c.l.b16 %v179
    %v2966 = vunpack.c.h.b16 %v179
    %v2967 = vunpack.c.l.b16 %v180
    %v2968 = vunpack.c.h.b16 %v180
    %v2969 = vunpack.c.l.b16 %v181
    %v2970 = vunpack.c.h.b16 %v181
    %v2971 = vunpack.c.l.b16 %v182
    %v2972 = vunpack.c.h.b16 %v182
    %v2973 = vunpack.c.l.b16 %v183
    %v2974 = vunpack.c.h.b16 %v183
    %v2975 = vunpack.c.l.b16 %v184
    %v2976 = vunpack.c.h.b16 %v184
    %v2977 = vunpack.c.l.b16 %v185
    %v2978 = vunpack.c.h.b16 %v185
    %v2979 = vunpack.c.l.b16 %v186
    %v2980 = vunpack.c.h.b16 %v186
    %v2981 = vunpack.c.l.b16 %v187
    %v2982 = vunpack.c.h.b16 %v187
    %v2983 = vunpack.c.l.b16 %v188
    %v2984 = vunpack.c.h.b16 %v188
    %v2985 = vunpack.c.l.b16 %v189
    %v2986 = vunpack.c.h.b16 %v189
    %v2987 = vunpack.c.l.b16 %v190
    %v2988 = vunpack.c.h.b16 %v190
    %v2989 = vunpack.c.l.b16 %v191
    %v2990 = vunpack.c.h.b16 %v191
    %v2991 = vunpack.c.l.b16 %v192
    %v2992 = vunpack.c.h.b16 %v192
    %v2993 = vunpack.c.l.b16 %v193
    %v2994 = vunpack.c.h.b16 %v193
    %v2995 = vunpack.c.l.b16 %v194
    %v2996 = vunpack.c.h.b16 %v194
    %v2997 = vunpack.c.l.b16 %v195
    %v2998 = vunpack.c.h.b16 %v195
    %v2999 = vunpack.c.l.b16 %v196
    %v3000 = vunpack.c.h.b16 %v196
    %v3001 = vunpack.c.l.b16 %v197
    %v3002 = vunpack.c.h.b16 %v197
    %v3003 = vunpack.c.l.b16 %v198
    %v3004 = vunpack.c.h.b16 %v198
    %v3005 = vunpack.c.l.b16 %v199
    %v3006 = vunpack.c.h.b16 %v199
    %v3007 = vunpack.c.l.b16 %v200
    %v3008 = vunpack.c.h.b16 %v200
    %v3009 = vunpack.c.l.b16 %v201
    %v3010 = vunpack.c.h.b16 %v201
    %v3011 = vunpack.c.l.b16 %v202
    %v3012 = vunpack.c.h.b16 %v202
    %v3013 = vunpack.c.l.b16 %v203
    %v3014 = vunpack.c.h.b16 %v203
    %v3015 = vunpack.c.l.b16 %v204
    %v3016 = vunpack.c.h.b16 %v204
    %v3017 = vunpack.c.l.b16 %v205
    %v3018 = vunpack.c.h.b16 %v205
    %v3019 = vunpack.c.l.b16 %v206
    %v3020 = vunpack.c.h.b16 %v206
    %v3021 = vunpack.c.l.b16 %v207
    %v3022 = vunpack.c.h.b16 %v207
    %v3023 = vunpack.c.l.b16 %v208
    %v3024 = vunpack.c.h.b16 %v208
    %v3025 = vunpack.c.l.b16 %v209
    %v3026 = vunpack.c.h.b16 %v209
    %v3027 = vunpack.c.l.b16 %v210
    %v3028 = vunpack.c.h.b16 %v210
    %v3029 = vunpack.c.l.b16 %v211
    %v3030 = vunpack.c.h.b16 %v211
    %v3031 = vunpack.c.l.b16 %v212
    %v3032 = vunpack.c.h.b16 %v212
    %v3033 = vunpack.c.l.b16 %v213
    %v3034 = vunpack.c.h.b16 %v213
    %v3035 = vunpack.c.l.b16 %v214
    %v3036 = vunpack.c.h.b16 %v214
    %v3037 = vunpack.c.l.b16 %v215
    %v3038 = vunpack.c.h.b16 %v215
    %v3039 = vunpack.c.l.b16 %v216
    %v3040 = vunpack.c.h.b16 %v216
    %v3041 = vunpack.c.l.b16 %v217
    %v3042 = vunpack.c.h.b16 %v217
    %v3043 = vunpack.c.l.b16 %v218
    %v3044 = vunpack.c.h.b16 %v218
    %v3045 = vunpack.c.l.b16 %v219
    %v3046 = vunpack.c.h.b16 %v219
    %v3047 = vunpack.c.l.b16 %v220
    %v3048 = vunpack.c.h.b16 %v220
    %v3049 = vunpack.c.l.b16 %v221
    %v3050 = vunpack.c.h.b16 %v221
    %v3051 = vunpack.c.l.b16 %v222
    %v3052 = vunpack.c.h.b16 %v222
    %v3053 = vunpack.c.l.b16 %v223
    %v3054 = vunpack.c.h.b16 %v223
    %v3055 = vunpack.c.l.b16 %v224
    %v3056 = vunpack.c.h.b16 %v224
    %v3057 = vunpack.c.l.b16 %v225
    %v3058 = vunpack.c.h.b16 %v225
    %v3059 = vunpack.c.l.b16 %v226
    %v3060 = vunpack.c.h.b16 %v226
    %v3061 = vunpack.c.l.b16 %v227
    %v3062 = vunpack.c.h.b16 %v227
    %v3063 = vunpack.c.l.b16 %v228
    %v3064 = vunpack.c.h.b16 %v228
    %v3065 = vunpack.c.l.b16 %v229
    %v3066 = vunpack.c.h.b16 %v229
    %v3067 = vunpack.c.l.b16 %v230
    %v3068 = vunpack.c.h.b16 %v230
    %v3069 = vunpack.c.l.b16 %v231
    %v3070 = vunpack.c.h.b16 %v231
    %v3071 = vunpack.c.l.b16 %v232
    %v3072 = vunpack.c.h.b16 %v232
    %v3073 = vunpack.c.l.b16 %v233
    %v3074 = vunpack.c.h.b16 %v233
    %v3075 = vunpack.c.l.b16 %v234
    %v3076 = vunpack.c.h.b16 %v234
    %v3077 = vunpack.c.l.b16 %v235
    %v3078 = vunpack.c.h.b16 %v235
    %v3079 = vunpack.c.l.b16 %v236
    %v3080 = vunpack.c.h.b16 %v236
    %v3081 = vunpack.c.l.b16 %v237
    %v3082 = vunpack.c.h.b16 %v237
    %v3083 = vunpack.c.l.b16 %v238
    %v3084 = vunpack.c.h.b16 %v238
    %v3085 = vunpack.c.l.b16 %v239
    %v3086 = vunpack.c.h.b16 %v239
    %v3087 = vunpack.c.l.b16 %v240
    %v3088 = vunpack.c.h.b16 %v240
    %v3089 = vunpack.c.l.b16 %v241
    %v3090 = vunpack.c.h.b16 %v241
    %v3091 = vunpack.c.l.b16 %v242
    %v3092 = vunpack.c.h.b16 %v242
    %v3093 = vunpack.c.l.b16 %v243
    %v3094 = vunpack.c.h.b16 %v243
    %v3095 = vunpack.c.l.b16 %v244
    %v3096 = vunpack.c.h.b16 %v244
    %v3097 = vunpack.c.l.b16 %v245
    %v3098 = vunpack.c.h.b16 %v245
    %v3099 = vunpack.c.l.b16 %v246
    %v3100 = vunpack.c.h.b16 %v246
    %v3101 = vunpack.c.l.b16 %v247
    %v3102 = vunpack.c.h.b16 %v247
    %v3103 = vunpack.c.l.b16 %v248
    %v3104 = vunpack.c.h.b16 %v248
    %v3105 = vunpack.c.l.b16 %v249
    %v3106 = vunpack.c.h.b16 %v249
    %v3107 = vunpack.c.l.b16 %v250
    %v3108 = vunpack.c.h.b16 %v250
    %v3109 = vunpack.c.l.b16 %v251
    %v3110 = vunpack.c.h.b16 %v251
    %v3111 = vunpack.c.l.b16 %v252
    %v3112 = vunpack.c.h.b16 %v252
    %v3113 = vunpack.c.l.b16 %v253
    %v3114 = vunpack.c.h.b16 %v253
    %v3115 = vunpack.c.l.b16 %v254
    %v3116 = vunpack.c.h.b16 %v254
    %v3117 = vunpack.c.l.b16 %v255
    %v3118 = vunpack.c.h.b16 %v255
    %v3119 = vunpack.c.l.b16 %v256
    %v3120 = vunpack.c.h.b16 %v256
    %v3121 = vunpack.c.l.b16 %v257
    %v3122 = vunpack.c.h.b16 %v257
    %v3123 = vunpack.c.l.b16 %v258
    %v3124 = vunpack.c.h.b16 %v258
    %v3125 = vunpack.c.l.b16 %v259
    %v3126 = vunpack.c.h.b16 %v259
    %v3127 = vunpack.c.l.b16 %v260
    %v3128 = vunpack.c.h.b16 %v260
    %v3129 = vunpack.c.l.b16 %v261
    %v3130 = vunpack.c.h.b16 %v261
    %v3131 = vunpack.c.l.b16 %v262
    %v3132 = vunpack.c.h.b16 %v262
    %v3133 = vunpack.c.l.b16 %v263
    %v3134 = vunpack.c.h.b16 %v263
    %v3135 = vunpack.c.l.b16 %v264
    %v3136 = vunpack.c.h.b16 %v264
    %v3137 = vunpack.c.l.b16 %v265
    %v3138 = vunpack.c.h.b16 %v265
    %v3139 = vunpack.c.l.b16 %v266
    %v3140 = vunpack.c.h.b16 %v266
    %v3141 = vunpack.c.l.b16 %v267
    %v3142 = vunpack.c.h.b16 %v267
    %v3143 = vunpack.c.l.b16 %v268
    %v3144 = vunpack.c.h.b16 %v268
    %v3145 = vunpack.c.l.b16 %v269
    %v3146 = vunpack.c.h.b16 %v269
    %v3147 = vunpack.c.l.b16 %v270
    %v3148 = vunpack.c.h.b16 %v270
    %v3149 = vunpack.c.l.b16 %v271
    %v3150 = vunpack.c.h.b16 %v271
    %v3151 = vunpack.c.l.b16 %v272
    %v3152 = vunpack.c.h.b16 %v272
    %v3153 = vunpack.c.l.b16 %v273
    %v3154 = vunpack.c.h.b16 %v273
    %v3155 = vunpack.c.l.b16 %v274
    %v3156 = vunpack.c.h.b16 %v274
    %v3157 = vunpack.c.l.b16 %v275
    %v3158 = vunpack.c.h.b16 %v275
    %v3159 = vunpack.c.l.b16 %v276
    %v3160 = vunpack.c.h.b16 %v276
    %v3161 = vunpack.c.l.b16 %v277
    %v3162 = vunpack.c.h.b16 %v277
    %v3163 = vunpack.c.l.b16 %v278
    %v3164 = vunpack.c.h.b16 %v278
    %v3165 = vunpack.c.l.b16 %v279
    %v3166 = vunpack.c.h.b16 %v279
    %v3167 = vunpack.c.l.b16 %v280
    %v3168 = vunpack.c.h.b16 %v280
    %v3169 = vunpack.c.l.b16 %v281
    %v3170 = vunpack.c.h.b16 %v281
    %v3171 = vunpack.c.l.b16 %v282
    %v3172 = vunpack.c.h.b16 %v282
    %v3173 = vunpack.c.l.b16 %v283
    %v3174 = vunpack.c.h.b16 %v283
    %v3175 = vunpack.c.l.b16 %v284
    %v3176 = vunpack.c.h.b16 %v284
    %v3177 = vunpack.c.l.b16 %v285
    %v3178 = vunpack.c.h.b16 %v285
    %v3179 = vunpack.c.l.b16 %v286
    %v3180 = vunpack.c.h.b16 %v286
    %v3181 = vunpack.c.l.b16 %v287
    %v3182 = vunpack.c.h.b16 %v287
    %v3183 = vunpack.c.l.b16 %v288
    %v3184 = vunpack.c.h.b16 %v288
    %v3185 = vunpack.c.l.b16 %v289
    %v3186 = vunpack.c.h.b16 %v289
    %v3187 = vunpack.c.l.b16 %v290
    %v3188 = vunpack.c.h.b16 %v290
    %v3189 = vunpack.c.l.b16 %v291
    %v3190 = vunpack.c.h.b16 %v291
    %v3191 = vunpack.c.l.b16 %v292
    %v3192 = vunpack.c.h.b16 %v292
    %v3193 = vunpack.c.l.b16 %v293
    %v3194 = vunpack.c.h.b16 %v293
    %v3195 = vunpack.c.l.b16 %v294
    %v3196 = vunpack.c.h.b16 %v294
    %v3197 = vunpack.c.l.b16 %v295
    %v3198 = vunpack.c.h.b16 %v295
    %v3199 = vunpack.c.l.b16 %v296
    %v3200 = vunpack.c.h.b16 %v296
    %v3201 = vunpack.c.l.b16 %v297
    %v3202 = vunpack.c.h.b16 %v297
    %v3203 = vunpack.c.l.b16 %v298
    %v3204 = vunpack.c.h.b16 %v298
    %v3205 = vunpack.c.l.b16 %v299
    %v3206 = vunpack.c.h.b16 %v299
    %v3207 = vunpack.c.l.b16 %v300
    %v3208 = vunpack.c.h.b16 %v300
    %v3209 = vunpack.c.l.b16 %v301
    %v3210 = vunpack.c.h.b16 %v301
    %v3211 = vunpack.c.l.b16 %v302
    %v3212 = vunpack.c.h.b16 %v302
    %v3213 = vunpack.c.l.b16 %v303
    %v3214 = vunpack.c.h.b16 %v303
    %v3215 = vunpack.c.l.b16 %v304
    %v3216 = vunpack.c.h.b16 %v304
    %v3217 = vunpack.c.l.b16 %v305
    %v3218 = vunpack.c.h.b16 %v305
    %v3219 = vunpack.c.l.b16 %v306
    %v3220 = vunpack.c.h.b16 %v306
    %v3221 = vunpack.c.l.b16 %v307
    %v3222 = vunpack.c.h.b16 %v307
    %v3223 = vunpack.c.l.b16 %v308
    %v3224 = vunpack.c.h.b16 %v308
    %v3225 = vunpack.c.l.b16 %v309
    %v3226 = vunpack.c.h.b16 %v309
    %v3227 = vunpack.c.l.b16 %v310
    %v3228 = vunpack.c.h.b16 %v310
    %v3229 = vunpack.c.l.b16 %v311
    %v3230 = vunpack.c.h.b16 %v311
    %v3231 = vunpack.c.l.b16 %v312
    %v3232 = vunpack.c.h.b16 %v312
    %v3233 = vunpack.c.l.b16 %v313
    %v3234 = vunpack.c.h.b16 %v313
    %v3235 = vunpack.c.l.b16 %v314
    %v3236 = vunpack.c.h.b16 %v314
    %v3237 = vunpack.c.l.b16 %v315
    %v3238 = vunpack.c.h.b16 %v315
    %v3239 = vunpack.c.l.b16 %v316
    %v3240 = vunpack.c.h.b16 %v316
    %v3241 = vunpack.c.l.b16 %v317
    %v3242 = vunpack.c.h.b16 %v317
    %v3243 = vunpack.c.l.b16 %v318
    %v3244 = vunpack.c.h.b16 %v318
    %v3245 = vunpack.c.l.b16 %v319
    %v3246 = vunpack.c.h.b16 %v319
    %v3247 = vunpack.c.l.b16 %v320
    %v3248 = vunpack.c.h.b16 %v320
    %v3249 = vunpack.c.l.b16 %v321
    %v3250 = vunpack.c.h.b16 %v321
    %v3251 = vunpack.c.l.b16 %v322
    %v3252 = vunpack.c.h.b16 %v322
    %v3253 = vunpack.c.l.b16 %v323
    %v3254 = vunpack.c.h.b16 %v323
    %v3255 = vunpack.c.l.b16 %v324
    %v3256 = vunpack.c.h.b16 %v324
    %v3257 = vunpack.c.l.b16 %v325
    %v3258 = vunpack.c.h.b16 %v325
    %v3259 = vunpack.c.l.b16 %v326
    %v3260 = vunpack.c.h.b16 %v326
    %v3261 = vunpack.c.l.b16 %v327
    %v3262 = vunpack.c.h.b16 %v327
    %v3263 = vunpack.c.l.b16 %v328
    %v3264 = vunpack.c.h.b16 %v328
    %v3265 = vunpack.c.l.b16 %v329
    %v3266 = vunpack.c.h.b16 %v329
    %v3267 = vunpack.c.l.b16 %v330
    %v3268 = vunpack.c.h.b16 %v330
    %v3269 = vunpack.c.l.b16 %v331
    %v3270 = vunpack.c.h.b16 %v331
    %v3271 = vunpack.c.l.b16 %v332
    %v3272 = vunpack.c.h.b16 %v332
    %v3273 = vunpack.c.l.b16 %v333
    %v3274 = vunpack.c.h.b16 %v333
    %v3275 = vunpack.c.l.b16 %v334
    %v3276 = vunpack.c.h.b16 %v334
    %v3277 = vunpack.c.l.b16 %v335
    %v3278 = vunpack.c.h.b16 %v335
    %v3279 = vunpack.c.l.b16 %v336
    %v3280 = vunpack.c.h.b16 %v336
    %v3281 = vunpack.c.l.b16 %v337
    %v3282 = vunpack.c.h.b16 %v337
    %v3283 = vunpack.c.l.b16 %v338
    %v3284 = vunpack.c.h.b16 %v338
    %v3285 = vunpack.c.l.b16 %v339
    %v3286 = vunpack.c.h.b16 %v339
    %v3287 = vunpack.c.l.b16 %v340
    %v3288 = vunpack.c.h.b16 %v340
    %v3289 = vunpack.c.l.b16 %v341
    %v3290 = vunpack.c.h.b16 %v341
    %v3291 = vunpack.c.l.b16 %v342
    %v3292 = vunpack.c.h.b16 %v342
    %v3293 = vunpack.c.l.b16 %v343
    %v3294 = vunpack.c.h.b16 %v343
    %v3295 = vunpack.c.l.b16 %v344
    %v3296 = vunpack.c.h.b16 %v344
    %v3297 = vunpack.c.l.b16 %v345
    %v3298 = vunpack.c.h.b16 %v345
    %v3299 = vunpack.c.l.b16 %v346
    %v3300 = vunpack.c.h.b16 %v346
    %v3301 = vunpack.c.l.b16 %v347
    %v3302 = vunpack.c.h.b16 %v347
    %v3303 = vunpack.c.l.b16 %v348
    %v3304 = vunpack.c.h.b16 %v348
    %v3305 = vunpack.c.l.b16 %v349
    %v3306 = vunpack.c.h.b16 %v349
    %v3307 = vunpack.c.l.b16 %v350
    %v3308 = vunpack.c.h.b16 %v350
    %v3309 = vunpack.c.l.b16 %v351
    %v3310 = vunpack.c.h.b16 %v351
    %v3311 = vunpack.c.l.b16 %v352
    %v3312 = vunpack.c.h.b16 %v352
    %v3313 = vunpack.c.l.b16 %v353
    %v3314 = vunpack.c.h.b16 %v353
    %v3315 = vunpack.c.l.b16 %v354
    %v3316 = vunpack.c.h.b16 %v354
    %v3317 = vunpack.c.l.b16 %v355
    %v3318 = vunpack.c.h.b16 %v355
    %v3319 = vunpack.c.l.b16 %v356
    %v3320 = vunpack.c.h.b16 %v356
    %v3321 = vunpack.c.l.b16 %v357
    %v3322 = vunpack.c.h.b16 %v357
    %v3323 = vunpack.c.l.b16 %v358
    %v3324 = vunpack.c.h.b16 %v358
    %v3325 = vunpack.c.l.b16 %v359
    %v3326 = vunpack.c.h.b16 %v359
    %v3327 = vunpack.c.l.b16 %v360
    %v3328 = vunpack.c.h.b16 %v360
    %v3329 = vunpack.c.l.b16 %v361
    %v3330 = vunpack.c.h.b16 %v361
    %v3331 = vunpack.c.l.b16 %v362
    %v3332 = vunpack.c.h.b16 %v362
    %v3333 = vunpack.c.l.b16 %v363
    %v3334 = vunpack.c.h.b16 %v363
    %v3335 = vunpack.c.l.b16 %v364
    %v3336 = vunpack.c.h.b16 %v364
    %v3337 = vunpack.c.l.b16 %v365
    %v3338 = vunpack.c.h.b16 %v365
    %v3339 = vunpack.c.l.b16 %v366
    %v3340 = vunpack.c.h.b16 %v366
    %v3341 = vunpack.c.l.b16 %v367
    %v3342 = vunpack.c.h.b16 %v367
    %v3343 = vunpack.c.l.b16 %v368
    %v3344 = vunpack.c.h.b16 %v368
    %v3345 = vunpack.c.l.b16 %v369
    %v3346 = vunpack.c.h.b16 %v369
    %v3347 = vunpack.c.l.b16 %v370
    %v3348 = vunpack.c.h.b16 %v370
    %v3349 = vunpack.c.l.b16 %v371
    %v3350 = vunpack.c.h.b16 %v371
    %v3351 = vunpack.c.l.b16 %v372
    %v3352 = vunpack.c.h.b16 %v372
    %v3353 = vunpack.c.l.b16 %v373
    %v3354 = vunpack.c.h.b16 %v373
    %v3355 = vunpack.c.l.b16 %v374
    %v3356 = vunpack.c.h.b16 %v374
    %v3357 = vunpack.c.l.b16 %v375
    %v3358 = vunpack.c.h.b16 %v375
    %v3359 = vunpack.c.l.b16 %v376
    %v3360 = vunpack.c.h.b16 %v376
    %v3361 = vunpack.c.l.b16 %v377
    %v3362 = vunpack.c.h.b16 %v377
    %v3363 = vunpack.c.l.b16 %v378
    %v3364 = vunpack.c.h.b16 %v378
    %v3365 = vunpack.c.l.b16 %v379
    %v3366 = vunpack.c.h.b16 %v379
    %v3367 = vunpack.c.l.b16 %v380
    %v3368 = vunpack.c.h.b16 %v380
    %v3369 = vunpack.c.l.b16 %v381
    %v3370 = vunpack.c.h.b16 %v381
    %v3371 = vunpack.c.l.b16 %v382
    %v3372 = vunpack.c.h.b16 %v382
    %v3373 = vunpack.c.l.b16 %v383
    %v3374 = vunpack.c.h.b16 %v383
    %v3375 = vunpack.c.l.b16 %v384
    %v3376 = vunpack.c.h.b16 %v384
    %v3377 = vunpack.c.l.b16 %v385
    %v3378 = vunpack.c.h.b16 %v385
    %v3379 = vunpack.c.l.b16 %v386
    %v3380 = vunpack.c.h.b16 %v386
    %v3381 = vunpack.c.l.b16 %v387
    %v3382 = vunpack.c.h.b16 %v387
    %v3383 = vunpack.c.l.b16 %v388
    %v3384 = vunpack.c.h.b16 %v388
    %v3385 = vunpack.c.l.b16 %v389
    %v3386 = vunpack.c.h.b16 %v389
    %v3387 = vunpack.c.l.b16 %v390
    %v3388 = vunpack.c.h.b16 %v390
    %v3389 = vunpack.c.l.b16 %v391
    %v3390 = vunpack.c.h.b16 %v391
    %v3391 = vunpack.c.l.b16 %v392
    %v3392 = vunpack.c.h.b16 %v392
    %v3393 = vunpack.c.l.b16 %v393
    %v3394 = vunpack.c.h.b16 %v393
    %v3395 = vunpack.c.l.b16 %v394
    %v3396 = vunpack.c.h.b16 %v394
    %v3397 = vunpack.c.l.b16 %v395
    %v3398 = vunpack.c.h.b16 %v395
    %v3399 = vunpack.c.l.b16 %v396
    %v3400 = vunpack.c.h.b16 %v396
    %v3401 = vunpack.c.l.b16 %v397
    %v3402 = vunpack.c.h.b16 %v397
    %v3403 = vunpack.c.l.b16 %v398
    %v3404 = vunpack.c.h.b16 %v398
    %v3405 = vunpack.c.l.b16 %v399
    %v3406 = vunpack.c.h.b16 %v399
    %v3407 = vunpack.c.l.b16 %v400
    %v3408 = vunpack.c.h.b16 %v400
    %v3409 = vunpack.c.l.b16 %v401
    %v3410 = vunpack.c.h.b16 %v401
    %v3411 = vunpack.c.l.b16 %v402
    %v3412 = vunpack.c.h.b16 %v402
    %v3413 = vunpack.c.l.b16 %v403
    %v3414 = vunpack.c.h.b16 %v403
    %v3415 = vunpack.c.l.b16 %v404
    %v3416 = vunpack.c.h.b16 %v404
    %v3417 = vunpack.c.l.b16 %v405
    %v3418 = vunpack.c.h.b16 %v405
    %v3419 = vunpack.c.l.b16 %v406
    %v3420 = vunpack.c.h.b16 %v406
    %v3421 = vunpack.c.l.b16 %v407
    %v3422 = vunpack.c.h.b16 %v407
    %v3423 = vunpack.c.l.b16 %v408
    %v3424 = vunpack.c.h.b16 %v408
    %v3425 = vunpack.c.l.b16 %v409
    %v3426 = vunpack.c.h.b16 %v409
    %v3427 = vunpack.c.l.b16 %v410
    %v3428 = vunpack.c.h.b16 %v410
    %v3429 = vunpack.c.l.b16 %v411
    %v3430 = vunpack.c.h.b16 %v411
    %v3431 = vunpack.c.l.b16 %v412
    %v3432 = vunpack.c.h.b16 %v412
    %v3433 = vunpack.c.l.b16 %v413
    %v3434 = vunpack.c.h.b16 %v413
    %v3435 = vunpack.c.l.b16 %v414
    %v3436 = vunpack.c.h.b16 %v414
    %v3437 = vunpack.c.l.b16 %v415
    %v3438 = vunpack.c.h.b16 %v415
    %v3439 = vunpack.c.l.b16 %v416
    %v3440 = vunpack.c.h.b16 %v416
    %v3441 = vunpack.c.l.b16 %v417
    %v3442 = vunpack.c.h.b16 %v417
    %v3443 = vunpack.c.l.b16 %v418
    %v3444 = vunpack.c.h.b16 %v418
    %v3445 = vunpack.c.l.b16 %v419
    %v3446 = vunpack.c.h.b16 %v419
    %v3447 = vunpack.c.l.b16 %v420
    %v3448 = vunpack.c.h.b16 %v420
    %v3449 = vunpack.c.l.b16 %v421
    %v3450 = vunpack.c.h.b16 %v421
    %v3451 = vunpack.c.l.b16 %v422
    %v3452 = vunpack.c.h.b16 %v422
    %v3453 = vunpack.c.l.b16 %v423
    %v3454 = vunpack.c.h.b16 %v423
    %v3455 = vunpack.c.l.b16 %v424
    %v3456 = vunpack.c.h.b16 %v424
    %v3457 = vunpack.c.l.b16 %v425
    %v3458 = vunpack.c.h.b16 %v425
    %v3459 = vunpack.c.l.b16 %v426
    %v3460 = vunpack.c.h.b16 %v426
    %v3461 = vunpack.c.l.b16 %v427
    %v3462 = vunpack.c.h.b16 %v427
    %v3463 = vunpack.c.l.b16 %v428
    %v3464 = vunpack.c.h.b16 %v428
    %v3465 = vunpack.c.l.b16 %v429
    %v3466 = vunpack.c.h.b16 %v429
    %v3467 = vunpack.c.l.b16 %v430
    %v3468 = vunpack.c.h.b16 %v430
    %v3469 = vunpack.c.l.b16 %v431
    %v3470 = vunpack.c.h.b16 %v431
    %v3471 = vunpack.c.l.b16 %v432
    %v3472 = vunpack.c.h.b16 %v432
    %v3473 = vunpack.c.l.b16 %v433
    %v3474 = vunpack.c.h.b16 %v433
    %v3475 = vunpack.c.l.b16 %v434
    %v3476 = vunpack.c.h.b16 %v434
    %v3477 = vunpack.c.l.b16 %v435
    %v3478 = vunpack.c.h.b16 %v435
    %v3479 = vunpack.c.l.b16 %v436
    %v3480 = vunpack.c.h.b16 %v436
    %v3481 = vunpack.c.l.b16 %v437
    %v3482 = vunpack.c.h.b16 %v437
    %v3483 = vunpack.c.l.b16 %v438
    %v3484 = vunpack.c.h.b16 %v438
    %v3485 = vunpack.c.l.b16 %v439
    %v3486 = vunpack.c.h.b16 %v439
    %v3487 = vunpack.c.l.b16 %v440
    %v3488 = vunpack.c.h.b16 %v440
    %v3489 = vunpack.c.l.b16 %v441
    %v3490 = vunpack.c.h.b16 %v441
    %v3491 = vunpack.c.l.b16 %v442
    %v3492 = vunpack.c.h.b16 %v442
    %v3493 = vunpack.c.l.b16 %v443
    %v3494 = vunpack.c.h.b16 %v443
    %v3495 = vunpack.c.l.b16 %v444
    %v3496 = vunpack.c.h.b16 %v444
    %v3497 = vunpack.c.l.b16 %v445
    %v3498 = vunpack.c.h.b16 %v445
    %v3499 = vunpack.c.l.b16 %v446
    %v3500 = vunpack.c.h.b16 %v446
    %v3501 = vunpack.c.l.b16 %v447
    %v3502 = vunpack.c.h.b16 %v447
    %v3503 = vunpack.c.l.b16 %v448
    %v3504 = vunpack.c.h.b16 %v448
    %v3505 = vunpack.c.l.b16 %v449
    %v3506 = vunpack.c.h.b16 %v449
    %v3507 = vunpack.c.l.b16 %v450
    %v3508 = vunpack.c.h.b16 %v450
    %v3509 = vunpack.c.l.b16 %v451
    %v3510 = vunpack.c.h.b16 %v451
    %v3511 = vunpack.c.l.b16 %v452
    %v3512 = vunpack.c.h.b16 %v452
    %v3513 = vunpack.c.l.b16 %v453
    %v3514 = vunpack.c.h.b16 %v453
    %v3515 = vunpack.c.l.b16 %v454
    %v3516 = vunpack.c.h.b16 %v454
    %v3517 = vunpack.c.l.b16 %v455
    %v3518 = vunpack.c.h.b16 %v455
    %v3519 = vunpack.c.l.b16 %v456
    %v3520 = vunpack.c.h.b16 %v456
    %v3521 = vunpack.c.l.b16 %v457
    %v3522 = vunpack.c.h.b16 %v457
    %v3523 = vunpack.c.l.b16 %v458
    %v3524 = vunpack.c.h.b16 %v458
    %v3525 = vunpack.c.l.b16 %v459
    %v3526 = vunpack.c.h.b16 %v459
    %v3527 = vunpack.c.l.b16 %v460
    %v3528 = vunpack.c.h.b16 %v460
    %v3529 = vunpack.c.l.b16 %v461
    %v3530 = vunpack.c.h.b16 %v461
    %v3531 = vunpack.c.l.b16 %v462
    %v3532 = vunpack.c.h.b16 %v462
    %v3533 = vunpack.c.l.b16 %v463
    %v3534 = vunpack.c.h.b16 %v463
    %v3535 = vunpack.c.l.b16 %v464
    %v3536 = vunpack.c.h.b16 %v464
    %v3537 = vunpack.c.l.b16 %v465
    %v3538 = vunpack.c.h.b16 %v465
    %v3539 = vunpack.c.l.b16 %v466
    %v3540 = vunpack.c.h.b16 %v466
    %v3541 = vunpack.c.l.b16 %v467
    %v3542 = vunpack.c.h.b16 %v467
    %v3543 = vunpack.c.l.b16 %v468
    %v3544 = vunpack.c.h.b16 %v468
    %v3545 = vunpack.c.l.b16 %v469
    %v3546 = vunpack.c.h.b16 %v469
    %v3547 = vunpack.c.l.b16 %v470
    %v3548 = vunpack.c.h.b16 %v470
    %v3549 = vunpack.c.l.b16 %v471
    %v3550 = vunpack.c.h.b16 %v471
    %v3551 = vunpack.c.l.b16 %v472
    %v3552 = vunpack.c.h.b16 %v472
    %v3553 = vunpack.c.l.b16 %v473
    %v3554 = vunpack.c.h.b16 %v473
    %v3555 = vunpack.c.l.b16 %v474
    %v3556 = vunpack.c.h.b16 %v474
    %v3557 = vunpack.c.l.b16 %v475
    %v3558 = vunpack.c.h.b16 %v475
    %v3559 = vunpack.c.l.b16 %v476
    %v3560 = vunpack.c.h.b16 %v476
    %v3561 = vunpack.c.l.b16 %v477
    %v3562 = vunpack.c.h.b16 %v477
    %v3563 = vunpack.c.l.b16 %v478
    %v3564 = vunpack.c.h.b16 %v478
    %v3565 = vunpack.c.l.b16 %v479
    %v3566 = vunpack.c.h.b16 %v479
    %v3567 = vunpack.c.l.b16 %v480
    %v3568 = vunpack.c.h.b16 %v480
    %v3569 = vunpack.c.l.b16 %v481
    %v3570 = vunpack.c.h.b16 %v481
    %v3571 = vunpack.c.l.b16 %v482
    %v3572 = vunpack.c.h.b16 %v482
    %v3573 = vunpack.c.l.b16 %v483
    %v3574 = vunpack.c.h.b16 %v483
    %v3575 = vunpack.c.l.b16 %v484
    %v3576 = vunpack.c.h.b16 %v484
    %v3577 = vunpack.c.l.b16 %v485
    %v3578 = vunpack.c.h.b16 %v485
    %v3579 = vunpack.c.l.b16 %v486
    %v3580 = vunpack.c.h.b16 %v486
    %v3581 = vunpack.c.l.b16 %v487
    %v3582 = vunpack.c.h.b16 %v487
    %v3583 = vunpack.c.l.b16 %v488
    %v3584 = vunpack.c.h.b16 %v488
    %v3585 = vunpack.c.l.b16 %v489
    %v3586 = vunpack.c.h.b16 %v489
    %v3587 = vunpack.c.l.b16 %v490
    %v3588 = vunpack.c.h.b16 %v490
    %v3589 = vunpack.c.l.b16 %v491
    %v3590 = vunpack.c.h.b16 %v491
    %v3591 = vunpack.c.l.b16 %v492
    %v3592 = vunpack.c.h.b16 %v492
    %v3593 = vunpack.c.l.b16 %v493
    %v3594 = vunpack.c.h.b16 %v493
    %v3595 = vunpack.c.l.b16 %v494
    %v3596 = vunpack.c.h.b16 %v494
    %v3597 = vunpack.c.l.b16 %v495
    %v3598 = vunpack.c.h.b16 %v495
    %v3599 = vunpack.c.l.b16 %v496
    %v3600 = vunpack.c.h.b16 %v496
    %v3601 = vunpack.c.l.b16 %v497
    %v3602 = vunpack.c.h.b16 %v497
    %v3603 = vunpack.c.l.b16 %v498
    %v3604 = vunpack.c.h.b16 %v498
    %v3605 = vunpack.c.l.b16 %v499
    %v3606 = vunpack.c.h.b16 %v499
    %v3607 = vunpack.c.l.b16 %v500
    %v3608 = vunpack.c.h.b16 %v500
    %v3609 = vunpack.c.l.b16 %v501
    %v3610 = vunpack.c.h.b16 %v501
    %v3611 = vunpack.c.l.b16 %v502
    %v3612 = vunpack.c.h.b16 %v502
    %v3613 = vunpack.c.l.b16 %v503
    %v3614 = vunpack.c.h.b16 %v503
    %v3615 = vunpack.c.l.b16 %v504
    %v3616 = vunpack.c.h.b16 %v504
    %v3617 = vunpack.c.l.b16 %v505
    %v3618 = vunpack.c.h.b16 %v505
    %v3619 = vunpack.c.l.b16 %v506
    %v3620 = vunpack.c.h.b16 %v506
    %v3621 = vunpack.c.l.b16 %v507
    %v3622 = vunpack.c.h.b16 %v507
    %v3623 = vunpack.c.l.b16 %v508
    %v3624 = vunpack.c.h.b16 %v508
    %v3625 = vunpack.c.l.b16 %v509
    %v3626 = vunpack.c.h.b16 %v509
    %v3627 = vunpack.c.l.b16 %v510
    %v3628 = vunpack.c.h.b16 %v510
    %v3629 = vunpack.c.l.b16 %v511
    %v3630 = vunpack.c.h.b16 %v511
    %v3631 = vunpack.c.l.b16 %v512
    %v3632 = vunpack.c.h.b16 %v512
    %v3633 = vunpack.c.l.b16 %v513
    %v3634 = vunpack.c.h.b16 %v513
    %v3635 = vunpack.c.l.b16 %v514
    %v3636 = vunpack.c.h.b16 %v514
    %v3637 = vunpack.c.l.b16 %v515
    %v3638 = vunpack.c.h.b16 %v515
    %v3639 = vunpack.c.l.b16 %v516
    %v3640 = vunpack.c.h.b16 %v516
    %v3641 = vunpack.c.l.b16 %v517
    %v3642 = vunpack.c.h.b16 %v517
    %v3643 = vunpack.c.l.b16 %v518
    %v3644 = vunpack.c.h.b16 %v518
    %v3645 = vunpack.c.l.b16 %v519
    %v3646 = vunpack.c.h.b16 %v519
    %v3647 = vunpack.c.l.b16 %v520
    %v3648 = vunpack.c.h.b16 %v520
    %v3649 = vunpack.c.l.b16 %v521
    %v3650 = vunpack.c.h.b16 %v521
    %v3651 = vunpack.c.l.b16 %v522
    %v3652 = vunpack.c.h.b16 %v522
    %v3653 = vunpack.c.l.b16 %v523
    %v3654 = vunpack.c.h.b16 %v523
    %v3655 = vunpack.c.l.b16 %v524
    %v3656 = vunpack.c.h.b16 %v524
    %v3657 = vunpack.c.l.b16 %v525
    %v3658 = vunpack.c.h.b16 %v525
    %v3659 = vunpack.c.l.b16 %v526
    %v3660 = vunpack.c.h.b16 %v526
    %v3661 = vunpack.c.l.b16 %v527
    %v3662 = vunpack.c.h.b16 %v527
    %v3663 = vunpack.c.l.b16 %v528
    %v3664 = vunpack.c.h.b16 %v528
    %v3665 = vunpack.c.l.b16 %v529
    %v3666 = vunpack.c.h.b16 %v529
    %v3667 = vunpack.c.l.b16 %v530
    %v3668 = vunpack.c.h.b16 %v530
    %v3669 = vunpack.c.l.b16 %v531
    %v3670 = vunpack.c.h.b16 %v531
    %v3671 = vunpack.c.l.b16 %v532
    %v3672 = vunpack.c.h.b16 %v532
    %v3673 = vunpack.c.l.b16 %v533
    %v3674 = vunpack.c.h.b16 %v533
    %v3675 = vunpack.c.l.b16 %v534
    %v3676 = vunpack.c.h.b16 %v534
    %v3677 = vunpack.c.l.b16 %v535
    %v3678 = vunpack.c.h.b16 %v535
    %v3679 = vunpack.c.l.b16 %v536
    %v3680 = vunpack.c.h.b16 %v536
    %v3681 = vunpack.c.l.b16 %v537
    %v3682 = vunpack.c.h.b16 %v537
    %v3683 = vunpack.c.l.b16 %v538
    %v3684 = vunpack.c.h.b16 %v538
    %v3685 = vunpack.c.l.b16 %v539
    %v3686 = vunpack.c.h.b16 %v539
    %v3687 = vunpack.c.l.b16 %v540
    %v3688 = vunpack.c.h.b16 %v540
    %v3689 = vunpack.c.l.b16 %v541
    %v3690 = vunpack.c.h.b16 %v541
    %v3691 = vunpack.c.l.b16 %v542
    %v3692 = vunpack.c.h.b16 %v542
    %v3693 = vunpack.c.l.b16 %v543
    %v3694 = vunpack.c.h.b16 %v543
    %v3695 = vunpack.c.l.b16 %v544
    %v3696 = vunpack.c.h.b16 %v544
    %v3697 = vunpack.c.l.b16 %v545
    %v3698 = vunpack.c.h.b16 %v545
    %v3699 = vunpack.c.l.b16 %v546
    %v3700 = vunpack.c.h.b16 %v546
    %v3701 = vunpack.c.l.b16 %v547
    %v3702 = vunpack.c.h.b16 %v547
    %v3703 = vunpack.c.l.b16 %v548
    %v3704 = vunpack.c.h.b16 %v548
    %v3705 = vunpack.c.l.b16 %v549
    %v3706 = vunpack.c.h.b16 %v549
    %v3707 = vunpack.c.l.b16 %v550
    %v3708 = vunpack.c.h.b16 %v550
    %v3709 = vunpack.c.l.b16 %v551
    %v3710 = vunpack.c.h.b16 %v551
    %v3711 = vunpack.c.l.b16 %v552
    %v3712 = vunpack.c.h.b16 %v552
    %v3713 = vunpack.c.l.b16 %v553
    %v3714 = vunpack.c.h.b16 %v553
    %v3715 = vunpack.c.l.b16 %v554
    %v3716 = vunpack.c.h.b16 %v554
    %v3717 = vunpack.c.l.b16 %v555
    %v3718 = vunpack.c.h.b16 %v555
    %v3719 = vunpack.c.l.b16 %v556
    %v3720 = vunpack.c.h.b16 %v556
    %v3721 = vunpack.c.l.b16 %v557
    %v3722 = vunpack.c.h.b16 %v557
    %v3723 = vunpack.c.l.b16 %v558
    %v3724 = vunpack.c.h.b16 %v558
    %v3725 = vunpack.c.l.b16 %v559
    %v3726 = vunpack.c.h.b16 %v559
    %v3727 = vunpack.c.l.b16 %v560
    %v3728 = vunpack.c.h.b16 %v560
    %v3729 = vunpack.c.l.b16 %v561
    %v3730 = vunpack.c.h.b16 %v561
    %v3731 = vunpack.c.l.b16 %v562
    %v3732 = vunpack.c.h.b16 %v562
    %v3733 = vunpack.c.l.b16 %v563
    %v3734 = vunpack.c.h.b16 %v563
    %v3735 = vunpack.c.l.b16 %v564
    %v3736 = vunpack.c.h.b16 %v564
    %v3737 = vunpack.c.l.b16 %v565
    %v3738 = vunpack.c.h.b16 %v565
    %v3739 = vunpack.c.l.b16 %v566
    %v3740 = vunpack.c.h.b16 %v566
    %v3741 = vunpack.c.l.b16 %v567
    %v3742 = vunpack.c.h.b16 %v567
    %v3743 = vunpack.c.l.b16 %v568
    %v3744 = vunpack.c.h.b16 %v568
    %v3745 = vunpack.c.l.b16 %v569
    %v3746 = vunpack.c.h.b16 %v569
    %v3747 = vunpack.c.l.b16 %v570
    %v3748 = vunpack.c.h.b16 %v570
    %v3749 = vunpack.c.l.b16 %v571
    %v3750 = vunpack.c.h.b16 %v571
    %v3751 = vunpack.c.l.b16 %v572
    %v3752 = vunpack.c.h.b16 %v572
    %v3753 = vunpack.c.l.b16 %v573
    %v3754 = vunpack.c.h.b16 %v573
    %v3755 = vunpack.c.l.b16 %v574
    %v3756 = vunpack.c.h.b16 %v574
    %v3757 = vunpack.c.l.b16 %v575
    %v3758 = vunpack.c.h.b16 %v575
    %v3759 = vunpack.c.l.b16 %v576
    %v3760 = vunpack.c.h.b16 %v576
    %v3761 = vunpack.c.l.b16 %v577
    %v3762 = vunpack.c.h.b16 %v577
    %v3763 = vunpack.c.l.b16 %v578
    %v3764 = vunpack.c.h.b16 %v578
    %v3765 = vunpack.c.l.b16 %v579
    %v3766 = vunpack.c.h.b16 %v579
    %v3767 = vunpack.c.l.b16 %v580
    %v3768 = vunpack.c.h.b16 %v580
    %v3769 = vunpack.c.l.b16 %v581
    %v3770 = vunpack.c.h.b16 %v581
    %v3771 = vunpack.c.l.b16 %v582
    %v3772 = vunpack.c.h.b16 %v582
    %v3773 = vunpack.c.l.b16 %v583
    %v3774 = vunpack.c.h.b16 %v583
    %v3775 = vunpack.c.l.b16 %v584
    %v3776 = vunpack.c.h.b16 %v584
    %v3777 = vunpack.c.l.b16 %v585
    %v3778 = vunpack.c.h.b16 %v585
    %v3779 = vunpack.c.l.b16 %v586
    %v3780 = vunpack.c.h.b16 %v586
    %v3781 = vunpack.c.l.b16 %v587
    %v3782 = vunpack.c.h.b16 %v587
    %v3783 = vunpack.c.l.b16 %v588
    %v3784 = vunpack.c.h.b16 %v588
    %v3785 = vunpack.c.l.b16 %v589
    %v3786 = vunpack.c.h.b16 %v589
    %v3787 = vunpack.c.l.b16 %v590
    %v3788 = vunpack.c.h.b16 %v590
    %v3789 = vunpack.c.l.b16 %v591
    %v3790 = vunpack.c.h.b16 %v591
    %v3791 = vunpack.c.l.b16 %v592
    %v3792 = vunpack.c.h.b16 %v592
    %v3793 = vunpack.c.l.b16 %v593
    %v3794 = vunpack.c.h.b16 %v593
    %v3795 = vunpack.c.l.b16 %v594
    %v3796 = vunpack.c.h.b16 %v594
    %v3797 = vunpack.c.l.b16 %v595
    %v3798 = vunpack.c.h.b16 %v595
    %v3799 = vunpack.c.l.b16 %v596
    %v3800 = vunpack.c.h.b16 %v596
    %v3801 = vunpack.c.l.b16 %v597
    %v3802 = vunpack.c.h.b16 %v597
    %v3803 = vunpack.c.l.b16 %v598
    %v3804 = vunpack.c.h.b16 %v598
    %v3805 = vunpack.c.l.b16 %v599
    %v3806 = vunpack.c.h.b16 %v599
    %v3807 = vunpack.c.l.b16 %v600
    %v3808 = vunpack.c.h.b16 %v600
    %v3809 = vunpack.c.l.b16 %v601
    %v3810 = vunpack.c.h.b16 %v601
    %v3811 = vunpack.c.l.b16 %v602
    %v3812 = vunpack.c.h.b16 %v602
    %v3813 = vunpack.c.l.b16 %v603
    %v3814 = vunpack.c.h.b16 %v603
    %v3815 = vunpack.c.l.b16 %v604
    %v3816 = vunpack.c.h.b16 %v604
    %v3817 = vunpack.c.l.b16 %v605
    %v3818 = vunpack.c.h.b16 %v605
    %v3819 = vunpack.c.l.b16 %v606
    %v3820 = vunpack.c.h.b16 %v606
    %v3821 = vunpack.c.l.b16 %v607
    %v3822 = vunpack.c.h.b16 %v607
    %v3823 = vunpack.c.l.b16 %v608
    %v3824 = vunpack.c.h.b16 %v608
    %v3825 = vunpack.c.l.b16 %v609
    %v3826 = vunpack.c.h.b16 %v609
    %v3827 = vunpack.c.l.b16 %v610
    %v3828 = vunpack.c.h.b16 %v610
    %v3829 = vunpack.c.l.b16 %v611
    %v3830 = vunpack.c.h.b16 %v611
    %v3831 = vunpack.c.l.b16 %v612
    %v3832 = vunpack.c.h.b16 %v612
    %v3833 = vunpack.c.l.b16 %v613
    %v3834 = vunpack.c.h.b16 %v613
    %v3835 = vunpack.c.l.b16 %v614
    %v3836 = vunpack.c.h.b16 %v614
    %v3837 = vunpack.c.l.b16 %v615
    %v3838 = vunpack.c.h.b16 %v615
    %v3839 = vunpack.c.l.b16 %v616
    %v3840 = vunpack.c.h.b16 %v616
    %v3841 = vunpack.c.l.b16 %v617
    %v3842 = vunpack.c.h.b16 %v617
    %v3843 = vunpack.c.l.b16 %v618
    %v3844 = vunpack.c.h.b16 %v618
    %v3845 = vunpack.c.l.b16 %v619
    %v3846 = vunpack.c.h.b16 %v619
    %v3847 = vunpack.c.l.b16 %v620
    %v3848 = vunpack.c.h.b16 %v620
    %v3849 = vunpack.c.l.b16 %v621
    %v3850 = vunpack.c.h.b16 %v621
    %v3851 = vunpack.c.l.b16 %v622
    %v3852 = vunpack.c.h.b16 %v622
    %v3853 = vunpack.c.l.b16 %v623
    %v3854 = vunpack.c.h.b16 %v623
    %v3855 = vunpack.c.l.b16 %v624
    %v3856 = vunpack.c.h.b16 %v624
    %v3857 = vunpack.c.l.b16 %v625
    %v3858 = vunpack.c.h.b16 %v625
    %v3859 = vunpack.c.l.b16 %v626
    %v3860 = vunpack.c.h.b16 %v626
    %v3861 = vunpack.c.l.b16 %v627
    %v3862 = vunpack.c.h.b16 %v627
    %v3863 = vunpack.c.l.b16 %v628
    %v3864 = vunpack.c.h.b16 %v628
    %v3865 = vunpack.c.l.b16 %v629
    %v3866 = vunpack.c.h.b16 %v629
    %v3867 = vunpack.c.l.b16 %v630
    %v3868 = vunpack.c.h.b16 %v630
    %v3869 = vunpack.c.l.b16 %v631
    %v3870 = vunpack.c.h.b16 %v631
    %v3871 = vunpack.c.l.b16 %v632
    %v3872 = vunpack.c.h.b16 %v632
    %v3873 = vunpack.c.l.b16 %v633
    %v3874 = vunpack.c.h.b16 %v633
    %v3875 = vunpack.c.l.b16 %v634
    %v3876 = vunpack.c.h.b16 %v634
    %v3877 = vunpack.c.l.b16 %v635
    %v3878 = vunpack.c.h.b16 %v635
    %v3879 = vunpack.c.l.b16 %v636
    %v3880 = vunpack.c.h.b16 %v636
    %v3881 = vunpack.c.l.b16 %v637
    %v3882 = vunpack.c.h.b16 %v637
    %v3883 = vunpack.c.l.b16 %v638
    %v3884 = vunpack.c.h.b16 %v638
    %v3885 = vunpack.c.l.b16 %v639
    %v3886 = vunpack.c.h.b16 %v639
    %v3887 = vunpack.c.l.b16 %v640
    %v3888 = vunpack.c.h.b16 %v640
    %v3889 = vunpack.c.l.b16 %v641
    %v3890 = vunpack.c.h.b16 %v641
    %v3891 = vunpack.c.l.b16 %v642
    %v3892 = vunpack.c.h.b16 %v642
    %v3893 = vunpack.c.l.b16 %v643
    %v3894 = vunpack.c.h.b16 %v643
    %v3895 = vunpack.c.l.b16 %v644
    %v3896 = vunpack.c.h.b16 %v644
    %v3897 = vunpack.c.l.b16 %v645
    %v3898 = vunpack.c.h.b16 %v645
    %v3899 = vunpack.c.l.b16 %v646
    %v3900 = vunpack.c.h.b16 %v646
    %v3901 = vunpack.c.l.b16 %v647
    %v3902 = vunpack.c.h.b16 %v647
    %v3903 = vunpack.c.l.b16 %v648
    %v3904 = vunpack.c.h.b16 %v648
    %v3905 = vunpack.c.l.b16 %v649
    %v3906 = vunpack.c.h.b16 %v649
    %v3907 = vunpack.c.l.b16 %v650
    %v3908 = vunpack.c.h.b16 %v650
    %v3909 = vunpack.c.l.b16 %v651
    %v3910 = vunpack.c.h.b16 %v651
    %v3911 = vunpack.c.l.b16 %v652
    %v3912 = vunpack.c.h.b16 %v652
    %v3913 = vunpack.c.l.b16 %v653
    %v3914 = vunpack.c.h.b16 %v653
    %v3915 = vunpack.c.l.b16 %v654
    %v3916 = vunpack.c.h.b16 %v654
    %v3917 = vunpack.c.l.b16 %v655
    %v3918 = vunpack.c.h.b16 %v655
    %v3919 = vunpack.c.l.b16 %v656
    %v3920 = vunpack.c.h.b16 %v656
    %v3921 = vunpack.c.l.b16 %v657
    %v3922 = vunpack.c.h.b16 %v657
    %v3923 = vunpack.c.l.b16 %v658
    %v3924 = vunpack.c.h.b16 %v658
    %v3925 = vunpack.c.l.b16 %v659
    %v3926 = vunpack.c.h.b16 %v659
    %v3927 = vunpack.c.l.b16 %v660
    %v3928 = vunpack.c.h.b16 %v660
    %v3929 = vunpack.c.l.b16 %v661
    %v3930 = vunpack.c.h.b16 %v661
    %v3931 = vunpack.c.l.b16 %v662
    %v3932 = vunpack.c.h.b16 %v662
    %v3933 = vunpack.c.l.b16 %v663
    %v3934 = vunpack.c.h.b16 %v663
    %v3935 = vunpack.c.l.b16 %v664
    %v3936 = vunpack.c.h.b16 %v664
    %v3937 = vunpack.c.l.b16 %v665
    %v3938 = vunpack.c.h.b16 %v665
    %v3939 = vunpack.c.l.b16 %v666
    %v3940 = vunpack.c.h.b16 %v666
    %v3941 = vunpack.c.l.b16 %v667
    %v3942 = vunpack.c.h.b16 %v667
    %v3943 = vunpack.c.l.b16 %v668
    %v3944 = vunpack.c.h.b16 %v668
    %v3945 = vunpack.c.l.b16 %v669
    %v3946 = vunpack.c.h.b16 %v669
    %v3947 = vunpack.c.l.b16 %v670
    %v3948 = vunpack.c.h.b16 %v670
    %v3949 = vunpack.c.l.b16 %v671
    %v3950 = vunpack.c.h.b16 %v671
    %v3951 = vunpack.c.l.b16 %v672
    %v3952 = vunpack.c.h.b16 %v672
    %v3953 = vunpack.c.l.b16 %v673
    %v3954 = vunpack.c.h.b16 %v673
    %v3955 = vunpack.c.l.b16 %v674
    %v3956 = vunpack.c.h.b16 %v674
    %v3957 = vunpack.c.l.b16 %v675
    %v3958 = vunpack.c.h.b16 %v675
    %v3959 = vunpack.c.l.b16 %v676
    %v3960 = vunpack.c.h.b16 %v676
    %v3961 = vunpack.c.l.b16 %v677
    %v3962 = vunpack.c.h.b16 %v677
    %v3963 = vunpack.c.l.b16 %v678
    %v3964 = vunpack.c.h.b16 %v678
    %v3965 = vunpack.c.l.b16 %v679
    %v3966 = vunpack.c.h.b16 %v679
    %v3967 = vunpack.c.l.b16 %v680
    %v3968 = vunpack.c.h.b16 %v680
    %v3969 = vunpack.c.l.b16 %v681
    %v3970 = vunpack.c.h.b16 %v681
    %v3971 = vunpack.c.l.b16 %v682
    %v3972 = vunpack.c.h.b16 %v682
    %v3973 = vunpack.c.l.b16 %v683
    %v3974 = vunpack.c.h.b16 %v683
    %v3975 = vunpack.c.l.b16 %v684
    %v3976 = vunpack.c.h.b16 %v684
    %v3977 = vunpack.c.l.b16 %v685
    %v3978 = vunpack.c.h.b16 %v685
    %v3979 = vunpack.c.l.b16 %v686
    %v3980 = vunpack.c.h.b16 %v686
    %v3981 = vunpack.c.l.b16 %v687
    %v3982 = vunpack.c.h.b16 %v687
    %v3983 = vunpack.c.l.b16 %v688
    %v3984 = vunpack.c.h.b16 %v688
    %v3985 = vunpack.c.l.b16 %v689
    %v3986 = vunpack.c.h.b16 %v689
    %v3987 = vunpack.c.l.b16 %v690
    %v3988 = vunpack.c.h.b16 %v690
    %v3989 = vunpack.c.l.b16 %v691
    %v3990 = vunpack.c.h.b16 %v691
    %v3991 = vunpack.c.l.b16 %v692
    %v3992 = vunpack.c.h.b16 %v692
    %v3993 = vunpack.c.l.b16 %v693
    %v3994 = vunpack.c.h.b16 %v693
    %v3995 = vunpack.c.l.b16 %v694
    %v3996 = vunpack.c.h.b16 %v694
    %v3997 = vunpack.c.l.b16 %v695
    %v3998 = vunpack.c.h.b16 %v695
    %v3999 = vunpack.c.l.b16 %v696
    %v4000 = vunpack.c.h.b16 %v696
    %v4001 = vunpack.c.l.b16 %v697
    %v4002 = vunpack.c.h.b16 %v697
    %v4003 = vunpack.c.l.b16 %v698
    %v4004 = vunpack.c.h.b16 %v698
    %v4005 = vunpack.c.l.b16 %v699
    %v4006 = vunpack.c.h.b16 %v699
    %v4007 = vunpack.c.l.b16 %v700
    %v4008 = vunpack.c.h.b16 %v700
    %v4009 = vunpack.c.l.b16 %v701
    %v4010 = vunpack.c.h.b16 %v701
    %v4011 = vunpack.c.l.b16 %v702
    %v4012 = vunpack.c.h.b16 %v702
    %v4013 = vunpack.c.l.b16 %v703
    %v4014 = vunpack.c.h.b16 %v703
    %v4015 = vunpack.c.l.b16 %v704
    %v4016 = vunpack.c.h.b16 %v704
    %v4017 = vunpack.c.l.b16 %v705
    %v4018 = vunpack.c.h.b16 %v705
    %v4019 = vunpack.c.l.b16 %v706
    %v4020 = vunpack.c.h.b16 %v706
    %v4021 = vunpack.c.l.b16 %v707
    %v4022 = vunpack.c.h.b16 %v707
    %v4023 = vunpack.c.l.b16 %v708
    %v4024 = vunpack.c.h.b16 %v708
    %v4025 = vunpack.c.l.b16 %v709
    %v4026 = vunpack.c.h.b16 %v709
    %v4027 = vunpack.c.l.b16 %v710
    %v4028 = vunpack.c.h.b16 %v710
    %v4029 = vunpack.c.l.b16 %v711
    %v4030 = vunpack.c.h.b16 %v711
    %v4031 = vunpack.c.l.b16 %v712
    %v4032 = vunpack.c.h.b16 %v712
    %v4033 = vunpack.c.l.b16 %v713
    %v4034 = vunpack.c.h.b16 %v713
    %v4035 = vunpack.c.l.b16 %v714
    %v4036 = vunpack.c.h.b16 %v714
    %v4037 = vunpack.c.l.b16 %v715
    %v4038 = vunpack.c.h.b16 %v715
    %v4039 = vunpack.c.l.b16 %v716
    %v4040 = vunpack.c.h.b16 %v716
    %v4041 = vunpack.c.l.b16 %v717
    %v4042 = vunpack.c.h.b16 %v717
    %v4043 = vunpack.c.l.b16 %v718
    %v4044 = vunpack.c.h.b16 %v718
    %v4045 = vunpack.c.l.b16 %v719
    %v4046 = vunpack.c.h.b16 %v719
    %v4047 = vunpack.c.l.b16 %v720
    %v4048 = vunpack.c.h.b16 %v720
    %v4049 = vunpack.c.l.b16 %v721
    %v4050 = vunpack.c.h.b16 %v721
    %v4051 = vunpack.c.l.b16 %v722
    %v4052 = vunpack.c.h.b16 %v722
    %v4053 = vunpack.c.l.b16 %v723
    %v4054 = vunpack.c.h.b16 %v723
    %v4055 = vunpack.c.l.b16 %v724
    %v4056 = vunpack.c.h.b16 %v724
    %v4057 = vunpack.c.l.b16 %v725
    %v4058 = vunpack.c.h.b16 %v725
    %v4059 = vunpack.c.l.b16 %v726
    %v4060 = vunpack.c.h.b16 %v726
    %v4061 = vunpack.c.l.b16 %v727
    %v4062 = vunpack.c.h.b16 %v727
    %v4063 = vunpack.c.l.b16 %v728
    %v4064 = vunpack.c.h.b16 %v728
    %v4065 = vunpack.c.l.b16 %v729
    %v4066 = vunpack.c.h.b16 %v729
    %v4067 = vunpack.c.l.b16 %v730
    %v4068 = vunpack.c.h.b16 %v730
    %v4069 = vunpack.c.l.b16 %v731
    %v4070 = vunpack.c.h.b16 %v731
    %v4071 = vunpack.c.l.b16 %v732
    %v4072 = vunpack.c.h.b16 %v732
    %v4073 = vunpack.c.l.b16 %v733
    %v4074 = vunpack.c.h.b16 %v733
    %v4075 = vunpack.c.l.b16 %v734
    %v4076 = vunpack.c.h.b16 %v734
    %v4077 = vunpack.c.l.b16 %v735
    %v4078 = vunpack.c.h.b16 %v735
    %v4079 = vunpack.c.l.b16 %v736
    %v4080 = vunpack.c.h.b16 %v736
    %v4081 = vunpack.c.l.b16 %v737
    %v4082 = vunpack.c.h.b16 %v737
    %v4083 = vunpack.c.l.b16 %v738
    %v4084 = vunpack.c.h.b16 %v738
    %v4085 = vunpack.c.l.b16 %v739
    %v4086 = vunpack.c.h.b16 %v739
    %v4087 = vunpack.c.l.b16 %v740
    %v4088 = vunpack.c.h.b16 %v740
    %v4089 = vunpack.c.l.b16 %v741
    %v4090 = vunpack.c.h.b16 %v741
    %v4091 = vunpack.c.l.b16 %v742
    %v4092 = vunpack.c.h.b16 %v742
    %v4093 = vunpack.c.l.b16 %v743
    %v4094 = vunpack.c.h.b16 %v743
    %v4095 = vunpack.c.l.b16 %v744
    %v4096 = vunpack.c.h.b16 %v744
    %v4097 = vunpack.c.l.b16 %v745
    %v4098 = vunpack.c.h.b16 %v745
    %v4099 = vunpack.c.l.b16 %v746
    %v4100 = vunpack.c.h.b16 %v746
    %v4101 = vunpack.c.l.b16 %v747
    %v4102 = vunpack.c.h.b16 %v747
    %v4103 = vunpack.c.l.b16 %v748
    %v4104 = vunpack.c.h.b16 %v748
    %v4105 = vunpack.c.l.b16 %v749
    %v4106 = vunpack.c.h.b16 %v749
    %v4107 = vunpack.c.l.b16 %v750
    %v4108 = vunpack.c.h.b16 %v750
    %v4109 = vunpack.c.l.b16 %v751
    %v4110 = vunpack.c.h.b16 %v751
    %v4111 = vunpack.c.l.b16 %v752
    %v4112 = vunpack.c.h.b16 %v752
    %v4113 = vunpack.c.l.b16 %v753
    %v4114 = vunpack.c.h.b16 %v753
    %v4115 = vunpack.c.l.b16 %v754
    %v4116 = vunpack.c.h.b16 %v754
    %v4117 = vunpack.c.l.b16 %v755
    %v4118 = vunpack.c.h.b16 %v755
    %v4119 = vunpack.c.l.b16 %v756
    %v4120 = vunpack.c.h.b16 %v756
    %v4121 = vunpack.c.l.b16 %v757
    %v4122 = vunpack.c.h.b16 %v757
    %v4123 = vunpack.c.l.b16 %v758
    %v4124 = vunpack.c.h.b16 %v758
    %v4125 = vunpack.c.l.b16 %v759
    %v4126 = vunpack.c.h.b16 %v759
    %v4127 = vunpack.c.l.b16 %v760
    %v4128 = vunpack.c.h.b16 %v760
    %v4129 = vunpack.c.l.b16 %v761
    %v4130 = vunpack.c.h.b16 %v761
    %v4131 = vunpack.c.l.b16 %v762
    %v4132 = vunpack.c.h.b16 %v762
    %v4133 = vunpack.c.l.b16 %v763
    %v4134 = vunpack.c.h.b16 %v763
    %v4135 = vunpack.c.l.b16 %v764
    %v4136 = vunpack.c.h.b16 %v764
    %v4137 = vunpack.c.l.b16 %v765
    %v4138 = vunpack.c.h.b16 %v765
    %v4139 = vunpack.c.l.b16 %v766
    %v4140 = vunpack.c.h.b16 %v766
    %v4141 = vunpack.c.l.b16 %v767
    %v4142 = vunpack.c.h.b16 %v767
    %v4143 = vunpack.c.l.b16 %v768
    %v4144 = vunpack.c.h.b16 %v768
    %v4145 = vunpack.c.l.b16 %v769
    %v4146 = vunpack.c.h.b16 %v769
    %v4147 = vunpack.c.l.b16 %v770
    %v4148 = vunpack.c.h.b16 %v770
    %v4149 = vunpack.c.l.b16 %v771
    %v4150 = vunpack.c.h.b16 %v771
    %v4151 = vunpack.c.l.b16 %v772
    %v4152 = vunpack.c.h.b16 %v772
    %v4153 = vunpack.c.l.b16 %v773
    %v4154 = vunpack.c.h.b16 %v773
    %v4155 = vunpack.c.l.b16 %v774
    %v4156 = vunpack.c.h.b16 %v774
    %v4157 = vunpack.c.l.b16 %v775
    %v4158 = vunpack.c.h.b16 %v775
    %v4159 = vunpack.c.l.b16 %v776
    %v4160 = vunpack.c.h.b16 %v776
    %v4161 = vunpack.c.l.b16 %v777
    %v4162 = vunpack.c.h.b16 %v777
    %v4163 = vunpack.c.l.b16 %v778
    %v4164 = vunpack.c.h.b16 %v778
    %v4165 = vunpack.c.l.b16 %v779
    %v4166 = vunpack.c.h.b16 %v779
    %v4167 = vunpack.c.l.b16 %v780
    %v4168 = vunpack.c.h.b16 %v780
    %v4169 = vunpack.c.l.b16 %v781
    %v4170 = vunpack.c.h.b16 %v781
    %v4171 = vunpack.c.l.b16 %v782
    %v4172 = vunpack.c.h.b16 %v782
    %v4173 = vunpack.c.l.b16 %v783
    %v4174 = vunpack.c.h.b16 %v783
    %v4175 = vunpack.c.l.b16 %v784
    %v4176 = vunpack.c.h.b16 %v784
    %v4177 = vunpack.c.l.b16 %v785
    %v4178 = vunpack.c.h.b16 %v785
    %v4179 = vunpack.c.l.b16 %v786
    %v4180 = vunpack.c.h.b16 %v786
    %v4181 = vunpack.c.l.b16 %v787
    %v4182 = vunpack.c.h.b16 %v787
    %v4183 = vunpack.c.l.b16 %v788
    %v4184 = vunpack.c.h.b16 %v788
    %v4185 = vunpack.c.l.b16 %v789
    %v4186 = vunpack.c.h.b16 %v789
    %v4187 = vunpack.c.l.b16 %v790
    %v4188 = vunpack.c.h.b16 %v790
    %v4189 = vunpack.c.l.b16 %v791
    %v4190 = vunpack.c.h.b16 %v791
    %v4191 = vunpack.c.l.b16 %v792
    %v4192 = vunpack.c.h.b16 %v792
    %v4193 = vunpack.c.l.b16 %v793
    %v4194 = vunpack.c.h.b16 %v793
    %v4195 = vunpack.c.l.b16 %v794
    %v4196 = vunpack.c.h.b16 %v794
    %v4197 = vunpack.c.l.b16 %v795
    %v4198 = vunpack.c.h.b16 %v795
    %v4199 = vunpack.c.l.b16 %v796
    %v4200 = vunpack.c.h.b16 %v796
    %v4201 = vunpack.c.l.b16 %v797
    %v4202 = vunpack.c.h.b16 %v797
    %v4203 = vunpack.c.l.b16 %v798
    %v4204 = vunpack.c.h.b16 %v798
    %v4205 = vunpack.c.l.b16 %v799
    %v4206 = vunpack.c.h.b16 %v799
    %v4207 = vunpack.c.l.b16 %v800
    %v4208 = vunpack.c.h.b16 %v800
    %v4209 = vunpack.c.l.b16 %v801
    %v4210 = vunpack.c.h.b16 %v801
    %v4211 = vunpack.c.l.b16 %v802
    %v4212 = vunpack.c.h.b16 %v802
    %v4213 = vunpack.c.l.b16 %v803
    %v4214 = vunpack.c.h.b16 %v803
    %v4215 = vunpack.c.l.b16 %v804
    %v4216 = vunpack.c.h.b16 %v804
    %v4217 = vunpack.c.l.b16 %v805
    %v4218 = vunpack.c.h.b16 %v805
    %v4219 = vunpack.c.l.b16 %v806
    %v4220 = vunpack.c.h.b16 %v806
    %v4221 = vunpack.c.l.b16 %v807
    %v4222 = vunpack.c.h.b16 %v807
    %v4223 = vunpack.c.l.b16 %v808
    %v4224 = vunpack.c.h.b16 %v808
    %v4225 = vunpack.c.l.b16 %v809
    %v4226 = vunpack.c.h.b16 %v809
    %v4227 = vunpack.c.l.b16 %v810
    %v4228 = vunpack.c.h.b16 %v810
    %v4229 = vunpack.c.l.b16 %v811
    %v4230 = vunpack.c.h.b16 %v811
    %v4231 = vunpack.c.l.b16 %v812
    %v4232 = vunpack.c.h.b16 %v812
    %v4233 = vunpack.c.l.b16 %v813
    %v4234 = vunpack.c.h.b16 %v813
    %v4235 = vunpack.c.l.b16 %v814
    %v4236 = vunpack.c.h.b16 %v814
    %v4237 = vunpack.c.l.b16 %v815
    %v4238 = vunpack.c.h.b16 %v815
    %v4239 = vunpack.c.l.b16 %v816
    %v4240 = vunpack.c.h.b16 %v816
    %v4241 = vunpack.c.l.b16 %v817
    %v4242 = vunpack.c.h.b16 %v817
    %v4243 = vunpack.c.l.b16 %v818
    %v4244 = vunpack.c.h.b16 %v818
    %v4245 = vunpack.c.l.b16 %v819
    %v4246 = vunpack.c.h.b16 %v819
    %v4247 = vunpack.c.l.b16 %v820
    %v4248 = vunpack.c.h.b16 %v820
    %v4249 = vunpack.c.l.b16 %v821
    %v4250 = vunpack.c.h.b16 %v821
    %v4251 = vunpack.c.l.b16 %v822
    %v4252 = vunpack.c.h.b16 %v822
    %v4253 = vunpack.c.l.b16 %v823
    %v4254 = vunpack.c.h.b16 %v823
    %v4255 = vunpack.c.l.b16 %v824
    %v4256 = vunpack.c.h.b16 %v824
    %v4257 = vunpack.c.l.b16 %v825
    %v4258 = vunpack.c.h.b16 %v825
    %v4259 = vunpack.c.l.b16 %v826
    %v4260 = vunpack.c.h.b16 %v826
    %v4261 = vunpack.c.l.b16 %v827
    %v4262 = vunpack.c.h.b16 %v827
    %v4263 = vunpack.c.l.b16 %v828
    %v4264 = vunpack.c.h.b16 %v828
    %v4265 = vunpack.c.l.b16 %v829
    %v4266 = vunpack.c.h.b16 %v829
    %v4267 = vunpack.c.l.b16 %v830
    %v4268 = vunpack.c.h.b16 %v830
    %v4269 = vunpack.c.l.b16 %v831
    %v4270 = vunpack.c.h.b16 %v831
    %v4271 = vunpack.c.l.b16 %v832
    %v4272 = vunpack.c.h.b16 %v832
    %v4273 = vunpack.c.l.b16 %v833
    %v4274 = vunpack.c.h.b16 %v833
    %v4275 = vunpack.c.l.b16 %v834
    %v4276 = vunpack.c.h.b16 %v834
    %v4277 = vunpack.c.l.b16 %v835
    %v4278 = vunpack.c.h.b16 %v835
    %v4279 = vunpack.c.l.b16 %v836
    %v4280 = vunpack.c.h.b16 %v836
    %v4281 = vunpack.c.l.b16 %v837
    %v4282 = vunpack.c.h.b16 %v837
    %v4283 = vunpack.c.l.b16 %v838
    %v4284 = vunpack.c.h.b16 %v838
    %v4285 = vunpack.c.l.b16 %v839
    %v4286 = vunpack.c.h.b16 %v839
    %v4287 = vunpack.c.l.b16 %v840
    %v4288 = vunpack.c.h.b16 %v840
    %v4289 = vunpack.c.l.b16 %v841
    %v4290 = vunpack.c.h.b16 %v841
    %v4291 = vunpack.c.l.b16 %v842
    %v4292 = vunpack.c.h.b16 %v842
    %v4293 = vunpack.c.l.b16 %v843
    %v4294 = vunpack.c.h.b16 %v843
    %v4295 = vunpack.c.l.b16 %v844
    %v4296 = vunpack.c.h.b16 %v844
    %v4297 = vunpack.c.l.b16 %v845
    %v4298 = vunpack.c.h.b16 %v845
    %v4299 = vunpack.c.l.b16 %v846
    %v4300 = vunpack.c.h.b16 %v846
    %v4301 = vunpack.c.l.b16 %v847
    %v4302 = vunpack.c.h.b16 %v847
    %v4303 = vunpack.c.l.b16 %v848
    %v4304 = vunpack.c.h.b16 %v848
    %v4305 = vunpack.c.l.b16 %v849
    %v4306 = vunpack.c.h.b16 %v849
    %v4307 = vunpack.c.l.b16 %v850
    %v4308 = vunpack.c.h.b16 %v850
    %v4309 = vunpack.c.l.b16 %v851
    %v4310 = vunpack.c.h.b16 %v851
    %v4311 = vunpack.c.l.b16 %v852
    %v4312 = vunpack.c.h.b16 %v852
    %v4313 = vunpack.c.l.b16 %v853
    %v4314 = vunpack.c.h.b16 %v853
    %v4315 = vunpack.c.l.b16 %v854
    %v4316 = vunpack.c.h.b16 %v854
    %v4317 = vunpack.c.l.b16 %v855
    %v4318 = vunpack.c.h.b16 %v855
    %v4319 = vunpack.c.l.b16 %v856
    %v4320 = vunpack.c.h.b16 %v856
    %v4321 = vunpack.c.l.b16 %v857
    %v4322 = vunpack.c.h.b16 %v857
    %v4323 = vunpack.c.l.b16 %v858
    %v4324 = vunpack.c.h.b16 %v858
    %v4325 = vunpack.c.l.b16 %v859
    %v4326 = vunpack.c.h.b16 %v859
    %v4327 = vunpack.c.l.b16 %v860
    %v4328 = vunpack.c.h.b16 %v860
    %v4329 = vunpack.c.l.b16 %v861
    %v4330 = vunpack.c.h.b16 %v861
    %v4331 = vunpack.c.l.b16 %v862
    %v4332 = vunpack.c.h.b16 %v862
    %v4333 = vunpack.c.l.b16 %v863
    %v4334 = vunpack.c.h.b16 %v863
    %v4335 = vunpack.c.l.b16 %v864
    %v4336 = vunpack.c.h.b16 %v864
    %v4337 = vunpack.c.l.b16 %v865
    %v4338 = vunpack.c.h.b16 %v865
    %v4339 = vunpack.c.l.b16 %v866
    %v4340 = vunpack.c.h.b16 %v866
    %v4341 = vunpack.c.l.b16 %v867
    %v4342 = vunpack.c.h.b16 %v867
    %v4343 = vunpack.c.l.b16 %v868
    %v4344 = vunpack.c.h.b16 %v868
    %v4345 = vunpack.c.l.b16 %v869
    %v4346 = vunpack.c.h.b16 %v869
    %v4347 = vunpack.c.l.b16 %v870
    %v4348 = vunpack.c.h.b16 %v870
    %v4349 = vunpack.c.l.b16 %v871
    %v4350 = vunpack.c.h.b16 %v871
    %v4351 = vunpack.c.l.b16 %v872
    %v4352 = vunpack.c.h.b16 %v872
    %v4353 = vunpack.c.l.b16 %v873
    %v4354 = vunpack.c.h.b16 %v873
    %v4355 = vunpack.c.l.b16 %v874
    %v4356 = vunpack.c.h.b16 %v874
    %v4357 = vunpack.c.l.b16 %v875
    %v4358 = vunpack.c.h.b16 %v875
    %v4359 = vunpack.c.l.b16 %v876
    %v4360 = vunpack.c.h.b16 %v876
    %v4361 = vunpack.c.l.b16 %v877
    %v4362 = vunpack.c.h.b16 %v877
    %v4363 = vunpack.c.l.b16 %v878
    %v4364 = vunpack.c.h.b16 %v878
    %v4365 = vunpack.c.l.b16 %v879
    %v4366 = vunpack.c.h.b16 %v879
    %v4367 = vunpack.c.l.b16 %v880
    %v4368 = vunpack.c.h.b16 %v880
    %v4369 = vunpack.c.l.b16 %v881
    %v4370 = vunpack.c.h.b16 %v881
    %v4371 = vunpack.c.l.b16 %v882
    %v4372 = vunpack.c.h.b16 %v882
    %v4373 = vunpack.c.l.b16 %v883
    %v4374 = vunpack.c.h.b16 %v883
    %v4375 = vunpack.c.l.b16 %v884
    %v4376 = vunpack.c.h.b16 %v884
    %v4377 = vunpack.c.l.b16 %v885
    %v4378 = vunpack.c.h.b16 %v885
    %v4379 = vunpack.c.l.b16 %v886
    %v4380 = vunpack.c.h.b16 %v886
    %v4381 = vunpack.c.l.b16 %v887
    %v4382 = vunpack.c.h.b16 %v887
    %v4383 = vunpack.c.l.b16 %v888
    %v4384 = vunpack.c.h.b16 %v888
    %v4385 = vunpack.c.l.b16 %v889
    %v4386 = vunpack.c.h.b16 %v889
    %v4387 = vunpack.c.l.b16 %v890
    %v4388 = vunpack.c.h.b16 %v890
    %v4389 = vunpack.c.l.b16 %v891
    %v4390 = vunpack.c.h.b16 %v891
    %v4391 = vunpack.c.l.b16 %v892
    %v4392 = vunpack.c.h.b16 %v892
    %v4393 = vunpack.c.l.b16 %v893
    %v4394 = vunpack.c.h.b16 %v893
    %v4395 = vunpack.c.l.b16 %v894
    %v4396 = vunpack.c.h.b16 %v894
    %v4397 = vunpack.c.l.b16 %v895
    %v4398 = vunpack.c.h.b16 %v895
    %v4399 = vunpack.c.l.b16 %v896
    %v4400 = vunpack.c.h.b16 %v896
    %v4401 = vunpack.c.l.b16 %v897
    %v4402 = vunpack.c.h.b16 %v897
    %v4403 = vunpack.c.l.b16 %v898
    %v4404 = vunpack.c.h.b16 %v898
    %v4405 = vunpack.c.l.b16 %v899
    %v4406 = vunpack.c.h.b16 %v899
    %v4407 = vunpack.c.l.b16 %v900
    %v4408 = vunpack.c.h.b16 %v900
    %v4409 = vunpack.c.l.b16 %v901
    %v4410 = vunpack.c.h.b16 %v901
    %v4411 = vunpack.c.l.b16 %v902
    %v4412 = vunpack.c.h.b16 %v902
    %v4413 = vunpack.c.l.b16 %v903
    %v4414 = vunpack.c.h.b16 %v903
    %v4415 = vunpack.c.l.b16 %v904
    %v4416 = vunpack.c.h.b16 %v904
    %v4417 = vunpack.c.l.b16 %v905
    %v4418 = vunpack.c.h.b16 %v905
    %v4419 = vunpack.c.l.b16 %v906
    %v4420 = vunpack.c.h.b16 %v906
    %v4421 = vunpack.c.l.b16 %v907
    %v4422 = vunpack.c.h.b16 %v907
    %v4423 = vunpack.c.l.b16 %v908
    %v4424 = vunpack.c.h.b16 %v908
    %v4425 = vunpack.c.l.b16 %v909
    %v4426 = vunpack.c.h.b16 %v909
    %v4427 = vunpack.c.l.b16 %v910
    %v4428 = vunpack.c.h.b16 %v910
    %v4429 = vunpack.c.l.b16 %v911
    %v4430 = vunpack.c.h.b16 %v911
    %v4431 = vunpack.c.l.b16 %v912
    %v4432 = vunpack.c.h.b16 %v912
    %v4433 = vunpack.c.l.b16 %v913
    %v4434 = vunpack.c.h.b16 %v913
    %v4435 = vunpack.c.l.b16 %v914
    %v4436 = vunpack.c.h.b16 %v914
    %v4437 = vunpack.c.l.b16 %v915
    %v4438 = vunpack.c.h.b16 %v915
    %v4439 = vunpack.c.l.b16 %v916
    %v4440 = vunpack.c.h.b16 %v916
    %v4441 = vunpack.c.l.b16 %v917
    %v4442 = vunpack.c.h.b16 %v917
    %v4443 = vunpack.c.l.b16 %v918
    %v4444 = vunpack.c.h.b16 %v918
    %v4445 = vunpack.c.l.b16 %v919
    %v4446 = vunpack.c.h.b16 %v919
    %v4447 = vunpack.c.l.b16 %v920
    %v4448 = vunpack.c.h.b16 %v920
    %v4449 = vunpack.c.l.b16 %v921
    %v4450 = vunpack.c.h.b16 %v921
    %v4451 = vunpack.c.l.b16 %v922
    %v4452 = vunpack.c.h.b16 %v922
    %v4453 = vunpack.c.l.b16 %v923
    %v4454 = vunpack.c.h.b16 %v923
    %v4455 = vunpack.c.l.b16 %v924
    %v4456 = vunpack.c.h.b16 %v924
    %v4457 = vunpack.c.l.b16 %v925
    %v4458 = vunpack.c.h.b16 %v925
    %v4459 = vunpack.c.l.b16 %v926
    %v4460 = vunpack.c.h.b16 %v926
    %v4461 = vunpack.c.l.b16 %v927
    %v4462 = vunpack.c.h.b16 %v927
    %v4463 = vunpack.c.l.b16 %v928
    %v4464 = vunpack.c.h.b16 %v928
    %v4465 = vunpack.c.l.b16 %v929
    %v4466 = vunpack.c.h.b16 %v929
    %v4467 = vunpack.c.l.b16 %v930
    %v4468 = vunpack.c.h.b16 %v930
    %v4469 = vunpack.c.l.b16 %v931
    %v4470 = vunpack.c.h.b16 %v931
    %v4471 = vunpack.c.l.b16 %v932
    %v4472 = vunpack.c.h.b16 %v932
    %v4473 = vunpack.c.l.b16 %v933
    %v4474 = vunpack.c.h.b16 %v933
    %v4475 = vunpack.c.l.b16 %v934
    %v4476 = vunpack.c.h.b16 %v934
    %v4477 = vunpack.c.l.b16 %v935
    %v4478 = vunpack.c.h.b16 %v935
    %v4479 = vunpack.c.l.b16 %v936
    %v4480 = vunpack.c.h.b16 %v936
    %v4481 = vunpack.c.l.b16 %v937
    %v4482 = vunpack.c.h.b16 %v937
    %v4483 = vunpack.c.l.b16 %v938
    %v4484 = vunpack.c.h.b16 %v938
    %v4485 = vunpack.c.l.b16 %v939
    %v4486 = vunpack.c.h.b16 %v939
    %v4487 = vunpack.c.l.b16 %v940
    %v4488 = vunpack.c.h.b16 %v940
    %v4489 = vunpack.c.l.b16 %v941
    %v4490 = vunpack.c.h.b16 %v941
    %v4491 = vunpack.c.l.b16 %v942
    %v4492 = vunpack.c.h.b16 %v942
    %v4493 = vunpack.c.l.b16 %v943
    %v4494 = vunpack.c.h.b16 %v943
    %v4495 = vunpack.c.l.b16 %v944
    %v4496 = vunpack.c.h.b16 %v944
    %v4497 = vunpack.c.l.b16 %v945
    %v4498 = vunpack.c.h.b16 %v945
    %v4499 = vunpack.c.l.b16 %v946
    %v4500 = vunpack.c.h.b16 %v946
    %v4501 = vunpack.c.l.b16 %v947
    %v4502 = vunpack.c.h.b16 %v947
    %v4503 = vunpack.c.l.b16 %v948
    %v4504 = vunpack.c.h.b16 %v948
    %v4505 = vunpack.c.l.b16 %v949
    %v4506 = vunpack.c.h.b16 %v949
    %v4507 = vunpack.c.l.b16 %v950
    %v4508 = vunpack.c.h.b16 %v950
    %v4509 = vunpack.c.l.b16 %v951
    %v4510 = vunpack.c.h.b16 %v951
    %v4511 = vunpack.c.l.b16 %v952
    %v4512 = vunpack.c.h.b16 %v952
    %v4513 = vunpack.c.l.b16 %v953
    %v4514 = vunpack.c.h.b16 %v953
    %v4515 = vunpack.c.l.b16 %v954
    %v4516 = vunpack.c.h.b16 %v954
    %v4517 = vunpack.c.l.b16 %v955
    %v4518 = vunpack.c.h.b16 %v955
    %v4519 = vunpack.c.l.b16 %v956
    %v4520 = vunpack.c.h.b16 %v956
    %v4521 = vunpack.c.l.b16 %v957
    %v4522 = vunpack.c.h.b16 %v957
    %v4523 = vunpack.c.l.b16 %v958
    %v4524 = vunpack.c.h.b16 %v958
    %v4525 = vunpack.c.l.b16 %v959
    %v4526 = vunpack.c.h.b16 %v959
    %v4527 = vunpack.c.l.b16 %v960
    %v4528 = vunpack.c.h.b16 %v960
    %v4529 = vunpack.c.l.b16 %v961
    %v4530 = vunpack.c.h.b16 %v961
    %v4531 = vunpack.c.l.b16 %v962
    %v4532 = vunpack.c.h.b16 %v962
    %v4533 = vunpack.c.l.b16 %v963
    %v4534 = vunpack.c.h.b16 %v963
    %v4535 = vunpack.c.l.b16 %v964
    %v4536 = vunpack.c.h.b16 %v964
    %v4537 = vunpack.c.l.b16 %v965
    %v4538 = vunpack.c.h.b16 %v965
    %v4539 = vunpack.c.l.b16 %v966
    %v4540 = vunpack.c.h.b16 %v966
    %v4541 = vunpack.c.l.b16 %v967
    %v4542 = vunpack.c.h.b16 %v967
    %v4543 = vunpack.c.l.b16 %v968
    %v4544 = vunpack.c.h.b16 %v968
    %v4545 = vunpack.c.l.b16 %v969
    %v4546 = vunpack.c.h.b16 %v969
    %v4547 = vunpack.c.l.b16 %v970
    %v4548 = vunpack.c.h.b16 %v970
    %v4549 = vunpack.c.l.b16 %v971
    %v4550 = vunpack.c.h.b16 %v971
    %v4551 = vunpack.c.l.b16 %v972
    %v4552 = vunpack.c.h.b16 %v972
    %v4553 = vunpack.c.l.b16 %v973
    %v4554 = vunpack.c.h.b16 %v973
    %v4555 = vunpack.c.l.b16 %v974
    %v4556 = vunpack.c.h.b16 %v974
    %v4557 = vunpack.c.l.b16 %v975
    %v4558 = vunpack.c.h.b16 %v975
    %v4559 = vunpack.c.l.b16 %v976
    %v4560 = vunpack.c.h.b16 %v976
    %v4561 = vunpack.c.l.b16 %v977
    %v4562 = vunpack.c.h.b16 %v977
    %v4563 = vunpack.c.l.b16 %v978
    %v4564 = vunpack.c.h.b16 %v978
    %v4565 = vunpack.c.l.b16 %v979
    %v4566 = vunpack.c.h.b16 %v979
    %v4567 = vunpack.c.l.b16 %v980
    %v4568 = vunpack.c.h.b16 %v980
    %v4569 = vunpack.c.l.b16 %v981
    %v4570 = vunpack.c.h.b16 %v981
    %v4571 = vunpack.c.l.b16 %v982
    %v4572 = vunpack.c.h.b16 %v982
    %v4573 = vunpack.c.l.b16 %v983
    %v4574 = vunpack.c.h.b16 %v983
    %v4575 = vunpack.c.l.b16 %v984
    %v4576 = vunpack.c.h.b16 %v984
    %v4577 = vunpack.c.l.b16 %v985
    %v4578 = vunpack.c.h.b16 %v985
    %v4579 = vunpack.c.l.b16 %v986
    %v4580 = vunpack.c.h.b16 %v986
    %v4581 = vunpack.c.l.b16 %v987
    %v4582 = vunpack.c.h.b16 %v987
    %v4583 = vunpack.c.l.b16 %v988
    %v4584 = vunpack.c.h.b16 %v988
    %v4585 = vunpack.c.l.b16 %v989
    %v4586 = vunpack.c.h.b16 %v989
    %v4587 = vunpack.c.l.b16 %v990
    %v4588 = vunpack.c.h.b16 %v990
    %v4589 = vunpack.c.l.b16 %v991
    %v4590 = vunpack.c.h.b16 %v991
    %v4591 = vunpack.c.l.b16 %v992
    %v4592 = vunpack.c.h.b16 %v992
    %v4593 = vunpack.c.l.b16 %v993
    %v4594 = vunpack.c.h.b16 %v993
    %v4595 = vunpack.c.l.b16 %v994
    %v4596 = vunpack.c.h.b16 %v994
    %v4597 = vunpack.c.l.b16 %v995
    %v4598 = vunpack.c.h.b16 %v995
    %v4599 = vunpack.c.l.b16 %v996
    %v4600 = vunpack.c.h.b16 %v996
    %v4601 = vunpack.c.l.b16 %v997
    %v4602 = vunpack.c.h.b16 %v997
    %v4603 = vunpack.c.l.b16 %v998
    %v4604 = vunpack.c.h.b16 %v998
    %v4605 = vunpack.c.l.b16 %v999
    %v4606 = vunpack.c.h.b16 %v999
    %v4607 = vunpack.c.l.b16 %v1000
    %v4608 = vunpack.c.h.b16 %v1000
    %v4609 = vunpack.c.l.b16 %v1001
    %v4610 = vunpack.c.h.b16 %v1001
    %v4611 = vunpack.c.l.b16 %v1002
    %v4612 = vunpack.c.h.b16 %v1002
    %v4613 = vunpack.c.l.b16 %v1003
    %v4614 = vunpack.c.h.b16 %v1003
    %v4615 = vunpack.c.l.b16 %v1004
    %v4616 = vunpack.c.h.b16 %v1004
    %v4617 = vunpack.c.l.b16 %v1005
    %v4618 = vunpack.c.h.b16 %v1005
    %v4619 = vunpack.c.l.b16 %v1006
    %v4620 = vunpack.c.h.b16 %v1006
    %v4621 = vunpack.c.l.b16 %v1007
    %v4622 = vunpack.c.h.b16 %v1007
    %v4623 = vunpack.c.l.b16 %v1008
    %v4624 = vunpack.c.h.b16 %v1008
    %v4625 = vunpack.c.l.b16 %v1009
    %v4626 = vunpack.c.h.b16 %v1009
    %v4627 = vunpack.c.l.b16 %v1010
    %v4628 = vunpack.c.h.b16 %v1010
    %v4629 = vunpack.c.l.b16 %v1011
    %v4630 = vunpack.c.h.b16 %v1011
    %v4631 = vunpack.c.l.b16 %v1012
    %v4632 = vunpack.c.h.b16 %v1012
    %v4633 = vunpack.c.l.b16 %v1013
    %v4634 = vunpack.c.h.b16 %v1013
    %v4635 = vunpack.c.l.b16 %v1014
    %v4636 = vunpack.c.h.b16 %v1014
    %v4637 = vunpack.c.l.b16 %v1015
    %v4638 = vunpack.c.h.b16 %v1015
    %v4639 = vunpack.c.l.b16 %v1016
    %v4640 = vunpack.c.h.b16 %v1016
    %v4641 = vunpack.c.l.b16 %v1017
    %v4642 = vunpack.c.h.b16 %v1017
    %v4643 = vunpack.c.l.b16 %v1018
    %v4644 = vunpack.c.h.b16 %v1018
    %v4645 = vunpack.c.l.b16 %v1019
    %v4646 = vunpack.c.h.b16 %v1019
    %v4647 = vunpack.c.l.b16 %v1020
    %v4648 = vunpack.c.h.b16 %v1020
    %v4649 = vunpack.c.l.b16 %v1021
    %v4650 = vunpack.c.h.b16 %v1021
    %v4651 = vunpack.c.l.b16 %v1022
    %v4652 = vunpack.c.h.b16 %v1022
    %v4653 = vunpack.c.l.b16 %v1023
    %v4654 = vunpack.c.h.b16 %v1023
    %v4655 = vunpack.c.l.b16 %v1024
    %v4656 = vunpack.c.h.b16 %v1024
    %v4657 = vunpack.c.l.b16 %v1025
    %v4658 = vunpack.c.h.b16 %v1025
    %v4659 = vunpack.c.l.b16 %v1026
    %v4660 = vunpack.c.h.b16 %v1026
    %v4661 = vunpack.c.l.b16 %v1027
    %v4662 = vunpack.c.h.b16 %v1027
    %v4663 = vunpack.c.l.b16 %v1028
    %v4664 = vunpack.c.h.b16 %v1028
    %v4665 = vunpack.c.l.b16 %v1029
    %v4666 = vunpack.c.h.b16 %v1029
    %v4667 = vunpack.c.l.b16 %v1030
    %v4668 = vunpack.c.h.b16 %v1030
    %v4669 = vunpack.c.l.b16 %v1031
    %v4670 = vunpack.c.h.b16 %v1031
    %v4671 = vunpack.c.l.b16 %v1032
    %v4672 = vunpack.c.h.b16 %v1032
    %v4673 = vunpack.c.l.b16 %v1033
    %v4674 = vunpack.c.h.b16 %v1033
    %v4675 = vunpack.c.l.b16 %v1034
    %v4676 = vunpack.c.h.b16 %v1034
    %v4677 = vunpack.c.l.b16 %v1035
    %v4678 = vunpack.c.h.b16 %v1035
    %v4679 = vunpack.c.l.b16 %v1036
    %v4680 = vunpack.c.h.b16 %v1036
    %v4681 = vunpack.c.l.b16 %v1037
    %v4682 = vunpack.c.h.b16 %v1037
    %v4683 = vunpack.c.l.b16 %v1038
    %v4684 = vunpack.c.h.b16 %v1038
    %v4685 = vunpack.c.l.b16 %v1039
    %v4686 = vunpack.c.h.b16 %v1039
    %v4687 = vunpack.c.l.b16 %v1040
    %v4688 = vunpack.c.h.b16 %v1040
    %v4689 = vunpack.c.l.b16 %v1041
    %v4690 = vunpack.c.h.b16 %v1041
    %v4691 = vunpack.c.l.b16 %v1042
    %v4692 = vunpack.c.h.b16 %v1042
    %v4693 = vunpack.c.l.b16 %v1043
    %v4694 = vunpack.c.h.b16 %v1043
    %v4695 = vunpack.c.l.b16 %v1044
    %v4696 = vunpack.c.h.b16 %v1044
    %v4697 = vunpack.c.l.b16 %v1045
    %v4698 = vunpack.c.h.b16 %v1045
    %v4699 = vunpack.c.l.b16 %v1046
    %v4700 = vunpack.c.h.b16 %v1046
    %v4701 = vunpack.c.l.b16 %v1047
    %v4702 = vunpack.c.h.b16 %v1047
    %v4703 = vunpack.c.l.b16 %v1048
    %v4704 = vunpack.c.h.b16 %v1048
    %v4705 = vunpack.c.l.b16 %v1049
    %v4706 = vunpack.c.h.b16 %v1049
    %v4707 = vunpack.c.l.b16 %v1050
    %v4708 = vunpack.c.h.b16 %v1050
    %v4709 = vunpack.c.l.b16 %v1051
    %v4710 = vunpack.c.h.b16 %v1051
    %v4711 = vunpack.c.l.b16 %v1052
    %v4712 = vunpack.c.h.b16 %v1052
    %v4713 = vunpack.c.l.b16 %v1053
    %v4714 = vunpack.c.h.b16 %v1053
    %v4715 = vunpack.c.l.b16 %v1054
    %v4716 = vunpack.c.h.b16 %v1054
    %v4717 = vunpack.c.l.b16 %v1055
    %v4718 = vunpack.c.h.b16 %v1055
    %v4719 = vunpack.c.l.b16 %v1056
    %v4720 = vunpack.c.h.b16 %v1056
    %v4721 = vunpack.c.l.b16 %v1057
    %v4722 = vunpack.c.h.b16 %v1057
    %v4723 = vunpack.c.l.b16 %v1058
    %v4724 = vunpack.c.h.b16 %v1058
    %v4725 = vunpack.c.l.b16 %v1059
    %v4726 = vunpack.c.h.b16 %v1059
    %v4727 = vunpack.c.l.b16 %v1060
    %v4728 = vunpack.c.h.b16 %v1060
    %v4729 = vunpack.c.l.b16 %v1061
    %v4730 = vunpack.c.h.b16 %v1061
    %v4731 = vunpack.c.l.b16 %v1062
    %v4732 = vunpack.c.h.b16 %v1062
    %v4733 = vunpack.c.l.b16 %v1063
    %v4734 = vunpack.c.h.b16 %v1063
    %v4735 = vunpack.c.l.b16 %v1064
    %v4736 = vunpack.c.h.b16 %v1064
    %v4737 = vunpack.c.l.b16 %v1065
    %v4738 = vunpack.c.h.b16 %v1065
    %v4739 = vunpack.c.l.b16 %v1066
    %v4740 = vunpack.c.h.b16 %v1066
    %v4741 = vunpack.c.l.b16 %v1067
    %v4742 = vunpack.c.h.b16 %v1067
    %v4743 = vunpack.c.l.b16 %v1068
    %v4744 = vunpack.c.h.b16 %v1068
    %v4745 = vunpack.c.l.b16 %v1069
    %v4746 = vunpack.c.h.b16 %v1069
    %v4747 = vunpack.c.l.b16 %v1070
    %v4748 = vunpack.c.h.b16 %v1070
    %v4749 = vunpack.c.l.b16 %v1071
    %v4750 = vunpack.c.h.b16 %v1071
    %v4751 = vunpack.c.l.b16 %v1072
    %v4752 = vunpack.c.h.b16 %v1072
    %v4753 = vunpack.c.l.b16 %v1073
    %v4754 = vunpack.c.h.b16 %v1073
    %v4755 = vunpack.c.l.b16 %v1074
    %v4756 = vunpack.c.h.b16 %v1074
    %v4757 = vunpack.c.l.b16 %v1075
    %v4758 = vunpack.c.h.b16 %v1075
    %v4759 = vunpack.c.l.b16 %v1076
    %v4760 = vunpack.c.h.b16 %v1076
    %v4761 = vunpack.c.l.b16 %v1077
    %v4762 = vunpack.c.h.b16 %v1077
    %v4763 = vunpack.c.l.b16 %v1078
    %v4764 = vunpack.c.h.b16 %v1078
    %v4765 = vunpack.c.l.b16 %v1079
    %v4766 = vunpack.c.h.b16 %v1079
    %v4767 = vunpack.c.l.b16 %v1080
    %v4768 = vunpack.c.h.b16 %v1080
    %v4769 = vunpack.c.l.b16 %v1081
    %v4770 = vunpack.c.h.b16 %v1081
    %v4771 = vunpack.c.l.b16 %v1082
    %v4772 = vunpack.c.h.b16 %v1082
    %v4773 = vunpack.c.l.b16 %v1083
    %v4774 = vunpack.c.h.b16 %v1083
    %v4775 = vunpack.c.l.b16 %v1084
    %v4776 = vunpack.c.h.b16 %v1084
    %v4777 = vunpack.c.l.b16 %v1085
    %v4778 = vunpack.c.h.b16 %v1085
    %v4779 = vunpack.c.l.b16 %v1086
    %v4780 = vunpack.c.h.b16 %v1086
    %v4781 = vunpack.c.l.b16 %v1087
    %v4782 = vunpack.c.h.b16 %v1087
    %v4783 = vunpack.c.l.b16 %v1088
    %v4784 = vunpack.c.h.b16 %v1088
    %v4785 = vunpack.c.l.b16 %v1089
    %v4786 = vunpack.c.h.b16 %v1089
    %v4787 = vunpack.c.l.b16 %v1090
    %v4788 = vunpack.c.h.b16 %v1090
    %v4789 = vunpack.c.l.b16 %v1091
    %v4790 = vunpack.c.h.b16 %v1091
    %v4791 = vunpack.c.l.b16 %v1092
    %v4792 = vunpack.c.h.b16 %v1092
    %v4793 = vunpack.c.l.b16 %v1093
    %v4794 = vunpack.c.h.b16 %v1093
    %v4795 = vunpack.c.l.b16 %v1094
    %v4796 = vunpack.c.h.b16 %v1094
    %v4797 = vunpack.c.l.b16 %v1095
    %v4798 = vunpack.c.h.b16 %v1095
    %v4799 = vunpack.c.l.b16 %v1096
    %v4800 = vunpack.c.h.b16 %v1096
    %v4801 = vunpack.c.l.b16 %v1097
    %v4802 = vunpack.c.h.b16 %v1097
    %v4803 = vunpack.c.l.b16 %v1098
    %v4804 = vunpack.c.h.b16 %v1098
    %v4805 = vunpack.c.l.b16 %v1099
    %v4806 = vunpack.c.h.b16 %v1099
    %v4807 = vunpack.c.l.b16 %v1100
    %v4808 = vunpack.c.h.b16 %v1100
    %v4809 = vunpack.c.l.b16 %v1101
    %v4810 = vunpack.c.h.b16 %v1101
    %v4811 = vunpack.c.l.b16 %v1102
    %v4812 = vunpack.c.h.b16 %v1102
    %v4813 = vunpack.c.l.b16 %v1103
    %v4814 = vunpack.c.h.b16 %v1103
    %v4815 = vunpack.c.l.b16 %v1104
    %v4816 = vunpack.c.h.b16 %v1104
    %v4817 = vunpack.c.l.b16 %v1105
    %v4818 = vunpack.c.h.b16 %v1105
    %v4819 = vunpack.c.l.b16 %v1106
    %v4820 = vunpack.c.h.b16 %v1106
    %v4821 = vunpack.c.l.b16 %v1107
    %v4822 = vunpack.c.h.b16 %v1107
    %v4823 = vunpack.c.l.b16 %v1108
    %v4824 = vunpack.c.h.b16 %v1108
    %v4825 = vunpack.c.l.b16 %v1109
    %v4826 = vunpack.c.h.b16 %v1109
    %v4827 = vunpack.c.l.b16 %v1110
    %v4828 = vunpack.c.h.b16 %v1110
    %v4829 = vunpack.c.l.b16 %v1111
    %v4830 = vunpack.c.h.b16 %v1111
    %v4831 = vunpack.c.l.b16 %v1112
    %v4832 = vunpack.c.h.b16 %v1112
    %v4833 = vunpack.c.l.b16 %v1113
    %v4834 = vunpack.c.h.b16 %v1113
    %v4835 = vunpack.c.l.b16 %v1114
    %v4836 = vunpack.c.h.b16 %v1114
    %v4837 = vunpack.c.l.b16 %v1115
    %v4838 = vunpack.c.h.b16 %v1115
    %v4839 = vunpack.c.l.b16 %v1116
    %v4840 = vunpack.c.h.b16 %v1116
    %v4841 = vunpack.c.l.b16 %v1117
    %v4842 = vunpack.c.h.b16 %v1117
    %v4843 = vunpack.c.l.b16 %v1118
    %v4844 = vunpack.c.h.b16 %v1118
    %v4845 = vunpack.c.l.b16 %v1119
    %v4846 = vunpack.c.h.b16 %v1119
    %v4847 = vunpack.c.l.b16 %v1120
    %v4848 = vunpack.c.h.b16 %v1120
    %v4849 = vunpack.c.l.b16 %v1121
    %v4850 = vunpack.c.h.b16 %v1121
    %v4851 = vunpack.c.l.b16 %v1122
    %v4852 = vunpack.c.h.b16 %v1122
    %v4853 = vunpack.c.l.b16 %v1123
    %v4854 = vunpack.c.h.b16 %v1123
    %v4855 = vunpack.c.l.b16 %v1124
    %v4856 = vunpack.c.h.b16 %v1124
    %v4857 = vunpack.c.l.b16 %v1125
    %v4858 = vunpack.c.h.b16 %v1125
    %v4859 = vunpack.c.l.b16 %v1126
    %v4860 = vunpack.c.h.b16 %v1126
    %v4861 = vunpack.c.l.b16 %v1127
    %v4862 = vunpack.c.h.b16 %v1127
    %v4863 = vunpack.c.l.b16 %v1128
    %v4864 = vunpack.c.h.b16 %v1128
    %v4865 = vunpack.c.l.b16 %v1129
    %v4866 = vunpack.c.h.b16 %v1129
    %v4867 = vunpack.c.l.b16 %v1130
    %v4868 = vunpack.c.h.b16 %v1130
    %v4869 = vunpack.c.l.b16 %v1131
    %v4870 = vunpack.c.h.b16 %v1131
    %v4871 = vunpack.c.l.b16 %v1132
    %v4872 = vunpack.c.h.b16 %v1132
    %v4873 = vunpack.c.l.b16 %v1133
    %v4874 = vunpack.c.h.b16 %v1133
    %v4875 = vunpack.c.l.b16 %v1134
    %v4876 = vunpack.c.h.b16 %v1134
    %v4877 = vunpack.c.l.b16 %v1135
    %v4878 = vunpack.c.h.b16 %v1135
    %v4879 = vunpack.c.l.b16 %v1136
    %v4880 = vunpack.c.h.b16 %v1136
    %v4881 = vunpack.c.l.b16 %v1137
    %v4882 = vunpack.c.h.b16 %v1137
    %v4883 = vunpack.c.l.b16 %v1138
    %v4884 = vunpack.c.h.b16 %v1138
    %v4885 = vunpack.c.l.b16 %v1139
    %v4886 = vunpack.c.h.b16 %v1139
    %v4887 = vunpack.c.l.b16 %v1140
    %v4888 = vunpack.c.h.b16 %v1140
    %v4889 = vunpack.c.l.b16 %v1141
    %v4890 = vunpack.c.h.b16 %v1141
    %v4891 = vunpack.c.l.b16 %v1142
    %v4892 = vunpack.c.h.b16 %v1142
    %v4893 = vunpack.c.l.b16 %v1143
    %v4894 = vunpack.c.h.b16 %v1143
    %v4895 = vunpack.c.l.b16 %v1144
    %v4896 = vunpack.c.h.b16 %v1144
    %v4897 = vunpack.c.l.b16 %v1145
    %v4898 = vunpack.c.h.b16 %v1145
    %v4899 = vunpack.c.l.b16 %v1146
    %v4900 = vunpack.c.h.b16 %v1146
    %v4901 = vunpack.c.l.b16 %v1147
    %v4902 = vunpack.c.h.b16 %v1147
    %v4903 = vunpack.c.l.b16 %v1148
    %v4904 = vunpack.c.h.b16 %v1148
    %v4905 = vunpack.c.l.b16 %v1149
    %v4906 = vunpack.c.h.b16 %v1149
    %v4907 = vunpack.c.l.b16 %v1150
    %v4908 = vunpack.c.h.b16 %v1150
    %v4909 = vunpack.c.l.b16 %v1151
    %v4910 = vunpack.c.h.b16 %v1151
    %v4911 = vunpack.c.l.b16 %v1152
    %v4912 = vunpack.c.h.b16 %v1152
    %v4913 = vunpack.c.l.b16 %v1153
    %v4914 = vunpack.c.h.b16 %v1153
    %v4915 = vunpack.c.l.b16 %v1154
    %v4916 = vunpack.c.h.b16 %v1154
    %v4917 = vunpack.c.l.b16 %v1155
    %v4918 = vunpack.c.h.b16 %v1155
    %v4919 = vunpack.c.l.b16 %v1156
    %v4920 = vunpack.c.h.b16 %v1156
    %v4921 = vunpack.c.l.b16 %v1157
    %v4922 = vunpack.c.h.b16 %v1157
    %v4923 = vunpack.c.l.b16 %v1158
    %v4924 = vunpack.c.h.b16 %v1158
    %v4925 = vunpack.c.l.b16 %v1159
    %v4926 = vunpack.c.h.b16 %v1159
    %v4927 = vunpack.c.l.b16 %v1160
    %v4928 = vunpack.c.h.b16 %v1160
    %v4929 = vunpack.c.l.b16 %v1161
    %v4930 = vunpack.c.h.b16 %v1161
    %v4931 = vunpack.c.l.b16 %v1162
    %v4932 = vunpack.c.h.b16 %v1162
    %v4933 = vunpack.c.l.b16 %v1163
    %v4934 = vunpack.c.h.b16 %v1163
    %v4935 = vunpack.c.l.b16 %v1164
    %v4936 = vunpack.c.h.b16 %v1164
    %v4937 = vunpack.c.l.b16 %v1165
    %v4938 = vunpack.c.h.b16 %v1165
    %v4939 = vunpack.c.l.b16 %v1166
    %v4940 = vunpack.c.h.b16 %v1166
    %v4941 = vunpack.c.l.b16 %v1167
    %v4942 = vunpack.c.h.b16 %v1167
    %v4943 = vunpack.c.l.b16 %v1168
    %v4944 = vunpack.c.h.b16 %v1168
    %v4945 = vunpack.c.l.b16 %v1169
    %v4946 = vunpack.c.h.b16 %v1169
    %v4947 = vunpack.c.l.b16 %v1170
    %v4948 = vunpack.c.h.b16 %v1170
    %v4949 = vunpack.c.l.b16 %v1171
    %v4950 = vunpack.c.h.b16 %v1171
    %v4951 = vunpack.c.l.b16 %v1172
    %v4952 = vunpack.c.h.b16 %v1172
    %v4953 = vunpack.c.l.b16 %v1173
    %v4954 = vunpack.c.h.b16 %v1173
    %v4955 = vunpack.c.l.b16 %v1174
    %v4956 = vunpack.c.h.b16 %v1174
    %v4957 = vunpack.c.l.b16 %v1175
    %v4958 = vunpack.c.h.b16 %v1175
    %v4959 = vunpack.c.l.b16 %v1176
    %v4960 = vunpack.c.h.b16 %v1176
    %v4961 = vunpack.c.l.b16 %v1177
    %v4962 = vunpack.c.h.b16 %v1177
    %v4963 = vunpack.c.l.b16 %v1178
    %v4964 = vunpack.c.h.b16 %v1178
    %v4965 = vunpack.c.l.b16 %v1179
    %v4966 = vunpack.c.h.b16 %v1179
    %v4967 = vunpack.c.l.b16 %v1180
    %v4968 = vunpack.c.h.b16 %v1180
    %v4969 = vunpack.c.l.b16 %v1181
    %v4970 = vunpack.c.h.b16 %v1181
    %v4971 = vunpack.c.l.b16 %v1182
    %v4972 = vunpack.c.h.b16 %v1182
    %v4973 = vunpack.c.l.b16 %v1183
    %v4974 = vunpack.c.h.b16 %v1183
    %v4975 = vunpack.c.l.b16 %v1184
    %v4976 = vunpack.c.h.b16 %v1184
    %v4977 = vunpack.c.l.b16 %v1185
    %v4978 = vunpack.c.h.b16 %v1185
    %v4979 = vunpack.c.l.b16 %v1186
    %v4980 = vunpack.c.h.b16 %v1186
    %v4981 = vunpack.c.l.b16 %v1187
    %v4982 = vunpack.c.h.b16 %v1187
    %v4983 = vunpack.c.l.b16 %v1188
    %v4984 = vunpack.c.h.b16 %v1188
    %v4985 = vunpack.c.l.b16 %v1189
    %v4986 = vunpack.c.h.b16 %v1189
    %v4987 = vunpack.c.l.b16 %v1190
    %v4988 = vunpack.c.h.b16 %v1190
    %v4989 = vunpack.c.l.b16 %v1191
    %v4990 = vunpack.c.h.b16 %v1191
    %v4991 = vunpack.c.l.b16 %v1192
    %v4992 = vunpack.c.h.b16 %v1192
    %v4993 = vunpack.c.l.b16 %v1193
    %v4994 = vunpack.c.h.b16 %v1193
    %v4995 = vunpack.c.l.b16 %v1194
    %v4996 = vunpack.c.h.b16 %v1194
    %v4997 = vpack.c.b16 %v2665, %v2661
    %v4998 = vpack.c.b16 %v2666, %v2662
    %v4999 = vpack.c.b16 %v2667, %v2663
    %v5000 = vpack.c.b16 %v2668, %v2664
    %v5001 = vpack.c.b16 %v2673, %v2669
    %v5002 = vpack.c.b16 %v2674, %v2670
    %v5003 = vpack.c.b16 %v2675, %v2671
    %v5004 = vpack.c.b16 %v2676, %v2672
    %v5005 = vpack.c.b16 %v2681, %v2677
    %v5006 = vpack.c.b16 %v2682, %v2678
    %v5007 = vpack.c.b16 %v2683, %v2679
    %v5008 = vpack.c.b16 %v2684, %v2680
    %v5009 = vpack.c.b16 %v2689, %v2685
    %v5010 = vpack.c.b16 %v2690, %v2686
    %v5011 = vpack.c.b16 %v2691, %v2687
    %v5012 = vpack.c.b16 %v2692, %v2688
    %v5013 = vpack.c.b16 %v2697, %v2693
    %v5014 = vpack.c.b16 %v2698, %v2694
    %v5015 = vpack.c.b16 %v2699, %v2695
    %v5016 = vpack.c.b16 %v2700, %v2696
    %v5017 = vpack.c.b16 %v2705, %v2701
    %v5018 = vpack.c.b16 %v2706, %v2702
    %v5019 = vpack.c.b16 %v2707, %v2703
    %v5020 = vpack.c.b16 %v2708, %v2704
    %v5021 = vpack.c.b16 %v2713, %v2709
    %v5022 = vpack.c.b16 %v2714, %v2710
    %v5023 = vpack.c.b16 %v2715, %v2711
    %v5024 = vpack.c.b16 %v2716, %v2712
    %v5025 = vpack.c.b16 %v2721, %v2717
    %v5026 = vpack.c.b16 %v2722, %v2718
    %v5027 = vpack.c.b16 %v2723, %v2719
    %v5028 = vpack.c.b16 %v2724, %v2720
    %v5029 = vpack.c.b16 %v2729, %v2725
    %v5030 = vpack.c.b16 %v2730, %v2726
    %v5031 = vpack.c.b16 %v2731, %v2727
    %v5032 = vpack.c.b16 %v2732, %v2728
    %v5033 = vpack.c.b16 %v2737, %v2733
    %v5034 = vpack.c.b16 %v2738, %v2734
    %v5035 = vpack.c.b16 %v2739, %v2735
    %v5036 = vpack.c.b16 %v2740, %v2736
    %v5037 = vpack.c.b16 %v2745, %v2741
    %v5038 = vpack.c.b16 %v2746, %v2742
    %v5039 = vpack.c.b16 %v2747, %v2743
    %v5040 = vpack.c.b16 %v2748, %v2744
    %v5041 = vpack.c.b16 %v2753, %v2749
    %v5042 = vpack.c.b16 %v2754, %v2750
    %v5043 = vpack.c.b16 %v2755, %v2751
    %v5044 = vpack.c.b16 %v2756, %v2752
    %v5045 = vpack.c.b16 %v2761, %v2757
    %v5046 = vpack.c.b16 %v2762, %v2758
    %v5047 = vpack.c.b16 %v2763, %v2759
    %v5048 = vpack.c.b16 %v2764, %v2760
    %v5049 = vpack.c.b16 %v2769, %v2765
    %v5050 = vpack.c.b16 %v2770, %v2766
    %v5051 = vpack.c.b16 %v2771, %v2767
    %v5052 = vpack.c.b16 %v2772, %v2768
    %v5053 = vpack.c.b16 %v2777, %v2773
    %v5054 = vpack.c.b16 %v2778, %v2774
    %v5055 = vpack.c.b16 %v2779, %v2775
    %v5056 = vpack.c.b16 %v2780, %v2776
    %v5057 = vpack.c.b16 %v2785, %v2781
    %v5058 = vpack.c.b16 %v2786, %v2782
    %v5059 = vpack.c.b16 %v2787, %v2783
    %v5060 = vpack.c.b16 %v2788, %v2784
    %v5061 = vpack.c.b16 %v2793, %v2789
    %v5062 = vpack.c.b16 %v2794, %v2790
    %v5063 = vpack.c.b16 %v2795, %v2791
    %v5064 = vpack.c.b16 %v2796, %v2792
    %v5065 = vpack.c.b16 %v2801, %v2797
    %v5066 = vpack.c.b16 %v2802, %v2798
    %v5067 = vpack.c.b16 %v2803, %v2799
    %v5068 = vpack.c.b16 %v2804, %v2800
    %v5069 = vpack.c.b16 %v2809, %v2805
    %v5070 = vpack.c.b16 %v2810, %v2806
    %v5071 = vpack.c.b16 %v2811, %v2807
    %v5072 = vpack.c.b16 %v2812, %v2808
    %v5073 = vpack.c.b16 %v2817, %v2813
    %v5074 = vpack.c.b16 %v2818, %v2814
    %v5075 = vpack.c.b16 %v2819, %v2815
    %v5076 = vpack.c.b16 %v2820, %v2816
    %v5077 = vpack.c.b16 %v2825, %v2821
    %v5078 = vpack.c.b16 %v2826, %v2822
    %v5079 = vpack.c.b16 %v2827, %v2823
    %v5080 = vpack.c.b16 %v2828, %v2824
    %v5081 = vpack.c.b16 %v2833, %v2829
    %v5082 = vpack.c.b16 %v2834, %v2830
    %v5083 = vpack.c.b16 %v2835, %v2831
    %v5084 = vpack.c.b16 %v2836, %v2832
    %v5085 = vpack.c.b16 %v2841, %v2837
    %v5086 = vpack.c.b16 %v2842, %v2838
    %v5087 = vpack.c.b16 %v2843, %v2839
    %v5088 = vpack.c.b16 %v2844, %v2840
    %v5089 = vpack.c.b16 %v2849, %v2845
    %v5090 = vpack.c.b16 %v2850, %v2846
    %v5091 = vpack.c.b16 %v2851, %v2847
    %v5092 = vpack.c.b16 %v2852, %v2848
    %v5093 = vpack.c.b16 %v2857, %v2853
    %v5094 = vpack.c.b16 %v2858, %v2854
    %v5095 = vpack.c.b16 %v2859, %v2855
    %v5096 = vpack.c.b16 %v2860, %v2856
    %v5097 = vpack.c.b16 %v2865, %v2861
    %v5098 = vpack.c.b16 %v2866, %v2862
    %v5099 = vpack.c.b16 %v2867, %v2863
    %v5100 = vpack.c.b16 %v2868, %v2864
    %v5101 = vpack.c.b16 %v2873, %v2869
    %v5102 = vpack.c.b16 %v2874, %v2870
    %v5103 = vpack.c.b16 %v2875, %v2871
    %v5104 = vpack.c.b16 %v2876, %v2872
    %v5105 = vpack.c.b16 %v2881, %v2877
    %v5106 = vpack.c.b16 %v2882, %v2878
    %v5107 = vpack.c.b16 %v2883, %v2879
    %v5108 = vpack.c.b16 %v2884, %v2880
    %v5109 = vpack.c.b16 %v2889, %v2885
    %v5110 = vpack.c.b16 %v2890, %v2886
    %v5111 = vpack.c.b16 %v2891, %v2887
    %v5112 = vpack.c.b16 %v2892, %v2888
    %v5113 = vpack.c.b16 %v2897, %v2893
    %v5114 = vpack.c.b16 %v2898, %v2894
    %v5115 = vpack.c.b16 %v2899, %v2895
    %v5116 = vpack.c.b16 %v2900, %v2896
    %v5117 = vpack.c.b16 %v2905, %v2901
    %v5118 = vpack.c.b16 %v2906, %v2902
    %v5119 = vpack.c.b16 %v2907, %v2903
    %v5120 = vpack.c.b16 %v2908, %v2904
    %v5121 = vpack.c.b16 %v2913, %v2909
    %v5122 = vpack.c.b16 %v2914, %v2910
    %v5123 = vpack.c.b16 %v2915, %v2911
    %v5124 = vpack.c.b16 %v2916, %v2912
    %v5125 = vpack.c.b16 %v2921, %v2917
    %v5126 = vpack.c.b16 %v2922, %v2918
    %v5127 = vpack.c.b16 %v2923, %v2919
    %v5128 = vpack.c.b16 %v2924, %v2920
    %v5129 = vpack.c.b16 %v2929, %v2925
    %v5130 = vpack.c.b16 %v2930, %v2926
    %v5131 = vpack.c.b16 %v2931, %v2927
    %v5132 = vpack.c.b16 %v2932, %v2928
    %v5133 = vpack.c.b16 %v2937, %v2933
    %v5134 = vpack.c.b16 %v2938, %v2934
    %v5135 = vpack.c.b16 %v2939, %v2935
    %v5136 = vpack.c.b16 %v2940, %v2936
    %v5137 = vpack.c.b16 %v2945, %v2941
    %v5138 = vpack.c.b16 %v2946, %v2942
    %v5139 = vpack.c.b16 %v2947, %v2943
    %v5140 = vpack.c.b16 %v2948, %v2944
    %v5141 = vpack.c.b16 %v2953, %v2949
    %v5142 = vpack.c.b16 %v2954, %v2950
    %v5143 = vpack.c.b16 %v2955, %v2951
    %v5144 = vpack.c.b16 %v2956, %v2952
    %v5145 = vpack.c.b16 %v2961, %v2957
    %v5146 = vpack.c.b16 %v2962, %v2958
    %v5147 = vpack.c.b16 %v2963, %v2959
    %v5148 = vpack.c.b16 %v2964, %v2960
    %v5149 = vpack.c.b16 %v2969, %v2965
    %v5150 = vpack.c.b16 %v2970, %v2966
    %v5151 = vpack.c.b16 %v2971, %v2967
    %v5152 = vpack.c.b16 %v2972, %v2968
    %v5153 = vpack.c.b16 %v2977, %v2973
    %v5154 = vpack.c.b16 %v2978, %v2974
    %v5155 = vpack.c.b16 %v2979, %v2975
    %v5156 = vpack.c.b16 %v2980, %v2976
    %v5157 = vpack.c.b16 %v2985, %v2981
    %v5158 = vpack.c.b16 %v2986, %v2982
    %v5159 = vpack.c.b16 %v2987, %v2983
    %v5160 = vpack.c.b16 %v2988, %v2984
    %v5161 = vpack.c.b16 %v2993, %v2989
    %v5162 = vpack.c.b16 %v2994, %v2990
    %v5163 = vpack.c.b16 %v2995, %v2991
    %v5164 = vpack.c.b16 %v2996, %v2992
    %v5165 = vpack.c.b16 %v3001, %v2997
    %v5166 = vpack.c.b16 %v3002, %v2998
    %v5167 = vpack.c.b16 %v3003, %v2999
    %v5168 = vpack.c.b16 %v3004, %v3000
    %v5169 = vpack.c.b16 %v3009, %v3005
    %v5170 = vpack.c.b16 %v3010, %v3006
    %v5171 = vpack.c.b16 %v3011, %v3007
    %v5172 = vpack.c.b16 %v3012, %v3008
    %v5173 = vpack.c.b16 %v3017, %v3013
    %v5174 = vpack.c.b16 %v3018, %v3014
    %v5175 = vpack.c.b16 %v3019, %v3015
    %v5176 = vpack.c.b16 %v3020, %v3016
    %v5177 = vpack.c.b16 %v3025, %v3021
    %v5178 = vpack.c.b16 %v3026, %v3022
    %v5179 = vpack.c.b16 %v3027, %v3023
    %v5180 = vpack.c.b16 %v3028, %v3024
    %v5181 = vpack.c.b16 %v3033, %v3029
    %v5182 = vpack.c.b16 %v3034, %v3030
    %v5183 = vpack.c.b16 %v3035, %v3031
    %v5184 = vpack.c.b16 %v3036, %v3032
    %v5185 = vpack.c.b16 %v3041, %v3037
    %v5186 = vpack.c.b16 %v3042, %v3038
    %v5187 = vpack.c.b16 %v3043, %v3039
    %v5188 = vpack.c.b16 %v3044, %v3040
    %v5189 = vpack.c.b16 %v3049, %v3045
    %v5190 = vpack.c.b16 %v3050, %v3046
    %v5191 = vpack.c.b16 %v3051, %v3047
    %v5192 = vpack.c.b16 %v3052, %v3048
    %v5193 = vpack.c.b16 %v3057, %v3053
    %v5194 = vpack.c.b16 %v3058, %v3054
    %v5195 = vpack.c.b16 %v3059, %v3055
    %v5196 = vpack.c.b16 %v3060, %v3056
    %v5197 = vpack.c.b16 %v3065, %v3061
    %v5198 = vpack.c.b16 %v3066, %v3062
    %v5199 = vpack.c.b16 %v3067, %v3063
    %v5200 = vpack.c.b16 %v3068, %v3064
    %v5201 = vpack.c.b16 %v3073, %v3069
    %v5202 = vpack.c.b16 %v3074, %v3070
    %v5203 = vpack.c.b16 %v3075, %v3071
    %v5204 = vpack.c.b16 %v3076, %v3072
    %v5205 = vpack.c.b16 %v3081, %v3077
    %v5206 = vpack.c.b16 %v3082, %v3078
    %v5207 = vpack.c.b16 %v3083, %v3079
    %v5208 = vpack.c.b16 %v3084, %v3080
    %v5209 = vpack.c.b16 %v3089, %v3085
    %v5210 = vpack.c.b16 %v3090, %v3086
    %v5211 = vpack.c.b16 %v3091, %v3087
    %v5212 = vpack.c.b16 %v3092, %v3088
    %v5213 = vpack.c.b16 %v3097, %v3093
    %v5214 = vpack.c.b16 %v3098, %v3094
    %v5215 = vpack.c.b16 %v3099, %v3095
    %v5216 = vpack.c.b16 %v3100, %v3096
    %v5217 = vpack.c.b16 %v3105, %v3101
    %v5218 = vpack.c.b16 %v3106, %v3102
    %v5219 = vpack.c.b16 %v3107, %v3103
    %v5220 = vpack.c.b16 %v3108, %v3104
    %v5221 = vpack.c.b16 %v3113, %v3109
    %v5222 = vpack.c.b16 %v3114, %v3110
    %v5223 = vpack.c.b16 %v3115, %v3111
    %v5224 = vpack.c.b16 %v3116, %v3112
    %v5225 = vpack.c.b16 %v3121, %v3117
    %v5226 = vpack.c.b16 %v3122, %v3118
    %v5227 = vpack.c.b16 %v3123, %v3119
    %v5228 = vpack.c.b16 %v3124, %v3120
    %v5229 = vpack.c.b16 %v3129, %v3125
    %v5230 = vpack.c.b16 %v3130, %v3126
    %v5231 = vpack.c.b16 %v3131, %v3127
    %v5232 = vpack.c.b16 %v3132, %v3128
    %v5233 = vpack.c.b16 %v3137, %v3133
    %v5234 = vpack.c.b16 %v3138, %v3134
    %v5235 = vpack.c.b16 %v3139, %v3135
    %v5236 = vpack.c.b16 %v3140, %v3136
    %v5237 = vpack.c.b16 %v3145, %v3141
    %v5238 = vpack.c.b16 %v3146, %v3142
    %v5239 = vpack.c.b16 %v3147, %v3143
    %v5240 = vpack.c.b16 %v3148, %v3144
    %v5241 = vpack.c.b16 %v3153, %v3149
    %v5242 = vpack.c.b16 %v3154, %v3150
    %v5243 = vpack.c.b16 %v3155, %v3151
    %v5244 = vpack.c.b16 %v3156, %v3152
    %v5245 = vpack.c.b16 %v3161, %v3157
    %v5246 = vpack.c.b16 %v3162, %v3158
    %v5247 = vpack.c.b16 %v3163, %v3159
    %v5248 = vpack.c.b16 %v3164, %v3160
    %v5249 = vpack.c.b16 %v3169, %v3165
    %v5250 = vpack.c.b16 %v3170, %v3166
    %v5251 = vpack.c.b16 %v3171, %v3167
    %v5252 = vpack.c.b16 %v3172, %v3168
    %v5253 = vpack.c.b16 %v3177, %v3173
    %v5254 = vpack.c.b16 %v3178, %v3174
    %v5255 = vpack.c.b16 %v3179, %v3175
    %v5256 = vpack.c.b16 %v3180, %v3176
    %v5257 = vpack.c.b16 %v3185, %v3181
    %v5258 = vpack.c.b16 %v3186, %v3182
    %v5259 = vpack.c.b16 %v3187, %v3183
    %v5260 = vpack.c.b16 %v3188, %v3184
    %v5261 = vpack.c.b16 %v3193, %v3189
    %v5262 = vpack.c.b16 %v3194, %v3190
    %v5263 = vpack.c.b16 %v3195, %v3191
    %v5264 = vpack.c.b16 %v3196, %v3192
    %v5265 = vpack.c.b16 %v3201, %v3197
    %v5266 = vpack.c.b16 %v3202, %v3198
    %v5267 = vpack.c.b16 %v3203, %v3199
    %v5268 = vpack.c.b16 %v3204, %v3200
    %v5269 = vpack.c.b16 %v3209, %v3205
    %v5270 = vpack.c.b16 %v3210, %v3206
    %v5271 = vpack.c.b16 %v3211, %v3207
    %v5272 = vpack.c.b16 %v3212, %v3208
    %v5273 = vpack.c.b16 %v3217, %v3213
    %v5274 = vpack.c.b16 %v3218, %v3214
    %v5275 = vpack.c.b16 %v3219, %v3215
    %v5276 = vpack.c.b16 %v3220, %v3216
    %v5277 = vpack.c.b16 %v3225, %v3221
    %v5278 = vpack.c.b16 %v3226, %v3222
    %v5279 = vpack.c.b16 %v3227, %v3223
    %v5280 = vpack.c.b16 %v3228, %v3224
    %v5281 = vpack.c.b16 %v3233, %v3229
    %v5282 = vpack.c.b16 %v3234, %v3230
    %v5283 = vpack.c.b16 %v3235, %v3231
    %v5284 = vpack.c.b16 %v3236, %v3232
    %v5285 = vpack.c.b16 %v3241, %v3237
    %v5286 = vpack.c.b16 %v3242, %v3238
    %v5287 = vpack.c.b16 %v3243, %v3239
    %v5288 = vpack.c.b16 %v3244, %v3240
    %v5289 = vpack.c.b16 %v3249, %v3245
    %v5290 = vpack.c.b16 %v3250, %v3246
    %v5291 = vpack.c.b16 %v3251, %v3247
    %v5292 = vpack.c.b16 %v3252, %v3248
    %v5293 = vpack.c.b16 %v3257, %v3253
    %v5294 = vpack.c.b16 %v3258, %v3254
    %v5295 = vpack.c.b16 %v3259, %v3255
    %v5296 = vpack.c.b16 %v3260, %v3256
    %v5297 = vpack.c.b16 %v3265, %v3261
    %v5298 = vpack.c.b16 %v3266, %v3262
    %v5299 = vpack.c.b16 %v3267, %v3263
    %v5300 = vpack.c.b16 %v3268, %v3264
    %v5301 = vpack.c.b16 %v3273, %v3269
    %v5302 = vpack.c.b16 %v3274, %v3270
    %v5303 = vpack.c.b16 %v3275, %v3271
    %v5304 = vpack.c.b16 %v3276, %v3272
    %v5305 = vpack.c.b16 %v3281, %v3277
    %v5306 = vpack.c.b16 %v3282, %v3278
    %v5307 = vpack.c.b16 %v3283, %v3279
    %v5308 = vpack.c.b16 %v3284, %v3280
    %v5309 = vpack.c.b16 %v3289, %v3285
    %v5310 = vpack.c.b16 %v3290, %v3286
    %v5311 = vpack.c.b16 %v3291, %v3287
    %v5312 = vpack.c.b16 %v3292, %v3288
    %v5313 = vpack.c.b16 %v3297, %v3293
    %v5314 = vpack.c.b16 %v3298, %v3294
    %v5315 = vpack.c.b16 %v3299, %v3295
    %v5316 = vpack.c.b16 %v3300, %v3296
    %v5317 = vpack.c.b16 %v3305, %v3301
    %v5318 = vpack.c.b16 %v3306, %v3302
    %v5319 = vpack.c.b16 %v3307, %v3303
    %v5320 = vpack.c.b16 %v3308, %v3304
    %v5321 = vpack.c.b16 %v3313, %v3309
    %v5322 = vpack.c.b16 %v3314, %v3310
    %v5323 = vpack.c.b16 %v3315, %v3311
    %v5324 = vpack.c.b16 %v3316, %v3312
    %v5325 = vpack.c.b16 %v3321, %v3317
    %v5326 = vpack.c.b16 %v3322, %v3318
    %v5327 = vpack.c.b16 %v3323, %v3319
    %v5328 = vpack.c.b16 %v3324, %v3320
    %v5329 = vpack.c.b16 %v3329, %v3325
    %v5330 = vpack.c.b16 %v3330, %v3326
    %v5331 = vpack.c.b16 %v3331, %v3327
    %v5332 = vpack.c.b16 %v3332, %v3328
    %v5333 = vpack.c.b16 %v3337, %v3333
    %v5334 = vpack.c.b16 %v3338, %v3334
    %v5335 = vpack.c.b16 %v3339, %v3335
    %v5336 = vpack.c.b16 %v3340, %v3336
    %v5337 = vpack.c.b16 %v3345, %v3341
    %v5338 = vpack.c.b16 %v3346, %v3342
    %v5339 = vpack.c.b16 %v3347, %v3343
    %v5340 = vpack.c.b16 %v3348, %v3344
    %v5341 = vpack.c.b16 %v3353, %v3349
    %v5342 = vpack.c.b16 %v3354, %v3350
    %v5343 = vpack.c.b16 %v3355, %v3351
    %v5344 = vpack.c.b16 %v3356, %v3352
    %v5345 = vpack.c.b16 %v3361, %v3357
    %v5346 = vpack.c.b16 %v3362, %v3358
    %v5347 = vpack.c.b16 %v3363, %v3359
    %v5348 = vpack.c.b16 %v3364, %v3360
    %v5349 = vpack.c.b16 %v3369, %v3365
    %v5350 = vpack.c.b16 %v3370, %v3366
    %v5351 = vpack.c.b16 %v3371, %v3367
    %v5352 = vpack.c.b16 %v3372, %v3368
    %v5353 = vpack.c.b16 %v3377, %v3373
    %v5354 = vpack.c.b16 %v3378, %v3374
    %v5355 = vpack.c.b16 %v3379, %v3375
    %v5356 = vpack.c.b16 %v3380, %v3376
    %v5357 = vpack.c.b16 %v3385, %v3381
    %v5358 = vpack.c.b16 %v3386, %v3382
    %v5359 = vpack.c.b16 %v3387, %v3383
    %v5360 = vpack.c.b16 %v3388, %v3384
    %v5361 = vpack.c.b16 %v3393, %v3389
    %v5362 = vpack.c.b16 %v3394, %v3390
    %v5363 = vpack.c.b16 %v3395, %v3391
    %v5364 = vpack.c.b16 %v3396, %v3392
    %v5365 = vpack.c.b16 %v3401, %v3397
    %v5366 = vpack.c.b16 %v3402, %v3398
    %v5367 = vpack.c.b16 %v3403, %v3399
    %v5368 = vpack.c.b16 %v3404, %v3400
    %v5369 = vpack.c.b16 %v3409, %v3405
    %v5370 = vpack.c.b16 %v3410, %v3406
    %v5371 = vpack.c.b16 %v3411, %v3407
    %v5372 = vpack.c.b16 %v3412, %v3408
    %v5373 = vpack.c.b16 %v3417, %v3413
    %v5374 = vpack.c.b16 %v3418, %v3414
    %v5375 = vpack.c.b16 %v3419, %v3415
    %v5376 = vpack.c.b16 %v3420, %v3416
    %v5377 = vpack.c.b16 %v3425, %v3421
    %v5378 = vpack.c.b16 %v3426, %v3422
    %v5379 = vpack.c.b16 %v3427, %v3423
    %v5380 = vpack.c.b16 %v3428, %v3424
    %v5381 = vpack.c.b16 %v3433, %v3429
    %v5382 = vpack.c.b16 %v3434, %v3430
    %v5383 = vpack.c.b16 %v3435, %v3431
    %v5384 = vpack.c.b16 %v3436, %v3432
    %v5385 = vpack.c.b16 %v3441, %v3437
    %v5386 = vpack.c.b16 %v3442, %v3438
    %v5387 = vpack.c.b16 %v3443, %v3439
    %v5388 = vpack.c.b16 %v3444, %v3440
    %v5389 = vpack.c.b16 %v3449, %v3445
    %v5390 = vpack.c.b16 %v3450, %v3446
    %v5391 = vpack.c.b16 %v3451, %v3447
    %v5392 = vpack.c.b16 %v3452, %v3448
    %v5393 = vpack.c.b16 %v3457, %v3453
    %v5394 = vpack.c.b16 %v3458, %v3454
    %v5395 = vpack.c.b16 %v3459, %v3455
    %v5396 = vpack.c.b16 %v3460, %v3456
    %v5397 = vpack.c.b16 %v3465, %v3461
    %v5398 = vpack.c.b16 %v3466, %v3462
    %v5399 = vpack.c.b16 %v3467, %v3463
    %v5400 = vpack.c.b16 %v3468, %v3464
    %v5401 = vpack.c.b16 %v3473, %v3469
    %v5402 = vpack.c.b16 %v3474, %v3470
    %v5403 = vpack.c.b16 %v3475, %v3471
    %v5404 = vpack.c.b16 %v3476, %v3472
    %v5405 = vpack.c.b16 %v3481, %v3477
    %v5406 = vpack.c.b16 %v3482, %v3478
    %v5407 = vpack.c.b16 %v3483, %v3479
    %v5408 = vpack.c.b16 %v3484, %v3480
    %v5409 = vpack.c.b16 %v3489, %v3485
    %v5410 = vpack.c.b16 %v3490, %v3486
    %v5411 = vpack.c.b16 %v3491, %v3487
    %v5412 = vpack.c.b16 %v3492, %v3488
    %v5413 = vpack.c.b16 %v3497, %v3493
    %v5414 = vpack.c.b16 %v3498, %v3494
    %v5415 = vpack.c.b16 %v3499, %v3495
    %v5416 = vpack.c.b16 %v3500, %v3496
    %v5417 = vpack.c.b16 %v3505, %v3501
    %v5418 = vpack.c.b16 %v3506, %v3502
    %v5419 = vpack.c.b16 %v3507, %v3503
    %v5420 = vpack.c.b16 %v3508, %v3504
    %v5421 = vpack.c.b16 %v3513, %v3509
    %v5422 = vpack.c.b16 %v3514, %v3510
    %v5423 = vpack.c.b16 %v3515, %v3511
    %v5424 = vpack.c.b16 %v3516, %v3512
    %v5425 = vpack.c.b16 %v3521, %v3517
    %v5426 = vpack.c.b16 %v3522, %v3518
    %v5427 = vpack.c.b16 %v3523, %v3519
    %v5428 = vpack.c.b16 %v3524, %v3520
    %v5429 = vpack.c.b16 %v3529, %v3525
    %v5430 = vpack.c.b16 %v3530, %v3526
    %v5431 = vpack.c.b16 %v3531, %v3527
    %v5432 = vpack.c.b16 %v3532, %v3528
    %v5433 = vpack.c.b16 %v3537, %v3533
    %v5434 = vpack.c.b16 %v3538, %v3534
    %v5435 = vpack.c.b16 %v3539, %v3535
    %v5436 = vpack.c.b16 %v3540, %v3536
    %v5437 = vpack.c.b16 %v3545, %v3541
    %v5438 = vpack.c.b16 %v3546, %v3542
    %v5439 = vpack.c.b16 %v3547, %v3543
    %v5440 = vpack.c.b16 %v3548, %v3544
    %v5441 = vpack.c.b16 %v3553, %v3549
    %v5442 = vpack.c.b16 %v3554, %v3550
    %v5443 = vpack.c.b16 %v3555, %v3551
    %v5444 = vpack.c.b16 %v3556, %v3552
    %v5445 = vpack.c.b16 %v3561, %v3557
    %v5446 = vpack.c.b16 %v3562, %v3558
    %v5447 = vpack.c.b16 %v3563, %v3559
    %v5448 = vpack.c.b16 %v3564, %v3560
    %v5449 = vpack.c.b16 %v3569, %v3565
    %v5450 = vpack.c.b16 %v3570, %v3566
    %v5451 = vpack.c.b16 %v3571, %v3567
    %v5452 = vpack.c.b16 %v3572, %v3568
    %v5453 = vpack.c.b16 %v3577, %v3573
    %v5454 = vpack.c.b16 %v3578, %v3574
    %v5455 = vpack.c.b16 %v3579, %v3575
    %v5456 = vpack.c.b16 %v3580, %v3576
    %v5457 = vpack.c.b16 %v3585, %v3581
    %v5458 = vpack.c.b16 %v3586, %v3582
    %v5459 = vpack.c.b16 %v3587, %v3583
    %v5460 = vpack.c.b16 %v3588, %v3584
    %v5461 = vpack.c.b16 %v3593, %v3589
    %v5462 = vpack.c.b16 %v3594, %v3590
    %v5463 = vpack.c.b16 %v3595, %v3591
    %v5464 = vpack.c.b16 %v3596, %v3592
    %v5465 = vpack.c.b16 %v3601, %v3597
    %v5466 = vpack.c.b16 %v3602, %v3598
    %v5467 = vpack.c.b16 %v3603, %v3599
    %v5468 = vpack.c.b16 %v3604, %v3600
    %v5469 = vpack.c.b16 %v3609, %v3605
    %v5470 = vpack.c.b16 %v3610, %v3606
    %v5471 = vpack.c.b16 %v3611, %v3607
    %v5472 = vpack.c.b16 %v3612, %v3608
    %v5473 = vpack.c.b16 %v3617, %v3613
    %v5474 = vpack.c.b16 %v3618, %v3614
    %v5475 = vpack.c.b16 %v3619, %v3615
    %v5476 = vpack.c.b16 %v3620, %v3616
    %v5477 = vpack.c.b16 %v3625, %v3621
    %v5478 = vpack.c.b16 %v3626, %v3622
    %v5479 = vpack.c.b16 %v3627, %v3623
    %v5480 = vpack.c.b16 %v3628, %v3624
    %v5481 = vpack.c.b16 %v3633, %v3629
    %v5482 = vpack.c.b16 %v3634, %v3630
    %v5483 = vpack.c.b16 %v3635, %v3631
    %v5484 = vpack.c.b16 %v3636, %v3632
    %v5485 = vpack.c.b16 %v3641, %v3637
    %v5486 = vpack.c.b16 %v3642, %v3638
    %v5487 = vpack.c.b16 %v3643, %v3639
    %v5488 = vpack.c.b16 %v3644, %v3640
    %v5489 = vpack.c.b16 %v3649, %v3645
    %v5490 = vpack.c.b16 %v3650, %v3646
    %v5491 = vpack.c.b16 %v3651, %v3647
    %v5492 = vpack.c.b16 %v3652, %v3648
    %v5493 = vpack.c.b16 %v3657, %v3653
    %v5494 = vpack.c.b16 %v3658, %v3654
    %v5495 = vpack.c.b16 %v3659, %v3655
    %v5496 = vpack.c.b16 %v3660, %v3656
    %v5497 = vpack.c.b16 %v3665, %v3661
    %v5498 = vpack.c.b16 %v3666, %v3662
    %v5499 = vpack.c.b16 %v3667, %v3663
    %v5500 = vpack.c.b16 %v3668, %v3664
    %v5501 = vpack.c.b16 %v3673, %v3669
    %v5502 = vpack.c.b16 %v3674, %v3670
    %v5503 = vpack.c.b16 %v3675, %v3671
    %v5504 = vpack.c.b16 %v3676, %v3672
    %v5505 = vpack.c.b16 %v3681, %v3677
    %v5506 = vpack.c.b16 %v3682, %v3678
    %v5507 = vpack.c.b16 %v3683, %v3679
    %v5508 = vpack.c.b16 %v3684, %v3680
    %v5509 = vpack.c.b16 %v3689, %v3685
    %v5510 = vpack.c.b16 %v3690, %v3686
    %v5511 = vpack.c.b16 %v3691, %v3687
    %v5512 = vpack.c.b16 %v3692, %v3688
    %v5513 = vpack.c.b16 %v3697, %v3693
    %v5514 = vpack.c.b16 %v3698, %v3694
    %v5515 = vpack.c.b16 %v3699, %v3695
    %v5516 = vpack.c.b16 %v3700, %v3696
    %v5517 = vpack.c.b16 %v3705, %v3701
    %v5518 = vpack.c.b16 %v3706, %v3702
    %v5519 = vpack.c.b16 %v3707, %v3703
    %v5520 = vpack.c.b16 %v3708, %v3704
    %v5521 = vpack.c.b16 %v3713, %v3709
    %v5522 = vpack.c.b16 %v3714, %v3710
    %v5523 = vpack.c.b16 %v3715, %v3711
    %v5524 = vpack.c.b16 %v3716, %v3712
    %v5525 = vpack.c.b16 %v3721, %v3717
    %v5526 = vpack.c.b16 %v3722, %v3718
    %v5527 = vpack.c.b16 %v3723, %v3719
    %v5528 = vpack.c.b16 %v3724, %v3720
    %v5529 = vpack.c.b16 %v3729, %v3725
    %v5530 = vpack.c.b16 %v3730, %v3726
    %v5531 = vpack.c.b16 %v3731, %v3727
    %v5532 = vpack.c.b16 %v3732, %v3728
    %v5533 = vpack.c.b16 %v3737, %v3733
    %v5534 = vpack.c.b16 %v3738, %v3734
    %v5535 = vpack.c.b16 %v3739, %v3735
    %v5536 = vpack.c.b16 %v3740, %v3736
    %v5537 = vpack.c.b16 %v3745, %v3741
    %v5538 = vpack.c.b16 %v3746, %v3742
    %v5539 = vpack.c.b16 %v3747, %v3743
    %v5540 = vpack.c.b16 %v3748, %v3744
    %v5541 = vpack.c.b16 %v3753, %v3749
    %v5542 = vpack.c.b16 %v3754, %v3750
    %v5543 = vpack.c.b16 %v3755, %v3751
    %v5544 = vpack.c.b16 %v3756, %v3752
    %v5545 = vpack.c.b16 %v3761, %v3757
    %v5546 = vpack.c.b16 %v3762, %v3758
    %v5547 = vpack.c.b16 %v3763, %v3759
    %v5548 = vpack.c.b16 %v3764, %v3760
    %v5549 = vpack.c.b16 %v3769, %v3765
    %v5550 = vpack.c.b16 %v3770, %v3766
    %v5551 = vpack.c.b16 %v3771, %v3767
    %v5552 = vpack.c.b16 %v3772, %v3768
    %v5553 = vpack.c.b16 %v3777, %v3773
    %v5554 = vpack.c.b16 %v3778, %v3774
    %v5555 = vpack.c.b16 %v3779, %v3775
    %v5556 = vpack.c.b16 %v3780, %v3776
    %v5557 = vpack.c.b16 %v3785, %v3781
    %v5558 = vpack.c.b16 %v3786, %v3782
    %v5559 = vpack.c.b16 %v3787, %v3783
    %v5560 = vpack.c.b16 %v3788, %v3784
    %v5561 = vpack.c.b16 %v3793, %v3789
    %v5562 = vpack.c.b16 %v3794, %v3790
    %v5563 = vpack.c.b16 %v3795, %v3791
    %v5564 = vpack.c.b16 %v3796, %v3792
    %v5565 = vpack.c.b16 %v3801, %v3797
    %v5566 = vpack.c.b16 %v3802, %v3798
    %v5567 = vpack.c.b16 %v3803, %v3799
    %v5568 = vpack.c.b16 %v3804, %v3800
    %v5569 = vpack.c.b16 %v3809, %v3805
    %v5570 = vpack.c.b16 %v3810, %v3806
    %v5571 = vpack.c.b16 %v3811, %v3807
    %v5572 = vpack.c.b16 %v3812, %v3808
    %v5573 = vpack.c.b16 %v3817, %v3813
    %v5574 = vpack.c.b16 %v3818, %v3814
    %v5575 = vpack.c.b16 %v3819, %v3815
    %v5576 = vpack.c.b16 %v3820, %v3816
    %v5577 = vpack.c.b16 %v3825, %v3821
    %v5578 = vpack.c.b16 %v3826, %v3822
    %v5579 = vpack.c.b16 %v3827, %v3823
    %v5580 = vpack.c.b16 %v3828, %v3824
    %v5581 = vpack.c.b16 %v3833, %v3829
    %v5582 = vpack.c.b16 %v3834, %v3830
    %v5583 = vpack.c.b16 %v3835, %v3831
    %v5584 = vpack.c.b16 %v3836, %v3832
    %v5585 = vpack.c.b16 %v3841, %v3837
    %v5586 = vpack.c.b16 %v3842, %v3838
    %v5587 = vpack.c.b16 %v3843, %v3839
    %v5588 = vpack.c.b16 %v3844, %v3840
    %v5589 = vpack.c.b16 %v3849, %v3845
    %v5590 = vpack.c.b16 %v3850, %v3846
    %v5591 = vpack.c.b16 %v3851, %v3847
    %v5592 = vpack.c.b16 %v3852, %v3848
    %v5593 = vpack.c.b16 %v3857, %v3853
    %v5594 = vpack.c.b16 %v3858, %v3854
    %v5595 = vpack.c.b16 %v3859, %v3855
    %v5596 = vpack.c.b16 %v3860, %v3856
    %v5597 = vpack.c.b16 %v3865, %v3861
    %v5598 = vpack.c.b16 %v3866, %v3862
    %v5599 = vpack.c.b16 %v3867, %v3863
    %v5600 = vpack.c.b16 %v3868, %v3864
    %v5601 = vpack.c.b16 %v3873, %v3869
    %v5602 = vpack.c.b16 %v3874, %v3870
    %v5603 = vpack.c.b16 %v3875, %v3871
    %v5604 = vpack.c.b16 %v3876, %v3872
    %v5605 = vpack.c.b16 %v3881, %v3877
    %v5606 = vpack.c.b16 %v3882, %v3878
    %v5607 = vpack.c.b16 %v3883, %v3879
    %v5608 = vpack.c.b16 %v3884, %v3880
    %v5609 = vpack.c.b16 %v3889, %v3885
    %v5610 = vpack.c.b16 %v3890, %v3886
    %v5611 = vpack.c.b16 %v3891, %v3887
    %v5612 = vpack.c.b16 %v3892, %v3888
    %v5613 = vpack.c.b16 %v3897, %v3893
    %v5614 = vpack.c.b16 %v3898, %v3894
    %v5615 = vpack.c.b16 %v3899, %v3895
    %v5616 = vpack.c.b16 %v3900, %v3896
    %v5617 = vpack.c.b16 %v3905, %v3901
    %v5618 = vpack.c.b16 %v3906, %v3902
    %v5619 = vpack.c.b16 %v3907, %v3903
    %v5620 = vpack.c.b16 %v3908, %v3904
    %v5621 = vpack.c.b16 %v3913, %v3909
    %v5622 = vpack.c.b16 %v3914, %v3910
    %v5623 = vpack.c.b16 %v3915, %v3911
    %v5624 = vpack.c.b16 %v3916, %v3912
    %v5625 = vpack.c.b16 %v3921, %v3917
    %v5626 = vpack.c.b16 %v3922, %v3918
    %v5627 = vpack.c.b16 %v3923, %v3919
    %v5628 = vpack.c.b16 %v3924, %v3920
    %v5629 = vpack.c.b16 %v3929, %v3925
    %v5630 = vpack.c.b16 %v3930, %v3926
    %v5631 = vpack.c.b16 %v3931, %v3927
    %v5632 = vpack.c.b16 %v3932, %v3928
    %v5633 = vpack.c.b16 %v3937, %v3933
    %v5634 = vpack.c.b16 %v3938, %v3934
    %v5635 = vpack.c.b16 %v3939, %v3935
    %v5636 = vpack.c.b16 %v3940, %v3936
    %v5637 = vpack.c.b16 %v3945, %v3941
    %v5638 = vpack.c.b16 %v3946, %v3942
    %v5639 = vpack.c.b16 %v3947, %v3943
    %v5640 = vpack.c.b16 %v3948, %v3944
    %v5641 = vpack.c.b16 %v3953, %v3949
    %v5642 = vpack.c.b16 %v3954, %v3950
    %v5643 = vpack.c.b16 %v3955, %v3951
    %v5644 = vpack.c.b16 %v3956, %v3952
    %v5645 = vpack.c.b16 %v3961, %v3957
    %v5646 = vpack.c.b16 %v3962, %v3958
    %v5647 = vpack.c.b16 %v3963, %v3959
    %v5648 = vpack.c.b16 %v3964, %v3960
    %v5649 = vpack.c.b16 %v3969, %v3965
    %v5650 = vpack.c.b16 %v3970, %v3966
    %v5651 = vpack.c.b16 %v3971, %v3967
    %v5652 = vpack.c.b16 %v3972, %v3968
    %v5653 = vpack.c.b16 %v3977, %v3973
    %v5654 = vpack.c.b16 %v3978, %v3974
    %v5655 = vpack.c.b16 %v3979, %v3975
    %v5656 = vpack.c.b16 %v3980, %v3976
    %v5657 = vpack.c.b16 %v3985, %v3981
    %v5658 = vpack.c.b16 %v3986, %v3982
    %v5659 = vpack.c.b16 %v3987, %v3983
    %v5660 = vpack.c.b16 %v3988, %v3984
    %v5661 = vpack.c.b16 %v3993, %v3989
    %v5662 = vpack.c.b16 %v3994, %v3990
    %v5663 = vpack.c.b16 %v3995, %v3991
    %v5664 = vpack.c.b16 %v3996, %v3992
    %v5665 = vpack.c.b16 %v4001, %v3997
    %v5666 = vpack.c.b16 %v4002, %v3998
    %v5667 = vpack.c.b16 %v4003, %v3999
    %v5668 = vpack.c.b16 %v4004, %v4000
    %v5669 = vpack.c.b16 %v4009, %v4005
    %v5670 = vpack.c.b16 %v4010, %v4006
    %v5671 = vpack.c.b16 %v4011, %v4007
    %v5672 = vpack.c.b16 %v4012, %v4008
    %v5673 = vpack.c.b16 %v4017, %v4013
    %v5674 = vpack.c.b16 %v4018, %v4014
    %v5675 = vpack.c.b16 %v4019, %v4015
    %v5676 = vpack.c.b16 %v4020, %v4016
    %v5677 = vpack.c.b16 %v4025, %v4021
    %v5678 = vpack.c.b16 %v4026, %v4022
    %v5679 = vpack.c.b16 %v4027, %v4023
    %v5680 = vpack.c.b16 %v4028, %v4024
    %v5681 = vpack.c.b16 %v4033, %v4029
    %v5682 = vpack.c.b16 %v4034, %v4030
    %v5683 = vpack.c.b16 %v4035, %v4031
    %v5684 = vpack.c.b16 %v4036, %v4032
    %v5685 = vpack.c.b16 %v4041, %v4037
    %v5686 = vpack.c.b16 %v4042, %v4038
    %v5687 = vpack.c.b16 %v4043, %v4039
    %v5688 = vpack.c.b16 %v4044, %v4040
    %v5689 = vpack.c.b16 %v4049, %v4045
    %v5690 = vpack.c.b16 %v4050, %v4046
    %v5691 = vpack.c.b16 %v4051, %v4047
    %v5692 = vpack.c.b16 %v4052, %v4048
    %v5693 = vpack.c.b16 %v4057, %v4053
    %v5694 = vpack.c.b16 %v4058, %v4054
    %v5695 = vpack.c.b16 %v4059, %v4055
    %v5696 = vpack.c.b16 %v4060, %v4056
    %v5697 = vpack.c.b16 %v4065, %v4061
    %v5698 = vpack.c.b16 %v4066, %v4062
    %v5699 = vpack.c.b16 %v4067, %v4063
    %v5700 = vpack.c.b16 %v4068, %v4064
    %v5701 = vpack.c.b16 %v4073, %v4069
    %v5702 = vpack.c.b16 %v4074, %v4070
    %v5703 = vpack.c.b16 %v4075, %v4071
    %v5704 = vpack.c.b16 %v4076, %v4072
    %v5705 = vpack.c.b16 %v4081, %v4077
    %v5706 = vpack.c.b16 %v4082, %v4078
    %v5707 = vpack.c.b16 %v4083, %v4079
    %v5708 = vpack.c.b16 %v4084, %v4080
    %v5709 = vpack.c.b16 %v4089, %v4085
    %v5710 = vpack.c.b16 %v4090, %v4086
    %v5711 = vpack.c.b16 %v4091, %v4087
    %v5712 = vpack.c.b16 %v4092, %v4088
    %v5713 = vpack.c.b16 %v4097, %v4093
    %v5714 = vpack.c.b16 %v4098, %v4094
    %v5715 = vpack.c.b16 %v4099, %v4095
    %v5716 = vpack.c.b16 %v4100, %v4096
    %v5717 = vpack.c.b16 %v4105, %v4101
    %v5718 = vpack.c.b16 %v4106, %v4102
    %v5719 = vpack.c.b16 %v4107, %v4103
    %v5720 = vpack.c.b16 %v4108, %v4104
    %v5721 = vpack.c.b16 %v4113, %v4109
    %v5722 = vpack.c.b16 %v4114, %v4110
    %v5723 = vpack.c.b16 %v4115, %v4111
    %v5724 = vpack.c.b16 %v4116, %v4112
    %v5725 = vpack.c.b16 %v4121, %v4117
    %v5726 = vpack.c.b16 %v4122, %v4118
    %v5727 = vpack.c.b16 %v4123, %v4119
    %v5728 = vpack.c.b16 %v4124, %v4120
    %v5729 = vpack.c.b16 %v4129, %v4125
    %v5730 = vpack.c.b16 %v4130, %v4126
    %v5731 = vpack.c.b16 %v4131, %v4127
    %v5732 = vpack.c.b16 %v4132, %v4128
    %v5733 = vpack.c.b16 %v4137, %v4133
    %v5734 = vpack.c.b16 %v4138, %v4134
    %v5735 = vpack.c.b16 %v4139, %v4135
    %v5736 = vpack.c.b16 %v4140, %v4136
    %v5737 = vpack.c.b16 %v4145, %v4141
    %v5738 = vpack.c.b16 %v4146, %v4142
    %v5739 = vpack.c.b16 %v4147, %v4143
    %v5740 = vpack.c.b16 %v4148, %v4144
    %v5741 = vpack.c.b16 %v4153, %v4149
    %v5742 = vpack.c.b16 %v4154, %v4150
    %v5743 = vpack.c.b16 %v4155, %v4151
    %v5744 = vpack.c.b16 %v4156, %v4152
    %v5745 = vpack.c.b16 %v4161, %v4157
    %v5746 = vpack.c.b16 %v4162, %v4158
    %v5747 = vpack.c.b16 %v4163, %v4159
    %v5748 = vpack.c.b16 %v4164, %v4160
    %v5749 = vpack.c.b16 %v4169, %v4165
    %v5750 = vpack.c.b16 %v4170, %v4166
    %v5751 = vpack.c.b16 %v4171, %v4167
    %v5752 = vpack.c.b16 %v4172, %v4168
    %v5753 = vpack.c.b16 %v4177, %v4173
    %v5754 = vpack.c.b16 %v4178, %v4174
    %v5755 = vpack.c.b16 %v4179, %v4175
    %v5756 = vpack.c.b16 %v4180, %v4176
    %v5757 = vpack.c.b16 %v4185, %v4181
    %v5758 = vpack.c.b16 %v4186, %v4182
    %v5759 = vpack.c.b16 %v4187, %v4183
    %v5760 = vpack.c.b16 %v4188, %v4184
    %v5761 = vpack.c.b16 %v4193, %v4189
    %v5762 = vpack.c.b16 %v4194, %v4190
    %v5763 = vpack.c.b16 %v4195, %v4191
    %v5764 = vpack.c.b16 %v4196, %v4192
    %v5765 = vpack.c.b16 %v4201, %v4197
    %v5766 = vpack.c.b16 %v4202, %v4198
    %v5767 = vpack.c.b16 %v4203, %v4199
    %v5768 = vpack.c.b16 %v4204, %v4200
    %v5769 = vpack.c.b16 %v4209, %v4205
    %v5770 = vpack.c.b16 %v4210, %v4206
    %v5771 = vpack.c.b16 %v4211, %v4207
    %v5772 = vpack.c.b16 %v4212, %v4208
    %v5773 = vpack.c.b16 %v4217, %v4213
    %v5774 = vpack.c.b16 %v4218, %v4214
    %v5775 = vpack.c.b16 %v4219, %v4215
    %v5776 = vpack.c.b16 %v4220, %v4216
    %v5777 = vpack.c.b16 %v4225, %v4221
    %v5778 = vpack.c.b16 %v4226, %v4222
    %v5779 = vpack.c.b16 %v4227, %v4223
    %v5780 = vpack.c.b16 %v4228, %v4224
    %v5781 = vpack.c.b16 %v4233, %v4229
    %v5782 = vpack.c.b16 %v4234, %v4230
    %v5783 = vpack.c.b16 %v4235, %v4231
    %v5784 = vpack.c.b16 %v4236, %v4232
    %v5785 = vpack.c.b16 %v4241, %v4237
    %v5786 = vpack.c.b16 %v4242, %v4238
    %v5787 = vpack.c.b16 %v4243, %v4239
    %v5788 = vpack.c.b16 %v4244, %v4240
    %v5789 = vpack.c.b16 %v4249, %v4245
    %v5790 = vpack.c.b16 %v4250, %v4246
    %v5791 = vpack.c.b16 %v4251, %v4247
    %v5792 = vpack.c.b16 %v4252, %v4248
    %v5793 = vpack.c.b16 %v4257, %v4253
    %v5794 = vpack.c.b16 %v4258, %v4254
    %v5795 = vpack.c.b16 %v4259, %v4255
    %v5796 = vpack.c.b16 %v4260, %v4256
    %v5797 = vpack.c.b16 %v4265, %v4261
    %v5798 = vpack.c.b16 %v4266, %v4262
    %v5799 = vpack.c.b16 %v4267, %v4263
    %v5800 = vpack.c.b16 %v4268, %v4264
    %v5801 = vpack.c.b16 %v4273, %v4269
    %v5802 = vpack.c.b16 %v4274, %v4270
    %v5803 = vpack.c.b16 %v4275, %v4271
    %v5804 = vpack.c.b16 %v4276, %v4272
    %v5805 = vpack.c.b16 %v4281, %v4277
    %v5806 = vpack.c.b16 %v4282, %v4278
    %v5807 = vpack.c.b16 %v4283, %v4279
    %v5808 = vpack.c.b16 %v4284, %v4280
    %v5809 = vpack.c.b16 %v4289, %v4285
    %v5810 = vpack.c.b16 %v4290, %v4286
    %v5811 = vpack.c.b16 %v4291, %v4287
    %v5812 = vpack.c.b16 %v4292, %v4288
    %v5813 = vpack.c.b16 %v4297, %v4293
    %v5814 = vpack.c.b16 %v4298, %v4294
    %v5815 = vpack.c.b16 %v4299, %v4295
    %v5816 = vpack.c.b16 %v4300, %v4296
    %v5817 = vpack.c.b16 %v4305, %v4301
    %v5818 = vpack.c.b16 %v4306, %v4302
    %v5819 = vpack.c.b16 %v4307, %v4303
    %v5820 = vpack.c.b16 %v4308, %v4304
    %v5821 = vpack.c.b16 %v4313, %v4309
    %v5822 = vpack.c.b16 %v4314, %v4310
    %v5823 = vpack.c.b16 %v4315, %v4311
    %v5824 = vpack.c.b16 %v4316, %v4312
    %v5825 = vpack.c.b16 %v4321, %v4317
    %v5826 = vpack.c.b16 %v4322, %v4318
    %v5827 = vpack.c.b16 %v4323, %v4319
    %v5828 = vpack.c.b16 %v4324, %v4320
    %v5829 = vpack.c.b16 %v4329, %v4325
    %v5830 = vpack.c.b16 %v4330, %v4326
    %v5831 = vpack.c.b16 %v4331, %v4327
    %v5832 = vpack.c.b16 %v4332, %v4328
    %v5833 = vpack.c.b16 %v4337, %v4333
    %v5834 = vpack.c.b16 %v4338, %v4334
    %v5835 = vpack.c.b16 %v4339, %v4335
    %v5836 = vpack.c.b16 %v4340, %v4336
    %v5837 = vpack.c.b16 %v4345, %v4341
    %v5838 = vpack.c.b16 %v4346, %v4342
    %v5839 = vpack.c.b16 %v4347, %v4343
    %v5840 = vpack.c.b16 %v4348, %v4344
    %v5841 = vpack.c.b16 %v4353, %v4349
    %v5842 = vpack.c.b16 %v4354, %v4350
    %v5843 = vpack.c.b16 %v4355, %v4351
    %v5844 = vpack.c.b16 %v4356, %v4352
    %v5845 = vpack.c.b16 %v4361, %v4357
    %v5846 = vpack.c.b16 %v4362, %v4358
    %v5847 = vpack.c.b16 %v4363, %v4359
    %v5848 = vpack.c.b16 %v4364, %v4360
    %v5849 = vpack.c.b16 %v4369, %v4365
    %v5850 = vpack.c.b16 %v4370, %v4366
    %v5851 = vpack.c.b16 %v4371, %v4367
    %v5852 = vpack.c.b16 %v4372, %v4368
    %v5853 = vpack.c.b16 %v4377, %v4373
    %v5854 = vpack.c.b16 %v4378, %v4374
    %v5855 = vpack.c.b16 %v4379, %v4375
    %v5856 = vpack.c.b16 %v4380, %v4376
    %v5857 = vpack.c.b16 %v4385, %v4381
    %v5858 = vpack.c.b16 %v4386, %v4382
    %v5859 = vpack.c.b16 %v4387, %v4383
    %v5860 = vpack.c.b16 %v4388, %v4384
    %v5861 = vpack.c.b16 %v4393, %v4389
    %v5862 = vpack.c.b16 %v4394, %v4390
    %v5863 = vpack.c.b16 %v4395, %v4391
    %v5864 = vpack.c.b16 %v4396, %v4392
    %v5865 = vpack.c.b16 %v4401, %v4397
    %v5866 = vpack.c.b16 %v4402, %v4398
    %v5867 = vpack.c.b16 %v4403, %v4399
    %v5868 = vpack.c.b16 %v4404, %v4400
    %v5869 = vpack.c.b16 %v4409, %v4405
    %v5870 = vpack.c.b16 %v4410, %v4406
    %v5871 = vpack.c.b16 %v4411, %v4407
    %v5872 = vpack.c.b16 %v4412, %v4408
    %v5873 = vpack.c.b16 %v4417, %v4413
    %v5874 = vpack.c.b16 %v4418, %v4414
    %v5875 = vpack.c.b16 %v4419, %v4415
    %v5876 = vpack.c.b16 %v4420, %v4416
    %v5877 = vpack.c.b16 %v4425, %v4421
    %v5878 = vpack.c.b16 %v4426, %v4422
    %v5879 = vpack.c.b16 %v4427, %v4423
    %v5880 = vpack.c.b16 %v4428, %v4424
    %v5881 = vpack.c.b16 %v4433, %v4429
    %v5882 = vpack.c.b16 %v4434, %v4430
    %v5883 = vpack.c.b16 %v4435, %v4431
    %v5884 = vpack.c.b16 %v4436, %v4432
    %v5885 = vpack.c.b16 %v4441, %v4437
    %v5886 = vpack.c.b16 %v4442, %v4438
    %v5887 = vpack.c.b16 %v4443, %v4439
    %v5888 = vpack.c.b16 %v4444, %v4440
    %v5889 = vpack.c.b16 %v4449, %v4445
    %v5890 = vpack.c.b16 %v4450, %v4446
    %v5891 = vpack.c.b16 %v4451, %v4447
    %v5892 = vpack.c.b16 %v4452, %v4448
    %v5893 = vpack.c.b16 %v4457, %v4453
    %v5894 = vpack.c.b16 %v4458, %v4454
    %v5895 = vpack.c.b16 %v4459, %v4455
    %v5896 = vpack.c.b16 %v4460, %v4456
    %v5897 = vpack.c.b16 %v4465, %v4461
    %v5898 = vpack.c.b16 %v4466, %v4462
    %v5899 = vpack.c.b16 %v4467, %v4463
    %v5900 = vpack.c.b16 %v4468, %v4464
    %v5901 = vpack.c.b16 %v4473, %v4469
    %v5902 = vpack.c.b16 %v4474, %v4470
    %v5903 = vpack.c.b16 %v4475, %v4471
    %v5904 = vpack.c.b16 %v4476, %v4472
    %v5905 = vpack.c.b16 %v4481, %v4477
    %v5906 = vpack.c.b16 %v4482, %v4478
    %v5907 = vpack.c.b16 %v4483, %v4479
    %v5908 = vpack.c.b16 %v4484, %v4480
    %v5909 = vpack.c.b16 %v4489, %v4485
    %v5910 = vpack.c.b16 %v4490, %v4486
    %v5911 = vpack.c.b16 %v4491, %v4487
    %v5912 = vpack.c.b16 %v4492, %v4488
    %v5913 = vpack.c.b16 %v4497, %v4493
    %v5914 = vpack.c.b16 %v4498, %v4494
    %v5915 = vpack.c.b16 %v4499, %v4495
    %v5916 = vpack.c.b16 %v4500, %v4496
    %v5917 = vpack.c.b16 %v4505, %v4501
    %v5918 = vpack.c.b16 %v4506, %v4502
    %v5919 = vpack.c.b16 %v4507, %v4503
    %v5920 = vpack.c.b16 %v4508, %v4504
    %v5921 = vpack.c.b16 %v4513, %v4509
    %v5922 = vpack.c.b16 %v4514, %v4510
    %v5923 = vpack.c.b16 %v4515, %v4511
    %v5924 = vpack.c.b16 %v4516, %v4512
    %v5925 = vpack.c.b16 %v4521, %v4517
    %v5926 = vpack.c.b16 %v4522, %v4518
    %v5927 = vpack.c.b16 %v4523, %v4519
    %v5928 = vpack.c.b16 %v4524, %v4520
    %v5929 = vpack.c.b16 %v4529, %v4525
    %v5930 = vpack.c.b16 %v4530, %v4526
    %v5931 = vpack.c.b16 %v4531, %v4527
    %v5932 = vpack.c.b16 %v4532, %v4528
    %v5933 = vpack.c.b16 %v4537, %v4533
    %v5934 = vpack.c.b16 %v4538, %v4534
    %v5935 = vpack.c.b16 %v4539, %v4535
    %v5936 = vpack.c.b16 %v4540, %v4536
    %v5937 = vpack.c.b16 %v4545, %v4541
    %v5938 = vpack.c.b16 %v4546, %v4542
    %v5939 = vpack.c.b16 %v4547, %v4543
    %v5940 = vpack.c.b16 %v4548, %v4544
    %v5941 = vpack.c.b16 %v4553, %v4549
    %v5942 = vpack.c.b16 %v4554, %v4550
    %v5943 = vpack.c.b16 %v4555, %v4551
    %v5944 = vpack.c.b16 %v4556, %v4552
    %v5945 = vpack.c.b16 %v4561, %v4557
    %v5946 = vpack.c.b16 %v4562, %v4558
    %v5947 = vpack.c.b16 %v4563, %v4559
    %v5948 = vpack.c.b16 %v4564, %v4560
    %v5949 = vpack.c.b16 %v4569, %v4565
    %v5950 = vpack.c.b16 %v4570, %v4566
    %v5951 = vpack.c.b16 %v4571, %v4567
    %v5952 = vpack.c.b16 %v4572, %v4568
    %v5953 = vpack.c.b16 %v4577, %v4573
    %v5954 = vpack.c.b16 %v4578, %v4574
    %v5955 = vpack.c.b16 %v4579, %v4575
    %v5956 = vpack.c.b16 %v4580, %v4576
    %v5957 = vpack.c.b16 %v4585, %v4581
    %v5958 = vpack.c.b16 %v4586, %v4582
    %v5959 = vpack.c.b16 %v4587, %v4583
    %v5960 = vpack.c.b16 %v4588, %v4584
    %v5961 = vpack.c.b16 %v4593, %v4589
    %v5962 = vpack.c.b16 %v4594, %v4590
    %v5963 = vpack.c.b16 %v4595, %v4591
    %v5964 = vpack.c.b16 %v4596, %v4592
    %v5965 = vpack.c.b16 %v4601, %v4597
    %v5966 = vpack.c.b16 %v4602, %v4598
    %v5967 = vpack.c.b16 %v4603, %v4599
    %v5968 = vpack.c.b16 %v4604, %v4600
    %v5969 = vpack.c.b16 %v4609, %v4605
    %v5970 = vpack.c.b16 %v4610, %v4606
    %v5971 = vpack.c.b16 %v4611, %v4607
    %v5972 = vpack.c.b16 %v4612, %v4608
    %v5973 = vpack.c.b16 %v4617, %v4613
    %v5974 = vpack.c.b16 %v4618, %v4614
    %v5975 = vpack.c.b16 %v4619, %v4615
    %v5976 = vpack.c.b16 %v4620, %v4616
    %v5977 = vpack.c.b16 %v4625, %v4621
    %v5978 = vpack.c.b16 %v4626, %v4622
    %v5979 = vpack.c.b16 %v4627, %v4623
    %v5980 = vpack.c.b16 %v4628, %v4624
    %v5981 = vpack.c.b16 %v4633, %v4629
    %v5982 = vpack.c.b16 %v4634, %v4630
    %v5983 = vpack.c.b16 %v4635, %v4631
    %v5984 = vpack.c.b16 %v4636, %v4632
    %v5985 = vpack.c.b16 %v4641, %v4637
    %v5986 = vpack.c.b16 %v4642, %v4638
    %v5987 = vpack.c.b16 %v4643, %v4639
    %v5988 = vpack.c.b16 %v4644, %v4640
    %v5989 = vpack.c.b16 %v4649, %v4645
    %v5990 = vpack.c.b16 %v4650, %v4646
    %v5991 = vpack.c.b16 %v4651, %v4647
    %v5992 = vpack.c.b16 %v4652, %v4648
    %v5993 = vpack.c.b16 %v4657, %v4653
    %v5994 = vpack.c.b16 %v4658, %v4654
    %v5995 = vpack.c.b16 %v4659, %v4655
    %v5996 = vpack.c.b16 %v4660, %v4656
    %v5997 = vpack.c.b16 %v4665, %v4661
    %v5998 = vpack.c.b16 %v4666, %v4662
    %v5999 = vpack.c.b16 %v4667, %v4663
    %v6000 = vpack.c.b16 %v4668, %v4664
    %v6001 = vpack.c.b16 %v4673, %v4669
    %v6002 = vpack.c.b16 %v4674, %v4670
    %v6003 = vpack.c.b16 %v4675, %v4671
    %v6004 = vpack.c.b16 %v4676, %v4672
    %v6005 = vpack.c.b16 %v4681, %v4677
    %v6006 = vpack.c.b16 %v4682, %v4678
    %v6007 = vpack.c.b16 %v4683, %v4679
    %v6008 = vpack.c.b16 %v4684, %v4680
    %v6009 = vpack.c.b16 %v4689, %v4685
    %v6010 = vpack.c.b16 %v4690, %v4686
    %v6011 = vpack.c.b16 %v4691, %v4687
    %v6012 = vpack.c.b16 %v4692, %v4688
    %v6013 = vpack.c.b16 %v4697, %v4693
    %v6014 = vpack.c.b16 %v4698, %v4694
    %v6015 = vpack.c.b16 %v4699, %v4695
    %v6016 = vpack.c.b16 %v4700, %v4696
    %v6017 = vpack.c.b16 %v4705, %v4701
    %v6018 = vpack.c.b16 %v4706, %v4702
    %v6019 = vpack.c.b16 %v4707, %v4703
    %v6020 = vpack.c.b16 %v4708, %v4704
    %v6021 = vpack.c.b16 %v4713, %v4709
    %v6022 = vpack.c.b16 %v4714, %v4710
    %v6023 = vpack.c.b16 %v4715, %v4711
    %v6024 = vpack.c.b16 %v4716, %v4712
    %v6025 = vpack.c.b16 %v4721, %v4717
    %v6026 = vpack.c.b16 %v4722, %v4718
    %v6027 = vpack.c.b16 %v4723, %v4719
    %v6028 = vpack.c.b16 %v4724, %v4720
    %v6029 = vpack.c.b16 %v4729, %v4725
    %v6030 = vpack.c.b16 %v4730, %v4726
    %v6031 = vpack.c.b16 %v4731, %v4727
    %v6032 = vpack.c.b16 %v4732, %v4728
    %v6033 = vpack.c.b16 %v4737, %v4733
    %v6034 = vpack.c.b16 %v4738, %v4734
    %v6035 = vpack.c.b16 %v4739, %v4735
    %v6036 = vpack.c.b16 %v4740, %v4736
    %v6037 = vpack.c.b16 %v4745, %v4741
    %v6038 = vpack.c.b16 %v4746, %v4742
    %v6039 = vpack.c.b16 %v4747, %v4743
    %v6040 = vpack.c.b16 %v4748, %v4744
    %v6041 = vpack.c.b16 %v4753, %v4749
    %v6042 = vpack.c.b16 %v4754, %v4750
    %v6043 = vpack.c.b16 %v4755, %v4751
    %v6044 = vpack.c.b16 %v4756, %v4752
    %v6045 = vpack.c.b16 %v4761, %v4757
    %v6046 = vpack.c.b16 %v4762, %v4758
    %v6047 = vpack.c.b16 %v4763, %v4759
    %v6048 = vpack.c.b16 %v4764, %v4760
    %v6049 = vpack.c.b16 %v4769, %v4765
    %v6050 = vpack.c.b16 %v4770, %v4766
    %v6051 = vpack.c.b16 %v4771, %v4767
    %v6052 = vpack.c.b16 %v4772, %v4768
    %v6053 = vpack.c.b16 %v4777, %v4773
    %v6054 = vpack.c.b16 %v4778, %v4774
    %v6055 = vpack.c.b16 %v4779, %v4775
    %v6056 = vpack.c.b16 %v4780, %v4776
    %v6057 = vpack.c.b16 %v4785, %v4781
    %v6058 = vpack.c.b16 %v4786, %v4782
    %v6059 = vpack.c.b16 %v4787, %v4783
    %v6060 = vpack.c.b16 %v4788, %v4784
    %v6061 = vpack.c.b16 %v4793, %v4789
    %v6062 = vpack.c.b16 %v4794, %v4790
    %v6063 = vpack.c.b16 %v4795, %v4791
    %v6064 = vpack.c.b16 %v4796, %v4792
    %v6065 = vpack.c.b16 %v4801, %v4797
    %v6066 = vpack.c.b16 %v4802, %v4798
    %v6067 = vpack.c.b16 %v4803, %v4799
    %v6068 = vpack.c.b16 %v4804, %v4800
    %v6069 = vpack.c.b16 %v4809, %v4805
    %v6070 = vpack.c.b16 %v4810, %v4806
    %v6071 = vpack.c.b16 %v4811, %v4807
    %v6072 = vpack.c.b16 %v4812, %v4808
    %v6073 = vpack.c.b16 %v4817, %v4813
    %v6074 = vpack.c.b16 %v4818, %v4814
    %v6075 = vpack.c.b16 %v4819, %v4815
    %v6076 = vpack.c.b16 %v4820, %v4816
    %v6077 = vpack.c.b16 %v4825, %v4821
    %v6078 = vpack.c.b16 %v4826, %v4822
    %v6079 = vpack.c.b16 %v4827, %v4823
    %v6080 = vpack.c.b16 %v4828, %v4824
    %v6081 = vpack.c.b16 %v4833, %v4829
    %v6082 = vpack.c.b16 %v4834, %v4830
    %v6083 = vpack.c.b16 %v4835, %v4831
    %v6084 = vpack.c.b16 %v4836, %v4832
    %v6085 = vpack.c.b16 %v4841, %v4837
    %v6086 = vpack.c.b16 %v4842, %v4838
    %v6087 = vpack.c.b16 %v4843, %v4839
    %v6088 = vpack.c.b16 %v4844, %v4840
    %v6089 = vpack.c.b16 %v4849, %v4845
    %v6090 = vpack.c.b16 %v4850, %v4846
    %v6091 = vpack.c.b16 %v4851, %v4847
    %v6092 = vpack.c.b16 %v4852, %v4848
    %v6093 = vpack.c.b16 %v4857, %v4853
    %v6094 = vpack.c.b16 %v4858, %v4854
    %v6095 = vpack.c.b16 %v4859, %v4855
    %v6096 = vpack.c.b16 %v4860, %v4856
    %v6097 = vpack.c.b16 %v4865, %v4861
    %v6098 = vpack.c.b16 %v4866, %v4862
    %v6099 = vpack.c.b16 %v4867, %v4863
    %v6100 = vpack.c.b16 %v4868, %v4864
    %v6101 = vpack.c.b16 %v4873, %v4869
    %v6102 = vpack.c.b16 %v4874, %v4870
    %v6103 = vpack.c.b16 %v4875, %v4871
    %v6104 = vpack.c.b16 %v4876, %v4872
    %v6105 = vpack.c.b16 %v4881, %v4877
    %v6106 = vpack.c.b16 %v4882, %v4878
    %v6107 = vpack.c.b16 %v4883, %v4879
    %v6108 = vpack.c.b16 %v4884, %v4880
    %v6109 = vpack.c.b16 %v4889, %v4885
    %v6110 = vpack.c.b16 %v4890, %v4886
    %v6111 = vpack.c.b16 %v4891, %v4887
    %v6112 = vpack.c.b16 %v4892, %v4888
    %v6113 = vpack.c.b16 %v4897, %v4893
    %v6114 = vpack.c.b16 %v4898, %v4894
    %v6115 = vpack.c.b16 %v4899, %v4895
    %v6116 = vpack.c.b16 %v4900, %v4896
    %v6117 = vpack.c.b16 %v4905, %v4901
    %v6118 = vpack.c.b16 %v4906, %v4902
    %v6119 = vpack.c.b16 %v4907, %v4903
    %v6120 = vpack.c.b16 %v4908, %v4904
    %v6121 = vpack.c.b16 %v4913, %v4909
    %v6122 = vpack.c.b16 %v4914, %v4910
    %v6123 = vpack.c.b16 %v4915, %v4911
    %v6124 = vpack.c.b16 %v4916, %v4912
    %v6125 = vpack.c.b16 %v4921, %v4917
    %v6126 = vpack.c.b16 %v4922, %v4918
    %v6127 = vpack.c.b16 %v4923, %v4919
    %v6128 = vpack.c.b16 %v4924, %v4920
    %v6129 = vpack.c.b16 %v4929, %v4925
    %v6130 = vpack.c.b16 %v4930, %v4926
    %v6131 = vpack.c.b16 %v4931, %v4927
    %v6132 = vpack.c.b16 %v4932, %v4928
    %v6133 = vpack.c.b16 %v4937, %v4933
    %v6134 = vpack.c.b16 %v4938, %v4934
    %v6135 = vpack.c.b16 %v4939, %v4935
    %v6136 = vpack.c.b16 %v4940, %v4936
    %v6137 = vpack.c.b16 %v4945, %v4941
    %v6138 = vpack.c.b16 %v4946, %v4942
    %v6139 = vpack.c.b16 %v4947, %v4943
    %v6140 = vpack.c.b16 %v4948, %v4944
    %v6141 = vpack.c.b16 %v4953, %v4949
    %v6142 = vpack.c.b16 %v4954, %v4950
    %v6143 = vpack.c.b16 %v4955, %v4951
    %v6144 = vpack.c.b16 %v4956, %v4952
    %v6145 = vpack.c.b16 %v4961, %v4957
    %v6146 = vpack.c.b16 %v4962, %v4958
    %v6147 = vpack.c.b16 %v4963, %v4959
    %v6148 = vpack.c.b16 %v4964, %v4960
    %v6149 = vpack.c.b16 %v4969, %v4965
    %v6150 = vpack.c.b16 %v4970, %v4966
    %v6151 = vpack.c.b16 %v4971, %v4967
    %v6152 = vpack.c.b16 %v4972, %v4968
    %v6153 = vpack.c.b16 %v4977, %v4973
    %v6154 = vpack.c.b16 %v4978, %v4974
    %v6155 = vpack.c.b16 %v4979, %v4975
    %v6156 = vpack.c.b16 %v4980, %v4976
    %v6157 = vpack.c.b16 %v4985, %v4981
    %v6158 = vpack.c.b16 %v4986, %v4982
    %v6159 = vpack.c.b16 %v4987, %v4983
    %v6160 = vpack.c.b16 %v4988, %v4984
    %v6161 = vpack.c.b16 %v4993, %v4989
    %v6162 = vpack.c.b16 %v4994, %v4990
    %v6163 = vpack.c.b16 %v4995, %v4991
    %v6164 = vpack.c.b16 %v4996, %v4992
    %vm7333 = vcmask 523264
    %v7335 = vsel %vm7333, %v1447, 0
    %7337 = vmatprep.subr.bf16.mxu0 %v4998
    %7338 = vmatpush1.bf16.msra.mxu0 %v4997
    %7339 = vmatprep.subr.bf16.mxu0 %v5002
    %7340 = vmatpush1.bf16.msra.mxu0 %v5001
    %7341 = vmatprep.subr.bf16.mxu0 %v5006
    %7342 = vmatpush1.bf16.msra.mxu0 %v5005
    %7343 = vmatprep.subr.bf16.mxu0 %v5010
    %7344 = vmatpush1.bf16.msra.mxu0 %v5009
    %7345 = vmatprep.subr.bf16.mxu0 %v5014
    %7346 = vmatpush1.bf16.msra.mxu0 %v5013
    %7347 = vmatprep.subr.bf16.mxu0 %v5018
    %7348 = vmatpush1.bf16.msra.mxu0 %v5017
    %7349 = vmatprep.subr.bf16.mxu0 %v5022
    %7350 = vmatpush1.bf16.msra.mxu0 %v5021
    %7351 = vmatprep.subr.bf16.mxu0 %v5026
    %7352 = vmatpush1.bf16.msra.mxu0 %v5025
    %7353 = vmatprep.subr.bf16.mxu0 %v5030
    %7354 = vmatpush1.bf16.msra.mxu0 %v5029
    %7355 = vmatprep.subr.bf16.mxu0 %v5034
    %7356 = vmatpush1.bf16.msra.mxu0 %v5033
    %7357 = vmatprep.subr.bf16.mxu0 %v5038
    %7358 = vmatpush1.bf16.msra.mxu0 %v5037
    %7359 = vmatprep.subr.bf16.mxu0 %v5042
    %7360 = vmatpush1.bf16.msra.mxu0 %v5041
    %7361 = vmatprep.subr.bf16.mxu0 %v5046
    %7362 = vmatpush1.bf16.msra.mxu0 %v5045
    %7363 = vmatprep.subr.bf16.mxu0 %v5050
    %7364 = vmatpush1.bf16.msra.mxu0 %v5049
    %7365 = vmatprep.subr.bf16.mxu0 %v5054
    %7366 = vmatpush1.bf16.msra.mxu0 %v5053
    %7367 = vmatprep.subr.bf16.mxu0 %v5058
    %7368 = vmatpush1.bf16.msra.mxu0 %v5057
    %7369 = vmatprep.mubr.bf16.mxu0 %v1259
    %7370 = vmatmul.mubr.bf16.gmra.mrb[0].mxu0 %v1245
    %v7371 = vpop.f32.mrb[0].mxu0
    %v7372 = vadd.f32 %v1200, %v7371
    %v7373 = vpop.f32.mrb[0].mxu0
    %v7374 = vadd.f32 %v1204, %v7373
    %v7375 = vpop.f32.mrb[0].mxu0
    %v7376 = vpop.f32.mrb[0].mxu0
    %7377 = vdwg.mxu0
    %7378 = vmatprep.subr.bf16.mxu0 %v5062
    %7379 = vmatpush1.bf16.msra.mxu0 %v5061
    %7380 = vmatprep.subr.bf16.mxu0 %v5066
    %7381 = vmatpush1.bf16.msra.mxu0 %v5065
    %7382 = vmatprep.subr.bf16.mxu0 %v5070
    %7383 = vmatpush1.bf16.msra.mxu0 %v5069
    %7384 = vmatprep.subr.bf16.mxu0 %v5074
    %7385 = vmatpush1.bf16.msra.mxu0 %v5073
    %7386 = vmatprep.subr.bf16.mxu0 %v5078
    %7387 = vmatpush1.bf16.msra.mxu0 %v5077
    %7388 = vmatprep.subr.bf16.mxu0 %v5082
    %7389 = vmatpush1.bf16.msra.mxu0 %v5081
    %7390 = vmatprep.subr.bf16.mxu0 %v5086
    %7391 = vmatpush1.bf16.msra.mxu0 %v5085
    %7392 = vmatprep.subr.bf16.mxu0 %v5090
    %7393 = vmatpush1.bf16.msra.mxu0 %v5089
    %7394 = vmatprep.subr.bf16.mxu0 %v5094
    %7395 = vmatpush1.bf16.msra.mxu0 %v5093
    %7396 = vmatprep.subr.bf16.mxu0 %v5098
    %7397 = vmatpush1.bf16.msra.mxu0 %v5097
    %7398 = vmatprep.subr.bf16.mxu0 %v5102
    %7399 = vmatpush1.bf16.msra.mxu0 %v5101
    %7400 = vmatprep.subr.bf16.mxu0 %v5106
    %7401 = vmatpush1.bf16.msra.mxu0 %v5105
    %7402 = vmatprep.subr.bf16.mxu0 %v5110
    %7403 = vmatpush1.bf16.msra.mxu0 %v5109
    %7404 = vmatprep.subr.bf16.mxu0 %v5114
    %7405 = vmatpush1.bf16.msra.mxu0 %v5113
    %7406 = vmatprep.subr.bf16.mxu0 %v5118
    %7407 = vmatpush1.bf16.msra.mxu0 %v5117
    %7408 = vmatprep.subr.bf16.mxu0 %v5122
    %7409 = vmatpush1.bf16.msra.mxu0 %v5121
    %7410 = vmatprep.mubr.bf16.mxu0 %v1269
    %7411 = vmatmul.mubr.bf16.gmra.mrb[0].mxu0 %v1267
    %v7412 = vpop.f32.mrb[0].mxu0
    %v7413 = vadd.f32 %v7372, %v7412
    %v7414 = vpop.f32.mrb[0].mxu0
    %v7415 = vadd.f32 %v7374, %v7414
    %v7416 = vpop.f32.mrb[0].mxu0
    %v7417 = vpop.f32.mrb[0].mxu0
    %7418 = vdwg.mxu0
    %7419 = vmatprep.subr.bf16.mxu0 %v5126
    %7420 = vmatpush1.bf16.msra.mxu0 %v5125
    %7421 = vmatprep.subr.bf16.mxu0 %v5130
    %7422 = vmatpush1.bf16.msra.mxu0 %v5129
    %7423 = vmatprep.subr.bf16.mxu0 %v5134
    %7424 = vmatpush1.bf16.msra.mxu0 %v5133
    %7425 = vmatprep.subr.bf16.mxu0 %v5138
    %7426 = vmatpush1.bf16.msra.mxu0 %v5137
    %7427 = vmatprep.subr.bf16.mxu0 %v5142
    %7428 = vmatpush1.bf16.msra.mxu0 %v5141
    %7429 = vmatprep.subr.bf16.mxu0 %v5146
    %7430 = vmatpush1.bf16.msra.mxu0 %v5145
    %7431 = vmatprep.subr.bf16.mxu0 %v5150
    %7432 = vmatpush1.bf16.msra.mxu0 %v5149
    %7433 = vmatprep.subr.bf16.mxu0 %v5154
    %7434 = vmatpush1.bf16.msra.mxu0 %v5153
    %7435 = vmatprep.subr.bf16.mxu0 %v5158
    %7436 = vmatpush1.bf16.msra.mxu0 %v5157
    %7437 = vmatprep.subr.bf16.mxu0 %v5162
    %7438 = vmatpush1.bf16.msra.mxu0 %v5161
    %7439 = vmatprep.subr.bf16.mxu0 %v5166
    %7440 = vmatpush1.bf16.msra.mxu0 %v5165
    %7441 = vmatprep.subr.bf16.mxu0 %v5170
    %7442 = vmatpush1.bf16.msra.mxu0 %v5169
    %7443 = vmatprep.subr.bf16.mxu0 %v5174
    %7444 = vmatpush1.bf16.msra.mxu0 %v5173
    %7445 = vmatprep.subr.bf16.mxu0 %v5178
    %7446 = vmatpush1.bf16.msra.mxu0 %v5177
    %7447 = vmatprep.subr.bf16.mxu0 %v5182
    %7448 = vmatpush1.bf16.msra.mxu0 %v5181
    %7449 = vmatprep.subr.bf16.mxu0 %v5186
    %7450 = vmatpush1.bf16.msra.mxu0 %v5185
    %7451 = vmatprep.mubr.bf16.mxu0 %v1266
    %7452 = vmatmul.mubr.bf16.gmra.mrb[0].mxu0 %v1252
    %v7453 = vpop.f32.mrb[0].mxu0
    %v7454 = vadd.f32 %v7413, %v7453
    %v7455 = vpop.f32.mrb[0].mxu0
    %v7456 = vadd.f32 %v7415, %v7455
    %v7457 = vpop.f32.mrb[0].mxu0
    %v7458 = vpop.f32.mrb[0].mxu0
    %7459 = vdwg.mxu0
    %7460 = vmatprep.subr.bf16.mxu0 %v5190
    %7461 = vmatpush1.bf16.msra.mxu0 %v5189
    %7462 = vmatprep.subr.bf16.mxu0 %v5194
    %7463 = vmatpush1.bf16.msra.mxu0 %v5193
    %7464 = vmatprep.subr.bf16.mxu0 %v5198
    %7465 = vmatpush1.bf16.msra.mxu0 %v5197
    %7466 = vmatprep.subr.bf16.mxu0 %v5202
    %7467 = vmatpush1.bf16.msra.mxu0 %v5201
    %7468 = vmatprep.subr.bf16.mxu0 %v5206
    %7469 = vmatpush1.bf16.msra.mxu0 %v5205
    %7470 = vmatprep.subr.bf16.mxu0 %v5210
    %7471 = vmatpush1.bf16.msra.mxu0 %v5209
    %7472 = vmatprep.subr.bf16.mxu0 %v5214
    %7473 = vmatpush1.bf16.msra.mxu0 %v5213
    %7474 = vmatprep.subr.bf16.mxu0 %v5218
    %7475 = vmatpush1.bf16.msra.mxu0 %v5217
    %7476 = vmatprep.subr.bf16.mxu0 %v5222
    %7477 = vmatpush1.bf16.msra.mxu0 %v5221
    %7478 = vmatprep.subr.bf16.mxu0 %v5226
    %7479 = vmatpush1.bf16.msra.mxu0 %v5225
    %7480 = vmatprep.subr.bf16.mxu0 %v5230
    %7481 = vmatpush1.bf16.msra.mxu0 %v5229
    %7482 = vmatprep.subr.bf16.mxu0 %v5234
    %7483 = vmatpush1.bf16.msra.mxu0 %v5233
    %7484 = vmatprep.subr.bf16.mxu0 %v5238
    %7485 = vmatpush1.bf16.msra.mxu0 %v5237
    %7486 = vmatprep.subr.bf16.mxu0 %v5242
    %7487 = vmatpush1.bf16.msra.mxu0 %v5241
    %7488 = vmatprep.subr.bf16.mxu0 %v5246
    %7489 = vmatpush1.bf16.msra.mxu0 %v5245
    %7490 = vmatprep.subr.bf16.mxu0 %v5250
    %7491 = vmatpush1.bf16.msra.mxu0 %v5249
    %7492 = vmatprep.mubr.bf16.mxu0 %v1270
    %7493 = vmatmul.mubr.bf16.gmra.mrb[0].mxu0 %v1268
    %v7494 = vpop.f32.mrb[0].mxu0
    %v7495 = vadd.f32 %v7454, %v7494
    %v7496 = vpop.f32.mrb[0].mxu0
    %v7497 = vadd.f32 %v7456, %v7496
    %v7498 = vpop.f32.mrb[0].mxu0
    %v7499 = vpop.f32.mrb[0].mxu0
    %7500 = vdwg.mxu0
    %7501 = vmatprep.subr.bf16.mxu0 %v5254
    %7502 = vmatpush1.bf16.msra.mxu0 %v5253
    %7503 = vmatprep.subr.bf16.mxu0 %v5258
    %7504 = vmatpush1.bf16.msra.mxu0 %v5257
    %7505 = vmatprep.subr.bf16.mxu0 %v5262
    %7506 = vmatpush1.bf16.msra.mxu0 %v5261
    %7507 = vmatprep.subr.bf16.mxu0 %v5266
    %7508 = vmatpush1.bf16.msra.mxu0 %v5265
    %7509 = vmatprep.subr.bf16.mxu0 %v5270
    %7510 = vmatpush1.bf16.msra.mxu0 %v5269
    %7511 = vmatprep.subr.bf16.mxu0 %v5274
    %7512 = vmatpush1.bf16.msra.mxu0 %v5273
    %7513 = vmatprep.subr.bf16.mxu0 %v5278
    %7514 = vmatpush1.bf16.msra.mxu0 %v5277
    %7515 = vmatprep.subr.bf16.mxu0 %v5282
    %7516 = vmatpush1.bf16.msra.mxu0 %v5281
    %7517 = vmatprep.subr.bf16.mxu0 %v5286
    %7518 = vmatpush1.bf16.msra.mxu0 %v5285
    %7519 = vmatprep.subr.bf16.mxu0 %v5290
    %7520 = vmatpush1.bf16.msra.mxu0 %v5289
    %7521 = vmatprep.subr.bf16.mxu0 %v5294
    %7522 = vmatpush1.bf16.msra.mxu0 %v5293
    %7523 = vmatprep.subr.bf16.mxu0 %v5298
    %7524 = vmatpush1.bf16.msra.mxu0 %v5297
    %7525 = vmatprep.subr.bf16.mxu0 %v5302
    %7526 = vmatpush1.bf16.msra.mxu0 %v5301
    %7527 = vmatprep.subr.bf16.mxu0 %v5306
    %7528 = vmatpush1.bf16.msra.mxu0 %v5305
    %7529 = vmatprep.subr.bf16.mxu0 %v5310
    %7530 = vmatpush1.bf16.msra.mxu0 %v5309
    %7531 = vmatprep.subr.bf16.mxu0 %v5314
    %7532 = vmatpush1.bf16.msra.mxu0 %v5313
    %7533 = vmatprep.mubr.bf16.mxu0 %v1308
    %7534 = vmatmul.mubr.bf16.gmra.mrb[0].mxu0 %v1294
    %v7535 = vpop.f32.mrb[0].mxu0
    %v7536 = vadd.f32 %v7495, %v7535
    %v7537 = vpop.f32.mrb[0].mxu0
    %v7538 = vadd.f32 %v7497, %v7537
    %v7539 = vpop.f32.mrb[0].mxu0
    %v7540 = vpop.f32.mrb[0].mxu0
    %7541 = vdwg.mxu0
    %7542 = vmatprep.subr.bf16.mxu0 %v5318
    %7543 = vmatpush1.bf16.msra.mxu0 %v5317
    %7544 = vmatprep.subr.bf16.mxu0 %v5322
    %7545 = vmatpush1.bf16.msra.mxu0 %v5321
    %7546 = vmatprep.subr.bf16.mxu0 %v5326
    %7547 = vmatpush1.bf16.msra.mxu0 %v5325
    %7548 = vmatprep.subr.bf16.mxu0 %v5330
    %7549 = vmatpush1.bf16.msra.mxu0 %v5329
    %7550 = vmatprep.subr.bf16.mxu0 %v5334
    %7551 = vmatpush1.bf16.msra.mxu0 %v5333
    %7552 = vmatprep.subr.bf16.mxu0 %v5338
    %7553 = vmatpush1.bf16.msra.mxu0 %v5337
    %7554 = vmatprep.subr.bf16.mxu0 %v5342
    %7555 = vmatpush1.bf16.msra.mxu0 %v5341
    %7556 = vmatprep.subr.bf16.mxu0 %v5346
    %7557 = vmatpush1.bf16.msra.mxu0 %v5345
    %7558 = vmatprep.subr.bf16.mxu0 %v5350
    %7559 = vmatpush1.bf16.msra.mxu0 %v5349
    %7560 = vmatprep.subr.bf16.mxu0 %v5354
    %7561 = vmatpush1.bf16.msra.mxu0 %v5353
    %7562 = vmatprep.subr.bf16.mxu0 %v5358
    %7563 = vmatpush1.bf16.msra.mxu0 %v5357
    %7564 = vmatprep.subr.bf16.mxu0 %v5362
    %7565 = vmatpush1.bf16.msra.mxu0 %v5361
    %7566 = vmatprep.subr.bf16.mxu0 %v5366
    %7567 = vmatpush1.bf16.msra.mxu0 %v5365
    %7568 = vmatprep.subr.bf16.mxu0 %v5370
    %7569 = vmatpush1.bf16.msra.mxu0 %v5369
    %7570 = vmatprep.subr.bf16.mxu0 %v5374
    %7571 = vmatpush1.bf16.msra.mxu0 %v5373
    %7572 = vmatprep.subr.bf16.mxu0 %v5378
    %7573 = vmatpush1.bf16.msra.mxu0 %v5377
    %7574 = vmatprep.mubr.bf16.mxu0 %v1318
    %7575 = vmatmul.mubr.bf16.gmra.mrb[0].mxu0 %v1316
    %v7576 = vpop.f32.mrb[0].mxu0
    %v7577 = vadd.f32 %v7536, %v7576
    %v7578 = vpop.f32.mrb[0].mxu0
    %v7579 = vadd.f32 %v7538, %v7578
    %v7580 = vpop.f32.mrb[0].mxu0
    %v7581 = vpop.f32.mrb[0].mxu0
    %7582 = vdwg.mxu0
    %7583 = vmatprep.subr.bf16.mxu0 %v5382
    %7584 = vmatpush1.bf16.msra.mxu0 %v5381
    %7585 = vmatprep.subr.bf16.mxu0 %v5386
    %7586 = vmatpush1.bf16.msra.mxu0 %v5385
    %7587 = vmatprep.subr.bf16.mxu0 %v5390
    %7588 = vmatpush1.bf16.msra.mxu0 %v5389
    %7589 = vmatprep.subr.bf16.mxu0 %v5394
    %7590 = vmatpush1.bf16.msra.mxu0 %v5393
    %7591 = vmatprep.subr.bf16.mxu0 %v5398
    %7592 = vmatpush1.bf16.msra.mxu0 %v5397
    %7593 = vmatprep.subr.bf16.mxu0 %v5402
    %7594 = vmatpush1.bf16.msra.mxu0 %v5401
    %7595 = vmatprep.subr.bf16.mxu0 %v5406
    %7596 = vmatpush1.bf16.msra.mxu0 %v5405
    %7597 = vmatprep.subr.bf16.mxu0 %v5410
    %7598 = vmatpush1.bf16.msra.mxu0 %v5409
    %7599 = vmatprep.subr.bf16.mxu0 %v5414
    %7600 = vmatpush1.bf16.msra.mxu0 %v5413
    %7601 = vmatprep.subr.bf16.mxu0 %v5418
    %7602 = vmatpush1.bf16.msra.mxu0 %v5417
    %7603 = vmatprep.subr.bf16.mxu0 %v5422
    %7604 = vmatpush1.bf16.msra.mxu0 %v5421
    %7605 = vmatprep.subr.bf16.mxu0 %v5426
    %7606 = vmatpush1.bf16.msra.mxu0 %v5425
    %7607 = vmatprep.subr.bf16.mxu0 %v5430
    %7608 = vmatpush1.bf16.msra.mxu0 %v5429
    %7609 = vmatprep.subr.bf16.mxu0 %v5434
    %7610 = vmatpush1.bf16.msra.mxu0 %v5433
    %7611 = vmatprep.subr.bf16.mxu0 %v5438
    %7612 = vmatpush1.bf16.msra.mxu0 %v5437
    %7613 = vmatprep.subr.bf16.mxu0 %v5442
    %7614 = vmatpush1.bf16.msra.mxu0 %v5441
    %7615 = vmatprep.mubr.bf16.mxu0 %v1315
    %7616 = vmatmul.mubr.bf16.gmra.mrb[0].mxu0 %v1301
    %v7617 = vpop.f32.mrb[0].mxu0
    %v7618 = vadd.f32 %v7577, %v7617
    %v7619 = vpop.f32.mrb[0].mxu0
    %v7620 = vadd.f32 %v7579, %v7619
    %v7621 = vpop.f32.mrb[0].mxu0
    %v7622 = vpop.f32.mrb[0].mxu0
    %7623 = vdwg.mxu0
    %7624 = vmatprep.subr.bf16.mxu0 %v5446
    %7625 = vmatpush1.bf16.msra.mxu0 %v5445
    %7626 = vmatprep.subr.bf16.mxu0 %v5450
    %7627 = vmatpush1.bf16.msra.mxu0 %v5449
    %7628 = vmatprep.subr.bf16.mxu0 %v5454
    %7629 = vmatpush1.bf16.msra.mxu0 %v5453
    %7630 = vmatprep.subr.bf16.mxu0 %v5458
    %7631 = vmatpush1.bf16.msra.mxu0 %v5457
    %7632 = vmatprep.subr.bf16.mxu0 %v5462
    %7633 = vmatpush1.bf16.msra.mxu0 %v5461
    %7634 = vmatprep.subr.bf16.mxu0 %v5466
    %7635 = vmatpush1.bf16.msra.mxu0 %v5465
    %7636 = vmatprep.subr.bf16.mxu0 %v5470
    %7637 = vmatpush1.bf16.msra.mxu0 %v5469
    %7638 = vmatprep.subr.bf16.mxu0 %v5474
    %7639 = vmatpush1.bf16.msra.mxu0 %v5473
    %7640 = vmatprep.subr.bf16.mxu0 %v5478
    %7641 = vmatpush1.bf16.msra.mxu0 %v5477
    %7642 = vmatprep.subr.bf16.mxu0 %v5482
    %7643 = vmatpush1.bf16.msra.mxu0 %v5481
    %7644 = vmatprep.subr.bf16.mxu0 %v5486
    %7645 = vmatpush1.bf16.msra.mxu0 %v5485
    %7646 = vmatprep.subr.bf16.mxu0 %v5490
    %7647 = vmatpush1.bf16.msra.mxu0 %v5489
    %7648 = vmatprep.subr.bf16.mxu0 %v5494
    %7649 = vmatpush1.bf16.msra.mxu0 %v5493
    %7650 = vmatprep.subr.bf16.mxu0 %v5498
    %7651 = vmatpush1.bf16.msra.mxu0 %v5497
    %7652 = vmatprep.subr.bf16.mxu0 %v5502
    %7653 = vmatpush1.bf16.msra.mxu0 %v5501
    %7654 = vmatprep.subr.bf16.mxu0 %v5506
    %7655 = vmatpush1.bf16.msra.mxu0 %v5505
    %7656 = vmatprep.mubr.bf16.mxu0 %v1319
    %7657 = vmatmul.mubr.bf16.gmra.mrb[0].mxu0 %v1317
    %v7658 = vpop.f32.mrb[0].mxu0
    %v7659 = vadd.f32 %v7618, %v7658
    %v7660 = vpop.f32.mrb[0].mxu0
    %v7661 = vadd.f32 %v7620, %v7660
    %v7662 = vpop.f32.mrb[0].mxu0
    %v7663 = vpop.f32.mrb[0].mxu0
    %7664 = vdwg.mxu0
    %7665 = vmatprep.subr.bf16.mxu0 %v5510
    %7666 = vmatpush1.bf16.msra.mxu0 %v5509
    %7667 = vmatprep.subr.bf16.mxu0 %v5514
    %7668 = vmatpush1.bf16.msra.mxu0 %v5513
    %7669 = vmatprep.subr.bf16.mxu0 %v5518
    %7670 = vmatpush1.bf16.msra.mxu0 %v5517
    %7671 = vmatprep.subr.bf16.mxu0 %v5522
    %7672 = vmatpush1.bf16.msra.mxu0 %v5521
    %7673 = vmatprep.subr.bf16.mxu0 %v5526
    %7674 = vmatpush1.bf16.msra.mxu0 %v5525
    %7675 = vmatprep.subr.bf16.mxu0 %v5530
    %7676 = vmatpush1.bf16.msra.mxu0 %v5529
    %7677 = vmatprep.subr.bf16.mxu0 %v5534
    %7678 = vmatpush1.bf16.msra.mxu0 %v5533
    %7679 = vmatprep.subr.bf16.mxu0 %v5538
    %7680 = vmatpush1.bf16.msra.mxu0 %v5537
    %7681 = vmatprep.subr.bf16.mxu0 %v5542
    %7682 = vmatpush1.bf16.msra.mxu0 %v5541
    %7683 = vmatprep.subr.bf16.mxu0 %v5546
    %7684 = vmatpush1.bf16.msra.mxu0 %v5545
    %7685 = vmatprep.subr.bf16.mxu0 %v5550
    %7686 = vmatpush1.bf16.msra.mxu0 %v5549
    %7687 = vmatprep.subr.bf16.mxu0 %v5554
    %7688 = vmatpush1.bf16.msra.mxu0 %v5553
    %7689 = vmatprep.subr.bf16.mxu0 %v5558
    %7690 = vmatpush1.bf16.msra.mxu0 %v5557
    %7691 = vmatprep.subr.bf16.mxu0 %v5562
    %7692 = vmatpush1.bf16.msra.mxu0 %v5561
    %7693 = vmatprep.subr.bf16.mxu0 %v5566
    %7694 = vmatpush1.bf16.msra.mxu0 %v5565
    %7695 = vmatprep.subr.bf16.mxu0 %v5570
    %7696 = vmatpush1.bf16.msra.mxu0 %v5569
    %7697 = vmatprep.mubr.bf16.mxu0 %v1357
    %7698 = vmatmul.mubr.bf16.gmra.mrb[0].mxu0 %v1343
    %v7699 = vpop.f32.mrb[0].mxu0
    %v7700 = vadd.f32 %v7659, %v7699
    %v7701 = vpop.f32.mrb[0].mxu0
    %v7702 = vadd.f32 %v7661, %v7701
    %v7703 = vpop.f32.mrb[0].mxu0
    %v7704 = vpop.f32.mrb[0].mxu0
    %7705 = vdwg.mxu0
    %7706 = vmatprep.subr.bf16.mxu0 %v5574
    %7707 = vmatpush1.bf16.msra.mxu0 %v5573
    %7708 = vmatprep.subr.bf16.mxu0 %v5578
    %7709 = vmatpush1.bf16.msra.mxu0 %v5577
    %7710 = vmatprep.subr.bf16.mxu0 %v5582
    %7711 = vmatpush1.bf16.msra.mxu0 %v5581
    %7712 = vmatprep.subr.bf16.mxu0 %v5586
    %7713 = vmatpush1.bf16.msra.mxu0 %v5585
    %7714 = vmatprep.subr.bf16.mxu0 %v5590
    %7715 = vmatpush1.bf16.msra.mxu0 %v5589
    %7716 = vmatprep.subr.bf16.mxu0 %v5594
    %7717 = vmatpush1.bf16.msra.mxu0 %v5593
    %7718 = vmatprep.subr.bf16.mxu0 %v5598
    %7719 = vmatpush1.bf16.msra.mxu0 %v5597
    %7720 = vmatprep.subr.bf16.mxu0 %v5602
    %7721 = vmatpush1.bf16.msra.mxu0 %v5601
    %7722 = vmatprep.subr.bf16.mxu0 %v5606
    %7723 = vmatpush1.bf16.msra.mxu0 %v5605
    %7724 = vmatprep.subr.bf16.mxu0 %v5610
    %7725 = vmatpush1.bf16.msra.mxu0 %v5609
    %7726 = vmatprep.subr.bf16.mxu0 %v5614
    %7727 = vmatpush1.bf16.msra.mxu0 %v5613
    %7728 = vmatprep.subr.bf16.mxu0 %v5618
    %7729 = vmatpush1.bf16.msra.mxu0 %v5617
    %7730 = vmatprep.subr.bf16.mxu0 %v5622
    %7731 = vmatpush1.bf16.msra.mxu0 %v5621
    %7732 = vmatprep.subr.bf16.mxu0 %v5626
    %7733 = vmatpush1.bf16.msra.mxu0 %v5625
    %7734 = vmatprep.subr.bf16.mxu0 %v5630
    %7735 = vmatpush1.bf16.msra.mxu0 %v5629
    %7736 = vmatprep.subr.bf16.mxu0 %v5634
    %7737 = vmatpush1.bf16.msra.mxu0 %v5633
    %7738 = vmatprep.mubr.bf16.mxu0 %v1367
    %7739 = vmatmul.mubr.bf16.gmra.mrb[0].mxu0 %v1365
    %v7740 = vpop.f32.mrb[0].mxu0
    %v7741 = vadd.f32 %v7700, %v7740
    %v7742 = vpop.f32.mrb[0].mxu0
    %v7743 = vadd.f32 %v7702, %v7742
    %v7744 = vpop.f32.mrb[0].mxu0
    %v7745 = vpop.f32.mrb[0].mxu0
    %7746 = vdwg.mxu0
    %7747 = vmatprep.subr.bf16.mxu0 %v5638
    %7748 = vmatpush1.bf16.msra.mxu0 %v5637
    %7749 = vmatprep.subr.bf16.mxu0 %v5642
    %7750 = vmatpush1.bf16.msra.mxu0 %v5641
    %7751 = vmatprep.subr.bf16.mxu0 %v5646
    %7752 = vmatpush1.bf16.msra.mxu0 %v5645
    %7753 = vmatprep.subr.bf16.mxu0 %v5650
    %7754 = vmatpush1.bf16.msra.mxu0 %v5649
    %7755 = vmatprep.subr.bf16.mxu0 %v5654
    %7756 = vmatpush1.bf16.msra.mxu0 %v5653
    %7757 = vmatprep.subr.bf16.mxu0 %v5658
    %7758 = vmatpush1.bf16.msra.mxu0 %v5657
    %7759 = vmatprep.subr.bf16.mxu0 %v5662
    %7760 = vmatpush1.bf16.msra.mxu0 %v5661
    %7761 = vmatprep.subr.bf16.mxu0 %v5666
    %7762 = vmatpush1.bf16.msra.mxu0 %v5665
    %7763 = vmatprep.subr.bf16.mxu0 %v5670
    %7764 = vmatpush1.bf16.msra.mxu0 %v5669
    %7765 = vmatprep.subr.bf16.mxu0 %v5674
    %7766 = vmatpush1.bf16.msra.mxu0 %v5673
    %7767 = vmatprep.subr.bf16.mxu0 %v5678
    %7768 = vmatpush1.bf16.msra.mxu0 %v5677
    %7769 = vmatprep.subr.bf16.mxu0 %v5682
    %7770 = vmatpush1.bf16.msra.mxu0 %v5681
    %7771 = vmatprep.subr.bf16.mxu0 %v5686
    %7772 = vmatpush1.bf16.msra.mxu0 %v5685
    %7773 = vmatprep.subr.bf16.mxu0 %v5690
    %7774 = vmatpush1.bf16.msra.mxu0 %v5689
    %7775 = vmatprep.subr.bf16.mxu0 %v5694
    %7776 = vmatpush1.bf16.msra.mxu0 %v5693
    %7777 = vmatprep.subr.bf16.mxu0 %v5698
    %7778 = vmatpush1.bf16.msra.mxu0 %v5697
    %7779 = vmatprep.mubr.bf16.mxu0 %v1364
    %7780 = vmatmul.mubr.bf16.gmra.mrb[0].mxu0 %v1350
    %v7781 = vpop.f32.mrb[0].mxu0
    %v7782 = vadd.f32 %v7741, %v7781
    %v7783 = vpop.f32.mrb[0].mxu0
    %v7784 = vadd.f32 %v7743, %v7783
    %v7785 = vpop.f32.mrb[0].mxu0
    %v7786 = vpop.f32.mrb[0].mxu0
    %7787 = vdwg.mxu0
    %7788 = vmatprep.subr.bf16.mxu0 %v5702
    %7789 = vmatpush1.bf16.msra.mxu0 %v5701
    %7790 = vmatprep.subr.bf16.mxu0 %v5706
    %7791 = vmatpush1.bf16.msra.mxu0 %v5705
    %7792 = vmatprep.subr.bf16.mxu0 %v5710
    %7793 = vmatpush1.bf16.msra.mxu0 %v5709
    %7794 = vmatprep.subr.bf16.mxu0 %v5714
    %7795 = vmatpush1.bf16.msra.mxu0 %v5713
    %7796 = vmatprep.subr.bf16.mxu0 %v5718
    %7797 = vmatpush1.bf16.msra.mxu0 %v5717
    %7798 = vmatprep.subr.bf16.mxu0 %v5722
    %7799 = vmatpush1.bf16.msra.mxu0 %v5721
    %7800 = vmatprep.subr.bf16.mxu0 %v5726
    %7801 = vmatpush1.bf16.msra.mxu0 %v5725
    %7802 = vmatprep.subr.bf16.mxu0 %v5730
    %7803 = vmatpush1.bf16.msra.mxu0 %v5729
    %7804 = vmatprep.subr.bf16.mxu0 %v5734
    %7805 = vmatpush1.bf16.msra.mxu0 %v5733
    %7806 = vmatprep.subr.bf16.mxu0 %v5738
    %7807 = vmatpush1.bf16.msra.mxu0 %v5737
    %7808 = vmatprep.subr.bf16.mxu0 %v5742
    %7809 = vmatpush1.bf16.msra.mxu0 %v5741
    %7810 = vmatprep.subr.bf16.mxu0 %v5746
    %7811 = vmatpush1.bf16.msra.mxu0 %v5745
    %7812 = vmatprep.subr.bf16.mxu0 %v5750
    %7813 = vmatpush1.bf16.msra.mxu0 %v5749
    %7814 = vmatprep.subr.bf16.mxu0 %v5754
    %7815 = vmatpush1.bf16.msra.mxu0 %v5753
    %7816 = vmatprep.subr.bf16.mxu0 %v5758
    %7817 = vmatpush1.bf16.msra.mxu0 %v5757
    %7818 = vmatprep.subr.bf16.mxu0 %v5762
    %7819 = vmatpush1.bf16.msra.mxu0 %v5761
    %7820 = vmatprep.mubr.bf16.mxu0 %v1368
    %7821 = vmatmul.mubr.bf16.gmra.mrb[0].mxu0 %v1366
    %v7822 = vpop.f32.mrb[0].mxu0
    %v7823 = vadd.f32 %v7782, %v7822
    %v7824 = vpop.f32.mrb[0].mxu0
    %v7825 = vadd.f32 %v7784, %v7824
    %v7826 = vpop.f32.mrb[0].mxu0
    %v7827 = vpop.f32.mrb[0].mxu0
    %7828 = vdwg.mxu0
    %7829 = vmatprep.subr.bf16.mxu0 %v5766
    %7830 = vmatpush1.bf16.msra.mxu0 %v5765
    %7831 = vmatprep.subr.bf16.mxu0 %v5770
    %7832 = vmatpush1.bf16.msra.mxu0 %v5769
    %7833 = vmatprep.subr.bf16.mxu0 %v5774
    %7834 = vmatpush1.bf16.msra.mxu0 %v5773
    %7835 = vmatprep.subr.bf16.mxu0 %v5778
    %7836 = vmatpush1.bf16.msra.mxu0 %v5777
    %7837 = vmatprep.subr.bf16.mxu0 %v5782
    %7838 = vmatpush1.bf16.msra.mxu0 %v5781
    %7839 = vmatprep.subr.bf16.mxu0 %v5786
    %7840 = vmatpush1.bf16.msra.mxu0 %v5785
    %7841 = vmatprep.subr.bf16.mxu0 %v5790
    %7842 = vmatpush1.bf16.msra.mxu0 %v5789
    %7843 = vmatprep.subr.bf16.mxu0 %v5794
    %7844 = vmatpush1.bf16.msra.mxu0 %v5793
    %7845 = vmatprep.subr.bf16.mxu0 %v5798
    %7846 = vmatpush1.bf16.msra.mxu0 %v5797
    %7847 = vmatprep.subr.bf16.mxu0 %v5802
    %7848 = vmatpush1.bf16.msra.mxu0 %v5801
    %7849 = vmatprep.subr.bf16.mxu0 %v5806
    %7850 = vmatpush1.bf16.msra.mxu0 %v5805
    %7851 = vmatprep.subr.bf16.mxu0 %v5810
    %7852 = vmatpush1.bf16.msra.mxu0 %v5809
    %7853 = vmatprep.subr.bf16.mxu0 %v5814
    %7854 = vmatpush1.bf16.msra.mxu0 %v5813
    %7855 = vmatprep.subr.bf16.mxu0 %v5818
    %7856 = vmatpush1.bf16.msra.mxu0 %v5817
    %7857 = vmatprep.subr.bf16.mxu0 %v5822
    %7858 = vmatpush1.bf16.msra.mxu0 %v5821
    %7859 = vmatprep.subr.bf16.mxu0 %v5826
    %7860 = vmatpush1.bf16.msra.mxu0 %v5825
    %7861 = vmatprep.mubr.bf16.mxu0 %v1406
    %7862 = vmatmul.mubr.bf16.gmra.mrb[0].mxu0 %v1392
    %v7863 = vpop.f32.mrb[0].mxu0
    %v7864 = vadd.f32 %v7823, %v7863
    %v7865 = vpop.f32.mrb[0].mxu0
    %v7866 = vadd.f32 %v7825, %v7865
    %v7867 = vpop.f32.mrb[0].mxu0
    %v7868 = vpop.f32.mrb[0].mxu0
    %7869 = vdwg.mxu0
    %7870 = vmatprep.subr.bf16.mxu0 %v5830
    %7871 = vmatpush1.bf16.msra.mxu0 %v5829
    %7872 = vmatprep.subr.bf16.mxu0 %v5834
    %7873 = vmatpush1.bf16.msra.mxu0 %v5833
    %7874 = vmatprep.subr.bf16.mxu0 %v5838
    %7875 = vmatpush1.bf16.msra.mxu0 %v5837
    %7876 = vmatprep.subr.bf16.mxu0 %v5842
    %7877 = vmatpush1.bf16.msra.mxu0 %v5841
    %7878 = vmatprep.subr.bf16.mxu0 %v5846
    %7879 = vmatpush1.bf16.msra.mxu0 %v5845
    %7880 = vmatprep.subr.bf16.mxu0 %v5850
    %7881 = vmatpush1.bf16.msra.mxu0 %v5849
    %7882 = vmatprep.subr.bf16.mxu0 %v5854
    %7883 = vmatpush1.bf16.msra.mxu0 %v5853
    %7884 = vmatprep.subr.bf16.mxu0 %v5858
    %7885 = vmatpush1.bf16.msra.mxu0 %v5857
    %7886 = vmatprep.subr.bf16.mxu0 %v5862
    %7887 = vmatpush1.bf16.msra.mxu0 %v5861
    %7888 = vmatprep.subr.bf16.mxu0 %v5866
    %7889 = vmatpush1.bf16.msra.mxu0 %v5865
    %7890 = vmatprep.subr.bf16.mxu0 %v5870
    %7891 = vmatpush1.bf16.msra.mxu0 %v5869
    %7892 = vmatprep.subr.bf16.mxu0 %v5874
    %7893 = vmatpush1.bf16.msra.mxu0 %v5873
    %7894 = vmatprep.subr.bf16.mxu0 %v5878
    %7895 = vmatpush1.bf16.msra.mxu0 %v5877
    %7896 = vmatprep.subr.bf16.mxu0 %v5882
    %7897 = vmatpush1.bf16.msra.mxu0 %v5881
    %7898 = vmatprep.subr.bf16.mxu0 %v5886
    %7899 = vmatpush1.bf16.msra.mxu0 %v5885
    %7900 = vmatprep.subr.bf16.mxu0 %v5890
    %7901 = vmatpush1.bf16.msra.mxu0 %v5889
    %7902 = vmatprep.mubr.bf16.mxu0 %v1416
    %7903 = vmatmul.mubr.bf16.gmra.mrb[0].mxu0 %v1414
    %v7904 = vpop.f32.mrb[0].mxu0
    %v7905 = vadd.f32 %v7864, %v7904
    %v7906 = vpop.f32.mrb[0].mxu0
    %v7907 = vadd.f32 %v7866, %v7906
    %v7908 = vpop.f32.mrb[0].mxu0
    %v7909 = vpop.f32.mrb[0].mxu0
    %7910 = vdwg.mxu0
    %7911 = vmatprep.subr.bf16.mxu0 %v5894
    %7912 = vmatpush1.bf16.msra.mxu0 %v5893
    %7913 = vmatprep.subr.bf16.mxu0 %v5898
    %7914 = vmatpush1.bf16.msra.mxu0 %v5897
    %7915 = vmatprep.subr.bf16.mxu0 %v5902
    %7916 = vmatpush1.bf16.msra.mxu0 %v5901
    %7917 = vmatprep.subr.bf16.mxu0 %v5906
    %7918 = vmatpush1.bf16.msra.mxu0 %v5905
    %7919 = vmatprep.subr.bf16.mxu0 %v5910
    %7920 = vmatpush1.bf16.msra.mxu0 %v5909
    %7921 = vmatprep.subr.bf16.mxu0 %v5914
    %7922 = vmatpush1.bf16.msra.mxu0 %v5913
    %7923 = vmatprep.subr.bf16.mxu0 %v5918
    %7924 = vmatpush1.bf16.msra.mxu0 %v5917
    %7925 = vmatprep.subr.bf16.mxu0 %v5922
    %7926 = vmatpush1.bf16.msra.mxu0 %v5921
    %7927 = vmatprep.subr.bf16.mxu0 %v5926
    %7928 = vmatpush1.bf16.msra.mxu0 %v5925
    %7929 = vmatprep.subr.bf16.mxu0 %v5930
    %7930 = vmatpush1.bf16.msra.mxu0 %v5929
    %7931 = vmatprep.subr.bf16.mxu0 %v5934
    %7932 = vmatpush1.bf16.msra.mxu0 %v5933
    %7933 = vmatprep.subr.bf16.mxu0 %v5938
    %7934 = vmatpush1.bf16.msra.mxu0 %v5937
    %7935 = vmatprep.subr.bf16.mxu0 %v5942
    %7936 = vmatpush1.bf16.msra.mxu0 %v5941
    %7937 = vmatprep.subr.bf16.mxu0 %v5946
    %7938 = vmatpush1.bf16.msra.mxu0 %v5945
    %7939 = vmatprep.subr.bf16.mxu0 %v5950
    %7940 = vmatpush1.bf16.msra.mxu0 %v5949
    %7941 = vmatprep.subr.bf16.mxu0 %v5954
    %7942 = vmatpush1.bf16.msra.mxu0 %v5953
    %7943 = vmatprep.mubr.bf16.mxu0 %v1413
    %7944 = vmatmul.mubr.bf16.gmra.mrb[0].mxu0 %v1399
    %v7945 = vpop.f32.mrb[0].mxu0
    %v7946 = vadd.f32 %v7905, %v7945
    %v7947 = vpop.f32.mrb[0].mxu0
    %v7948 = vadd.f32 %v7907, %v7947
    %v7949 = vpop.f32.mrb[0].mxu0
    %v7950 = vpop.f32.mrb[0].mxu0
    %7951 = vdwg.mxu0
    %7952 = vmatprep.subr.bf16.mxu0 %v5958
    %7953 = vmatpush1.bf16.msra.mxu0 %v5957
    %7954 = vmatprep.subr.bf16.mxu0 %v5962
    %7955 = vmatpush1.bf16.msra.mxu0 %v5961
    %7956 = vmatprep.subr.bf16.mxu0 %v5966
    %7957 = vmatpush1.bf16.msra.mxu0 %v5965
    %7958 = vmatprep.subr.bf16.mxu0 %v5970
    %7959 = vmatpush1.bf16.msra.mxu0 %v5969
    %7960 = vmatprep.subr.bf16.mxu0 %v5974
    %7961 = vmatpush1.bf16.msra.mxu0 %v5973
    %7962 = vmatprep.subr.bf16.mxu0 %v5978
    %7963 = vmatpush1.bf16.msra.mxu0 %v5977
    %7964 = vmatprep.subr.bf16.mxu0 %v5982
    %7965 = vmatpush1.bf16.msra.mxu0 %v5981
    %7966 = vmatprep.subr.bf16.mxu0 %v5986
    %7967 = vmatpush1.bf16.msra.mxu0 %v5985
    %7968 = vmatprep.subr.bf16.mxu0 %v5990
    %7969 = vmatpush1.bf16.msra.mxu0 %v5989
    %7970 = vmatprep.subr.bf16.mxu0 %v5994
    %7971 = vmatpush1.bf16.msra.mxu0 %v5993
    %7972 = vmatprep.subr.bf16.mxu0 %v5998
    %7973 = vmatpush1.bf16.msra.mxu0 %v5997
    %7974 = vmatprep.subr.bf16.mxu0 %v6002
    %7975 = vmatpush1.bf16.msra.mxu0 %v6001
    %7976 = vmatprep.subr.bf16.mxu0 %v6006
    %7977 = vmatpush1.bf16.msra.mxu0 %v6005
    %7978 = vmatprep.subr.bf16.mxu0 %v6010
    %7979 = vmatpush1.bf16.msra.mxu0 %v6009
    %7980 = vmatprep.subr.bf16.mxu0 %v6014
    %7981 = vmatpush1.bf16.msra.mxu0 %v6013
    %7982 = vmatprep.subr.bf16.mxu0 %v6018
    %7983 = vmatpush1.bf16.msra.mxu0 %v6017
    %7984 = vmatprep.mubr.bf16.mxu0 %v1417
    %7985 = vmatmul.mubr.bf16.gmra.mrb[0].mxu0 %v1415
    %v7986 = vpop.f32.mrb[0].mxu0
    %v7987 = vadd.f32 %v7946, %v7986
    %v7988 = vpop.f32.mrb[0].mxu0
    %v7989 = vadd.f32 %v7948, %v7988
    %v7990 = vpop.f32.mrb[0].mxu0
    %v7991 = vpop.f32.mrb[0].mxu0
    %7992 = vdwg.mxu0
    %7993 = vmatprep.subr.bf16.mxu0 %v6022
    %7994 = vmatpush1.bf16.msra.mxu0 %v6021
    %7995 = vmatprep.subr.bf16.mxu0 %v6026
    %7996 = vmatpush1.bf16.msra.mxu0 %v6025
    %7997 = vmatprep.subr.bf16.mxu0 %v6030
    %7998 = vmatpush1.bf16.msra.mxu0 %v6029
    %7999 = vmatprep.subr.bf16.mxu0 %v6034
    %8000 = vmatpush1.bf16.msra.mxu0 %v6033
    %8001 = vmatprep.subr.bf16.mxu0 %v6038
    %8002 = vmatpush1.bf16.msra.mxu0 %v6037
    %8003 = vmatprep.subr.bf16.mxu0 %v6042
    %8004 = vmatpush1.bf16.msra.mxu0 %v6041
    %8005 = vmatprep.subr.bf16.mxu0 %v6046
    %8006 = vmatpush1.bf16.msra.mxu0 %v6045
    %8007 = vmatprep.subr.bf16.mxu0 %v6050
    %8008 = vmatpush1.bf16.msra.mxu0 %v6049
    %8009 = vmatprep.subr.bf16.mxu0 %v6054
    %8010 = vmatpush1.bf16.msra.mxu0 %v6053
    %8011 = vmatprep.subr.bf16.mxu0 %v6058
    %8012 = vmatpush1.bf16.msra.mxu0 %v6057
    %8013 = vmatprep.subr.bf16.mxu0 %v6062
    %8014 = vmatpush1.bf16.msra.mxu0 %v6061
    %8015 = vmatprep.subr.bf16.mxu0 %v6066
    %8016 = vmatpush1.bf16.msra.mxu0 %v6065
    %8017 = vmatprep.subr.bf16.mxu0 %v6070
    %8018 = vmatpush1.bf16.msra.mxu0 %v6069
    %8019 = vmatprep.subr.bf16.mxu0 %v6074
    %8020 = vmatpush1.bf16.msra.mxu0 %v6073
    %8021 = vmatprep.subr.bf16.mxu0 %v6078
    %8022 = vmatpush1.bf16.msra.mxu0 %v6077
    %8023 = vmatprep.subr.bf16.mxu0 %v6082
    %8024 = vmatpush1.bf16.msra.mxu0 %v6081
    %8025 = vmatprep.mubr.bf16.mxu0 %v1454
    %8026 = vmatmul.mubr.bf16.gmra.mrb[0].mxu0 %v1440
    %v8027 = vpop.f32.mrb[0].mxu0
    %v8028 = vadd.f32 %v7987, %v8027
    %v8029 = vpop.f32.mrb[0].mxu0
    %v8030 = vadd.f32 %v7989, %v8029
    %v8031 = vpop.f32.mrb[0].mxu0
    %v8032 = vpop.f32.mrb[0].mxu0
    %8033 = vdwg.mxu0
    %8034 = vmatprep.subr.bf16.mxu0 %v6086
    %8035 = vmatpush1.bf16.msra.mxu0 %v6085
    %8036 = vmatprep.subr.bf16.mxu0 %v6090
    %8037 = vmatpush1.bf16.msra.mxu0 %v6089
    %8038 = vmatprep.subr.bf16.mxu0 %v6094
    %8039 = vmatpush1.bf16.msra.mxu0 %v6093
    %8040 = vmatprep.subr.bf16.mxu0 %v6098
    %8041 = vmatpush1.bf16.msra.mxu0 %v6097
    %8042 = vmatprep.subr.bf16.mxu0 %v6102
    %8043 = vmatpush1.bf16.msra.mxu0 %v6101
    %8044 = vmatprep.subr.bf16.mxu0 %v6106
    %8045 = vmatpush1.bf16.msra.mxu0 %v6105
    %8046 = vmatprep.subr.bf16.mxu0 %v6110
    %8047 = vmatpush1.bf16.msra.mxu0 %v6109
    %8048 = vmatprep.subr.bf16.mxu0 %v6114
    %8049 = vmatpush1.bf16.msra.mxu0 %v6113
    %8050 = vmatprep.subr.bf16.mxu0 %v6118
    %8051 = vmatpush1.bf16.msra.mxu0 %v6117
    %8052 = vmatprep.subr.bf16.mxu0 %v6122
    %8053 = vmatpush1.bf16.msra.mxu0 %v6121
    %8054 = vmatprep.subr.bf16.mxu0 %v6126
    %8055 = vmatpush1.bf16.msra.mxu0 %v6125
    %8056 = vmatprep.subr.bf16.mxu0 %v6130
    %8057 = vmatpush1.bf16.msra.mxu0 %v6129
    %8058 = vmatprep.subr.bf16.mxu0 %v6134
    %8059 = vmatpush1.bf16.msra.mxu0 %v6133
    %8060 = vmatprep.subr.bf16.mxu0 %v6138
    %8061 = vmatpush1.bf16.msra.mxu0 %v6137
    %8062 = vmatprep.subr.bf16.mxu0 %v6142
    %8063 = vmatpush1.bf16.msra.mxu0 %v6141
    %8064 = vmatprep.subr.bf16.mxu0 %v6146
    %8065 = vmatpush1.bf16.msra.mxu0 %v6145
    %8066 = vmatprep.mubr.bf16.mxu0 %v1456
    %8067 = vmatmul.mubr.bf16.gmra.mrb[0].mxu0 %v1455
    %v8068 = vpop.f32.mrb[0].mxu0
    %v8069 = vadd.f32 %v8028, %v8068
    %v8070 = vpop.f32.mrb[0].mxu0
    %v8071 = vadd.f32 %v8030, %v8070
    %v8072 = vpop.f32.mrb[0].mxu0
    %v8073 = vpop.f32.mrb[0].mxu0
    %8074 = vdwg.mxu0
    %8075 = vmatprep.subr.bf16.mxu0 %v6150
    %8076 = vmatpush1.bf16.msra.mxu0 %v6149
    %8077 = vmatprep.subr.bf16.mxu0 %v6154
    %8078 = vmatpush1.bf16.msra.mxu0 %v6153
    %8079 = vmatprep.subr.bf16.mxu0 %v6158
    %8080 = vmatpush1.bf16.msra.mxu0 %v6157
    %8081 = vmatprep.subr.bf16.mxu0 %v6162
    %8082 = vmatpush1.bf16.msra.mxu0 %v6161
    %8083 = vmatprep.subr.bf16.mxu0 0
    %8084 = vmatpush1.bf16.msra.mxu0 0
    %8085 = vmatprep.subr.bf16.mxu0 0
    %8086 = vmatpush1.bf16.msra.mxu0 0
    %8087 = vmatprep.subr.bf16.mxu0 0
    %8088 = vmatpush1.bf16.msra.mxu0 0
    %8089 = vmatprep.subr.bf16.mxu0 0
    %8090 = vmatpush1.bf16.msra.mxu0 0
    %8091 = vmatprep.subr.bf16.mxu0 0
    %8092 = vmatpush1.bf16.msra.mxu0 0
    %8093 = vmatprep.subr.bf16.mxu0 0
    %8094 = vmatpush1.bf16.msra.mxu0 0
    %8095 = vmatprep.subr.bf16.mxu0 0
    %8096 = vmatpush1.bf16.msra.mxu0 0
    %8097 = vmatprep.subr.bf16.mxu0 0
    %8098 = vmatpush1.bf16.msra.mxu0 0
    %8099 = vmatprep.subr.bf16.mxu0 0
    %8100 = vmatpush1.bf16.msra.mxu0 0
    %8101 = vmatprep.subr.bf16.mxu0 0
    %8102 = vmatpush1.bf16.msra.mxu0 0
    %8103 = vmatprep.subr.bf16.mxu0 0
    %8104 = vmatpush1.bf16.msra.mxu0 0
    %8105 = vmatprep.subr.bf16.mxu0 0
    %8106 = vmatpush1.bf16.msra.mxu0 0
    %8107 = vmatprep.mubr.bf16.mxu0 0
    %8108 = vmatmul.mubr.bf16.gmra.mrb[0].mxu0 %v7335
    %v8109 = vpop.f32.mrb[0].mxu0
    %v8110 = vadd.f32 %v8069, %v8109
    %v8111 = vpop.f32.mrb[0].mxu0
    %v8112 = vadd.f32 %v8071, %v8111
    %v8113 = vpop.f32.mrb[0].mxu0
    %v8114 = vpop.f32.mrb[0].mxu0
    %8115 = vdwg.mxu0
    %8116 = vmatprep.subr.bf16.mxu0 %v5000
    %8117 = vmatpush1.bf16.msra.mxu0 %v4999
    %8118 = vmatprep.subr.bf16.mxu0 %v5004
    %8119 = vmatpush1.bf16.msra.mxu0 %v5003
    %8120 = vmatprep.subr.bf16.mxu0 %v5008
    %8121 = vmatpush1.bf16.msra.mxu0 %v5007
    %8122 = vmatprep.subr.bf16.mxu0 %v5012
    %8123 = vmatpush1.bf16.msra.mxu0 %v5011
    %8124 = vmatprep.subr.bf16.mxu0 %v5016
    %8125 = vmatpush1.bf16.msra.mxu0 %v5015
    %8126 = vmatprep.subr.bf16.mxu0 %v5020
    %8127 = vmatpush1.bf16.msra.mxu0 %v5019
    %8128 = vmatprep.subr.bf16.mxu0 %v5024
    %8129 = vmatpush1.bf16.msra.mxu0 %v5023
    %8130 = vmatprep.subr.bf16.mxu0 %v5028
    %8131 = vmatpush1.bf16.msra.mxu0 %v5027
    %8132 = vmatprep.subr.bf16.mxu0 %v5032
    %8133 = vmatpush1.bf16.msra.mxu0 %v5031
    %8134 = vmatprep.subr.bf16.mxu0 %v5036
    %8135 = vmatpush1.bf16.msra.mxu0 %v5035
    %8136 = vmatprep.subr.bf16.mxu0 %v5040
    %8137 = vmatpush1.bf16.msra.mxu0 %v5039
    %8138 = vmatprep.subr.bf16.mxu0 %v5044
    %8139 = vmatpush1.bf16.msra.mxu0 %v5043
    %8140 = vmatprep.subr.bf16.mxu0 %v5048
    %8141 = vmatpush1.bf16.msra.mxu0 %v5047
    %8142 = vmatprep.subr.bf16.mxu0 %v5052
    %8143 = vmatpush1.bf16.msra.mxu0 %v5051
    %8144 = vmatprep.subr.bf16.mxu0 %v5056
    %8145 = vmatpush1.bf16.msra.mxu0 %v5055
    %8146 = vmatprep.subr.bf16.mxu0 %v5060
    %8147 = vmatpush1.bf16.msra.mxu0 %v5059
    %8148 = vmatprep.mubr.bf16.mxu0 %v1259
    %8149 = vmatmul.mubr.bf16.gmra.mrb[0].mxu0 %v1245
    %v8150 = vpop.f32.mrb[0].mxu0
    %v8151 = vadd.f32 %v1208, %v8150
    %v8152 = vpop.f32.mrb[0].mxu0
    %v8153 = vadd.f32 %v1212, %v8152
    %v8154 = vpop.f32.mrb[0].mxu0
    %v8155 = vpop.f32.mrb[0].mxu0
    %8156 = vdwg.mxu0
    %8157 = vmatprep.subr.bf16.mxu0 %v5064
    %8158 = vmatpush1.bf16.msra.mxu0 %v5063
    %8159 = vmatprep.subr.bf16.mxu0 %v5068
    %8160 = vmatpush1.bf16.msra.mxu0 %v5067
    %8161 = vmatprep.subr.bf16.mxu0 %v5072
    %8162 = vmatpush1.bf16.msra.mxu0 %v5071
    %8163 = vmatprep.subr.bf16.mxu0 %v5076
    %8164 = vmatpush1.bf16.msra.mxu0 %v5075
    %8165 = vmatprep.subr.bf16.mxu0 %v5080
    %8166 = vmatpush1.bf16.msra.mxu0 %v5079
    %8167 = vmatprep.subr.bf16.mxu0 %v5084
    %8168 = vmatpush1.bf16.msra.mxu0 %v5083
    %8169 = vmatprep.subr.bf16.mxu0 %v5088
    %8170 = vmatpush1.bf16.msra.mxu0 %v5087
    %8171 = vmatprep.subr.bf16.mxu0 %v5092
    %8172 = vmatpush1.bf16.msra.mxu0 %v5091
    %8173 = vmatprep.subr.bf16.mxu0 %v5096
    %8174 = vmatpush1.bf16.msra.mxu0 %v5095
    %8175 = vmatprep.subr.bf16.mxu0 %v5100
    %8176 = vmatpush1.bf16.msra.mxu0 %v5099
    %8177 = vmatprep.subr.bf16.mxu0 %v5104
    %8178 = vmatpush1.bf16.msra.mxu0 %v5103
    %8179 = vmatprep.subr.bf16.mxu0 %v5108
    %8180 = vmatpush1.bf16.msra.mxu0 %v5107
    %8181 = vmatprep.subr.bf16.mxu0 %v5112
    %8182 = vmatpush1.bf16.msra.mxu0 %v5111
    %8183 = vmatprep.subr.bf16.mxu0 %v5116
    %8184 = vmatpush1.bf16.msra.mxu0 %v5115
    %8185 = vmatprep.subr.bf16.mxu0 %v5120
    %8186 = vmatpush1.bf16.msra.mxu0 %v5119
    %8187 = vmatprep.subr.bf16.mxu0 %v5124
    %8188 = vmatpush1.bf16.msra.mxu0 %v5123
    %8189 = vmatprep.mubr.bf16.mxu0 %v1269
    %8190 = vmatmul.mubr.bf16.gmra.mrb[0].mxu0 %v1267
    %v8191 = vpop.f32.mrb[0].mxu0
    %v8192 = vadd.f32 %v8151, %v8191
    %v8193 = vpop.f32.mrb[0].mxu0
    %v8194 = vadd.f32 %v8153, %v8193
    %v8195 = vpop.f32.mrb[0].mxu0
    %v8196 = vpop.f32.mrb[0].mxu0
    %8197 = vdwg.mxu0
    %8198 = vmatprep.subr.bf16.mxu0 %v5128
    %8199 = vmatpush1.bf16.msra.mxu0 %v5127
    %8200 = vmatprep.subr.bf16.mxu0 %v5132
    %8201 = vmatpush1.bf16.msra.mxu0 %v5131
    %8202 = vmatprep.subr.bf16.mxu0 %v5136
    %8203 = vmatpush1.bf16.msra.mxu0 %v5135
    %8204 = vmatprep.subr.bf16.mxu0 %v5140
    %8205 = vmatpush1.bf16.msra.mxu0 %v5139
    %8206 = vmatprep.subr.bf16.mxu0 %v5144
    %8207 = vmatpush1.bf16.msra.mxu0 %v5143
    %8208 = vmatprep.subr.bf16.mxu0 %v5148
    %8209 = vmatpush1.bf16.msra.mxu0 %v5147
    %8210 = vmatprep.subr.bf16.mxu0 %v5152
    %8211 = vmatpush1.bf16.msra.mxu0 %v5151
    %8212 = vmatprep.subr.bf16.mxu0 %v5156
    %8213 = vmatpush1.bf16.msra.mxu0 %v5155
    %8214 = vmatprep.subr.bf16.mxu0 %v5160
    %8215 = vmatpush1.bf16.msra.mxu0 %v5159
    %8216 = vmatprep.subr.bf16.mxu0 %v5164
    %8217 = vmatpush1.bf16.msra.mxu0 %v5163
    %8218 = vmatprep.subr.bf16.mxu0 %v5168
    %8219 = vmatpush1.bf16.msra.mxu0 %v5167
    %8220 = vmatprep.subr.bf16.mxu0 %v5172
    %8221 = vmatpush1.bf16.msra.mxu0 %v5171
    %8222 = vmatprep.subr.bf16.mxu0 %v5176
    %8223 = vmatpush1.bf16.msra.mxu0 %v5175
    %8224 = vmatprep.subr.bf16.mxu0 %v5180
    %8225 = vmatpush1.bf16.msra.mxu0 %v5179
    %8226 = vmatprep.subr.bf16.mxu0 %v5184
    %8227 = vmatpush1.bf16.msra.mxu0 %v5183
    %8228 = vmatprep.subr.bf16.mxu0 %v5188
    %8229 = vmatpush1.bf16.msra.mxu0 %v5187
    %8230 = vmatprep.mubr.bf16.mxu0 %v1266
    %8231 = vmatmul.mubr.bf16.gmra.mrb[0].mxu0 %v1252
    %v8232 = vpop.f32.mrb[0].mxu0
    %v8233 = vadd.f32 %v8192, %v8232
    %v8234 = vpop.f32.mrb[0].mxu0
    %v8235 = vadd.f32 %v8194, %v8234
    %v8236 = vpop.f32.mrb[0].mxu0
    %v8237 = vpop.f32.mrb[0].mxu0
    %8238 = vdwg.mxu0
    %8239 = vmatprep.subr.bf16.mxu0 %v5192
    %8240 = vmatpush1.bf16.msra.mxu0 %v5191
    %8241 = vmatprep.subr.bf16.mxu0 %v5196
    %8242 = vmatpush1.bf16.msra.mxu0 %v5195
    %8243 = vmatprep.subr.bf16.mxu0 %v5200
    %8244 = vmatpush1.bf16.msra.mxu0 %v5199
    %8245 = vmatprep.subr.bf16.mxu0 %v5204
    %8246 = vmatpush1.bf16.msra.mxu0 %v5203
    %8247 = vmatprep.subr.bf16.mxu0 %v5208
    %8248 = vmatpush1.bf16.msra.mxu0 %v5207
    %8249 = vmatprep.subr.bf16.mxu0 %v5212
    %8250 = vmatpush1.bf16.msra.mxu0 %v5211
    %8251 = vmatprep.subr.bf16.mxu0 %v5216
    %8252 = vmatpush1.bf16.msra.mxu0 %v5215
    %8253 = vmatprep.subr.bf16.mxu0 %v5220
    %8254 = vmatpush1.bf16.msra.mxu0 %v5219
    %8255 = vmatprep.subr.bf16.mxu0 %v5224
    %8256 = vmatpush1.bf16.msra.mxu0 %v5223
    %8257 = vmatprep.subr.bf16.mxu0 %v5228
    %8258 = vmatpush1.bf16.msra.mxu0 %v5227
    %8259 = vmatprep.subr.bf16.mxu0 %v5232
    %8260 = vmatpush1.bf16.msra.mxu0 %v5231
    %8261 = vmatprep.subr.bf16.mxu0 %v5236
    %8262 = vmatpush1.bf16.msra.mxu0 %v5235
    %8263 = vmatprep.subr.bf16.mxu0 %v5240
    %8264 = vmatpush1.bf16.msra.mxu0 %v5239
    %8265 = vmatprep.subr.bf16.mxu0 %v5244
    %8266 = vmatpush1.bf16.msra.mxu0 %v5243
    %8267 = vmatprep.subr.bf16.mxu0 %v5248
    %8268 = vmatpush1.bf16.msra.mxu0 %v5247
    %8269 = vmatprep.subr.bf16.mxu0 %v5252
    %8270 = vmatpush1.bf16.msra.mxu0 %v5251
    %8271 = vmatprep.mubr.bf16.mxu0 %v1270
    %8272 = vmatmul.mubr.bf16.gmra.mrb[0].mxu0 %v1268
    %v8273 = vpop.f32.mrb[0].mxu0
    %v8274 = vadd.f32 %v8233, %v8273
    %v8275 = vpop.f32.mrb[0].mxu0
    %v8276 = vadd.f32 %v8235, %v8275
    %v8277 = vpop.f32.mrb[0].mxu0
    %v8278 = vpop.f32.mrb[0].mxu0
    %8279 = vdwg.mxu0
    %8280 = vmatprep.subr.bf16.mxu0 %v5256
    %8281 = vmatpush1.bf16.msra.mxu0 %v5255
    %8282 = vmatprep.subr.bf16.mxu0 %v5260
    %8283 = vmatpush1.bf16.msra.mxu0 %v5259
    %8284 = vmatprep.subr.bf16.mxu0 %v5264
    %8285 = vmatpush1.bf16.msra.mxu0 %v5263
    %8286 = vmatprep.subr.bf16.mxu0 %v5268
    %8287 = vmatpush1.bf16.msra.mxu0 %v5267
    %8288 = vmatprep.subr.bf16.mxu0 %v5272
    %8289 = vmatpush1.bf16.msra.mxu0 %v5271
    %8290 = vmatprep.subr.bf16.mxu0 %v5276
    %8291 = vmatpush1.bf16.msra.mxu0 %v5275
    %8292 = vmatprep.subr.bf16.mxu0 %v5280
    %8293 = vmatpush1.bf16.msra.mxu0 %v5279
    %8294 = vmatprep.subr.bf16.mxu0 %v5284
    %8295 = vmatpush1.bf16.msra.mxu0 %v5283
    %8296 = vmatprep.subr.bf16.mxu0 %v5288
    %8297 = vmatpush1.bf16.msra.mxu0 %v5287
    %8298 = vmatprep.subr.bf16.mxu0 %v5292
    %8299 = vmatpush1.bf16.msra.mxu0 %v5291
    %8300 = vmatprep.subr.bf16.mxu0 %v5296
    %8301 = vmatpush1.bf16.msra.mxu0 %v5295
    %8302 = vmatprep.subr.bf16.mxu0 %v5300
    %8303 = vmatpush1.bf16.msra.mxu0 %v5299
    %8304 = vmatprep.subr.bf16.mxu0 %v5304
    %8305 = vmatpush1.bf16.msra.mxu0 %v5303
    %8306 = vmatprep.subr.bf16.mxu0 %v5308
    %8307 = vmatpush1.bf16.msra.mxu0 %v5307
    %8308 = vmatprep.subr.bf16.mxu0 %v5312
    %8309 = vmatpush1.bf16.msra.mxu0 %v5311
    %8310 = vmatprep.subr.bf16.mxu0 %v5316
    %8311 = vmatpush1.bf16.msra.mxu0 %v5315
    %8312 = vmatprep.mubr.bf16.mxu0 %v1308
    %8313 = vmatmul.mubr.bf16.gmra.mrb[0].mxu0 %v1294
    %v8314 = vpop.f32.mrb[0].mxu0
    %v8315 = vadd.f32 %v8274, %v8314
    %v8316 = vpop.f32.mrb[0].mxu0
    %v8317 = vadd.f32 %v8276, %v8316
    %v8318 = vpop.f32.mrb[0].mxu0
    %v8319 = vpop.f32.mrb[0].mxu0
    %8320 = vdwg.mxu0
    %8321 = vmatprep.subr.bf16.mxu0 %v5320
    %8322 = vmatpush1.bf16.msra.mxu0 %v5319
    %8323 = vmatprep.subr.bf16.mxu0 %v5324
    %8324 = vmatpush1.bf16.msra.mxu0 %v5323
    %8325 = vmatprep.subr.bf16.mxu0 %v5328
    %8326 = vmatpush1.bf16.msra.mxu0 %v5327
    %8327 = vmatprep.subr.bf16.mxu0 %v5332
    %8328 = vmatpush1.bf16.msra.mxu0 %v5331
    %8329 = vmatprep.subr.bf16.mxu0 %v5336
    %8330 = vmatpush1.bf16.msra.mxu0 %v5335
    %8331 = vmatprep.subr.bf16.mxu0 %v5340
    %8332 = vmatpush1.bf16.msra.mxu0 %v5339
    %8333 = vmatprep.subr.bf16.mxu0 %v5344
    %8334 = vmatpush1.bf16.msra.mxu0 %v5343
    %8335 = vmatprep.subr.bf16.mxu0 %v5348
    %8336 = vmatpush1.bf16.msra.mxu0 %v5347
    %8337 = vmatprep.subr.bf16.mxu0 %v5352
    %8338 = vmatpush1.bf16.msra.mxu0 %v5351
    %8339 = vmatprep.subr.bf16.mxu0 %v5356
    %8340 = vmatpush1.bf16.msra.mxu0 %v5355
    %8341 = vmatprep.subr.bf16.mxu0 %v5360
    %8342 = vmatpush1.bf16.msra.mxu0 %v5359
    %8343 = vmatprep.subr.bf16.mxu0 %v5364
    %8344 = vmatpush1.bf16.msra.mxu0 %v5363
    %8345 = vmatprep.subr.bf16.mxu0 %v5368
    %8346 = vmatpush1.bf16.msra.mxu0 %v5367
    %8347 = vmatprep.subr.bf16.mxu0 %v5372
    %8348 = vmatpush1.bf16.msra.mxu0 %v5371
    %8349 = vmatprep.subr.bf16.mxu0 %v5376
    %8350 = vmatpush1.bf16.msra.mxu0 %v5375
    %8351 = vmatprep.subr.bf16.mxu0 %v5380
    %8352 = vmatpush1.bf16.msra.mxu0 %v5379
    %8353 = vmatprep.mubr.bf16.mxu0 %v1318
    %8354 = vmatmul.mubr.bf16.gmra.mrb[0].mxu0 %v1316
    %v8355 = vpop.f32.mrb[0].mxu0
    %v8356 = vadd.f32 %v8315, %v8355
    %v8357 = vpop.f32.mrb[0].mxu0
    %v8358 = vadd.f32 %v8317, %v8357
    %v8359 = vpop.f32.mrb[0].mxu0
    %v8360 = vpop.f32.mrb[0].mxu0
    %8361 = vdwg.mxu0
    %8362 = vmatprep.subr.bf16.mxu0 %v5384
    %8363 = vmatpush1.bf16.msra.mxu0 %v5383
    %8364 = vmatprep.subr.bf16.mxu0 %v5388
    %8365 = vmatpush1.bf16.msra.mxu0 %v5387
    %8366 = vmatprep.subr.bf16.mxu0 %v5392
    %8367 = vmatpush1.bf16.msra.mxu0 %v5391
    %8368 = vmatprep.subr.bf16.mxu0 %v5396
    %8369 = vmatpush1.bf16.msra.mxu0 %v5395
    %8370 = vmatprep.subr.bf16.mxu0 %v5400
    %8371 = vmatpush1.bf16.msra.mxu0 %v5399
    %8372 = vmatprep.subr.bf16.mxu0 %v5404
    %8373 = vmatpush1.bf16.msra.mxu0 %v5403
    %8374 = vmatprep.subr.bf16.mxu0 %v5408
    %8375 = vmatpush1.bf16.msra.mxu0 %v5407
    %8376 = vmatprep.subr.bf16.mxu0 %v5412
    %8377 = vmatpush1.bf16.msra.mxu0 %v5411
    %8378 = vmatprep.subr.bf16.mxu0 %v5416
    %8379 = vmatpush1.bf16.msra.mxu0 %v5415
    %8380 = vmatprep.subr.bf16.mxu0 %v5420
    %8381 = vmatpush1.bf16.msra.mxu0 %v5419
    %8382 = vmatprep.subr.bf16.mxu0 %v5424
    %8383 = vmatpush1.bf16.msra.mxu0 %v5423
    %8384 = vmatprep.subr.bf16.mxu0 %v5428
    %8385 = vmatpush1.bf16.msra.mxu0 %v5427
    %8386 = vmatprep.subr.bf16.mxu0 %v5432
    %8387 = vmatpush1.bf16.msra.mxu0 %v5431
    %8388 = vmatprep.subr.bf16.mxu0 %v5436
    %8389 = vmatpush1.bf16.msra.mxu0 %v5435
    %8390 = vmatprep.subr.bf16.mxu0 %v5440
    %8391 = vmatpush1.bf16.msra.mxu0 %v5439
    %8392 = vmatprep.subr.bf16.mxu0 %v5444
    %8393 = vmatpush1.bf16.msra.mxu0 %v5443
    %8394 = vmatprep.mubr.bf16.mxu0 %v1315
    %8395 = vmatmul.mubr.bf16.gmra.mrb[0].mxu0 %v1301
    %v8396 = vpop.f32.mrb[0].mxu0
    %v8397 = vadd.f32 %v8356, %v8396
    %v8398 = vpop.f32.mrb[0].mxu0
    %v8399 = vadd.f32 %v8358, %v8398
    %v8400 = vpop.f32.mrb[0].mxu0
    %v8401 = vpop.f32.mrb[0].mxu0
    %8402 = vdwg.mxu0
    %8403 = vmatprep.subr.bf16.mxu0 %v5448
    %8404 = vmatpush1.bf16.msra.mxu0 %v5447
    %8405 = vmatprep.subr.bf16.mxu0 %v5452
    %8406 = vmatpush1.bf16.msra.mxu0 %v5451
    %8407 = vmatprep.subr.bf16.mxu0 %v5456
    %8408 = vmatpush1.bf16.msra.mxu0 %v5455
    %8409 = vmatprep.subr.bf16.mxu0 %v5460
    %8410 = vmatpush1.bf16.msra.mxu0 %v5459
    %8411 = vmatprep.subr.bf16.mxu0 %v5464
    %8412 = vmatpush1.bf16.msra.mxu0 %v5463
    %8413 = vmatprep.subr.bf16.mxu0 %v5468
    %8414 = vmatpush1.bf16.msra.mxu0 %v5467
    %8415 = vmatprep.subr.bf16.mxu0 %v5472
    %8416 = vmatpush1.bf16.msra.mxu0 %v5471
    %8417 = vmatprep.subr.bf16.mxu0 %v5476
    %8418 = vmatpush1.bf16.msra.mxu0 %v5475
    %8419 = vmatprep.subr.bf16.mxu0 %v5480
    %8420 = vmatpush1.bf16.msra.mxu0 %v5479
    %8421 = vmatprep.subr.bf16.mxu0 %v5484
    %8422 = vmatpush1.bf16.msra.mxu0 %v5483
    %8423 = vmatprep.subr.bf16.mxu0 %v5488
    %8424 = vmatpush1.bf16.msra.mxu0 %v5487
    %8425 = vmatprep.subr.bf16.mxu0 %v5492
    %8426 = vmatpush1.bf16.msra.mxu0 %v5491
    %8427 = vmatprep.subr.bf16.mxu0 %v5496
    %8428 = vmatpush1.bf16.msra.mxu0 %v5495
    %8429 = vmatprep.subr.bf16.mxu0 %v5500
    %8430 = vmatpush1.bf16.msra.mxu0 %v5499
    %8431 = vmatprep.subr.bf16.mxu0 %v5504
    %8432 = vmatpush1.bf16.msra.mxu0 %v5503
    %8433 = vmatprep.subr.bf16.mxu0 %v5508
    %8434 = vmatpush1.bf16.msra.mxu0 %v5507
    %8435 = vmatprep.mubr.bf16.mxu0 %v1319
    %8436 = vmatmul.mubr.bf16.gmra.mrb[0].mxu0 %v1317
    %v8437 = vpop.f32.mrb[0].mxu0
    %v8438 = vadd.f32 %v8397, %v8437
    %v8439 = vpop.f32.mrb[0].mxu0
    %v8440 = vadd.f32 %v8399, %v8439
    %v8441 = vpop.f32.mrb[0].mxu0
    %v8442 = vpop.f32.mrb[0].mxu0
    %8443 = vdwg.mxu0
    %8444 = vmatprep.subr.bf16.mxu0 %v5512
    %8445 = vmatpush1.bf16.msra.mxu0 %v5511
    %8446 = vmatprep.subr.bf16.mxu0 %v5516
    %8447 = vmatpush1.bf16.msra.mxu0 %v5515
    %8448 = vmatprep.subr.bf16.mxu0 %v5520
    %8449 = vmatpush1.bf16.msra.mxu0 %v5519
    %8450 = vmatprep.subr.bf16.mxu0 %v5524
    %8451 = vmatpush1.bf16.msra.mxu0 %v5523
    %8452 = vmatprep.subr.bf16.mxu0 %v5528
    %8453 = vmatpush1.bf16.msra.mxu0 %v5527
    %8454 = vmatprep.subr.bf16.mxu0 %v5532
    %8455 = vmatpush1.bf16.msra.mxu0 %v5531
    %8456 = vmatprep.subr.bf16.mxu0 %v5536
    %8457 = vmatpush1.bf16.msra.mxu0 %v5535
    %8458 = vmatprep.subr.bf16.mxu0 %v5540
    %8459 = vmatpush1.bf16.msra.mxu0 %v5539
    %8460 = vmatprep.subr.bf16.mxu0 %v5544
    %8461 = vmatpush1.bf16.msra.mxu0 %v5543
    %8462 = vmatprep.subr.bf16.mxu0 %v5548
    %8463 = vmatpush1.bf16.msra.mxu0 %v5547
    %8464 = vmatprep.subr.bf16.mxu0 %v5552
    %8465 = vmatpush1.bf16.msra.mxu0 %v5551
    %8466 = vmatprep.subr.bf16.mxu0 %v5556
    %8467 = vmatpush1.bf16.msra.mxu0 %v5555
    %8468 = vmatprep.subr.bf16.mxu0 %v5560
    %8469 = vmatpush1.bf16.msra.mxu0 %v5559
    %8470 = vmatprep.subr.bf16.mxu0 %v5564
    %8471 = vmatpush1.bf16.msra.mxu0 %v5563
    %8472 = vmatprep.subr.bf16.mxu0 %v5568
    %8473 = vmatpush1.bf16.msra.mxu0 %v5567
    %8474 = vmatprep.subr.bf16.mxu0 %v5572
    %8475 = vmatpush1.bf16.msra.mxu0 %v5571
    %8476 = vmatprep.mubr.bf16.mxu0 %v1357
    %8477 = vmatmul.mubr.bf16.gmra.mrb[0].mxu0 %v1343
    %v8478 = vpop.f32.mrb[0].mxu0
    %v8479 = vadd.f32 %v8438, %v8478
    %v8480 = vpop.f32.mrb[0].mxu0
    %v8481 = vadd.f32 %v8440, %v8480
    %v8482 = vpop.f32.mrb[0].mxu0
    %v8483 = vpop.f32.mrb[0].mxu0
    %8484 = vdwg.mxu0
    %8485 = vmatprep.subr.bf16.mxu0 %v5576
    %8486 = vmatpush1.bf16.msra.mxu0 %v5575
    %8487 = vmatprep.subr.bf16.mxu0 %v5580
    %8488 = vmatpush1.bf16.msra.mxu0 %v5579
    %8489 = vmatprep.subr.bf16.mxu0 %v5584
    %8490 = vmatpush1.bf16.msra.mxu0 %v5583
    %8491 = vmatprep.subr.bf16.mxu0 %v5588
    %8492 = vmatpush1.bf16.msra.mxu0 %v5587
    %8493 = vmatprep.subr.bf16.mxu0 %v5592
    %8494 = vmatpush1.bf16.msra.mxu0 %v5591
    %8495 = vmatprep.subr.bf16.mxu0 %v5596
    %8496 = vmatpush1.bf16.msra.mxu0 %v5595
    %8497 = vmatprep.subr.bf16.mxu0 %v5600
    %8498 = vmatpush1.bf16.msra.mxu0 %v5599
    %8499 = vmatprep.subr.bf16.mxu0 %v5604
    %8500 = vmatpush1.bf16.msra.mxu0 %v5603
    %8501 = vmatprep.subr.bf16.mxu0 %v5608
    %8502 = vmatpush1.bf16.msra.mxu0 %v5607
    %8503 = vmatprep.subr.bf16.mxu0 %v5612
    %8504 = vmatpush1.bf16.msra.mxu0 %v5611
    %8505 = vmatprep.subr.bf16.mxu0 %v5616
    %8506 = vmatpush1.bf16.msra.mxu0 %v5615
    %8507 = vmatprep.subr.bf16.mxu0 %v5620
    %8508 = vmatpush1.bf16.msra.mxu0 %v5619
    %8509 = vmatprep.subr.bf16.mxu0 %v5624
    %8510 = vmatpush1.bf16.msra.mxu0 %v5623
    %8511 = vmatprep.subr.bf16.mxu0 %v5628
    %8512 = vmatpush1.bf16.msra.mxu0 %v5627
    %8513 = vmatprep.subr.bf16.mxu0 %v5632
    %8514 = vmatpush1.bf16.msra.mxu0 %v5631
    %8515 = vmatprep.subr.bf16.mxu0 %v5636
    %8516 = vmatpush1.bf16.msra.mxu0 %v5635
    %8517 = vmatprep.mubr.bf16.mxu0 %v1367
    %8518 = vmatmul.mubr.bf16.gmra.mrb[0].mxu0 %v1365
    %v8519 = vpop.f32.mrb[0].mxu0
    %v8520 = vadd.f32 %v8479, %v8519
    %v8521 = vpop.f32.mrb[0].mxu0
    %v8522 = vadd.f32 %v8481, %v8521
    %v8523 = vpop.f32.mrb[0].mxu0
    %v8524 = vpop.f32.mrb[0].mxu0
    %8525 = vdwg.mxu0
    %8526 = vmatprep.subr.bf16.mxu0 %v5640
    %8527 = vmatpush1.bf16.msra.mxu0 %v5639
    %8528 = vmatprep.subr.bf16.mxu0 %v5644
    %8529 = vmatpush1.bf16.msra.mxu0 %v5643
    %8530 = vmatprep.subr.bf16.mxu0 %v5648
    %8531 = vmatpush1.bf16.msra.mxu0 %v5647
    %8532 = vmatprep.subr.bf16.mxu0 %v5652
    %8533 = vmatpush1.bf16.msra.mxu0 %v5651
    %8534 = vmatprep.subr.bf16.mxu0 %v5656
    %8535 = vmatpush1.bf16.msra.mxu0 %v5655
    %8536 = vmatprep.subr.bf16.mxu0 %v5660
    %8537 = vmatpush1.bf16.msra.mxu0 %v5659
    %8538 = vmatprep.subr.bf16.mxu0 %v5664
    %8539 = vmatpush1.bf16.msra.mxu0 %v5663
    %8540 = vmatprep.subr.bf16.mxu0 %v5668
    %8541 = vmatpush1.bf16.msra.mxu0 %v5667
    %8542 = vmatprep.subr.bf16.mxu0 %v5672
    %8543 = vmatpush1.bf16.msra.mxu0 %v5671
    %8544 = vmatprep.subr.bf16.mxu0 %v5676
    %8545 = vmatpush1.bf16.msra.mxu0 %v5675
    %8546 = vmatprep.subr.bf16.mxu0 %v5680
    %8547 = vmatpush1.bf16.msra.mxu0 %v5679
    %8548 = vmatprep.subr.bf16.mxu0 %v5684
    %8549 = vmatpush1.bf16.msra.mxu0 %v5683
    %8550 = vmatprep.subr.bf16.mxu0 %v5688
    %8551 = vmatpush1.bf16.msra.mxu0 %v5687
    %8552 = vmatprep.subr.bf16.mxu0 %v5692
    %8553 = vmatpush1.bf16.msra.mxu0 %v5691
    %8554 = vmatprep.subr.bf16.mxu0 %v5696
    %8555 = vmatpush1.bf16.msra.mxu0 %v5695
    %8556 = vmatprep.subr.bf16.mxu0 %v5700
    %8557 = vmatpush1.bf16.msra.mxu0 %v5699
    %8558 = vmatprep.mubr.bf16.mxu0 %v1364
    %8559 = vmatmul.mubr.bf16.gmra.mrb[0].mxu0 %v1350
    %v8560 = vpop.f32.mrb[0].mxu0
    %v8561 = vadd.f32 %v8520, %v8560
    %v8562 = vpop.f32.mrb[0].mxu0
    %v8563 = vadd.f32 %v8522, %v8562
    %v8564 = vpop.f32.mrb[0].mxu0
    %v8565 = vpop.f32.mrb[0].mxu0
    %8566 = vdwg.mxu0
    %8567 = vmatprep.subr.bf16.mxu0 %v5704
    %8568 = vmatpush1.bf16.msra.mxu0 %v5703
    %8569 = vmatprep.subr.bf16.mxu0 %v5708
    %8570 = vmatpush1.bf16.msra.mxu0 %v5707
    %8571 = vmatprep.subr.bf16.mxu0 %v5712
    %8572 = vmatpush1.bf16.msra.mxu0 %v5711
    %8573 = vmatprep.subr.bf16.mxu0 %v5716
    %8574 = vmatpush1.bf16.msra.mxu0 %v5715
    %8575 = vmatprep.subr.bf16.mxu0 %v5720
    %8576 = vmatpush1.bf16.msra.mxu0 %v5719
    %8577 = vmatprep.subr.bf16.mxu0 %v5724
    %8578 = vmatpush1.bf16.msra.mxu0 %v5723
    %8579 = vmatprep.subr.bf16.mxu0 %v5728
    %8580 = vmatpush1.bf16.msra.mxu0 %v5727
    %8581 = vmatprep.subr.bf16.mxu0 %v5732
    %8582 = vmatpush1.bf16.msra.mxu0 %v5731
    %8583 = vmatprep.subr.bf16.mxu0 %v5736
    %8584 = vmatpush1.bf16.msra.mxu0 %v5735
    %8585 = vmatprep.subr.bf16.mxu0 %v5740
    %8586 = vmatpush1.bf16.msra.mxu0 %v5739
    %8587 = vmatprep.subr.bf16.mxu0 %v5744
    %8588 = vmatpush1.bf16.msra.mxu0 %v5743
    %8589 = vmatprep.subr.bf16.mxu0 %v5748
    %8590 = vmatpush1.bf16.msra.mxu0 %v5747
    %8591 = vmatprep.subr.bf16.mxu0 %v5752
    %8592 = vmatpush1.bf16.msra.mxu0 %v5751
    %8593 = vmatprep.subr.bf16.mxu0 %v5756
    %8594 = vmatpush1.bf16.msra.mxu0 %v5755
    %8595 = vmatprep.subr.bf16.mxu0 %v5760
    %8596 = vmatpush1.bf16.msra.mxu0 %v5759
    %8597 = vmatprep.subr.bf16.mxu0 %v5764
    %8598 = vmatpush1.bf16.msra.mxu0 %v5763
    %8599 = vmatprep.mubr.bf16.mxu0 %v1368
    %8600 = vmatmul.mubr.bf16.gmra.mrb[0].mxu0 %v1366
    %v8601 = vpop.f32.mrb[0].mxu0
    %v8602 = vadd.f32 %v8561, %v8601
    %v8603 = vpop.f32.mrb[0].mxu0
    %v8604 = vadd.f32 %v8563, %v8603
    %v8605 = vpop.f32.mrb[0].mxu0
    %v8606 = vpop.f32.mrb[0].mxu0
    %8607 = vdwg.mxu0
    %8608 = vmatprep.subr.bf16.mxu0 %v5768
    %8609 = vmatpush1.bf16.msra.mxu0 %v5767
    %8610 = vmatprep.subr.bf16.mxu0 %v5772
    %8611 = vmatpush1.bf16.msra.mxu0 %v5771
    %8612 = vmatprep.subr.bf16.mxu0 %v5776
    %8613 = vmatpush1.bf16.msra.mxu0 %v5775
    %8614 = vmatprep.subr.bf16.mxu0 %v5780
    %8615 = vmatpush1.bf16.msra.mxu0 %v5779
    %8616 = vmatprep.subr.bf16.mxu0 %v5784
    %8617 = vmatpush1.bf16.msra.mxu0 %v5783
    %8618 = vmatprep.subr.bf16.mxu0 %v5788
    %8619 = vmatpush1.bf16.msra.mxu0 %v5787
    %8620 = vmatprep.subr.bf16.mxu0 %v5792
    %8621 = vmatpush1.bf16.msra.mxu0 %v5791
    %8622 = vmatprep.subr.bf16.mxu0 %v5796
    %8623 = vmatpush1.bf16.msra.mxu0 %v5795
    %8624 = vmatprep.subr.bf16.mxu0 %v5800
    %8625 = vmatpush1.bf16.msra.mxu0 %v5799
    %8626 = vmatprep.subr.bf16.mxu0 %v5804
    %8627 = vmatpush1.bf16.msra.mxu0 %v5803
    %8628 = vmatprep.subr.bf16.mxu0 %v5808
    %8629 = vmatpush1.bf16.msra.mxu0 %v5807
    %8630 = vmatprep.subr.bf16.mxu0 %v5812
    %8631 = vmatpush1.bf16.msra.mxu0 %v5811
    %8632 = vmatprep.subr.bf16.mxu0 %v5816
    %8633 = vmatpush1.bf16.msra.mxu0 %v5815
    %8634 = vmatprep.subr.bf16.mxu0 %v5820
    %8635 = vmatpush1.bf16.msra.mxu0 %v5819
    %8636 = vmatprep.subr.bf16.mxu0 %v5824
    %8637 = vmatpush1.bf16.msra.mxu0 %v5823
    %8638 = vmatprep.subr.bf16.mxu0 %v5828
    %8639 = vmatpush1.bf16.msra.mxu0 %v5827
    %8640 = vmatprep.mubr.bf16.mxu0 %v1406
    %8641 = vmatmul.mubr.bf16.gmra.mrb[0].mxu0 %v1392
    %v8642 = vpop.f32.mrb[0].mxu0
    %v8643 = vadd.f32 %v8602, %v8642
    %v8644 = vpop.f32.mrb[0].mxu0
    %v8645 = vadd.f32 %v8604, %v8644
    %v8646 = vpop.f32.mrb[0].mxu0
    %v8647 = vpop.f32.mrb[0].mxu0
    %8648 = vdwg.mxu0
    %8649 = vmatprep.subr.bf16.mxu0 %v5832
    %8650 = vmatpush1.bf16.msra.mxu0 %v5831
    %8651 = vmatprep.subr.bf16.mxu0 %v5836
    %8652 = vmatpush1.bf16.msra.mxu0 %v5835
    %8653 = vmatprep.subr.bf16.mxu0 %v5840
    %8654 = vmatpush1.bf16.msra.mxu0 %v5839
    %8655 = vmatprep.subr.bf16.mxu0 %v5844
    %8656 = vmatpush1.bf16.msra.mxu0 %v5843
    %8657 = vmatprep.subr.bf16.mxu0 %v5848
    %8658 = vmatpush1.bf16.msra.mxu0 %v5847
    %8659 = vmatprep.subr.bf16.mxu0 %v5852
    %8660 = vmatpush1.bf16.msra.mxu0 %v5851
    %8661 = vmatprep.subr.bf16.mxu0 %v5856
    %8662 = vmatpush1.bf16.msra.mxu0 %v5855
    %8663 = vmatprep.subr.bf16.mxu0 %v5860
    %8664 = vmatpush1.bf16.msra.mxu0 %v5859
    %8665 = vmatprep.subr.bf16.mxu0 %v5864
    %8666 = vmatpush1.bf16.msra.mxu0 %v5863
    %8667 = vmatprep.subr.bf16.mxu0 %v5868
    %8668 = vmatpush1.bf16.msra.mxu0 %v5867
    %8669 = vmatprep.subr.bf16.mxu0 %v5872
    %8670 = vmatpush1.bf16.msra.mxu0 %v5871
    %8671 = vmatprep.subr.bf16.mxu0 %v5876
    %8672 = vmatpush1.bf16.msra.mxu0 %v5875
    %8673 = vmatprep.subr.bf16.mxu0 %v5880
    %8674 = vmatpush1.bf16.msra.mxu0 %v5879
    %8675 = vmatprep.subr.bf16.mxu0 %v5884
    %8676 = vmatpush1.bf16.msra.mxu0 %v5883
    %8677 = vmatprep.subr.bf16.mxu0 %v5888
    %8678 = vmatpush1.bf16.msra.mxu0 %v5887
    %8679 = vmatprep.subr.bf16.mxu0 %v5892
    %8680 = vmatpush1.bf16.msra.mxu0 %v5891
    %8681 = vmatprep.mubr.bf16.mxu0 %v1416
    %8682 = vmatmul.mubr.bf16.gmra.mrb[0].mxu0 %v1414
    %v8683 = vpop.f32.mrb[0].mxu0
    %v8684 = vadd.f32 %v8643, %v8683
    %v8685 = vpop.f32.mrb[0].mxu0
    %v8686 = vadd.f32 %v8645, %v8685
    %v8687 = vpop.f32.mrb[0].mxu0
    %v8688 = vpop.f32.mrb[0].mxu0
    %8689 = vdwg.mxu0
    %8690 = vmatprep.subr.bf16.mxu0 %v5896
    %8691 = vmatpush1.bf16.msra.mxu0 %v5895
    %8692 = vmatprep.subr.bf16.mxu0 %v5900
    %8693 = vmatpush1.bf16.msra.mxu0 %v5899
    %8694 = vmatprep.subr.bf16.mxu0 %v5904
    %8695 = vmatpush1.bf16.msra.mxu0 %v5903
    %8696 = vmatprep.subr.bf16.mxu0 %v5908
    %8697 = vmatpush1.bf16.msra.mxu0 %v5907
    %8698 = vmatprep.subr.bf16.mxu0 %v5912
    %8699 = vmatpush1.bf16.msra.mxu0 %v5911
    %8700 = vmatprep.subr.bf16.mxu0 %v5916
    %8701 = vmatpush1.bf16.msra.mxu0 %v5915
    %8702 = vmatprep.subr.bf16.mxu0 %v5920
    %8703 = vmatpush1.bf16.msra.mxu0 %v5919
    %8704 = vmatprep.subr.bf16.mxu0 %v5924
    %8705 = vmatpush1.bf16.msra.mxu0 %v5923
    %8706 = vmatprep.subr.bf16.mxu0 %v5928
    %8707 = vmatpush1.bf16.msra.mxu0 %v5927
    %8708 = vmatprep.subr.bf16.mxu0 %v5932
    %8709 = vmatpush1.bf16.msra.mxu0 %v5931
    %8710 = vmatprep.subr.bf16.mxu0 %v5936
    %8711 = vmatpush1.bf16.msra.mxu0 %v5935
    %8712 = vmatprep.subr.bf16.mxu0 %v5940
    %8713 = vmatpush1.bf16.msra.mxu0 %v5939
    %8714 = vmatprep.subr.bf16.mxu0 %v5944
    %8715 = vmatpush1.bf16.msra.mxu0 %v5943
    %8716 = vmatprep.subr.bf16.mxu0 %v5948
    %8717 = vmatpush1.bf16.msra.mxu0 %v5947
    %8718 = vmatprep.subr.bf16.mxu0 %v5952
    %8719 = vmatpush1.bf16.msra.mxu0 %v5951
    %8720 = vmatprep.subr.bf16.mxu0 %v5956
    %8721 = vmatpush1.bf16.msra.mxu0 %v5955
    %8722 = vmatprep.mubr.bf16.mxu0 %v1413
    %8723 = vmatmul.mubr.bf16.gmra.mrb[0].mxu0 %v1399
    %v8724 = vpop.f32.mrb[0].mxu0
    %v8725 = vadd.f32 %v8684, %v8724
    %v8726 = vpop.f32.mrb[0].mxu0
    %v8727 = vadd.f32 %v8686, %v8726
    %v8728 = vpop.f32.mrb[0].mxu0
    %v8729 = vpop.f32.mrb[0].mxu0
    %8730 = vdwg.mxu0
    %8731 = vmatprep.subr.bf16.mxu0 %v5960
    %8732 = vmatpush1.bf16.msra.mxu0 %v5959
    %8733 = vmatprep.subr.bf16.mxu0 %v5964
    %8734 = vmatpush1.bf16.msra.mxu0 %v5963
    %8735 = vmatprep.subr.bf16.mxu0 %v5968
    %8736 = vmatpush1.bf16.msra.mxu0 %v5967
    %8737 = vmatprep.subr.bf16.mxu0 %v5972
    %8738 = vmatpush1.bf16.msra.mxu0 %v5971
    %8739 = vmatprep.subr.bf16.mxu0 %v5976
    %8740 = vmatpush1.bf16.msra.mxu0 %v5975
    %8741 = vmatprep.subr.bf16.mxu0 %v5980
    %8742 = vmatpush1.bf16.msra.mxu0 %v5979
    %8743 = vmatprep.subr.bf16.mxu0 %v5984
    %8744 = vmatpush1.bf16.msra.mxu0 %v5983
    %8745 = vmatprep.subr.bf16.mxu0 %v5988
    %8746 = vmatpush1.bf16.msra.mxu0 %v5987
    %8747 = vmatprep.subr.bf16.mxu0 %v5992
    %8748 = vmatpush1.bf16.msra.mxu0 %v5991
    %8749 = vmatprep.subr.bf16.mxu0 %v5996
    %8750 = vmatpush1.bf16.msra.mxu0 %v5995
    %8751 = vmatprep.subr.bf16.mxu0 %v6000
    %8752 = vmatpush1.bf16.msra.mxu0 %v5999
    %8753 = vmatprep.subr.bf16.mxu0 %v6004
    %8754 = vmatpush1.bf16.msra.mxu0 %v6003
    %8755 = vmatprep.subr.bf16.mxu0 %v6008
    %8756 = vmatpush1.bf16.msra.mxu0 %v6007
    %8757 = vmatprep.subr.bf16.mxu0 %v6012
    %8758 = vmatpush1.bf16.msra.mxu0 %v6011
    %8759 = vmatprep.subr.bf16.mxu0 %v6016
    %8760 = vmatpush1.bf16.msra.mxu0 %v6015
    %8761 = vmatprep.subr.bf16.mxu0 %v6020
    %8762 = vmatpush1.bf16.msra.mxu0 %v6019
    %8763 = vmatprep.mubr.bf16.mxu0 %v1417
    %8764 = vmatmul.mubr.bf16.gmra.mrb[0].mxu0 %v1415
    %v8765 = vpop.f32.mrb[0].mxu0
    %v8766 = vadd.f32 %v8725, %v8765
    %v8767 = vpop.f32.mrb[0].mxu0
    %v8768 = vadd.f32 %v8727, %v8767
    %v8769 = vpop.f32.mrb[0].mxu0
    %v8770 = vpop.f32.mrb[0].mxu0
    %8771 = vdwg.mxu0
    %8772 = vmatprep.subr.bf16.mxu0 %v6024
    %8773 = vmatpush1.bf16.msra.mxu0 %v6023
    %8774 = vmatprep.subr.bf16.mxu0 %v6028
    %8775 = vmatpush1.bf16.msra.mxu0 %v6027
    %8776 = vmatprep.subr.bf16.mxu0 %v6032
    %8777 = vmatpush1.bf16.msra.mxu0 %v6031
    %8778 = vmatprep.subr.bf16.mxu0 %v6036
    %8779 = vmatpush1.bf16.msra.mxu0 %v6035
    %8780 = vmatprep.subr.bf16.mxu0 %v6040
    %8781 = vmatpush1.bf16.msra.mxu0 %v6039
    %8782 = vmatprep.subr.bf16.mxu0 %v6044
    %8783 = vmatpush1.bf16.msra.mxu0 %v6043
    %8784 = vmatprep.subr.bf16.mxu0 %v6048
    %8785 = vmatpush1.bf16.msra.mxu0 %v6047
    %8786 = vmatprep.subr.bf16.mxu0 %v6052
    %8787 = vmatpush1.bf16.msra.mxu0 %v6051
    %8788 = vmatprep.subr.bf16.mxu0 %v6056
    %8789 = vmatpush1.bf16.msra.mxu0 %v6055
    %8790 = vmatprep.subr.bf16.mxu0 %v6060
    %8791 = vmatpush1.bf16.msra.mxu0 %v6059
    %8792 = vmatprep.subr.bf16.mxu0 %v6064
    %8793 = vmatpush1.bf16.msra.mxu0 %v6063
    %8794 = vmatprep.subr.bf16.mxu0 %v6068
    %8795 = vmatpush1.bf16.msra.mxu0 %v6067
    %8796 = vmatprep.subr.bf16.mxu0 %v6072
    %8797 = vmatpush1.bf16.msra.mxu0 %v6071
    %8798 = vmatprep.subr.bf16.mxu0 %v6076
    %8799 = vmatpush1.bf16.msra.mxu0 %v6075
    %8800 = vmatprep.subr.bf16.mxu0 %v6080
    %8801 = vmatpush1.bf16.msra.mxu0 %v6079
    %8802 = vmatprep.subr.bf16.mxu0 %v6084
    %8803 = vmatpush1.bf16.msra.mxu0 %v6083
    %8804 = vmatprep.mubr.bf16.mxu0 %v1454
    %8805 = vmatmul.mubr.bf16.gmra.mrb[0].mxu0 %v1440
    %v8806 = vpop.f32.mrb[0].mxu0
    %v8807 = vadd.f32 %v8766, %v8806
    %v8808 = vpop.f32.mrb[0].mxu0
    %v8809 = vadd.f32 %v8768, %v8808
    %v8810 = vpop.f32.mrb[0].mxu0
    %v8811 = vpop.f32.mrb[0].mxu0
    %8812 = vdwg.mxu0
    %8813 = vmatprep.subr.bf16.mxu0 %v6088
    %8814 = vmatpush1.bf16.msra.mxu0 %v6087
    %8815 = vmatprep.subr.bf16.mxu0 %v6092
    %8816 = vmatpush1.bf16.msra.mxu0 %v6091
    %8817 = vmatprep.subr.bf16.mxu0 %v6096
    %8818 = vmatpush1.bf16.msra.mxu0 %v6095
    %8819 = vmatprep.subr.bf16.mxu0 %v6100
    %8820 = vmatpush1.bf16.msra.mxu0 %v6099
    %8821 = vmatprep.subr.bf16.mxu0 %v6104
    %8822 = vmatpush1.bf16.msra.mxu0 %v6103
    %8823 = vmatprep.subr.bf16.mxu0 %v6108
    %8824 = vmatpush1.bf16.msra.mxu0 %v6107
    %8825 = vmatprep.subr.bf16.mxu0 %v6112
    %8826 = vmatpush1.bf16.msra.mxu0 %v6111
    %8827 = vmatprep.subr.bf16.mxu0 %v6116
    %8828 = vmatpush1.bf16.msra.mxu0 %v6115
    %8829 = vmatprep.subr.bf16.mxu0 %v6120
    %8830 = vmatpush1.bf16.msra.mxu0 %v6119
    %8831 = vmatprep.subr.bf16.mxu0 %v6124
    %8832 = vmatpush1.bf16.msra.mxu0 %v6123
    %8833 = vmatprep.subr.bf16.mxu0 %v6128
    %8834 = vmatpush1.bf16.msra.mxu0 %v6127
    %8835 = vmatprep.subr.bf16.mxu0 %v6132
    %8836 = vmatpush1.bf16.msra.mxu0 %v6131
    %8837 = vmatprep.subr.bf16.mxu0 %v6136
    %8838 = vmatpush1.bf16.msra.mxu0 %v6135
    %8839 = vmatprep.subr.bf16.mxu0 %v6140
    %8840 = vmatpush1.bf16.msra.mxu0 %v6139
    %8841 = vmatprep.subr.bf16.mxu0 %v6144
    %8842 = vmatpush1.bf16.msra.mxu0 %v6143
    %8843 = vmatprep.subr.bf16.mxu0 %v6148
    %8844 = vmatpush1.bf16.msra.mxu0 %v6147
    %8845 = vmatprep.mubr.bf16.mxu0 %v1456
    %8846 = vmatmul.mubr.bf16.gmra.mrb[0].mxu0 %v1455
    %v8847 = vpop.f32.mrb[0].mxu0
    %v8848 = vadd.f32 %v8807, %v8847
    %v8849 = vpop.f32.mrb[0].mxu0
    %v8850 = vadd.f32 %v8809, %v8849
    %v8851 = vpop.f32.mrb[0].mxu0
    %v8852 = vpop.f32.mrb[0].mxu0
    %8853 = vdwg.mxu0
    %8854 = vmatprep.subr.bf16.mxu0 %v6152
    %8855 = vmatpush1.bf16.msra.mxu0 %v6151
    %8856 = vmatprep.subr.bf16.mxu0 %v6156
    %8857 = vmatpush1.bf16.msra.mxu0 %v6155
    %8858 = vmatprep.subr.bf16.mxu0 %v6160
    %8859 = vmatpush1.bf16.msra.mxu0 %v6159
    %8860 = vmatprep.subr.bf16.mxu0 %v6164
    %8861 = vmatpush1.bf16.msra.mxu0 %v6163
    %8862 = vmatprep.subr.bf16.mxu0 0
    %8863 = vmatpush1.bf16.msra.mxu0 0
    %8864 = vmatprep.subr.bf16.mxu0 0
    %8865 = vmatpush1.bf16.msra.mxu0 0
    %8866 = vmatprep.subr.bf16.mxu0 0
    %8867 = vmatpush1.bf16.msra.mxu0 0
    %8868 = vmatprep.subr.bf16.mxu0 0
    %8869 = vmatpush1.bf16.msra.mxu0 0
    %8870 = vmatprep.subr.bf16.mxu0 0
    %8871 = vmatpush1.bf16.msra.mxu0 0
    %8872 = vmatprep.subr.bf16.mxu0 0
    %8873 = vmatpush1.bf16.msra.mxu0 0
    %8874 = vmatprep.subr.bf16.mxu0 0
    %8875 = vmatpush1.bf16.msra.mxu0 0
    %8876 = vmatprep.subr.bf16.mxu0 0
    %8877 = vmatpush1.bf16.msra.mxu0 0
    %8878 = vmatprep.subr.bf16.mxu0 0
    %8879 = vmatpush1.bf16.msra.mxu0 0
    %8880 = vmatprep.subr.bf16.mxu0 0
    %8881 = vmatpush1.bf16.msra.mxu0 0
    %8882 = vmatprep.subr.bf16.mxu0 0
    %8883 = vmatpush1.bf16.msra.mxu0 0
    %8884 = vmatprep.subr.bf16.mxu0 0
    %8885 = vmatpush1.bf16.msra.mxu0 0
    %8886 = vmatprep.mubr.bf16.mxu0 0
    %8887 = vmatmul.mubr.bf16.gmra.mrb[0].mxu0 %v7335
    %v8888 = vpop.f32.mrb[0].mxu0
    %v8889 = vadd.f32 %v8848, %v8888
    %v8890 = vpop.f32.mrb[0].mxu0
    %v8891 = vadd.f32 %v8850, %v8890
    %v8892 = vpop.f32.mrb[0].mxu0
    %v8893 = vpop.f32.mrb[0].mxu0
    %8894 = vdwg.mxu0
    %v8895 = vmax.f32 %v8110, 0.0
    %v8896 = vmax.f32 %v8112, 0.0
    %v8897 = vmax.f32 %v8889, 0.0
    %v8898 = vmax.f32 %v8891, 0.0
    %v8899 = vld [vmem:[%s3] sm:$0xff]
    %v8900 = vld [vmem:[%s3 + $0x8] sm:$0xff]
    %v8901 = vld [vmem:[%s3 + $0x10] sm:$0xff]
    %v8902 = vld [vmem:[%s3 + $0x18] sm:$0xff]
    %v8903 = vld [vmem:[%s3 + $0x20] sm:$0xff]
    %v8904 = vld [vmem:[%s3 + $0x28] sm:$0xff]
    %v8905 = vld [vmem:[%s3 + $0x30] sm:$0xff]
    %v8906 = vld [vmem:[%s3 + $0x38] sm:$0xff]
    %v8907 = vld [vmem:[%s3 + $0x40] sm:$0xff]
    %v8908 = vld [vmem:[%s3 + $0x48] sm:$0xff]
    %v8909 = vld [vmem:[%s3 + $0x50] sm:$0xff]
    %v8910 = vld [vmem:[%s3 + $0x58] sm:$0xff]
    %v8911 = vld [vmem:[%s3 + $0x60] sm:$0xff]
    %v8912 = vld [vmem:[%s3 + $0x68] sm:$0xff]
    %v8913 = vld [vmem:[%s3 + $0x70] sm:$0xff]
    %v8914 = vld [vmem:[%s3 + $0x78] sm:$0xff]
    %v8915 = vld [vmem:[%s3 + $0x80] sm:$0xff]
    %v8916 = vld [vmem:[%s3 + $0x88] sm:$0xff]
    %v8917 = vld [vmem:[%s3 + $0x90] sm:$0xff]
    %v8918 = vld [vmem:[%s3 + $0x98] sm:$0xff]
    %v8919 = vld [vmem:[%s3 + $0xa0] sm:$0xff]
    %v8920 = vld [vmem:[%s3 + $0xa8] sm:$0xff]
    %v8921 = vld [vmem:[%s3 + $0xb0] sm:$0xff]
    %v8922 = vld [vmem:[%s3 + $0xb8] sm:$0xff]
    %v8923 = vld [vmem:[%s3 + $0xc0] sm:$0xff]
    %v8924 = vld [vmem:[%s3 + $0xc8] sm:$0xff]
    %v8925 = vld [vmem:[%s3 + $0xd0] sm:$0xff]
    %v8926 = vld [vmem:[%s3 + $0xd8] sm:$0xff]
    %v8927 = vld [vmem:[%s3 + $0xe0] sm:$0xff]
    %v8928 = vld [vmem:[%s3 + $0xe8] sm:$0xff]
    %v8929 = vld [vmem:[%s3 + $0xf0] sm:$0xff]
    %v8930 = vld [vmem:[%s3 + $0xf8] sm:$0xff]
    %v8931 = vld [vmem:[%s3 + $0x100] sm:$0xff]
    %v8932 = vld [vmem:[%s3 + $0x108] sm:$0xff]
    %v8933 = vld [vmem:[%s3 + $0x110] sm:$0xff]
    %v8934 = vld [vmem:[%s3 + $0x118] sm:$0xff]
    %v8935 = vld [vmem:[%s3 + $0x120] sm:$0xff]
    %v8936 = vld [vmem:[%s3 + $0x128] sm:$0xff]
    %v8937 = vld [vmem:[%s3 + $0x130] sm:$0xff]
    %v8938 = vld [vmem:[%s3 + $0x138] sm:$0xff]
    %v8939 = vld [vmem:[%s3 + $0x140] sm:$0xff]
    %v8940 = vld [vmem:[%s3 + $0x148] sm:$0xff]
    %v8941 = vld [vmem:[%s3 + $0x150] sm:$0xff]
    %v8942 = vld [vmem:[%s3 + $0x158] sm:$0xff]
    %v8943 = vld [vmem:[%s3 + $0x160] sm:$0xff]
    %v8944 = vld [vmem:[%s3 + $0x168] sm:$0xff]
    %v8945 = vld [vmem:[%s3 + $0x170] sm:$0xff]
    %v8946 = vld [vmem:[%s3 + $0x178] sm:$0xff]
    %v8947 = vld [vmem:[%s3 + $0x180] sm:$0xff]
    %v8948 = vld [vmem:[%s3 + $0x188] sm:$0xff]
    %v8949 = vld [vmem:[%s3 + $0x190] sm:$0xff]
    %v8950 = vld [vmem:[%s3 + $0x198] sm:$0xff]
    %v8951 = vld [vmem:[%s3 + $0x1a0] sm:$0xff]
    %v8952 = vld [vmem:[%s3 + $0x1a8] sm:$0xff]
    %v8953 = vld [vmem:[%s3 + $0x1b0] sm:$0xff]
    %v8954 = vld [vmem:[%s3 + $0x1b8] sm:$0xff]
    %v8955 = vld [vmem:[%s3 + $0x1c0] sm:$0xff]
    %v8956 = vld [vmem:[%s3 + $0x1c8] sm:$0xff]
    %v8957 = vld [vmem:[%s3 + $0x1d0] sm:$0xff]
    %v8958 = vld [vmem:[%s3 + $0x1d8] sm:$0xff]
    %v8959 = vld [vmem:[%s3 + $0x1e0] sm:$0xff]
    %v8960 = vld [vmem:[%s3 + $0x1e8] sm:$0xff]
    %v8961 = vld [vmem:[%s3 + $0x1f0] sm:$0xff]
    %v8962 = vld [vmem:[%s3 + $0x1f8] sm:$0xff]
    %v8963 = vld [vmem:[%s4] sm:$0x1]
    %v8965 = vlaneseq
    %v8966 = vshrl.u32 %v8965, 7
    %v8967 = vsub.s32 0, %v8966
    %v8968 = vrot.slane %v8963, %v8967
    %8970 = vmatprep.subr.mxu0 0.0
    %8971 = vmatpush1.msra.mxu0 %v8899
    %8972 = vmatprep.subr.mxu0 0.0
    %8973 = vmatpush1.msra.mxu0 %v8900
    %8974 = vmatprep.subr.mxu0 0.0
    %8975 = vmatpush1.msra.mxu0 %v8901
    %8976 = vmatprep.subr.mxu0 0.0
    %8977 = vmatpush1.msra.mxu0 %v8902
    %8978 = vmatprep.subr.mxu0 0.0
    %8979 = vmatpush1.msra.mxu0 %v8903
    %8980 = vmatprep.subr.mxu0 0.0
    %8981 = vmatpush1.msra.mxu0 %v8904
    %8982 = vmatprep.subr.mxu0 0.0
    %8983 = vmatpush1.msra.mxu0 %v8905
    %8984 = vmatprep.subr.mxu0 0.0
    %8985 = vmatpush1.msra.mxu0 %v8906
    %8986 = vmatprep.subr.mxu0 0.0
    %8987 = vmatpush1.msra.mxu0 %v8907
    %8988 = vmatprep.subr.mxu0 0.0
    %8989 = vmatpush1.msra.mxu0 %v8908
    %8990 = vmatprep.subr.mxu0 0.0
    %8991 = vmatpush1.msra.mxu0 %v8909
    %8992 = vmatprep.subr.mxu0 0.0
    %8993 = vmatpush1.msra.mxu0 %v8910
    %8994 = vmatprep.subr.mxu0 0.0
    %8995 = vmatpush1.msra.mxu0 %v8911
    %8996 = vmatprep.subr.mxu0 0.0
    %8997 = vmatpush1.msra.mxu0 %v8912
    %8998 = vmatprep.subr.mxu0 0.0
    %8999 = vmatpush1.msra.mxu0 %v8913
    %9000 = vmatprep.subr.mxu0 0.0
    %9001 = vmatpush1.msra.mxu0 %v8914
    %9002 = vmatprep.subr.mxu0 0.0
    %9003 = vmatpush1.msra.mxu0 %v8915
    %9004 = vmatprep.subr.mxu0 0.0
    %9005 = vmatpush1.msra.mxu0 %v8916
    %9006 = vmatprep.subr.mxu0 0.0
    %9007 = vmatpush1.msra.mxu0 %v8917
    %9008 = vmatprep.subr.mxu0 0.0
    %9009 = vmatpush1.msra.mxu0 %v8918
    %9010 = vmatprep.subr.mxu0 0.0
    %9011 = vmatpush1.msra.mxu0 %v8919
    %9012 = vmatprep.subr.mxu0 0.0
    %9013 = vmatpush1.msra.mxu0 %v8920
    %9014 = vmatprep.subr.mxu0 0.0
    %9015 = vmatpush1.msra.mxu0 %v8921
    %9016 = vmatprep.subr.mxu0 0.0
    %9017 = vmatpush1.msra.mxu0 %v8922
    %9018 = vmatprep.subr.mxu0 0.0
    %9019 = vmatpush1.msra.mxu0 %v8923
    %9020 = vmatprep.subr.mxu0 0.0
    %9021 = vmatpush1.msra.mxu0 %v8924
    %9022 = vmatprep.subr.mxu0 0.0
    %9023 = vmatpush1.msra.mxu0 %v8925
    %9024 = vmatprep.subr.mxu0 0.0
    %9025 = vmatpush1.msra.mxu0 %v8926
    %9026 = vmatprep.subr.mxu0 0.0
    %9027 = vmatpush1.msra.mxu0 %v8927
    %9028 = vmatprep.subr.mxu0 0.0
    %9029 = vmatpush1.msra.mxu0 %v8928
    %9030 = vmatprep.subr.mxu0 0.0
    %9031 = vmatpush1.msra.mxu0 %v8929
    %9032 = vmatprep.subr.mxu0 0.0
    %9033 = vmatpush1.msra.mxu0 %v8930
    %9034 = vmatprep.mubr.f32.mxu0 %v8896
    %9035 = vmatmul.mubr.f32.gmra.mrb[0].mxu0 %v8895
    %v9036 = vpop.f32.mrb[0].mxu0
    %v9037 = vadd.f32 %v8968, %v9036
    %v9038 = vpop.f32.mrb[0].mxu0
    %9039 = vdwg.mxu0
    %9040 = vmatprep.subr.mxu0 0.0
    %9041 = vmatpush1.msra.mxu0 %v8931
    %9042 = vmatprep.subr.mxu0 0.0
    %9043 = vmatpush1.msra.mxu0 %v8932
    %9044 = vmatprep.subr.mxu0 0.0
    %9045 = vmatpush1.msra.mxu0 %v8933
    %9046 = vmatprep.subr.mxu0 0.0
    %9047 = vmatpush1.msra.mxu0 %v8934
    %9048 = vmatprep.subr.mxu0 0.0
    %9049 = vmatpush1.msra.mxu0 %v8935
    %9050 = vmatprep.subr.mxu0 0.0
    %9051 = vmatpush1.msra.mxu0 %v8936
    %9052 = vmatprep.subr.mxu0 0.0
    %9053 = vmatpush1.msra.mxu0 %v8937
    %9054 = vmatprep.subr.mxu0 0.0
    %9055 = vmatpush1.msra.mxu0 %v8938
    %9056 = vmatprep.subr.mxu0 0.0
    %9057 = vmatpush1.msra.mxu0 %v8939
    %9058 = vmatprep.subr.mxu0 0.0
    %9059 = vmatpush1.msra.mxu0 %v8940
    %9060 = vmatprep.subr.mxu0 0.0
    %9061 = vmatpush1.msra.mxu0 %v8941
    %9062 = vmatprep.subr.mxu0 0.0
    %9063 = vmatpush1.msra.mxu0 %v8942
    %9064 = vmatprep.subr.mxu0 0.0
    %9065 = vmatpush1.msra.mxu0 %v8943
    %9066 = vmatprep.subr.mxu0 0.0
    %9067 = vmatpush1.msra.mxu0 %v8944
    %9068 = vmatprep.subr.mxu0 0.0
    %9069 = vmatpush1.msra.mxu0 %v8945
    %9070 = vmatprep.subr.mxu0 0.0
    %9071 = vmatpush1.msra.mxu0 %v8946
    %9072 = vmatprep.subr.mxu0 0.0
    %9073 = vmatpush1.msra.mxu0 %v8947
    %9074 = vmatprep.subr.mxu0 0.0
    %9075 = vmatpush1.msra.mxu0 %v8948
    %9076 = vmatprep.subr.mxu0 0.0
    %9077 = vmatpush1.msra.mxu0 %v8949
    %9078 = vmatprep.subr.mxu0 0.0
    %9079 = vmatpush1.msra.mxu0 %v8950
    %9080 = vmatprep.subr.mxu0 0.0
    %9081 = vmatpush1.msra.mxu0 %v8951
    %9082 = vmatprep.subr.mxu0 0.0
    %9083 = vmatpush1.msra.mxu0 %v8952
    %9084 = vmatprep.subr.mxu0 0.0
    %9085 = vmatpush1.msra.mxu0 %v8953
    %9086 = vmatprep.subr.mxu0 0.0
    %9087 = vmatpush1.msra.mxu0 %v8954
    %9088 = vmatprep.subr.mxu0 0.0
    %9089 = vmatpush1.msra.mxu0 %v8955
    %9090 = vmatprep.subr.mxu0 0.0
    %9091 = vmatpush1.msra.mxu0 %v8956
    %9092 = vmatprep.subr.mxu0 0.0
    %9093 = vmatpush1.msra.mxu0 %v8957
    %9094 = vmatprep.subr.mxu0 0.0
    %9095 = vmatpush1.msra.mxu0 %v8958
    %9096 = vmatprep.subr.mxu0 0.0
    %9097 = vmatpush1.msra.mxu0 %v8959
    %9098 = vmatprep.subr.mxu0 0.0
    %9099 = vmatpush1.msra.mxu0 %v8960
    %9100 = vmatprep.subr.mxu0 0.0
    %9101 = vmatpush1.msra.mxu0 %v8961
    %9102 = vmatprep.subr.mxu0 0.0
    %9103 = vmatpush1.msra.mxu0 %v8962
    %9104 = vmatprep.mubr.f32.mxu0 %v8898
    %9105 = vmatmul.mubr.f32.gmra.mrb[0].mxu0 %v8897
    %v9106 = vpop.f32.mrb[0].mxu0
    %v9107 = vadd.f32 %v9037, %v9106
    %v9108 = vpop.f32.mrb[0].mxu0
    %9109 = vdwg.mxu0
    %9110 = vst [vmem:[#allocation2] sm:$0x3] %v9107
    // Predicated region
    $region22: #{dqn_forward.3} parent=1 // pred_check
      _
    $region23: #{dqn_forward.3} parent=1 // pred_check_branch
      %9112 = sbr.rel (0) target = $region25
    $region24: #{dqn_forward.3} parent=1 // pred_region
      %s9114 = ssub.s32 32, 32
      %9115 = vsyncadd [#allocation3], %s9114
      %s9117 = sshll.u32 [#allocation2], 4
      %s9118 = int_to_ptr.vmem [resolvable:$true] %s9117
      %9120 = dma.vmem_to_hbm [thread:$0]  %s9118, 32, %s5, [#allocation3]
    $region25: #{dqn_forward.3} parent=1 // pred_fallthru
      _
    // Predicated region
    $region26: #{dqn_forward.3} parent=1 // pred_check
      _
    $region27: #{dqn_forward.3} parent=1 // pred_check_branch
      %9122 = sbr.rel (0) target = $region29
    $region28: #{dqn_forward.3} parent=1 // pred_region
      %9123 = dma.done [#allocation3], 32
    $region29: #{dqn_forward.3} parent=1 // pred_fallthru
      _
    %9124 = vsyncpa [#allocation3], 1

</llo_original>
